<compile_context>
chip_gen: v6e
topology: v6e:2x2x1
jax: 0.10.0
libtpu: 0.0.40
codegen_flags: <defaults>
</compile_context>

<pallas_src>
import functools
import math

import jax
import jax.numpy as jnp
from jax.experimental import pallas as pl
from jax.experimental.pallas import tpu as pltpu


# ----------------------------- config helpers ------------------------------------- #

@functools.lru_cache(maxsize=1)
def _vmem_limit_bytes():
    """Generation-aware scoped-VMEM limit: ~48 MiB on v7x (64 MiB physical),
    ~96 MiB on v5e/v6e (128 MiB physical)."""
    try:
        cap = int(pltpu.get_tpu_info().vmem_capacity_bytes)
    except Exception:
        cap = 128 * 1024 * 1024
    return int(min(cap * 3 // 4, 96 * 1024 * 1024))


def _cparams(*semantics):
    return pltpu.CompilerParams(dimension_semantics=tuple(semantics),
                                vmem_limit_bytes=_vmem_limit_bytes())


def _const_spec(shape):
    """Whole-array operand, same block at every grid step (stays VMEM resident)."""
    nd = len(shape)
    return pl.BlockSpec(shape, lambda *_: (0,) * nd)


def _choose_bt(B, seq, max_rows=256):
    """Batch elements per row block: fold as many batches as possible into the MXU
    M dimension while keeping >= 2 grid blocks (v7x megacore) when B allows."""
    divs = [d for d in range(1, B + 1) if B % d == 0 and d * seq <= max_rows]
    if not divs:
        return 1
    two = [d for d in divs if B // d >= 2]
    return max(two) if two else max(divs)


# ----------------------------- in-kernel helpers ---------------------------------- #

def _layernorm_f32(x, g, b):
    """LayerNorm over last dim, eps=1e-5 (PyTorch default). x, g, b are f32."""
    mu = jnp.mean(x, axis=-1, keepdims=True)
    var = jnp.mean((x - mu) ** 2, axis=-1, keepdims=True)
    return (x - mu) * jax.lax.rsqrt(var + 1e-5) * g + b


def _gelu_erf(x):
    """Exact erf GELU — matches PyTorch activation='gelu'."""
    # TODO(synk): tanh-approx GELU would ride the otherwise idle EUP slot if the
    # erf VALU polynomial ever binds, but would no longer match PyTorch exactly.
    return 0.5 * x * (1.0 + jax.lax.erf(x * (2.0 ** -0.5)))


def _softmax_rows(s):
    s = s - jnp.max(s, axis=-1, keepdims=True)
    p = jnp.exp(s)
    return p * pl.reciprocal(jnp.sum(p, axis=-1, keepdims=True), approx=True)


# ----------------------------- Pallas kernels ------------------------------------- #

def _embed_prenorm_kernel(emb_ref, pos_ref, g_ref, b_ref, o_ref):
    """x = LayerNorm(embedding + pos_encoding)  (dropout = identity)."""
    # NOTE: the reference module does NOT scale the token embedding by sqrt(D).
    x = emb_ref[...].astype(jnp.float32) + pos_ref[...].astype(jnp.float32)
    o_ref[...] = _layernorm_f32(x, g_ref[...].astype(jnp.float32),
                                b_ref[...].astype(jnp.float32)).astype(o_ref.dtype)


def _self_attn_kernel(x_ref, g_ref, b_ref, wqkv_ref, bqkv_ref, wo_ref, bo_ref,
                      o_ref, attn_ref, *, bt, seq, num_heads, head_dim, scale):
    """x + MHA(LN(x)) with causal mask. Batch-folded rows; one QKV and one out-proj
    matmul over all rt = bt*seq rows; tiny attention core per (batch, head)."""
    x = x_ref[...].astype(jnp.float32)                                  # (rt, D)
    D = num_heads * head_dim
    h = _layernorm_f32(x, g_ref[...].astype(jnp.float32),
                       b_ref[...].astype(jnp.float32)).astype(jnp.bfloat16)

    # one wide QKV projection: (rt, D) @ (D, 3D), f32 acc, cast to bf16 once
    qkv = jnp.dot(h, wqkv_ref[...], preferred_element_type=jnp.float32)
    qkv = (qkv + bqkv_ref[...].astype(jnp.float32)).astype(jnp.bfloat16)

    rows = jax.lax.broadcasted_iota(jnp.int32, (seq, seq), 0)
    cols = jax.lax.broadcasted_iota(jnp.int32, (seq, seq), 1)
    neg = jnp.where(cols > rows, jnp.float32(-1e30), jnp.float32(0.0))

    for b_i in range(bt):                    # static unrolled: bt * H small cores
        r0 = b_i * seq
        for hd in range(num_heads):
            lo = hd * head_dim
            q = qkv[r0:r0 + seq, lo:lo + head_dim]
            k = qkv[r0:r0 + seq, D + lo:D + lo + head_dim]
            v = qkv[r0:r0 + seq, 2 * D + lo:2 * D + lo + head_dim]
            s = jax.lax.dot_general(q, k, (((1,), (1,)), ((), ())),
                                    preferred_element_type=jnp.float32) * scale
            p = _softmax_rows(s + neg).astype(jnp.bfloat16)
            o = jnp.dot(p, v, preferred_element_type=jnp.float32)       # (seq, Dh)
            attn_ref[r0:r0 + seq, lo:lo + head_dim] = o                  # concat

    # single out-projection over the concatenated heads: (rt, D) @ (D, D)
    attn = jnp.dot(attn_ref[...].astype(jnp.bfloat16), wo_ref[...],
                   preferred_element_type=jnp.float32)
    attn = attn + bo_ref[...].astype(jnp.float32)
    o_ref[...] = (x + attn).astype(o_ref.dtype)


def _cross_attn_kernel(x_ref, mem_ref, g_ref, b_ref, wq_ref, bq_ref,
                       wkv_ref, bkv_ref, wo_ref, bo_ref, o_ref, attn_ref,
                       *, bt, seq, mem_len, num_heads, head_dim, scale):
    """x + MHA(LN(x), memory, memory). Batch-folded; fused-KV proj over bt*S rows."""
    x = x_ref[...].astype(jnp.float32)                                   # (rt, D)
    D = num_heads * head_dim
    mem = mem_ref[...]                                                   # (bt*S, D) bf16

    h = _layernorm_f32(x, g_ref[...].astype(jnp.float32),
                       b_ref[...].astype(jnp.float32)).astype(jnp.bfloat16)

    q_all = jnp.dot(h, wq_ref[...], preferred_element_type=jnp.float32)
    q_all = (q_all + bq_ref[...].astype(jnp.float32)).astype(jnp.bfloat16)
    kv = jnp.dot(mem, wkv_ref[...], preferred_element_type=jnp.float32)
    kv = (kv + bkv_ref[...].astype(jnp.float32)).astype(jnp.bfloat16)

    for b_i in range(bt):
        r0 = b_i * seq
        m0 = b_i * mem_len
        for hd in range(num_heads):
            lo = hd * head_dim
            q = q_all[r0:r0 + seq, lo:lo + head_dim]
            k = kv[m0:m0 + mem_len, lo:lo + head_dim]
            v = kv[m0:m0 + mem_len, D + lo:D + lo + head_dim]
            s = jax.lax.dot_general(q, k, (((1,), (1,)), ((), ())),
                                    preferred_element_type=jnp.float32) * scale
            p = _softmax_rows(s).astype(jnp.bfloat16)                    # no mask
            o = jnp.dot(p, v, preferred_element_type=jnp.float32)
            attn_ref[r0:r0 + seq, lo:lo + head_dim] = o

    attn = jnp.dot(attn_ref[...].astype(jnp.bfloat16), wo_ref[...],
                   preferred_element_type=jnp.float32)
    attn = attn + bo_ref[...].astype(jnp.float32)
    o_ref[...] = (x + attn).astype(o_ref.dtype)


def _ffn_kernel(x_ref, g_ref, b_ref, w1_ref, b1_ref, w2_ref, b2_ref, o_ref,
                h_ref, acc_ref):
    """x + lin2(GELU(lin1(LN(x)))), with the hidden dim F streamed in (D,tf)/(tf,D)
    weight tiles over the 'arbitrary' grid axis 1 (accumulator in scratch)."""
    k = pl.program_id(1)

    @pl.when(k == 0)
    def _():
        x = x_ref[...].astype(jnp.float32)
        h_ref[...] = _layernorm_f32(x, g_ref[...].astype(jnp.float32),
                                    b_ref[...].astype(jnp.float32)
                                    ).astype(jnp.bfloat16)
        acc_ref[...] = jnp.zeros_like(acc_ref)

    a = jnp.dot(h_ref[...], w1_ref[...], preferred_element_type=jnp.float32)
    a = _gelu_erf(a + b1_ref[...].astype(jnp.float32)).astype(jnp.bfloat16)
    acc_ref[...] += jnp.dot(a, w2_ref[...], preferred_element_type=jnp.float32)

    @pl.when(k == pl.num_programs(1) - 1)
    def _():
        y = acc_ref[...] + b2_ref[...].astype(jnp.float32)
        o_ref[...] = (x_ref[...].astype(jnp.float32) + y).astype(o_ref.dtype)


def _logits_kernel(x_ref, e_ref, b_ref, o_ref):
    """logits = x @ E^T + bias, contracting over D (no transposed copy of E)."""
    x = x_ref[...].astype(jnp.bfloat16)                                  # (rt, D)
    logits = jax.lax.dot_general(x, e_ref[...], (((1,), (1,)), ((), ())),
                                 preferred_element_type=jnp.float32)     # (rt, tv)
    o_ref[...] = (logits + b_ref[...].astype(jnp.float32)).astype(o_ref.dtype)


# ----------------------------- kernel wrappers ------------------------------------ #

def embed_prenorm(emb_flat, pos_tile, g, b, *, rt):
    M, D = emb_flat.shape
    return pl.pallas_call(
        _embed_prenorm_kernel,
        out_shape=jax.ShapeDtypeStruct((M, D), jnp.float32),
        grid=(M // rt,),
        in_specs=[pl.BlockSpec((rt, D), lambda i: (i, 0)),
                  _const_spec((rt, D)),
                  _const_spec((1, D)), _const_spec((1, D))],
        out_specs=pl.BlockSpec((rt, D), lambda i: (i, 0)),
        compiler_params=_cparams("parallel"),
    )(emb_flat, pos_tile, g, b)


def self_attn_block(x, p, *, bt, seq, num_heads):
    M, D = x.shape
    Dh = D // num_heads
    rt = bt * seq
    kern = functools.partial(_self_attn_kernel, bt=bt, seq=seq,
                             num_heads=num_heads, head_dim=Dh,
                             scale=1.0 / math.sqrt(Dh))
    return pl.pallas_call(
        kern,
        out_shape=jax.ShapeDtypeStruct((M, D), jnp.float32),
        grid=(M // rt,),
        in_specs=[pl.BlockSpec((rt, D), lambda i: (i, 0)),
                  _const_spec((1, D)), _const_spec((1, D)),
                  _const_spec((D, 3 * D)), _const_spec((1, 3 * D)),
                  _const_spec((D, D)), _const_spec((1, D))],
        out_specs=pl.BlockSpec((rt, D), lambda i: (i, 0)),
        scratch_shapes=[pltpu.VMEM((rt, D), jnp.float32)],
        input_output_aliases={0: 0},
        compiler_params=_cparams("parallel"),
    )(x, p["norm_g"], p["norm_b"], p["w_qkv"], p["b_qkv"], p["w_o"], p["b_o"])


def cross_attn_block(x, mem_flat, p, *, bt, seq, mem_len, num_heads):
    M, D = x.shape
    Dh = D // num_heads
    rt = bt * seq
    mrt = bt * mem_len
    kern = functools.partial(_cross_attn_kernel, bt=bt, seq=seq, mem_len=mem_len,
                             num_heads=num_heads, head_dim=Dh,
                             scale=1.0 / math.sqrt(Dh))
    return pl.pallas_call(
        kern,
        out_shape=jax.ShapeDtypeStruct((M, D), jnp.float32),
        grid=(M // rt,),
        in_specs=[pl.BlockSpec((rt, D), lambda i: (i, 0)),
                  pl.BlockSpec((mrt, D), lambda i: (i, 0)),
                  _const_spec((1, D)), _const_spec((1, D)),
                  _const_spec((D, D)), _const_spec((1, D)),
                  _const_spec((D, 2 * D)), _const_spec((1, 2 * D)),
                  _const_spec((D, D)), _const_spec((1, D))],
        out_specs=pl.BlockSpec((rt, D), lambda i: (i, 0)),
        scratch_shapes=[pltpu.VMEM((rt, D), jnp.float32)],
        input_output_aliases={0: 0},
        compiler_params=_cparams("parallel"),
    )(x, mem_flat, p["norm_g"], p["norm_b"], p["w_q"], p["b_q"],
      p["w_kv"], p["b_kv"], p["w_o"], p["b_o"])


def ffn_block(x, p, *, rt, tf=None):
    M, D = x.shape
    F = p["w1"].shape[1]
    if tf is None:
        tf = min(F, 1024)
        while tf > 128 and F % tf:
            tf -= 128
        if F % tf:
            tf = F
    nk = F // tf
    return pl.pallas_call(
        _ffn_kernel,
        out_shape=jax.ShapeDtypeStruct((M, D), jnp.float32),
        grid=(M // rt, nk),                       # reduction axis (F tiles) last
        in_specs=[pl.BlockSpec((rt, D), lambda i, k: (i, 0)),
                  _const_spec((1, D)), _const_spec((1, D)),
                  pl.BlockSpec((D, tf), lambda i, k: (0, k)),
                  pl.BlockSpec((1, tf), lambda i, k: (0, k)),
                  pl.BlockSpec((tf, D), lambda i, k: (k, 0)),
                  _const_spec((1, D))],
        out_specs=pl.BlockSpec((rt, D), lambda i, k: (i, 0)),
        scratch_shapes=[pltpu.VMEM((rt, D), jnp.bfloat16),    # cached LN(x)
                        pltpu.VMEM((rt, D), jnp.float32)],    # f32 accumulator
        input_output_aliases={0: 0},
        compiler_params=_cparams("parallel", "arbitrary"),
    )(x, p["norm_g"], p["norm_b"], p["w1"], p["b1"], p["w2"], p["b2"])


def logits_proj(x, embedding, bias, *, rt):
    """x: (M, D) f32 flat rows; embedding: (Vp, D) bf16, vocab padded to mult of 128."""
    M, D = x.shape
    Vp = embedding.shape[0]
    tv = min(Vp, 2048)
    while tv > 128 and Vp % tv:
        tv -= 128
    if Vp % tv:
        tv = Vp
    nv = Vp // tv
    return pl.pallas_call(
        _logits_kernel,
        out_shape=jax.ShapeDtypeStruct((M, Vp), jnp.float32),
        grid=(M // rt, nv),
        in_specs=[pl.BlockSpec((rt, D), lambda i, v: (i, 0)),
                  pl.BlockSpec((tv, D), lambda i, v: (v, 0)),
                  pl.BlockSpec((1, tv), lambda i, v: (0, v))],
        out_specs=pl.BlockSpec((rt, tv), lambda i, v: (i, v)),
        compiler_params=_cparams("parallel", "parallel"),
    )(x, embedding, bias)


# ----------------------------- model composition ---------------------------------- #

def decoder_forward(tgt_tokens, memory, params, cfg):
    """Equivalent of TransformerDecoderModule.forward(tgt_tokens, memory)."""
    B, T = tgt_tokens.shape
    Tq = T - 1
    D = cfg["embed_dim"]
    H = cfg["num_heads"]
    V = cfg["vocab_size"]
    S = memory.shape[1]

    bt = _choose_bt(B, Tq)          # batches folded into the MXU M dimension
    rt = bt * Tq                    # rows per grid block

    # JAX glue: embedding gather, batch-flattening, positional slice.
    tok = tgt_tokens[:, :-1]
    emb_flat = params["embedding"][tok].reshape(B * Tq, D)         # (M, D) bf16
    pos_tile = jnp.tile(params["pos_encoding"][:Tq], (bt, 1))      # (rt, D) f32
    mem_flat = memory.astype(jnp.bfloat16).reshape(B * S, D)       # (B*S, D) bf16

    # fused: (embedding + pos) -> dropout(identity) -> pre_norm
    # TODO(synk): nn.Dropout treated as identity (inference semantics); stochastic
    # training-mode dropout is not reproduced.
    x = embed_prenorm(emb_flat, pos_tile, params["pre_norm_g"],
                      params["pre_norm_b"], rt=rt)

    # TransformerDecoder (norm_first=True layers; no final norm: norm=None default)
    for layer in params["layers"]:
        x = self_attn_block(x, layer["self_attn"], bt=bt, seq=Tq, num_heads=H)
        x = cross_attn_block(x, mem_flat, layer["cross_attn"],
                             bt=bt, seq=Tq, mem_len=S, num_heads=H)
        x = ffn_block(x, layer["ffn"], rt=rt, tf=cfg.get("ffn_tile"))

    # output projection with weight tied to the embedding; vocab padded -> lane-dense
    logits = logits_proj(x, params["embedding"], params["output_bias"], rt=rt)
    return logits[:, :V].reshape(B, Tq, V)


# ----------------------------- parameter construction ----------------------------- #

def init_params(key, cfg):
    D, V, F = cfg["embed_dim"], cfg["vocab_size"], cfg["ffn_dim"]
    L, ML = cfg["num_layers"], cfg["max_length"]
    Vp = ((V + 127) // 128) * 128                     # lane-dense padded vocab

    def nrm(k, shape, std=0.02):
        return (jax.random.normal(k, shape, jnp.float32) * std).astype(jnp.bfloat16)

    keys = iter(jax.random.split(key, 4 + 8 * L))

    emb = jax.random.normal(next(keys), (V, D), jnp.float32) * 0.02
    emb = jnp.pad(emb, ((0, Vp - V), (0, 0))).astype(jnp.bfloat16)   # pad rows are 0

    params = {
        "embedding": emb,                              # (Vp, D), rows >= V unused
        "pos_encoding": (jax.random.normal(next(keys), (ML, D), jnp.float32) * 0.02),
        "pre_norm_g": jnp.ones((1, D), jnp.float32),
        "pre_norm_b": jnp.zeros((1, D), jnp.float32),
        "output_bias": jnp.zeros((1, Vp), jnp.float32),
        "layers": [],
    }

    for _ in range(L):
        params["layers"].append({
            "self_attn": {
                "norm_g": jnp.ones((1, D), jnp.float32),
                "norm_b": jnp.zeros((1, D), jnp.float32),
                "w_qkv": nrm(next(keys), (D, 3 * D)),
                "b_qkv": jnp.zeros((1, 3 * D), jnp.float32),
                "w_o": nrm(next(keys), (D, D)),
                "b_o": jnp.zeros((1, D), jnp.float32),
            },
            "cross_attn": {
                "norm_g": jnp.ones((1, D), jnp.float32),
                "norm_b": jnp.zeros((1, D), jnp.float32),
                "w_q": nrm(next(keys), (D, D)),
                "b_q": jnp.zeros((1, D), jnp.float32),
                "w_kv": nrm(next(keys), (D, 2 * D)),
                "b_kv": jnp.zeros((1, 2 * D), jnp.float32),
                "w_o": nrm(next(keys), (D, D)),
                "b_o": jnp.zeros((1, D), jnp.float32),
            },
            "ffn": {
                "norm_g": jnp.ones((1, D), jnp.float32),
                "norm_b": jnp.zeros((1, D), jnp.float32),
                "w1": nrm(next(keys), (D, F)),
                "b1": jnp.zeros((1, F), jnp.float32),
                "w2": nrm(next(keys), (F, D)),
                "b2": jnp.zeros((1, D), jnp.float32),
            },
        })
    return params


# ----------------------------- main ------------------------------------------------ #

if __name__ == "__main__":
    # Scaled-down config consistent with the module (head_dim = D/H = 128, same as
    # the reference model's 1536/12 = 128).  ffn_tile=256 forces 2 F-tiles so the
    # streamed-FFN accumulator path is exercised.
    cfg = dict(vocab_size=64, embed_dim=256, num_heads=2, num_layers=2,
               ffn_dim=512, max_length=16, sos_index=1, eos_index=2,
               ffn_tile=256)

    B, T, S_mem = 4, 9, 16   # teacher-forcing: decoder sees T-1 = 8 positions

    key = jax.random.PRNGKey(0)
    k_par, k_tok, k_mem = jax.random.split(key, 3)

    params = init_params(k_par, cfg)
    tgt_tokens = jax.random.randint(k_tok, (B, T), 0, cfg["vocab_size"], jnp.int32)
    memory = jax.random.normal(k_mem, (B, S_mem, cfg["embed_dim"]), jnp.float32)

    fwd = jax.jit(lambda t, m, p: decoder_forward(t, m, p, cfg))
    logits = fwd(tgt_tokens, memory, params)
    jax.block_until_ready(logits)

    assert logits.shape == (B, T - 1, cfg["vocab_size"])
    assert bool(jnp.all(jnp.isfinite(logits)))
    print("KERNEL_OK")
</pallas_src>

<mosaic_0001>
module attributes {stable_mosaic.version = 11 : i64} {
  func.func @_self_attn_kernel(%arg0: i32, %arg1: memref<16x256xf32, #tpu.memory_space<vmem>>, %arg2: memref<1x256xf32, #tpu.memory_space<vmem>>, %arg3: memref<1x256xf32, #tpu.memory_space<vmem>>, %arg4: memref<256x768xbf16, #tpu.memory_space<vmem>>, %arg5: memref<1x768xf32, #tpu.memory_space<vmem>>, %arg6: memref<256x256xbf16, #tpu.memory_space<vmem>>, %arg7: memref<1x256xf32, #tpu.memory_space<vmem>>, %arg8: memref<16x256xf32, #tpu.memory_space<vmem>>, %arg9: memref<16x256xf32, #tpu.memory_space<vmem>>) attributes {dimension_semantics = [#tpu.dimension_semantics<parallel>], iteration_bounds = array<i64: 2>, scalar_prefetch = 0 : i64, scratch_operands = 1 : i64, tpu.core_type = #tpu.core_type<tc>, window_params = [{transform_indices = @transform_0, window_bounds = array<i64: 16, 256>}, {pipeline_mode = #tpu.pipeline_mode<synchronous>, transform_indices = @transform_1, window_bounds = array<i64: 1, 256>}, {pipeline_mode = #tpu.pipeline_mode<synchronous>, transform_indices = @transform_2, window_bounds = array<i64: 1, 256>}, {pipeline_mode = #tpu.pipeline_mode<synchronous>, transform_indices = @transform_3, window_bounds = array<i64: 256, 768>}, {pipeline_mode = #tpu.pipeline_mode<synchronous>, transform_indices = @transform_4, window_bounds = array<i64: 1, 768>}, {pipeline_mode = #tpu.pipeline_mode<synchronous>, transform_indices = @transform_5, window_bounds = array<i64: 256, 256>}, {pipeline_mode = #tpu.pipeline_mode<synchronous>, transform_indices = @transform_6, window_bounds = array<i64: 1, 256>}, {transform_indices = @transform_7, window_bounds = array<i64: 16, 256>}]} {
    %c0 = arith.constant 0 : index
    %c0_0 = arith.constant 0 : index
    %0 = vector.load %arg1[%c0, %c0_0] : memref<16x256xf32, #tpu.memory_space<vmem>>, vector<16x256xf32>
    %c0_1 = arith.constant 0 : index
    %c0_2 = arith.constant 0 : index
    %1 = vector.load %arg2[%c0_1, %c0_2] : memref<1x256xf32, #tpu.memory_space<vmem>>, vector<1x256xf32>
    %c0_3 = arith.constant 0 : index
    %c0_4 = arith.constant 0 : index
    %2 = vector.load %arg3[%c0_3, %c0_4] : memref<1x256xf32, #tpu.memory_space<vmem>>, vector<1x256xf32>
    %cst = arith.constant dense<0.000000e+00> : vector<16xf32>
    %3 = vector.multi_reduction <add>, %0, %cst [1] : vector<16x256xf32> to vector<16xf32>
    %4 = vector.shape_cast %3 : vector<16xf32> to vector<16x1xf32>
    %cst_5 = arith.constant 2.560000e+02 : f32
    %5 = vector.broadcast %cst_5 : f32 to vector<16x1xf32>
    %6 = arith.divf %4, %5 : vector<16x1xf32>
    %7 = vector.broadcast %6 : vector<16x1xf32> to vector<16x256xf32>
    %8 = arith.subf %0, %7 : vector<16x256xf32>
    %9 = arith.mulf %8, %8 : vector<16x256xf32>
    %cst_6 = arith.constant dense<0.000000e+00> : vector<16xf32>
    %10 = vector.multi_reduction <add>, %9, %cst_6 [1] : vector<16x256xf32> to vector<16xf32>
    %11 = vector.shape_cast %10 : vector<16xf32> to vector<16x1xf32>
    %cst_7 = arith.constant 2.560000e+02 : f32
    %12 = vector.broadcast %cst_7 : f32 to vector<16x1xf32>
    %13 = arith.divf %11, %12 : vector<16x1xf32>
    %14 = vector.broadcast %6 : vector<16x1xf32> to vector<16x256xf32>
    %15 = arith.subf %0, %14 : vector<16x256xf32>
    %cst_8 = arith.constant 9.99999974E-6 : f32
    %16 = vector.broadcast %cst_8 : f32 to vector<16x1xf32>
    %17 = arith.addf %13, %16 : vector<16x1xf32>
    %18 = math.rsqrt %17 : vector<16x1xf32>
    %19 = vector.broadcast %18 : vector<16x1xf32> to vector<16x256xf32>
    %20 = arith.mulf %15, %19 : vector<16x256xf32>
    %21 = vector.broadcast %1 : vector<1x256xf32> to vector<16x256xf32>
    %22 = arith.mulf %20, %21 : vector<16x256xf32>
    %23 = vector.broadcast %2 : vector<1x256xf32> to vector<16x256xf32>
    %24 = arith.addf %22, %23 : vector<16x256xf32>
    %25 = arith.truncf %24 : vector<16x256xf32> to vector<16x256xbf16>
    %c0_9 = arith.constant 0 : index
    %c0_10 = arith.constant 0 : index
    %26 = vector.load %arg4[%c0_9, %c0_10] : memref<256x768xbf16, #tpu.memory_space<vmem>>, vector<256x768xbf16>
    %cst_11 = arith.constant dense<0.000000e+00> : vector<16x768xf32>
    %27 = tpu.matmul %25, %26, %cst_11 {dimension_numbers = #tpu.dot_dimension_numbers<[1], [0], [0], [1], [0, 0, 1, 1], [], []>} : vector<16x256xbf16>, vector<256x768xbf16>, vector<16x768xf32> -> vector<16x768xf32>
    %c0_12 = arith.constant 0 : index
    %c0_13 = arith.constant 0 : index
    %28 = vector.load %arg5[%c0_12, %c0_13] : memref<1x768xf32, #tpu.memory_space<vmem>>, vector<1x768xf32>
    %29 = vector.broadcast %28 : vector<1x768xf32> to vector<16x768xf32>
    %30 = arith.addf %27, %29 : vector<16x768xf32>
    %31 = arith.truncf %30 : vector<16x768xf32> to vector<16x768xbf16>
    %32 = tpu.iota {dimensions = array<i32: 0>} : vector<8x8xi32>
    %33 = tpu.iota {dimensions = array<i32: 1>} : vector<8x8xi32>
    %34 = arith.cmpi sgt, %33, %32 : vector<8x8xi32>
    %cst_14 = arith.constant -1.000000e+30 : f32
    %cst_15 = arith.constant 0.000000e+00 : f32
    %35 = vector.broadcast %cst_14 : f32 to vector<8x8xf32>
    %36 = vector.broadcast %cst_15 : f32 to vector<8x8xf32>
    %37 = arith.select %34, %35, %36 : vector<8x8xi1>, vector<8x8xf32>
    %38 = vector.extract_strided_slice %31 {offsets = [0, 0], sizes = [8, 128], strides = [1, 1]} : vector<16x768xbf16> to vector<8x128xbf16>
    %39 = vector.extract_strided_slice %31 {offsets = [0, 256], sizes = [8, 128], strides = [1, 1]} : vector<16x768xbf16> to vector<8x128xbf16>
    %40 = vector.extract_strided_slice %31 {offsets = [0, 512], sizes = [8, 128], strides = [1, 1]} : vector<16x768xbf16> to vector<8x128xbf16>
    %cst_16 = arith.constant dense<0.000000e+00> : vector<8x8xf32>
    %41 = tpu.matmul %38, %39, %cst_16 {dimension_numbers = #tpu.dot_dimension_numbers<[1], [1], [0], [0], [0, 0, 1, 0], [], []>} : vector<8x128xbf16>, vector<8x128xbf16>, vector<8x8xf32> -> vector<8x8xf32>
    %cst_17 = arith.constant 0.0883883461 : f32
    %42 = vector.broadcast %cst_17 : f32 to vector<8x8xf32>
    %43 = arith.mulf %41, %42 : vector<8x8xf32>
    %44 = arith.addf %43, %37 : vector<8x8xf32>
    %cst_18 = arith.constant dense<0xFF800000> : vector<8xf32>
    %45 = vector.multi_reduction <maximumf>, %44, %cst_18 [1] : vector<8x8xf32> to vector<8xf32>
    %46 = vector.shape_cast %45 : vector<8xf32> to vector<8x1xf32>
    %47 = vector.broadcast %46 : vector<8x1xf32> to vector<8x8xf32>
    %48 = arith.subf %44, %47 : vector<8x8xf32>
    %49 = math.exp %48 : vector<8x8xf32>
    %cst_19 = arith.constant dense<0.000000e+00> : vector<8xf32>
    %50 = vector.multi_reduction <add>, %49, %cst_19 [1] : vector<8x8xf32> to vector<8xf32>
    %51 = vector.shape_cast %50 : vector<8xf32> to vector<8x1xf32>
    %52 = tpu.reciprocal %51 {approx = true} : vector<8x1xf32> -> vector<8x1xf32>
    %53 = vector.broadcast %52 : vector<8x1xf32> to vector<8x8xf32>
    %54 = arith.mulf %49, %53 : vector<8x8xf32>
    %55 = arith.truncf %54 : vector<8x8xf32> to vector<8x8xbf16>
    %cst_20 = arith.constant dense<0.000000e+00> : vector<8x128xf32>
    %56 = tpu.matmul %55, %40, %cst_20 {dimension_numbers = #tpu.dot_dimension_numbers<[1], [0], [0], [1], [0, 0, 1, 1], [], []>} : vector<8x8xbf16>, vector<8x128xbf16>, vector<8x128xf32> -> vector<8x128xf32>
    %c0_21 = arith.constant 0 : index
    %c0_22 = arith.constant 0 : index
    %57 = vector.load %arg9[%c0_21, %c0_22] : memref<16x256xf32, #tpu.memory_space<vmem>>, vector<8x128xf32>
    tpu.vector_store %arg9[%c0_21, %c0_22], %56 {strides = array<i32>} : memref<16x256xf32, #tpu.memory_space<vmem>>, vector<8x128xf32>,
    %58 = vector.extract_strided_slice %31 {offsets = [0, 128], sizes = [8, 128], strides = [1, 1]} : vector<16x768xbf16> to vector<8x128xbf16>
    %59 = vector.extract_strided_slice %31 {offsets = [0, 384], sizes = [8, 128], strides = [1, 1]} : vector<16x768xbf16> to vector<8x128xbf16>
    %60 = vector.extract_strided_slice %31 {offsets = [0, 640], sizes = [8, 128], strides = [1, 1]} : vector<16x768xbf16> to vector<8x128xbf16>
    %cst_23 = arith.constant dense<0.000000e+00> : vector<8x8xf32>
    %61 = tpu.matmul %58, %59, %cst_23 {dimension_numbers = #tpu.dot_dimension_numbers<[1], [1], [0], [0], [0, 0, 1, 0], [], []>} : vector<8x128xbf16>, vector<8x128xbf16>, vector<8x8xf32> -> vector<8x8xf32>
    %cst_24 = arith.constant 0.0883883461 : f32
    %62 = vector.broadcast %cst_24 : f32 to vector<8x8xf32>
    %63 = arith.mulf %61, %62 : vector<8x8xf32>
    %64 = arith.addf %63, %37 : vector<8x8xf32>
    %cst_25 = arith.constant dense<0xFF800000> : vector<8xf32>
    %65 = vector.multi_reduction <maximumf>, %64, %cst_25 [1] : vector<8x8xf32> to vector<8xf32>
    %66 = vector.shape_cast %65 : vector<8xf32> to vector<8x1xf32>
    %67 = vector.broadcast %66 : vector<8x1xf32> to vector<8x8xf32>
    %68 = arith.subf %64, %67 : vector<8x8xf32>
    %69 = math.exp %68 : vector<8x8xf32>
    %cst_26 = arith.constant dense<0.000000e+00> : vector<8xf32>
    %70 = vector.multi_reduction <add>, %69, %cst_26 [1] : vector<8x8xf32> to vector<8xf32>
    %71 = vector.shape_cast %70 : vector<8xf32> to vector<8x1xf32>
    %72 = tpu.reciprocal %71 {approx = true} : vector<8x1xf32> -> vector<8x1xf32>
    %73 = vector.broadcast %72 : vector<8x1xf32> to vector<8x8xf32>
    %74 = arith.mulf %69, %73 : vector<8x8xf32>
    %75 = arith.truncf %74 : vector<8x8xf32> to vector<8x8xbf16>
    %cst_27 = arith.constant dense<0.000000e+00> : vector<8x128xf32>
    %76 = tpu.matmul %75, %60, %cst_27 {dimension_numbers = #tpu.dot_dimension_numbers<[1], [0], [0], [1], [0, 0, 1, 1], [], []>} : vector<8x8xbf16>, vector<8x128xbf16>, vector<8x128xf32> -> vector<8x128xf32>
    %c0_28 = arith.constant 0 : index
    %c128 = arith.constant 128 : index
    %77 = vector.load %arg9[%c0_28, %c128] : memref<16x256xf32, #tpu.memory_space<vmem>>, vector<8x128xf32>
    tpu.vector_store %arg9[%c0_28, %c128], %76 {strides = array<i32>} : memref<16x256xf32, #tpu.memory_space<vmem>>, vector<8x128xf32>,
    %78 = vector.extract_strided_slice %31 {offsets = [8, 0], sizes = [8, 128], strides = [1, 1]} : vector<16x768xbf16> to vector<8x128xbf16>
    %79 = vector.extract_strided_slice %31 {offsets = [8, 256], sizes = [8, 128], strides = [1, 1]} : vector<16x768xbf16> to vector<8x128xbf16>
    %80 = vector.extract_strided_slice %31 {offsets = [8, 512], sizes = [8, 128], strides = [1, 1]} : vector<16x768xbf16> to vector<8x128xbf16>
    %cst_29 = arith.constant dense<0.000000e+00> : vector<8x8xf32>
    %81 = tpu.matmul %78, %79, %cst_29 {dimension_numbers = #tpu.dot_dimension_numbers<[1], [1], [0], [0], [0, 0, 1, 0], [], []>} : vector<8x128xbf16>, vector<8x128xbf16>, vector<8x8xf32> -> vector<8x8xf32>
    %cst_30 = arith.constant 0.0883883461 : f32
    %82 = vector.broadcast %cst_30 : f32 to vector<8x8xf32>
    %83 = arith.mulf %81, %82 : vector<8x8xf32>
    %84 = arith.addf %83, %37 : vector<8x8xf32>
    %cst_31 = arith.constant dense<0xFF800000> : vector<8xf32>
    %85 = vector.multi_reduction <maximumf>, %84, %cst_31 [1] : vector<8x8xf32> to vector<8xf32>
    %86 = vector.shape_cast %85 : vector<8xf32> to vector<8x1xf32>
    %87 = vector.broadcast %86 : vector<8x1xf32> to vector<8x8xf32>
    %88 = arith.subf %84, %87 : vector<8x8xf32>
    %89 = math.exp %88 : vector<8x8xf32>
    %cst_32 = arith.constant dense<0.000000e+00> : vector<8xf32>
    %90 = vector.multi_reduction <add>, %89, %cst_32 [1] : vector<8x8xf32> to vector<8xf32>
    %91 = vector.shape_cast %90 : vector<8xf32> to vector<8x1xf32>
    %92 = tpu.reciprocal %91 {approx = true} : vector<8x1xf32> -> vector<8x1xf32>
    %93 = vector.broadcast %92 : vector<8x1xf32> to vector<8x8xf32>
    %94 = arith.mulf %89, %93 : vector<8x8xf32>
    %95 = arith.truncf %94 : vector<8x8xf32> to vector<8x8xbf16>
    %cst_33 = arith.constant dense<0.000000e+00> : vector<8x128xf32>
    %96 = tpu.matmul %95, %80, %cst_33 {dimension_numbers = #tpu.dot_dimension_numbers<[1], [0], [0], [1], [0, 0, 1, 1], [], []>} : vector<8x8xbf16>, vector<8x128xbf16>, vector<8x128xf32> -> vector<8x128xf32>
    %c8 = arith.constant 8 : index
    %c0_34 = arith.constant 0 : index
    %97 = vector.load %arg9[%c8, %c0_34] : memref<16x256xf32, #tpu.memory_space<vmem>>, vector<8x128xf32>
    tpu.vector_store %arg9[%c8, %c0_34], %96 {strides = array<i32>} : memref<16x256xf32, #tpu.memory_space<vmem>>, vector<8x128xf32>,
    %98 = vector.extract_strided_slice %31 {offsets = [8, 128], sizes = [8, 128], strides = [1, 1]} : vector<16x768xbf16> to vector<8x128xbf16>
    %99 = vector.extract_strided_slice %31 {offsets = [8, 384], sizes = [8, 128], strides = [1, 1]} : vector<16x768xbf16> to vector<8x128xbf16>
    %100 = vector.extract_strided_slice %31 {offsets = [8, 640], sizes = [8, 128], strides = [1, 1]} : vector<16x768xbf16> to vector<8x128xbf16>
    %cst_35 = arith.constant dense<0.000000e+00> : vector<8x8xf32>
    %101 = tpu.matmul %98, %99, %cst_35 {dimension_numbers = #tpu.dot_dimension_numbers<[1], [1], [0], [0], [0, 0, 1, 0], [], []>} : vector<8x128xbf16>, vector<8x128xbf16>, vector<8x8xf32> -> vector<8x8xf32>
    %cst_36 = arith.constant 0.0883883461 : f32
    %102 = vector.broadcast %cst_36 : f32 to vector<8x8xf32>
    %103 = arith.mulf %101, %102 : vector<8x8xf32>
    %104 = arith.addf %103, %37 : vector<8x8xf32>
    %cst_37 = arith.constant dense<0xFF800000> : vector<8xf32>
    %105 = vector.multi_reduction <maximumf>, %104, %cst_37 [1] : vector<8x8xf32> to vector<8xf32>
    %106 = vector.shape_cast %105 : vector<8xf32> to vector<8x1xf32>
    %107 = vector.broadcast %106 : vector<8x1xf32> to vector<8x8xf32>
    %108 = arith.subf %104, %107 : vector<8x8xf32>
    %109 = math.exp %108 : vector<8x8xf32>
    %cst_38 = arith.constant dense<0.000000e+00> : vector<8xf32>
    %110 = vector.multi_reduction <add>, %109, %cst_38 [1] : vector<8x8xf32> to vector<8xf32>
    %111 = vector.shape_cast %110 : vector<8xf32> to vector<8x1xf32>
    %112 = tpu.reciprocal %111 {approx = true} : vector<8x1xf32> -> vector<8x1xf32>
    %113 = vector.broadcast %112 : vector<8x1xf32> to vector<8x8xf32>
    %114 = arith.mulf %109, %113 : vector<8x8xf32>
    %115 = arith.truncf %114 : vector<8x8xf32> to vector<8x8xbf16>
    %cst_39 = arith.constant dense<0.000000e+00> : vector<8x128xf32>
    %116 = tpu.matmul %115, %100, %cst_39 {dimension_numbers = #tpu.dot_dimension_numbers<[1], [0], [0], [1], [0, 0, 1, 1], [], []>} : vector<8x8xbf16>, vector<8x128xbf16>, vector<8x128xf32> -> vector<8x128xf32>
    %c8_40 = arith.constant 8 : index
    %c128_41 = arith.constant 128 : index
    %117 = vector.load %arg9[%c8_40, %c128_41] : memref<16x256xf32, #tpu.memory_space<vmem>>, vector<8x128xf32>
    tpu.vector_store %arg9[%c8_40, %c128_41], %116 {strides = array<i32>} : memref<16x256xf32, #tpu.memory_space<vmem>>, vector<8x128xf32>,
    %c0_42 = arith.constant 0 : index
    %c0_43 = arith.constant 0 : index
    %118 = vector.load %arg9[%c0_42, %c0_43] : memref<16x256xf32, #tpu.memory_space<vmem>>, vector<16x256xf32>
    %119 = arith.truncf %118 : vector<16x256xf32> to vector<16x256xbf16>
    %c0_44 = arith.constant 0 : index
    %c0_45 = arith.constant 0 : index
    %120 = vector.load %arg6[%c0_44, %c0_45] : memref<256x256xbf16, #tpu.memory_space<vmem>>, vector<256x256xbf16>
    %cst_46 = arith.constant dense<0.000000e+00> : vector<16x256xf32>
    %121 = tpu.matmul %119, %120, %cst_46 {dimension_numbers = #tpu.dot_dimension_numbers<[1], [0], [0], [1], [0, 0, 1, 1], [], []>} : vector<16x256xbf16>, vector<256x256xbf16>, vector<16x256xf32> -> vector<16x256xf32>
    %c0_47 = arith.constant 0 : index
    %c0_48 = arith.constant 0 : index
    %122 = vector.load %arg7[%c0_47, %c0_48] : memref<1x256xf32, #tpu.memory_space<vmem>>, vector<1x256xf32>
    %123 = vector.broadcast %122 : vector<1x256xf32> to vector<16x256xf32>
    %124 = arith.addf %121, %123 : vector<16x256xf32>
    %125 = arith.addf %0, %124 : vector<16x256xf32>
    %c0_49 = arith.constant 0 : index
    %c0_50 = arith.constant 0 : index
    %126 = vector.load %arg8[%c0_49, %c0_50] : memref<16x256xf32, #tpu.memory_space<vmem>>, vector<16x256xf32>
    tpu.vector_store %arg8[%c0_49, %c0_50], %125 {strides = array<i32>} : memref<16x256xf32, #tpu.memory_space<vmem>>, vector<16x256xf32>,
    return
  }
  func.func @transform_0(%arg0: i32) -> (i32, i32) {
    %c0_i32 = arith.constant 0 : i32
    %c0_i32_0 = arith.constant 0 : i32
    return %arg0, %c0_i32 : i32, i32
  }
  func.func @transform_1(%arg0: i32) -> (i32, i32) {
    %c0_i32 = arith.constant 0 : i32
    %c0_i32_0 = arith.constant 0 : i32
    %c0_i32_1 = arith.constant 0 : i32
    return %c0_i32, %c0_i32_0 : i32, i32
  }
  func.func @transform_2(%arg0: i32) -> (i32, i32) {
    %c0_i32 = arith.constant 0 : i32
    %c0_i32_0 = arith.constant 0 : i32
    %c0_i32_1 = arith.constant 0 : i32
    return %c0_i32, %c0_i32_0 : i32, i32
  }
  func.func @transform_3(%arg0: i32) -> (i32, i32) {
    %c0_i32 = arith.constant 0 : i32
    %c0_i32_0 = arith.constant 0 : i32
    %c0_i32_1 = arith.constant 0 : i32
    return %c0_i32, %c0_i32_0 : i32, i32
  }
  func.func @transform_4(%arg0: i32) -> (i32, i32) {
    %c0_i32 = arith.constant 0 : i32
    %c0_i32_0 = arith.constant 0 : i32
    %c0_i32_1 = arith.constant 0 : i32
    return %c0_i32, %c0_i32_0 : i32, i32
  }
  func.func @transform_5(%arg0: i32) -> (i32, i32) {
    %c0_i32 = arith.constant 0 : i32
    %c0_i32_0 = arith.constant 0 : i32
    %c0_i32_1 = arith.constant 0 : i32
    return %c0_i32, %c0_i32_0 : i32, i32
  }
  func.func @transform_6(%arg0: i32) -> (i32, i32) {
    %c0_i32 = arith.constant 0 : i32
    %c0_i32_0 = arith.constant 0 : i32
    %c0_i32_1 = arith.constant 0 : i32
    return %c0_i32, %c0_i32_0 : i32, i32
  }
  func.func @transform_7(%arg0: i32) -> (i32, i32) {
    %c0_i32 = arith.constant 0 : i32
    %c0_i32_0 = arith.constant 0 : i32
    return %arg0, %c0_i32 : i32, i32
  }
}

module attributes {stable_mosaic.version = 11 : i64} {
  func.func @_embed_prenorm_kernel(%arg0: i32, %arg1: memref<16x256xbf16, #tpu.memory_space<vmem>>, %arg2: memref<16x256xf32, #tpu.memory_space<vmem>>, %arg3: memref<1x256xf32, #tpu.memory_space<vmem>>, %arg4: memref<1x256xf32, #tpu.memory_space<vmem>>, %arg5: memref<16x256xf32, #tpu.memory_space<vmem>>) attributes {dimension_semantics = [#tpu.dimension_semantics<parallel>], iteration_bounds = array<i64: 2>, scalar_prefetch = 0 : i64, scratch_operands = 0 : i64, tpu.core_type = #tpu.core_type<tc>, window_params = [{transform_indices = @transform_0, window_bounds = array<i64: 16, 256>}, {pipeline_mode = #tpu.pipeline_mode<synchronous>, transform_indices = @transform_1, window_bounds = array<i64: 16, 256>}, {pipeline_mode = #tpu.pipeline_mode<synchronous>, transform_indices = @transform_2, window_bounds = array<i64: 1, 256>}, {pipeline_mode = #tpu.pipeline_mode<synchronous>, transform_indices = @transform_3, window_bounds = array<i64: 1, 256>}, {transform_indices = @transform_4, window_bounds = array<i64: 16, 256>}]} {
    %c0 = arith.constant 0 : index
    %c0_0 = arith.constant 0 : index
    %0 = vector.load %arg1[%c0, %c0_0] : memref<16x256xbf16, #tpu.memory_space<vmem>>, vector<16x256xbf16>
    %1 = arith.extf %0 : vector<16x256xbf16> to vector<16x256xf32>
    %c0_1 = arith.constant 0 : index
    %c0_2 = arith.constant 0 : index
    %2 = vector.load %arg2[%c0_1, %c0_2] : memref<16x256xf32, #tpu.memory_space<vmem>>, vector<16x256xf32>
    %3 = arith.addf %1, %2 : vector<16x256xf32>
    %c0_3 = arith.constant 0 : index
    %c0_4 = arith.constant 0 : index
    %4 = vector.load %arg3[%c0_3, %c0_4] : memref<1x256xf32, #tpu.memory_space<vmem>>, vector<1x256xf32>
    %c0_5 = arith.constant 0 : index
    %c0_6 = arith.constant 0 : index
    %5 = vector.load %arg4[%c0_5, %c0_6] : memref<1x256xf32, #tpu.memory_space<vmem>>, vector<1x256xf32>
    %cst = arith.constant dense<0.000000e+00> : vector<16xf32>
    %6 = vector.multi_reduction <add>, %3, %cst [1] : vector<16x256xf32> to vector<16xf32>
    %7 = vector.shape_cast %6 : vector<16xf32> to vector<16x1xf32>
    %cst_7 = arith.constant 2.560000e+02 : f32
    %8 = vector.broadcast %cst_7 : f32 to vector<16x1xf32>
    %9 = arith.divf %7, %8 : vector<16x1xf32>
    %10 = vector.broadcast %9 : vector<16x1xf32> to vector<16x256xf32>
    %11 = arith.subf %3, %10 : vector<16x256xf32>
    %12 = arith.mulf %11, %11 : vector<16x256xf32>
    %cst_8 = arith.constant dense<0.000000e+00> : vector<16xf32>
    %13 = vector.multi_reduction <add>, %12, %cst_8 [1] : vector<16x256xf32> to vector<16xf32>
    %14 = vector.shape_cast %13 : vector<16xf32> to vector<16x1xf32>
    %cst_9 = arith.constant 2.560000e+02 : f32
    %15 = vector.broadcast %cst_9 : f32 to vector<16x1xf32>
    %16 = arith.divf %14, %15 : vector<16x1xf32>
    %17 = vector.broadcast %9 : vector<16x1xf32> to vector<16x256xf32>
    %18 = arith.subf %3, %17 : vector<16x256xf32>
    %cst_10 = arith.constant 9.99999974E-6 : f32
    %19 = vector.broadcast %cst_10 : f32 to vector<16x1xf32>
    %20 = arith.addf %16, %19 : vector<16x1xf32>
    %21 = math.rsqrt %20 : vector<16x1xf32>
    %22 = vector.broadcast %21 : vector<16x1xf32> to vector<16x256xf32>
    %23 = arith.mulf %18, %22 : vector<16x256xf32>
    %24 = vector.broadcast %4 : vector<1x256xf32> to vector<16x256xf32>
    %25 = arith.mulf %23, %24 : vector<16x256xf32>
    %26 = vector.broadcast %5 : vector<1x256xf32> to vector<16x256xf32>
    %27 = arith.addf %25, %26 : vector<16x256xf32>
    %c0_11 = arith.constant 0 : index
    %c0_12 = arith.constant 0 : index
    %28 = vector.load %arg5[%c0_11, %c0_12] : memref<16x256xf32, #tpu.memory_space<vmem>>, vector<16x256xf32>
    tpu.vector_store %arg5[%c0_11, %c0_12], %27 {strides = array<i32>} : memref<16x256xf32, #tpu.memory_space<vmem>>, vector<16x256xf32>,
    return
  }
  func.func @transform_0(%arg0: i32) -> (i32, i32) {
    %c0_i32 = arith.constant 0 : i32
    %c0_i32_0 = arith.constant 0 : i32
    return %arg0, %c0_i32 : i32, i32
  }
  func.func @transform_1(%arg0: i32) -> (i32, i32) {
    %c0_i32 = arith.constant 0 : i32
    %c0_i32_0 = arith.constant 0 : i32
    %c0_i32_1 = arith.constant 0 : i32
    return %c0_i32, %c0_i32_0 : i32, i32
  }
  func.func @transform_2(%arg0: i32) -> (i32, i32) {
    %c0_i32 = arith.constant 0 : i32
    %c0_i32_0 = arith.constant 0 : i32
    %c0_i32_1 = arith.constant 0 : i32
    return %c0_i32, %c0_i32_0 : i32, i32
  }
  func.func @transform_3(%arg0: i32) -> (i32, i32) {
    %c0_i32 = arith.constant 0 : i32
    %c0_i32_0 = arith.constant 0 : i32
    %c0_i32_1 = arith.constant 0 : i32
    return %c0_i32, %c0_i32_0 : i32, i32
  }
  func.func @transform_4(%arg0: i32) -> (i32, i32) {
    %c0_i32 = arith.constant 0 : i32
    %c0_i32_0 = arith.constant 0 : i32
    return %arg0, %c0_i32 : i32, i32
  }
}

module attributes {stable_mosaic.version = 11 : i64} {
  func.func @_ffn_kernel(%arg0: i32, %arg1: i32, %arg2: memref<16x256xf32, #tpu.memory_space<vmem>>, %arg3: memref<1x256xf32, #tpu.memory_space<vmem>>, %arg4: memref<1x256xf32, #tpu.memory_space<vmem>>, %arg5: memref<256x256xbf16, #tpu.memory_space<vmem>>, %arg6: memref<1x256xf32, #tpu.memory_space<vmem>>, %arg7: memref<256x256xbf16, #tpu.memory_space<vmem>>, %arg8: memref<1x256xf32, #tpu.memory_space<vmem>>, %arg9: memref<16x256xf32, #tpu.memory_space<vmem>>, %arg10: memref<16x256xbf16, #tpu.memory_space<vmem>>, %arg11: memref<16x256xf32, #tpu.memory_space<vmem>>) attributes {dimension_semantics = [#tpu.dimension_semantics<parallel>, #tpu.dimension_semantics<arbitrary>], iteration_bounds = array<i64: 2, 2>, scalar_prefetch = 0 : i64, scratch_operands = 2 : i64, tpu.core_type = #tpu.core_type<tc>, window_params = [{transform_indices = @transform_0, window_bounds = array<i64: 16, 256>}, {pipeline_mode = #tpu.pipeline_mode<synchronous>, transform_indices = @transform_1, window_bounds = array<i64: 1, 256>}, {pipeline_mode = #tpu.pipeline_mode<synchronous>, transform_indices = @transform_2, window_bounds = array<i64: 1, 256>}, {transform_indices = @transform_3, window_bounds = array<i64: 256, 256>}, {transform_indices = @transform_4, window_bounds = array<i64: 1, 256>}, {transform_indices = @transform_5, window_bounds = array<i64: 256, 256>}, {pipeline_mode = #tpu.pipeline_mode<synchronous>, transform_indices = @transform_6, window_bounds = array<i64: 1, 256>}, {transform_indices = @transform_7, window_bounds = array<i64: 16, 256>}]} {
    %c0_i32 = arith.constant 0 : i32
    %0 = arith.cmpi eq, %arg1, %c0_i32 : i32
    %1 = arith.extui %0 : i1 to i32
    %c0_i32_0 = arith.constant 0 : i32
    %2 = arith.cmpi ne, %1, %c0_i32_0 : i32
    scf.if %2 {
      %c0_17 = arith.constant 0 : index
      %c0_18 = arith.constant 0 : index
      %26 = vector.load %arg2[%c0_17, %c0_18] : memref<16x256xf32, #tpu.memory_space<vmem>>, vector<16x256xf32>
      %c0_19 = arith.constant 0 : index
      %c0_20 = arith.constant 0 : index
      %27 = vector.load %arg3[%c0_19, %c0_20] : memref<1x256xf32, #tpu.memory_space<vmem>>, vector<1x256xf32>
      %c0_21 = arith.constant 0 : index
      %c0_22 = arith.constant 0 : index
      %28 = vector.load %arg4[%c0_21, %c0_22] : memref<1x256xf32, #tpu.memory_space<vmem>>, vector<1x256xf32>
      %cst_23 = arith.constant dense<0.000000e+00> : vector<16xf32>
      %29 = vector.multi_reduction <add>, %26, %cst_23 [1] : vector<16x256xf32> to vector<16xf32>
      %30 = vector.shape_cast %29 : vector<16xf32> to vector<16x1xf32>
      %cst_24 = arith.constant 2.560000e+02 : f32
      %31 = vector.broadcast %cst_24 : f32 to vector<16x1xf32>
      %32 = arith.divf %30, %31 : vector<16x1xf32>
      %33 = vector.broadcast %32 : vector<16x1xf32> to vector<16x256xf32>
      %34 = arith.subf %26, %33 : vector<16x256xf32>
      %35 = arith.mulf %34, %34 : vector<16x256xf32>
      %cst_25 = arith.constant dense<0.000000e+00> : vector<16xf32>
      %36 = vector.multi_reduction <add>, %35, %cst_25 [1] : vector<16x256xf32> to vector<16xf32>
      %37 = vector.shape_cast %36 : vector<16xf32> to vector<16x1xf32>
      %cst_26 = arith.constant 2.560000e+02 : f32
      %38 = vector.broadcast %cst_26 : f32 to vector<16x1xf32>
      %39 = arith.divf %37, %38 : vector<16x1xf32>
      %40 = vector.broadcast %32 : vector<16x1xf32> to vector<16x256xf32>
      %41 = arith.subf %26, %40 : vector<16x256xf32>
      %cst_27 = arith.constant 9.99999974E-6 : f32
      %42 = vector.broadcast %cst_27 : f32 to vector<16x1xf32>
      %43 = arith.addf %39, %42 : vector<16x1xf32>
      %44 = math.rsqrt %43 : vector<16x1xf32>
      %45 = vector.broadcast %44 : vector<16x1xf32> to vector<16x256xf32>
      %46 = arith.mulf %41, %45 : vector<16x256xf32>
      %47 = vector.broadcast %27 : vector<1x256xf32> to vector<16x256xf32>
      %48 = arith.mulf %46, %47 : vector<16x256xf32>
      %49 = vector.broadcast %28 : vector<1x256xf32> to vector<16x256xf32>
      %50 = arith.addf %48, %49 : vector<16x256xf32>
      %51 = arith.truncf %50 : vector<16x256xf32> to vector<16x256xbf16>
      %c0_28 = arith.constant 0 : index
      %c0_29 = arith.constant 0 : index
      %52 = vector.load %arg10[%c0_28, %c0_29] : memref<16x256xbf16, #tpu.memory_space<vmem>>, vector<16x256xbf16>
      tpu.vector_store %arg10[%c0_28, %c0_29], %51 {strides = array<i32>} : memref<16x256xbf16, #tpu.memory_space<vmem>>, vector<16x256xbf16>,
      %cst_30 = arith.constant 0.000000e+00 : f32
      %53 = vector.broadcast %cst_30 : f32 to vector<16x256xf32>
      %c0_31 = arith.constant 0 : index
      %c0_32 = arith.constant 0 : index
      %54 = vector.load %arg11[%c0_31, %c0_32] : memref<16x256xf32, #tpu.memory_space<vmem>>, vector<16x256xf32>
      tpu.vector_store %arg11[%c0_31, %c0_32], %53 {strides = array<i32>} : memref<16x256xf32, #tpu.memory_space<vmem>>, vector<16x256xf32>,
    } else {
    }
    %c0 = arith.constant 0 : index
    %c0_1 = arith.constant 0 : index
    %3 = vector.load %arg10[%c0, %c0_1] : memref<16x256xbf16, #tpu.memory_space<vmem>>, vector<16x256xbf16>
    %c0_2 = arith.constant 0 : index
    %c0_3 = arith.constant 0 : index
    %4 = vector.load %arg5[%c0_2, %c0_3] : memref<256x256xbf16, #tpu.memory_space<vmem>>, vector<256x256xbf16>
    %cst = arith.constant dense<0.000000e+00> : vector<16x256xf32>
    %5 = tpu.matmul %3, %4, %cst {dimension_numbers = #tpu.dot_dimension_numbers<[1], [0], [0], [1], [0, 0, 1, 1], [], []>} : vector<16x256xbf16>, vector<256x256xbf16>, vector<16x256xf32> -> vector<16x256xf32>
    %c0_4 = arith.constant 0 : index
    %c0_5 = arith.constant 0 : index
    %6 = vector.load %arg6[%c0_4, %c0_5] : memref<1x256xf32, #tpu.memory_space<vmem>>, vector<1x256xf32>
    %7 = vector.broadcast %6 : vector<1x256xf32> to vector<16x256xf32>
    %8 = arith.addf %5, %7 : vector<16x256xf32>
    %cst_6 = arith.constant 5.000000e-01 : f32
    %9 = vector.broadcast %cst_6 : f32 to vector<16x256xf32>
    %10 = arith.mulf %9, %8 : vector<16x256xf32>
    %cst_7 = arith.constant 0.707106769 : f32
    %11 = vector.broadcast %cst_7 : f32 to vector<16x256xf32>
    %12 = arith.mulf %8, %11 : vector<16x256xf32>
    %13 = math.erf %12 : vector<16x256xf32>
    %cst_8 = arith.constant 1.000000e+00 : f32
    %14 = vector.broadcast %cst_8 : f32 to vector<16x256xf32>
    %15 = arith.addf %14, %13 : vector<16x256xf32>
    %16 = arith.mulf %10, %15 : vector<16x256xf32>
    %17 = arith.truncf %16 : vector<16x256xf32> to vector<16x256xbf16>
    %c0_9 = arith.constant 0 : index
    %c0_10 = arith.constant 0 : index
    %18 = vector.load %arg11[%c0_9, %c0_10] : memref<16x256xf32, #tpu.memory_space<vmem>>, vector<16x256xf32>
    %c0_11 = arith.constant 0 : index
    %c0_12 = arith.constant 0 : index
    %19 = vector.load %arg7[%c0_11, %c0_12] : memref<256x256xbf16, #tpu.memory_space<vmem>>, vector<256x256xbf16>
    %cst_13 = arith.constant dense<0.000000e+00> : vector<16x256xf32>
    %20 = tpu.matmul %17, %19, %cst_13 {dimension_numbers = #tpu.dot_dimension_numbers<[1], [0], [0], [1], [0, 0, 1, 1], [], []>} : vector<16x256xbf16>, vector<256x256xbf16>, vector<16x256xf32> -> vector<16x256xf32>
    %21 = arith.addf %18, %20 : vector<16x256xf32>
    %c0_14 = arith.constant 0 : index
    %c0_15 = arith.constant 0 : index
    %22 = vector.load %arg11[%c0_14, %c0_15] : memref<16x256xf32, #tpu.memory_space<vmem>>, vector<16x256xf32>
    tpu.vector_store %arg11[%c0_14, %c0_15], %21 {strides = array<i32>} : memref<16x256xf32, #tpu.memory_space<vmem>>, vector<16x256xf32>,
    %c1_i32 = arith.constant 1 : i32
    %23 = arith.cmpi eq, %arg1, %c1_i32 : i32
    %24 = arith.extui %23 : i1 to i32
    %c0_i32_16 = arith.constant 0 : i32
    %25 = arith.cmpi ne, %24, %c0_i32_16 : i32
    scf.if %25 {
      %c0_17 = arith.constant 0 : index
      %c0_18 = arith.constant 0 : index
      %26 = vector.load %arg11[%c0_17, %c0_18] : memref<16x256xf32, #tpu.memory_space<vmem>>, vector<16x256xf32>
      %c0_19 = arith.constant 0 : index
      %c0_20 = arith.constant 0 : index
      %27 = vector.load %arg8[%c0_19, %c0_20] : memref<1x256xf32, #tpu.memory_space<vmem>>, vector<1x256xf32>
      %28 = vector.broadcast %27 : vector<1x256xf32> to vector<16x256xf32>
      %29 = arith.addf %26, %28 : vector<16x256xf32>
      %c0_21 = arith.constant 0 : index
      %c0_22 = arith.constant 0 : index
      %30 = vector.load %arg2[%c0_21, %c0_22] : memref<16x256xf32, #tpu.memory_space<vmem>>, vector<16x256xf32>
      %31 = arith.addf %30, %29 : vector<16x256xf32>
      %c0_23 = arith.constant 0 : index
      %c0_24 = arith.constant 0 : index
      %32 = vector.load %arg9[%c0_23, %c0_24] : memref<16x256xf32, #tpu.memory_space<vmem>>, vector<16x256xf32>
      tpu.vector_store %arg9[%c0_23, %c0_24], %31 {strides = array<i32>} : memref<16x256xf32, #tpu.memory_space<vmem>>, vector<16x256xf32>,
    } else {
    }
    return
  }
  func.func @transform_0(%arg0: i32, %arg1: i32) -> (i32, i32) {
    %c0_i32 = arith.constant 0 : i32
    %c0_i32_0 = arith.constant 0 : i32
    return %arg0, %c0_i32 : i32, i32
  }
  func.func @transform_1(%arg0: i32, %arg1: i32) -> (i32, i32) {
    %c0_i32 = arith.constant 0 : i32
    %c0_i32_0 = arith.constant 0 : i32
    %c0_i32_1 = arith.constant 0 : i32
    return %c0_i32, %c0_i32_0 : i32, i32
  }
  func.func @transform_2(%arg0: i32, %arg1: i32) -> (i32, i32) {
    %c0_i32 = arith.constant 0 : i32
    %c0_i32_0 = arith.constant 0 : i32
    %c0_i32_1 = arith.constant 0 : i32
    return %c0_i32, %c0_i32_0 : i32, i32
  }
  func.func @transform_3(%arg0: i32, %arg1: i32) -> (i32, i32) {
    %c0_i32 = arith.constant 0 : i32
    %c0_i32_0 = arith.constant 0 : i32
    return %c0_i32, %arg1 : i32, i32
  }
  func.func @transform_4(%arg0: i32, %arg1: i32) -> (i32, i32) {
    %c0_i32 = arith.constant 0 : i32
    %c0_i32_0 = arith.constant 0 : i32
    return %c0_i32, %arg1 : i32, i32
  }
  func.func @transform_5(%arg0: i32, %arg1: i32) -> (i32, i32) {
    %c0_i32 = arith.constant 0 : i32
    %c0_i32_0 = arith.constant 0 : i32
    return %arg1, %c0_i32 : i32, i32
  }
  func.func @transform_6(%arg0: i32, %arg1: i32) -> (i32, i32) {
    %c0_i32 = arith.constant 0 : i32
    %c0_i32_0 = arith.constant 0 : i32
    %c0_i32_1 = arith.constant 0 : i32
    return %c0_i32, %c0_i32_0 : i32, i32
  }
  func.func @transform_7(%arg0: i32, %arg1: i32) -> (i32, i32) {
    %c0_i32 = arith.constant 0 : i32
    %c0_i32_0 = arith.constant 0 : i32
    return %arg0, %c0_i32 : i32, i32
  }
}

module attributes {stable_mosaic.version = 11 : i64} {
  func.func @_cross_attn_kernel(%arg0: i32, %arg1: memref<16x256xf32, #tpu.memory_space<vmem>>, %arg2: memref<32x256xbf16, #tpu.memory_space<vmem>>, %arg3: memref<1x256xf32, #tpu.memory_space<vmem>>, %arg4: memref<1x256xf32, #tpu.memory_space<vmem>>, %arg5: memref<256x256xbf16, #tpu.memory_space<vmem>>, %arg6: memref<1x256xf32, #tpu.memory_space<vmem>>, %arg7: memref<256x512xbf16, #tpu.memory_space<vmem>>, %arg8: memref<1x512xf32, #tpu.memory_space<vmem>>, %arg9: memref<256x256xbf16, #tpu.memory_space<vmem>>, %arg10: memref<1x256xf32, #tpu.memory_space<vmem>>, %arg11: memref<16x256xf32, #tpu.memory_space<vmem>>, %arg12: memref<16x256xf32, #tpu.memory_space<vmem>>) attributes {dimension_semantics = [#tpu.dimension_semantics<parallel>], iteration_bounds = array<i64: 2>, scalar_prefetch = 0 : i64, scratch_operands = 1 : i64, tpu.core_type = #tpu.core_type<tc>, window_params = [{transform_indices = @transform_0, window_bounds = array<i64: 16, 256>}, {transform_indices = @transform_1, window_bounds = array<i64: 32, 256>}, {pipeline_mode = #tpu.pipeline_mode<synchronous>, transform_indices = @transform_2, window_bounds = array<i64: 1, 256>}, {pipeline_mode = #tpu.pipeline_mode<synchronous>, transform_indices = @transform_3, window_bounds = array<i64: 1, 256>}, {pipeline_mode = #tpu.pipeline_mode<synchronous>, transform_indices = @transform_4, window_bounds = array<i64: 256, 256>}, {pipeline_mode = #tpu.pipeline_mode<synchronous>, transform_indices = @transform_5, window_bounds = array<i64: 1, 256>}, {pipeline_mode = #tpu.pipeline_mode<synchronous>, transform_indices = @transform_6, window_bounds = array<i64: 256, 512>}, {pipeline_mode = #tpu.pipeline_mode<synchronous>, transform_indices = @transform_7, window_bounds = array<i64: 1, 512>}, {pipeline_mode = #tpu.pipeline_mode<synchronous>, transform_indices = @transform_8, window_bounds = array<i64: 256, 256>}, {pipeline_mode = #tpu.pipeline_mode<synchronous>, transform_indices = @transform_9, window_bounds = array<i64: 1, 256>}, {transform_indices = @transform_10, window_bounds = array<i64: 16, 256>}]} {
    %c0 = arith.constant 0 : index
    %c0_0 = arith.constant 0 : index
    %0 = vector.load %arg1[%c0, %c0_0] : memref<16x256xf32, #tpu.memory_space<vmem>>, vector<16x256xf32>
    %c0_1 = arith.constant 0 : index
    %c0_2 = arith.constant 0 : index
    %1 = vector.load %arg2[%c0_1, %c0_2] : memref<32x256xbf16, #tpu.memory_space<vmem>>, vector<32x256xbf16>
    %c0_3 = arith.constant 0 : index
    %c0_4 = arith.constant 0 : index
    %2 = vector.load %arg3[%c0_3, %c0_4] : memref<1x256xf32, #tpu.memory_space<vmem>>, vector<1x256xf32>
    %c0_5 = arith.constant 0 : index
    %c0_6 = arith.constant 0 : index
    %3 = vector.load %arg4[%c0_5, %c0_6] : memref<1x256xf32, #tpu.memory_space<vmem>>, vector<1x256xf32>
    %cst = arith.constant dense<0.000000e+00> : vector<16xf32>
    %4 = vector.multi_reduction <add>, %0, %cst [1] : vector<16x256xf32> to vector<16xf32>
    %5 = vector.shape_cast %4 : vector<16xf32> to vector<16x1xf32>
    %cst_7 = arith.constant 2.560000e+02 : f32
    %6 = vector.broadcast %cst_7 : f32 to vector<16x1xf32>
    %7 = arith.divf %5, %6 : vector<16x1xf32>
    %8 = vector.broadcast %7 : vector<16x1xf32> to vector<16x256xf32>
    %9 = arith.subf %0, %8 : vector<16x256xf32>
    %10 = arith.mulf %9, %9 : vector<16x256xf32>
    %cst_8 = arith.constant dense<0.000000e+00> : vector<16xf32>
    %11 = vector.multi_reduction <add>, %10, %cst_8 [1] : vector<16x256xf32> to vector<16xf32>
    %12 = vector.shape_cast %11 : vector<16xf32> to vector<16x1xf32>
    %cst_9 = arith.constant 2.560000e+02 : f32
    %13 = vector.broadcast %cst_9 : f32 to vector<16x1xf32>
    %14 = arith.divf %12, %13 : vector<16x1xf32>
    %15 = vector.broadcast %7 : vector<16x1xf32> to vector<16x256xf32>
    %16 = arith.subf %0, %15 : vector<16x256xf32>
    %cst_10 = arith.constant 9.99999974E-6 : f32
    %17 = vector.broadcast %cst_10 : f32 to vector<16x1xf32>
    %18 = arith.addf %14, %17 : vector<16x1xf32>
    %19 = math.rsqrt %18 : vector<16x1xf32>
    %20 = vector.broadcast %19 : vector<16x1xf32> to vector<16x256xf32>
    %21 = arith.mulf %16, %20 : vector<16x256xf32>
    %22 = vector.broadcast %2 : vector<1x256xf32> to vector<16x256xf32>
    %23 = arith.mulf %21, %22 : vector<16x256xf32>
    %24 = vector.broadcast %3 : vector<1x256xf32> to vector<16x256xf32>
    %25 = arith.addf %23, %24 : vector<16x256xf32>
    %26 = arith.truncf %25 : vector<16x256xf32> to vector<16x256xbf16>
    %c0_11 = arith.constant 0 : index
    %c0_12 = arith.constant 0 : index
    %27 = vector.load %arg5[%c0_11, %c0_12] : memref<256x256xbf16, #tpu.memory_space<vmem>>, vector<256x256xbf16>
    %cst_13 = arith.constant dense<0.000000e+00> : vector<16x256xf32>
    %28 = tpu.matmul %26, %27, %cst_13 {dimension_numbers = #tpu.dot_dimension_numbers<[1], [0], [0], [1], [0, 0, 1, 1], [], []>} : vector<16x256xbf16>, vector<256x256xbf16>, vector<16x256xf32> -> vector<16x256xf32>
    %c0_14 = arith.constant 0 : index
    %c0_15 = arith.constant 0 : index
    %29 = vector.load %arg6[%c0_14, %c0_15] : memref<1x256xf32, #tpu.memory_space<vmem>>, vector<1x256xf32>
    %30 = vector.broadcast %29 : vector<1x256xf32> to vector<16x256xf32>
    %31 = arith.addf %28, %30 : vector<16x256xf32>
    %32 = arith.truncf %31 : vector<16x256xf32> to vector<16x256xbf16>
    %c0_16 = arith.constant 0 : index
    %c0_17 = arith.constant 0 : index
    %33 = vector.load %arg7[%c0_16, %c0_17] : memref<256x512xbf16, #tpu.memory_space<vmem>>, vector<256x512xbf16>
    %cst_18 = arith.constant dense<0.000000e+00> : vector<32x512xf32>
    %34 = tpu.matmul %1, %33, %cst_18 {dimension_numbers = #tpu.dot_dimension_numbers<[1], [0], [0], [1], [0, 0, 1, 1], [], []>} : vector<32x256xbf16>, vector<256x512xbf16>, vector<32x512xf32> -> vector<32x512xf32>
    %c0_19 = arith.constant 0 : index
    %c0_20 = arith.constant 0 : index
    %35 = vector.load %arg8[%c0_19, %c0_20] : memref<1x512xf32, #tpu.memory_space<vmem>>, vector<1x512xf32>
    %36 = vector.broadcast %35 : vector<1x512xf32> to vector<32x512xf32>
    %37 = arith.addf %34, %36 : vector<32x512xf32>
    %38 = arith.truncf %37 : vector<32x512xf32> to vector<32x512xbf16>
    %39 = vector.extract_strided_slice %32 {offsets = [0, 0], sizes = [8, 128], strides = [1, 1]} : vector<16x256xbf16> to vector<8x128xbf16>
    %40 = vector.extract_strided_slice %38 {offsets = [0, 0], sizes = [16, 128], strides = [1, 1]} : vector<32x512xbf16> to vector<16x128xbf16>
    %41 = vector.extract_strided_slice %38 {offsets = [0, 256], sizes = [16, 128], strides = [1, 1]} : vector<32x512xbf16> to vector<16x128xbf16>
    %cst_21 = arith.constant dense<0.000000e+00> : vector<8x16xf32>
    %42 = tpu.matmul %39, %40, %cst_21 {dimension_numbers = #tpu.dot_dimension_numbers<[1], [1], [0], [0], [0, 0, 1, 0], [], []>} : vector<8x128xbf16>, vector<16x128xbf16>, vector<8x16xf32> -> vector<8x16xf32>
    %cst_22 = arith.constant 0.0883883461 : f32
    %43 = vector.broadcast %cst_22 : f32 to vector<8x16xf32>
    %44 = arith.mulf %42, %43 : vector<8x16xf32>
    %cst_23 = arith.constant dense<0xFF800000> : vector<8xf32>
    %45 = vector.multi_reduction <maximumf>, %44, %cst_23 [1] : vector<8x16xf32> to vector<8xf32>
    %46 = vector.shape_cast %45 : vector<8xf32> to vector<8x1xf32>
    %47 = vector.broadcast %46 : vector<8x1xf32> to vector<8x16xf32>
    %48 = arith.subf %44, %47 : vector<8x16xf32>
    %49 = math.exp %48 : vector<8x16xf32>
    %cst_24 = arith.constant dense<0.000000e+00> : vector<8xf32>
    %50 = vector.multi_reduction <add>, %49, %cst_24 [1] : vector<8x16xf32> to vector<8xf32>
    %51 = vector.shape_cast %50 : vector<8xf32> to vector<8x1xf32>
    %52 = tpu.reciprocal %51 {approx = true} : vector<8x1xf32> -> vector<8x1xf32>
    %53 = vector.broadcast %52 : vector<8x1xf32> to vector<8x16xf32>
    %54 = arith.mulf %49, %53 : vector<8x16xf32>
    %55 = arith.truncf %54 : vector<8x16xf32> to vector<8x16xbf16>
    %cst_25 = arith.constant dense<0.000000e+00> : vector<8x128xf32>
    %56 = tpu.matmul %55, %41, %cst_25 {dimension_numbers = #tpu.dot_dimension_numbers<[1], [0], [0], [1], [0, 0, 1, 1], [], []>} : vector<8x16xbf16>, vector<16x128xbf16>, vector<8x128xf32> -> vector<8x128xf32>
    %c0_26 = arith.constant 0 : index
    %c0_27 = arith.constant 0 : index
    %57 = vector.load %arg12[%c0_26, %c0_27] : memref<16x256xf32, #tpu.memory_space<vmem>>, vector<8x128xf32>
    tpu.vector_store %arg12[%c0_26, %c0_27], %56 {strides = array<i32>} : memref<16x256xf32, #tpu.memory_space<vmem>>, vector<8x128xf32>,
    %58 = vector.extract_strided_slice %32 {offsets = [0, 128], sizes = [8, 128], strides = [1, 1]} : vector<16x256xbf16> to vector<8x128xbf16>
    %59 = vector.extract_strided_slice %38 {offsets = [0, 128], sizes = [16, 128], strides = [1, 1]} : vector<32x512xbf16> to vector<16x128xbf16>
    %60 = vector.extract_strided_slice %38 {offsets = [0, 384], sizes = [16, 128], strides = [1, 1]} : vector<32x512xbf16> to vector<16x128xbf16>
    %cst_28 = arith.constant dense<0.000000e+00> : vector<8x16xf32>
    %61 = tpu.matmul %58, %59, %cst_28 {dimension_numbers = #tpu.dot_dimension_numbers<[1], [1], [0], [0], [0, 0, 1, 0], [], []>} : vector<8x128xbf16>, vector<16x128xbf16>, vector<8x16xf32> -> vector<8x16xf32>
    %cst_29 = arith.constant 0.0883883461 : f32
    %62 = vector.broadcast %cst_29 : f32 to vector<8x16xf32>
    %63 = arith.mulf %61, %62 : vector<8x16xf32>
    %cst_30 = arith.constant dense<0xFF800000> : vector<8xf32>
    %64 = vector.multi_reduction <maximumf>, %63, %cst_30 [1] : vector<8x16xf32> to vector<8xf32>
    %65 = vector.shape_cast %64 : vector<8xf32> to vector<8x1xf32>
    %66 = vector.broadcast %65 : vector<8x1xf32> to vector<8x16xf32>
    %67 = arith.subf %63, %66 : vector<8x16xf32>
    %68 = math.exp %67 : vector<8x16xf32>
    %cst_31 = arith.constant dense<0.000000e+00> : vector<8xf32>
    %69 = vector.multi_reduction <add>, %68, %cst_31 [1] : vector<8x16xf32> to vector<8xf32>
    %70 = vector.shape_cast %69 : vector<8xf32> to vector<8x1xf32>
    %71 = tpu.reciprocal %70 {approx = true} : vector<8x1xf32> -> vector<8x1xf32>
    %72 = vector.broadcast %71 : vector<8x1xf32> to vector<8x16xf32>
    %73 = arith.mulf %68, %72 : vector<8x16xf32>
    %74 = arith.truncf %73 : vector<8x16xf32> to vector<8x16xbf16>
    %cst_32 = arith.constant dense<0.000000e+00> : vector<8x128xf32>
    %75 = tpu.matmul %74, %60, %cst_32 {dimension_numbers = #tpu.dot_dimension_numbers<[1], [0], [0], [1], [0, 0, 1, 1], [], []>} : vector<8x16xbf16>, vector<16x128xbf16>, vector<8x128xf32> -> vector<8x128xf32>
    %c0_33 = arith.constant 0 : index
    %c128 = arith.constant 128 : index
    %76 = vector.load %arg12[%c0_33, %c128] : memref<16x256xf32, #tpu.memory_space<vmem>>, vector<8x128xf32>
    tpu.vector_store %arg12[%c0_33, %c128], %75 {strides = array<i32>} : memref<16x256xf32, #tpu.memory_space<vmem>>, vector<8x128xf32>,
    %77 = vector.extract_strided_slice %32 {offsets = [8, 0], sizes = [8, 128], strides = [1, 1]} : vector<16x256xbf16> to vector<8x128xbf16>
    %78 = vector.extract_strided_slice %38 {offsets = [16, 0], sizes = [16, 128], strides = [1, 1]} : vector<32x512xbf16> to vector<16x128xbf16>
    %79 = vector.extract_strided_slice %38 {offsets = [16, 256], sizes = [16, 128], strides = [1, 1]} : vector<32x512xbf16> to vector<16x128xbf16>
    %cst_34 = arith.constant dense<0.000000e+00> : vector<8x16xf32>
    %80 = tpu.matmul %77, %78, %cst_34 {dimension_numbers = #tpu.dot_dimension_numbers<[1], [1], [0], [0], [0, 0, 1, 0], [], []>} : vector<8x128xbf16>, vector<16x128xbf16>, vector<8x16xf32> -> vector<8x16xf32>
    %cst_35 = arith.constant 0.0883883461 : f32
    %81 = vector.broadcast %cst_35 : f32 to vector<8x16xf32>
    %82 = arith.mulf %80, %81 : vector<8x16xf32>
    %cst_36 = arith.constant dense<0xFF800000> : vector<8xf32>
    %83 = vector.multi_reduction <maximumf>, %82, %cst_36 [1] : vector<8x16xf32> to vector<8xf32>
    %84 = vector.shape_cast %83 : vector<8xf32> to vector<8x1xf32>
    %85 = vector.broadcast %84 : vector<8x1xf32> to vector<8x16xf32>
    %86 = arith.subf %82, %85 : vector<8x16xf32>
    %87 = math.exp %86 : vector<8x16xf32>
    %cst_37 = arith.constant dense<0.000000e+00> : vector<8xf32>
    %88 = vector.multi_reduction <add>, %87, %cst_37 [1] : vector<8x16xf32> to vector<8xf32>
    %89 = vector.shape_cast %88 : vector<8xf32> to vector<8x1xf32>
    %90 = tpu.reciprocal %89 {approx = true} : vector<8x1xf32> -> vector<8x1xf32>
    %91 = vector.broadcast %90 : vector<8x1xf32> to vector<8x16xf32>
    %92 = arith.mulf %87, %91 : vector<8x16xf32>
    %93 = arith.truncf %92 : vector<8x16xf32> to vector<8x16xbf16>
    %cst_38 = arith.constant dense<0.000000e+00> : vector<8x128xf32>
    %94 = tpu.matmul %93, %79, %cst_38 {dimension_numbers = #tpu.dot_dimension_numbers<[1], [0], [0], [1], [0, 0, 1, 1], [], []>} : vector<8x16xbf16>, vector<16x128xbf16>, vector<8x128xf32> -> vector<8x128xf32>
    %c8 = arith.constant 8 : index
    %c0_39 = arith.constant 0 : index
    %95 = vector.load %arg12[%c8, %c0_39] : memref<16x256xf32, #tpu.memory_space<vmem>>, vector<8x128xf32>
    tpu.vector_store %arg12[%c8, %c0_39], %94 {strides = array<i32>} : memref<16x256xf32, #tpu.memory_space<vmem>>, vector<8x128xf32>,
    %96 = vector.extract_strided_slice %32 {offsets = [8, 128], sizes = [8, 128], strides = [1, 1]} : vector<16x256xbf16> to vector<8x128xbf16>
    %97 = vector.extract_strided_slice %38 {offsets = [16, 128], sizes = [16, 128], strides = [1, 1]} : vector<32x512xbf16> to vector<16x128xbf16>
    %98 = vector.extract_strided_slice %38 {offsets = [16, 384], sizes = [16, 128], strides = [1, 1]} : vector<32x512xbf16> to vector<16x128xbf16>
    %cst_40 = arith.constant dense<0.000000e+00> : vector<8x16xf32>
    %99 = tpu.matmul %96, %97, %cst_40 {dimension_numbers = #tpu.dot_dimension_numbers<[1], [1], [0], [0], [0, 0, 1, 0], [], []>} : vector<8x128xbf16>, vector<16x128xbf16>, vector<8x16xf32> -> vector<8x16xf32>
    %cst_41 = arith.constant 0.0883883461 : f32
    %100 = vector.broadcast %cst_41 : f32 to vector<8x16xf32>
    %101 = arith.mulf %99, %100 : vector<8x16xf32>
    %cst_42 = arith.constant dense<0xFF800000> : vector<8xf32>
    %102 = vector.multi_reduction <maximumf>, %101, %cst_42 [1] : vector<8x16xf32> to vector<8xf32>
    %103 = vector.shape_cast %102 : vector<8xf32> to vector<8x1xf32>
    %104 = vector.broadcast %103 : vector<8x1xf32> to vector<8x16xf32>
    %105 = arith.subf %101, %104 : vector<8x16xf32>
    %106 = math.exp %105 : vector<8x16xf32>
    %cst_43 = arith.constant dense<0.000000e+00> : vector<8xf32>
    %107 = vector.multi_reduction <add>, %106, %cst_43 [1] : vector<8x16xf32> to vector<8xf32>
    %108 = vector.shape_cast %107 : vector<8xf32> to vector<8x1xf32>
    %109 = tpu.reciprocal %108 {approx = true} : vector<8x1xf32> -> vector<8x1xf32>
    %110 = vector.broadcast %109 : vector<8x1xf32> to vector<8x16xf32>
    %111 = arith.mulf %106, %110 : vector<8x16xf32>
    %112 = arith.truncf %111 : vector<8x16xf32> to vector<8x16xbf16>
    %cst_44 = arith.constant dense<0.000000e+00> : vector<8x128xf32>
    %113 = tpu.matmul %112, %98, %cst_44 {dimension_numbers = #tpu.dot_dimension_numbers<[1], [0], [0], [1], [0, 0, 1, 1], [], []>} : vector<8x16xbf16>, vector<16x128xbf16>, vector<8x128xf32> -> vector<8x128xf32>
    %c8_45 = arith.constant 8 : index
    %c128_46 = arith.constant 128 : index
    %114 = vector.load %arg12[%c8_45, %c128_46] : memref<16x256xf32, #tpu.memory_space<vmem>>, vector<8x128xf32>
    tpu.vector_store %arg12[%c8_45, %c128_46], %113 {strides = array<i32>} : memref<16x256xf32, #tpu.memory_space<vmem>>, vector<8x128xf32>,
    %c0_47 = arith.constant 0 : index
    %c0_48 = arith.constant 0 : index
    %115 = vector.load %arg12[%c0_47, %c0_48] : memref<16x256xf32, #tpu.memory_space<vmem>>, vector<16x256xf32>
    %116 = arith.truncf %115 : vector<16x256xf32> to vector<16x256xbf16>
    %c0_49 = arith.constant 0 : index
    %c0_50 = arith.constant 0 : index
    %117 = vector.load %arg9[%c0_49, %c0_50] : memref<256x256xbf16, #tpu.memory_space<vmem>>, vector<256x256xbf16>
    %cst_51 = arith.constant dense<0.000000e+00> : vector<16x256xf32>
    %118 = tpu.matmul %116, %117, %cst_51 {dimension_numbers = #tpu.dot_dimension_numbers<[1], [0], [0], [1], [0, 0, 1, 1], [], []>} : vector<16x256xbf16>, vector<256x256xbf16>, vector<16x256xf32> -> vector<16x256xf32>
    %c0_52 = arith.constant 0 : index
    %c0_53 = arith.constant 0 : index
    %119 = vector.load %arg10[%c0_52, %c0_53] : memref<1x256xf32, #tpu.memory_space<vmem>>, vector<1x256xf32>
    %120 = vector.broadcast %119 : vector<1x256xf32> to vector<16x256xf32>
    %121 = arith.addf %118, %120 : vector<16x256xf32>
    %122 = arith.addf %0, %121 : vector<16x256xf32>
    %c0_54 = arith.constant 0 : index
    %c0_55 = arith.constant 0 : index
    %123 = vector.load %arg11[%c0_54, %c0_55] : memref<16x256xf32, #tpu.memory_space<vmem>>, vector<16x256xf32>
    tpu.vector_store %arg11[%c0_54, %c0_55], %122 {strides = array<i32>} : memref<16x256xf32, #tpu.memory_space<vmem>>, vector<16x256xf32>,
    return
  }
  func.func @transform_0(%arg0: i32) -> (i32, i32) {
    %c0_i32 = arith.constant 0 : i32
    %c0_i32_0 = arith.constant 0 : i32
    return %arg0, %c0_i32 : i32, i32
  }
  func.func @transform_1(%arg0: i32) -> (i32, i32) {
    %c0_i32 = arith.constant 0 : i32
    %c0_i32_0 = arith.constant 0 : i32
    return %arg0, %c0_i32 : i32, i32
  }
  func.func @transform_2(%arg0: i32) -> (i32, i32) {
    %c0_i32 = arith.constant 0 : i32
    %c0_i32_0 = arith.constant 0 : i32
    %c0_i32_1 = arith.constant 0 : i32
    return %c0_i32, %c0_i32_0 : i32, i32
  }
  func.func @transform_3(%arg0: i32) -> (i32, i32) {
    %c0_i32 = arith.constant 0 : i32
    %c0_i32_0 = arith.constant 0 : i32
    %c0_i32_1 = arith.constant 0 : i32
    return %c0_i32, %c0_i32_0 : i32, i32
  }
  func.func @transform_4(%arg0: i32) -> (i32, i32) {
    %c0_i32 = arith.constant 0 : i32
    %c0_i32_0 = arith.constant 0 : i32
    %c0_i32_1 = arith.constant 0 : i32
    return %c0_i32, %c0_i32_0 : i32, i32
  }
  func.func @transform_5(%arg0: i32) -> (i32, i32) {
    %c0_i32 = arith.constant 0 : i32
    %c0_i32_0 = arith.constant 0 : i32
    %c0_i32_1 = arith.constant 0 : i32
    return %c0_i32, %c0_i32_0 : i32, i32
  }
  func.func @transform_6(%arg0: i32) -> (i32, i32) {
    %c0_i32 = arith.constant 0 : i32
    %c0_i32_0 = arith.constant 0 : i32
    %c0_i32_1 = arith.constant 0 : i32
    return %c0_i32, %c0_i32_0 : i32, i32
  }
  func.func @transform_7(%arg0: i32) -> (i32, i32) {
    %c0_i32 = arith.constant 0 : i32
    %c0_i32_0 = arith.constant 0 : i32
    %c0_i32_1 = arith.constant 0 : i32
    return %c0_i32, %c0_i32_0 : i32, i32
  }
  func.func @transform_8(%arg0: i32) -> (i32, i32) {
    %c0_i32 = arith.constant 0 : i32
    %c0_i32_0 = arith.constant 0 : i32
    %c0_i32_1 = arith.constant 0 : i32
    return %c0_i32, %c0_i32_0 : i32, i32
  }
  func.func @transform_9(%arg0: i32) -> (i32, i32) {
    %c0_i32 = arith.constant 0 : i32
    %c0_i32_0 = arith.constant 0 : i32
    %c0_i32_1 = arith.constant 0 : i32
    return %c0_i32, %c0_i32_0 : i32, i32
  }
  func.func @transform_10(%arg0: i32) -> (i32, i32) {
    %c0_i32 = arith.constant 0 : i32
    %c0_i32_0 = arith.constant 0 : i32
    return %arg0, %c0_i32 : i32, i32
  }
}

module attributes {stable_mosaic.version = 11 : i64} {
  func.func @_self_attn_kernel(%arg0: i32, %arg1: memref<16x256xf32, #tpu.memory_space<vmem>>, %arg2: memref<1x256xf32, #tpu.memory_space<vmem>>, %arg3: memref<1x256xf32, #tpu.memory_space<vmem>>, %arg4: memref<256x768xbf16, #tpu.memory_space<vmem>>, %arg5: memref<1x768xf32, #tpu.memory_space<vmem>>, %arg6: memref<256x256xbf16, #tpu.memory_space<vmem>>, %arg7: memref<1x256xf32, #tpu.memory_space<vmem>>, %arg8: memref<16x256xf32, #tpu.memory_space<vmem>>, %arg9: memref<16x256xf32, #tpu.memory_space<vmem>>) attributes {dimension_semantics = [#tpu.dimension_semantics<parallel>], iteration_bounds = array<i64: 2>, scalar_prefetch = 0 : i64, scratch_operands = 1 : i64, tpu.core_type = #tpu.core_type<tc>, window_params = [{transform_indices = @transform_0, window_bounds = array<i64: 16, 256>}, {pipeline_mode = #tpu.pipeline_mode<synchronous>, transform_indices = @transform_1, window_bounds = array<i64: 1, 256>}, {pipeline_mode = #tpu.pipeline_mode<synchronous>, transform_indices = @transform_2, window_bounds = array<i64: 1, 256>}, {pipeline_mode = #tpu.pipeline_mode<synchronous>, transform_indices = @transform_3, window_bounds = array<i64: 256, 768>}, {pipeline_mode = #tpu.pipeline_mode<synchronous>, transform_indices = @transform_4, window_bounds = array<i64: 1, 768>}, {pipeline_mode = #tpu.pipeline_mode<synchronous>, transform_indices = @transform_5, window_bounds = array<i64: 256, 256>}, {pipeline_mode = #tpu.pipeline_mode<synchronous>, transform_indices = @transform_6, window_bounds = array<i64: 1, 256>}, {transform_indices = @transform_7, window_bounds = array<i64: 16, 256>}]} {
    %c0 = arith.constant 0 : index
    %c0_0 = arith.constant 0 : index
    %0 = vector.load %arg1[%c0, %c0_0] : memref<16x256xf32, #tpu.memory_space<vmem>>, vector<16x256xf32>
    %c0_1 = arith.constant 0 : index
    %c0_2 = arith.constant 0 : index
    %1 = vector.load %arg2[%c0_1, %c0_2] : memref<1x256xf32, #tpu.memory_space<vmem>>, vector<1x256xf32>
    %c0_3 = arith.constant 0 : index
    %c0_4 = arith.constant 0 : index
    %2 = vector.load %arg3[%c0_3, %c0_4] : memref<1x256xf32, #tpu.memory_space<vmem>>, vector<1x256xf32>
    %cst = arith.constant dense<0.000000e+00> : vector<16xf32>
    %3 = vector.multi_reduction <add>, %0, %cst [1] : vector<16x256xf32> to vector<16xf32>
    %4 = vector.shape_cast %3 : vector<16xf32> to vector<16x1xf32>
    %cst_5 = arith.constant 2.560000e+02 : f32
    %5 = vector.broadcast %cst_5 : f32 to vector<16x1xf32>
    %6 = arith.divf %4, %5 : vector<16x1xf32>
    %7 = vector.broadcast %6 : vector<16x1xf32> to vector<16x256xf32>
    %8 = arith.subf %0, %7 : vector<16x256xf32>
    %9 = arith.mulf %8, %8 : vector<16x256xf32>
    %cst_6 = arith.constant dense<0.000000e+00> : vector<16xf32>
    %10 = vector.multi_reduction <add>, %9, %cst_6 [1] : vector<16x256xf32> to vector<16xf32>
    %11 = vector.shape_cast %10 : vector<16xf32> to vector<16x1xf32>
    %cst_7 = arith.constant 2.560000e+02 : f32
    %12 = vector.broadcast %cst_7 : f32 to vector<16x1xf32>
    %13 = arith.divf %11, %12 : vector<16x1xf32>
    %14 = vector.broadcast %6 : vector<16x1xf32> to vector<16x256xf32>
    %15 = arith.subf %0, %14 : vector<16x256xf32>
    %cst_8 = arith.constant 9.99999974E-6 : f32
    %16 = vector.broadcast %cst_8 : f32 to vector<16x1xf32>
    %17 = arith.addf %13, %16 : vector<16x1xf32>
    %18 = math.rsqrt %17 : vector<16x1xf32>
    %19 = vector.broadcast %18 : vector<16x1xf32> to vector<16x256xf32>
    %20 = arith.mulf %15, %19 : vector<16x256xf32>
    %21 = vector.broadcast %1 : vector<1x256xf32> to vector<16x256xf32>
    %22 = arith.mulf %20, %21 : vector<16x256xf32>
    %23 = vector.broadcast %2 : vector<1x256xf32> to vector<16x256xf32>
    %24 = arith.addf %22, %23 : vector<16x256xf32>
    %25 = arith.truncf %24 : vector<16x256xf32> to vector<16x256xbf16>
    %c0_9 = arith.constant 0 : index
    %c0_10 = arith.constant 0 : index
    %26 = vector.load %arg4[%c0_9, %c0_10] : memref<256x768xbf16, #tpu.memory_space<vmem>>, vector<256x768xbf16>
    %cst_11 = arith.constant dense<0.000000e+00> : vector<16x768xf32>
    %27 = tpu.matmul %25, %26, %cst_11 {dimension_numbers = #tpu.dot_dimension_numbers<[1], [0], [0], [1], [0, 0, 1, 1], [], []>} : vector<16x256xbf16>, vector<256x768xbf16>, vector<16x768xf32> -> vector<16x768xf32>
    %c0_12 = arith.constant 0 : index
    %c0_13 = arith.constant 0 : index
    %28 = vector.load %arg5[%c0_12, %c0_13] : memref<1x768xf32, #tpu.memory_space<vmem>>, vector<1x768xf32>
    %29 = vector.broadcast %28 : vector<1x768xf32> to vector<16x768xf32>
    %30 = arith.addf %27, %29 : vector<16x768xf32>
    %31 = arith.truncf %30 : vector<16x768xf32> to vector<16x768xbf16>
    %32 = tpu.iota {dimensions = array<i32: 0>} : vector<8x8xi32>
    %33 = tpu.iota {dimensions = array<i32: 1>} : vector<8x8xi32>
    %34 = arith.cmpi sgt, %33, %32 : vector<8x8xi32>
    %cst_14 = arith.constant -1.000000e+30 : f32
    %cst_15 = arith.constant 0.000000e+00 : f32
    %35 = vector.broadcast %cst_14 : f32 to vector<8x8xf32>
    %36 = vector.broadcast %cst_15 : f32 to vector<8x8xf32>
    %37 = arith.select %34, %35, %36 : vector<8x8xi1>, vector<8x8xf32>
    %38 = vector.extract_strided_slice %31 {offsets = [0, 0], sizes = [8, 128], strides = [1, 1]} : vector<16x768xbf16> to vector<8x128xbf16>
    %39 = vector.extract_strided_slice %31 {offsets = [0, 256], sizes = [8, 128], strides = [1, 1]} : vector<16x768xbf16> to vector<8x128xbf16>
    %40 = vector.extract_strided_slice %31 {offsets = [0, 512], sizes = [8, 128], strides = [1, 1]} : vector<16x768xbf16> to vector<8x128xbf16>
    %cst_16 = arith.constant dense<0.000000e+00> : vector<8x8xf32>
    %41 = tpu.matmul %38, %39, %cst_16 {dimension_numbers = #tpu.dot_dimension_numbers<[1], [1], [0], [0], [0, 0, 1, 0], [], []>} : vector<8x128xbf16>, vector<8x128xbf16>, vector<8x8xf32> -> vector<8x8xf32>
    %cst_17 = arith.constant 0.0883883461 : f32
    %42 = vector.broadcast %cst_17 : f32 to vector<8x8xf32>
    %43 = arith.mulf %41, %42 : vector<8x8xf32>
    %44 = arith.addf %43, %37 : vector<8x8xf32>
    %cst_18 = arith.constant dense<0xFF800000> : vector<8xf32>
    %45 = vector.multi_reduction <maximumf>, %44, %cst_18 [1] : vector<8x8xf32> to vector<8xf32>
    %46 = vector.shape_cast %45 : vector<8xf32> to vector<8x1xf32>
    %47 = vector.broadcast %46 : vector<8x1xf32> to vector<8x8xf32>
    %48 = arith.subf %44, %47 : vector<8x8xf32>
    %49 = math.exp %48 : vector<8x8xf32>
    %cst_19 = arith.constant dense<0.000000e+00> : vector<8xf32>
    %50 = vector.multi_reduction <add>, %49, %cst_19 [1] : vector<8x8xf32> to vector<8xf32>
    %51 = vector.shape_cast %50 : vector<8xf32> to vector<8x1xf32>
    %52 = tpu.reciprocal %51 {approx = true} : vector<8x1xf32> -> vector<8x1xf32>
    %53 = vector.broadcast %52 : vector<8x1xf32> to vector<8x8xf32>
    %54 = arith.mulf %49, %53 : vector<8x8xf32>
    %55 = arith.truncf %54 : vector<8x8xf32> to vector<8x8xbf16>
    %cst_20 = arith.constant dense<0.000000e+00> : vector<8x128xf32>
    %56 = tpu.matmul %55, %40, %cst_20 {dimension_numbers = #tpu.dot_dimension_numbers<[1], [0], [0], [1], [0, 0, 1, 1], [], []>} : vector<8x8xbf16>, vector<8x128xbf16>, vector<8x128xf32> -> vector<8x128xf32>
    %c0_21 = arith.constant 0 : index
    %c0_22 = arith.constant 0 : index
    %57 = vector.load %arg9[%c0_21, %c0_22] : memref<16x256xf32, #tpu.memory_space<vmem>>, vector<8x128xf32>
    tpu.vector_store %arg9[%c0_21, %c0_22], %56 {strides = array<i32>} : memref<16x256xf32, #tpu.memory_space<vmem>>, vector<8x128xf32>,
    %58 = vector.extract_strided_slice %31 {offsets = [0, 128], sizes = [8, 128], strides = [1, 1]} : vector<16x768xbf16> to vector<8x128xbf16>
    %59 = vector.extract_strided_slice %31 {offsets = [0, 384], sizes = [8, 128], strides = [1, 1]} : vector<16x768xbf16> to vector<8x128xbf16>
    %60 = vector.extract_strided_slice %31 {offsets = [0, 640], sizes = [8, 128], strides = [1, 1]} : vector<16x768xbf16> to vector<8x128xbf16>
    %cst_23 = arith.constant dense<0.000000e+00> : vector<8x8xf32>
    %61 = tpu.matmul %58, %59, %cst_23 {dimension_numbers = #tpu.dot_dimension_numbers<[1], [1], [0], [0], [0, 0, 1, 0], [], []>} : vector<8x128xbf16>, vector<8x128xbf16>, vector<8x8xf32> -> vector<8x8xf32>
    %cst_24 = arith.constant 0.0883883461 : f32
    %62 = vector.broadcast %cst_24 : f32 to vector<8x8xf32>
    %63 = arith.mulf %61, %62 : vector<8x8xf32>
    %64 = arith.addf %63, %37 : vector<8x8xf32>
    %cst_25 = arith.constant dense<0xFF800000> : vector<8xf32>
    %65 = vector.multi_reduction <maximumf>, %64, %cst_25 [1] : vector<8x8xf32> to vector<8xf32>
    %66 = vector.shape_cast %65 : vector<8xf32> to vector<8x1xf32>
    %67 = vector.broadcast %66 : vector<8x1xf32> to vector<8x8xf32>
    %68 = arith.subf %64, %67 : vector<8x8xf32>
    %69 = math.exp %68 : vector<8x8xf32>
    %cst_26 = arith.constant dense<0.000000e+00> : vector<8xf32>
    %70 = vector.multi_reduction <add>, %69, %cst_26 [1] : vector<8x8xf32> to vector<8xf32>
    %71 = vector.shape_cast %70 : vector<8xf32> to vector<8x1xf32>
    %72 = tpu.reciprocal %71 {approx = true} : vector<8x1xf32> -> vector<8x1xf32>
    %73 = vector.broadcast %72 : vector<8x1xf32> to vector<8x8xf32>
    %74 = arith.mulf %69, %73 : vector<8x8xf32>
    %75 = arith.truncf %74 : vector<8x8xf32> to vector<8x8xbf16>
    %cst_27 = arith.constant dense<0.000000e+00> : vector<8x128xf32>
    %76 = tpu.matmul %75, %60, %cst_27 {dimension_numbers = #tpu.dot_dimension_numbers<[1], [0], [0], [1], [0, 0, 1, 1], [], []>} : vector<8x8xbf16>, vector<8x128xbf16>, vector<8x128xf32> -> vector<8x128xf32>
    %c0_28 = arith.constant 0 : index
    %c128 = arith.constant 128 : index
    %77 = vector.load %arg9[%c0_28, %c128] : memref<16x256xf32, #tpu.memory_space<vmem>>, vector<8x128xf32>
    tpu.vector_store %arg9[%c0_28, %c128], %76 {strides = array<i32>} : memref<16x256xf32, #tpu.memory_space<vmem>>, vector<8x128xf32>,
    %78 = vector.extract_strided_slice %31 {offsets = [8, 0], sizes = [8, 128], strides = [1, 1]} : vector<16x768xbf16> to vector<8x128xbf16>
    %79 = vector.extract_strided_slice %31 {offsets = [8, 256], sizes = [8, 128], strides = [1, 1]} : vector<16x768xbf16> to vector<8x128xbf16>
    %80 = vector.extract_strided_slice %31 {offsets = [8, 512], sizes = [8, 128], strides = [1, 1]} : vector<16x768xbf16> to vector<8x128xbf16>
    %cst_29 = arith.constant dense<0.000000e+00> : vector<8x8xf32>
    %81 = tpu.matmul %78, %79, %cst_29 {dimension_numbers = #tpu.dot_dimension_numbers<[1], [1], [0], [0], [0, 0, 1, 0], [], []>} : vector<8x128xbf16>, vector<8x128xbf16>, vector<8x8xf32> -> vector<8x8xf32>
    %cst_30 = arith.constant 0.0883883461 : f32
    %82 = vector.broadcast %cst_30 : f32 to vector<8x8xf32>
    %83 = arith.mulf %81, %82 : vector<8x8xf32>
    %84 = arith.addf %83, %37 : vector<8x8xf32>
    %cst_31 = arith.constant dense<0xFF800000> : vector<8xf32>
    %85 = vector.multi_reduction <maximumf>, %84, %cst_31 [1] : vector<8x8xf32> to vector<8xf32>
    %86 = vector.shape_cast %85 : vector<8xf32> to vector<8x1xf32>
    %87 = vector.broadcast %86 : vector<8x1xf32> to vector<8x8xf32>
    %88 = arith.subf %84, %87 : vector<8x8xf32>
    %89 = math.exp %88 : vector<8x8xf32>
    %cst_32 = arith.constant dense<0.000000e+00> : vector<8xf32>
    %90 = vector.multi_reduction <add>, %89, %cst_32 [1] : vector<8x8xf32> to vector<8xf32>
    %91 = vector.shape_cast %90 : vector<8xf32> to vector<8x1xf32>
    %92 = tpu.reciprocal %91 {approx = true} : vector<8x1xf32> -> vector<8x1xf32>
    %93 = vector.broadcast %92 : vector<8x1xf32> to vector<8x8xf32>
    %94 = arith.mulf %89, %93 : vector<8x8xf32>
    %95 = arith.truncf %94 : vector<8x8xf32> to vector<8x8xbf16>
    %cst_33 = arith.constant dense<0.000000e+00> : vector<8x128xf32>
    %96 = tpu.matmul %95, %80, %cst_33 {dimension_numbers = #tpu.dot_dimension_numbers<[1], [0], [0], [1], [0, 0, 1, 1], [], []>} : vector<8x8xbf16>, vector<8x128xbf16>, vector<8x128xf32> -> vector<8x128xf32>
    %c8 = arith.constant 8 : index
    %c0_34 = arith.constant 0 : index
    %97 = vector.load %arg9[%c8, %c0_34] : memref<16x256xf32, #tpu.memory_space<vmem>>, vector<8x128xf32>
    tpu.vector_store %arg9[%c8, %c0_34], %96 {strides = array<i32>} : memref<16x256xf32, #tpu.memory_space<vmem>>, vector<8x128xf32>,
    %98 = vector.extract_strided_slice %31 {offsets = [8, 128], sizes = [8, 128], strides = [1, 1]} : vector<16x768xbf16> to vector<8x128xbf16>
    %99 = vector.extract_strided_slice %31 {offsets = [8, 384], sizes = [8, 128], strides = [1, 1]} : vector<16x768xbf16> to vector<8x128xbf16>
    %100 = vector.extract_strided_slice %31 {offsets = [8, 640], sizes = [8, 128], strides = [1, 1]} : vector<16x768xbf16> to vector<8x128xbf16>
    %cst_35 = arith.constant dense<0.000000e+00> : vector<8x8xf32>
    %101 = tpu.matmul %98, %99, %cst_35 {dimension_numbers = #tpu.dot_dimension_numbers<[1], [1], [0], [0], [0, 0, 1, 0], [], []>} : vector<8x128xbf16>, vector<8x128xbf16>, vector<8x8xf32> -> vector<8x8xf32>
    %cst_36 = arith.constant 0.0883883461 : f32
    %102 = vector.broadcast %cst_36 : f32 to vector<8x8xf32>
    %103 = arith.mulf %101, %102 : vector<8x8xf32>
    %104 = arith.addf %103, %37 : vector<8x8xf32>
    %cst_37 = arith.constant dense<0xFF800000> : vector<8xf32>
    %105 = vector.multi_reduction <maximumf>, %104, %cst_37 [1] : vector<8x8xf32> to vector<8xf32>
    %106 = vector.shape_cast %105 : vector<8xf32> to vector<8x1xf32>
    %107 = vector.broadcast %106 : vector<8x1xf32> to vector<8x8xf32>
    %108 = arith.subf %104, %107 : vector<8x8xf32>
    %109 = math.exp %108 : vector<8x8xf32>
    %cst_38 = arith.constant dense<0.000000e+00> : vector<8xf32>
    %110 = vector.multi_reduction <add>, %109, %cst_38 [1] : vector<8x8xf32> to vector<8xf32>
    %111 = vector.shape_cast %110 : vector<8xf32> to vector<8x1xf32>
    %112 = tpu.reciprocal %111 {approx = true} : vector<8x1xf32> -> vector<8x1xf32>
    %113 = vector.broadcast %112 : vector<8x1xf32> to vector<8x8xf32>
    %114 = arith.mulf %109, %113 : vector<8x8xf32>
    %115 = arith.truncf %114 : vector<8x8xf32> to vector<8x8xbf16>
    %cst_39 = arith.constant dense<0.000000e+00> : vector<8x128xf32>
    %116 = tpu.matmul %115, %100, %cst_39 {dimension_numbers = #tpu.dot_dimension_numbers<[1], [0], [0], [1], [0, 0, 1, 1], [], []>} : vector<8x8xbf16>, vector<8x128xbf16>, vector<8x128xf32> -> vector<8x128xf32>
    %c8_40 = arith.constant 8 : index
    %c128_41 = arith.constant 128 : index
    %117 = vector.load %arg9[%c8_40, %c128_41] : memref<16x256xf32, #tpu.memory_space<vmem>>, vector<8x128xf32>
    tpu.vector_store %arg9[%c8_40, %c128_41], %116 {strides = array<i32>} : memref<16x256xf32, #tpu.memory_space<vmem>>, vector<8x128xf32>,
    %c0_42 = arith.constant 0 : index
    %c0_43 = arith.constant 0 : index
    %118 = vector.load %arg9[%c0_42, %c0_43] : memref<16x256xf32, #tpu.memory_space<vmem>>, vector<16x256xf32>
    %119 = arith.truncf %118 : vector<16x256xf32> to vector<16x256xbf16>
    %c0_44 = arith.constant 0 : index
    %c0_45 = arith.constant 0 : index
    %120 = vector.load %arg6[%c0_44, %c0_45] : memref<256x256xbf16, #tpu.memory_space<vmem>>, vector<256x256xbf16>
    %cst_46 = arith.constant dense<0.000000e+00> : vector<16x256xf32>
    %121 = tpu.matmul %119, %120, %cst_46 {dimension_numbers = #tpu.dot_dimension_numbers<[1], [0], [0], [1], [0, 0, 1, 1], [], []>} : vector<16x256xbf16>, vector<256x256xbf16>, vector<16x256xf32> -> vector<16x256xf32>
    %c0_47 = arith.constant 0 : index
    %c0_48 = arith.constant 0 : index
    %122 = vector.load %arg7[%c0_47, %c0_48] : memref<1x256xf32, #tpu.memory_space<vmem>>, vector<1x256xf32>
    %123 = vector.broadcast %122 : vector<1x256xf32> to vector<16x256xf32>
    %124 = arith.addf %121, %123 : vector<16x256xf32>
    %125 = arith.addf %0, %124 : vector<16x256xf32>
    %c0_49 = arith.constant 0 : index
    %c0_50 = arith.constant 0 : index
    %126 = vector.load %arg8[%c0_49, %c0_50] : memref<16x256xf32, #tpu.memory_space<vmem>>, vector<16x256xf32>
    tpu.vector_store %arg8[%c0_49, %c0_50], %125 {strides = array<i32>} : memref<16x256xf32, #tpu.memory_space<vmem>>, vector<16x256xf32>,
    return
  }
  func.func @transform_0(%arg0: i32) -> (i32, i32) {
    %c0_i32 = arith.constant 0 : i32
    %c0_i32_0 = arith.constant 0 : i32
    return %arg0, %c0_i32 : i32, i32
  }
  func.func @transform_1(%arg0: i32) -> (i32, i32) {
    %c0_i32 = arith.constant 0 : i32
    %c0_i32_0 = arith.constant 0 : i32
    %c0_i32_1 = arith.constant 0 : i32
    return %c0_i32, %c0_i32_0 : i32, i32
  }
  func.func @transform_2(%arg0: i32) -> (i32, i32) {
    %c0_i32 = arith.constant 0 : i32
    %c0_i32_0 = arith.constant 0 : i32
    %c0_i32_1 = arith.constant 0 : i32
    return %c0_i32, %c0_i32_0 : i32, i32
  }
  func.func @transform_3(%arg0: i32) -> (i32, i32) {
    %c0_i32 = arith.constant 0 : i32
    %c0_i32_0 = arith.constant 0 : i32
    %c0_i32_1 = arith.constant 0 : i32
    return %c0_i32, %c0_i32_0 : i32, i32
  }
  func.func @transform_4(%arg0: i32) -> (i32, i32) {
    %c0_i32 = arith.constant 0 : i32
    %c0_i32_0 = arith.constant 0 : i32
    %c0_i32_1 = arith.constant 0 : i32
    return %c0_i32, %c0_i32_0 : i32, i32
  }
  func.func @transform_5(%arg0: i32) -> (i32, i32) {
    %c0_i32 = arith.constant 0 : i32
    %c0_i32_0 = arith.constant 0 : i32
    %c0_i32_1 = arith.constant 0 : i32
    return %c0_i32, %c0_i32_0 : i32, i32
  }
  func.func @transform_6(%arg0: i32) -> (i32, i32) {
    %c0_i32 = arith.constant 0 : i32
    %c0_i32_0 = arith.constant 0 : i32
    %c0_i32_1 = arith.constant 0 : i32
    return %c0_i32, %c0_i32_0 : i32, i32
  }
  func.func @transform_7(%arg0: i32) -> (i32, i32) {
    %c0_i32 = arith.constant 0 : i32
    %c0_i32_0 = arith.constant 0 : i32
    return %arg0, %c0_i32 : i32, i32
  }
}

module attributes {stable_mosaic.version = 11 : i64} {
  func.func @_logits_kernel(%arg0: i32, %arg1: i32, %arg2: memref<16x256xf32, #tpu.memory_space<vmem>>, %arg3: memref<128x256xbf16, #tpu.memory_space<vmem>>, %arg4: memref<1x128xf32, #tpu.memory_space<vmem>>, %arg5: memref<16x128xf32, #tpu.memory_space<vmem>>) attributes {dimension_semantics = [#tpu.dimension_semantics<parallel>, #tpu.dimension_semantics<parallel>], iteration_bounds = array<i64: 2, 1>, scalar_prefetch = 0 : i64, scratch_operands = 0 : i64, tpu.core_type = #tpu.core_type<tc>, window_params = [{transform_indices = @transform_0, window_bounds = array<i64: 16, 256>}, {transform_indices = @transform_1, window_bounds = array<i64: 128, 256>}, {transform_indices = @transform_2, window_bounds = array<i64: 1, 128>}, {transform_indices = @transform_3, window_bounds = array<i64: 16, 128>}]} {
    %c0 = arith.constant 0 : index
    %c0_0 = arith.constant 0 : index
    %0 = vector.load %arg2[%c0, %c0_0] : memref<16x256xf32, #tpu.memory_space<vmem>>, vector<16x256xf32>
    %1 = arith.truncf %0 : vector<16x256xf32> to vector<16x256xbf16>
    %c0_1 = arith.constant 0 : index
    %c0_2 = arith.constant 0 : index
    %2 = vector.load %arg3[%c0_1, %c0_2] : memref<128x256xbf16, #tpu.memory_space<vmem>>, vector<128x256xbf16>
    %cst = arith.constant dense<0.000000e+00> : vector<16x128xf32>
    %3 = tpu.matmul %1, %2, %cst {dimension_numbers = #tpu.dot_dimension_numbers<[1], [1], [0], [0], [0, 0, 1, 0], [], []>} : vector<16x256xbf16>, vector<128x256xbf16>, vector<16x128xf32> -> vector<16x128xf32>
    %c0_3 = arith.constant 0 : index
    %c0_4 = arith.constant 0 : index
    %4 = vector.load %arg4[%c0_3, %c0_4] : memref<1x128xf32, #tpu.memory_space<vmem>>, vector<1x128xf32>
    %5 = vector.broadcast %4 : vector<1x128xf32> to vector<16x128xf32>
    %6 = arith.addf %3, %5 : vector<16x128xf32>
    %c0_5 = arith.constant 0 : index
    %c0_6 = arith.constant 0 : index
    %7 = vector.load %arg5[%c0_5, %c0_6] : memref<16x128xf32, #tpu.memory_space<vmem>>, vector<16x128xf32>
    tpu.vector_store %arg5[%c0_5, %c0_6], %6 {strides = array<i32>} : memref<16x128xf32, #tpu.memory_space<vmem>>, vector<16x128xf32>,
    return
  }
  func.func @transform_0(%arg0: i32, %arg1: i32) -> (i32, i32) {
    %c0_i32 = arith.constant 0 : i32
    %c0_i32_0 = arith.constant 0 : i32
    return %arg0, %c0_i32 : i32, i32
  }
  func.func @transform_1(%arg0: i32, %arg1: i32) -> (i32, i32) {
    %c0_i32 = arith.constant 0 : i32
    %c0_i32_0 = arith.constant 0 : i32
    return %arg1, %c0_i32 : i32, i32
  }
  func.func @transform_2(%arg0: i32, %arg1: i32) -> (i32, i32) {
    %c0_i32 = arith.constant 0 : i32
    %c0_i32_0 = arith.constant 0 : i32
    return %c0_i32, %arg1 : i32, i32
  }
  func.func @transform_3(%arg0: i32, %arg1: i32) -> (i32, i32) {
    %c0_i32 = arith.constant 0 : i32
    return %arg0, %arg1 : i32, i32
  }
}

</mosaic_0001>

<llo_original>
// kernel: _lambda_.8
$region0: #{_lambda_.8}
  #allocation0 [shape = 'u32[]', space=smem, size = 0x4, offset = 0x4, fixed_abs, tag = 'smem constant byte address 0x4 - core index']
  #allocation1 [shape = 'u32[144,128]{1,0:T(1,128)}', space=vmem, size = 0x12000, scoped, tag = 'internal scratch']
  %s0 = inlined_call_operand.vmem [shape: bf16[32,256], index: 0, kind: input, shape index: {}]
  %s1 = inlined_call_operand.vmem [shape: f32[16,256], index: 1, kind: input, shape index: {}]
  %s2 = inlined_call_operand.vmem [shape: f32[1,256], index: 2, kind: input, shape index: {}]
  %s3 = inlined_call_operand.vmem [shape: f32[1,256], index: 3, kind: input, shape index: {}]
  %s4 = inlined_call_operand.vmem [shape: f32[32,256], index: 4, kind: output, shape index: {}]
  %s5 = sld [smem:[#allocation0]]
  $region49: #{_lambda_.8} parent=0
    _
  %s7 = ssub.s32 1, %s5
  %s8 = scalar_select 0, %s7, %s5
  loop: start=0, step=1, limit=4
  $region2: #{_lambda_.8} parent=0 // loop_pre_header
    _
  $region3: #{_lambda_.8} parent=0 // loop_header
    %s10 = sphi 0, %s14
    %p11 = scmp.ge.s32.totalorder %s10, 4
    %s20 = sphi 0, %s22
    %s23 = sphi 0, %s20
    %s24 = sphi 0, %s23
    %s40 = sphi 0, %s24
    %s44 = sphi 0, %s44
    %s46 = sphi 0, %s44
    %s47 = sphi 0, %s46
    %s61 = sphi 0, %s47
    %s65 = sphi 0, %s65
    %s67 = sphi 0, %s65
    %s68 = sphi 0, %s67
    %s82 = sphi 0, %s68
    %s86 = sphi 0, %s86
    %s88 = sphi 0, %s86
    %s89 = sphi 0, %s88
    %s103 = sphi 0, %s89
    %s109 = sphi 0, %s111
    %s112 = sphi 0, %s109
    %s113 = sphi 0, %s112
    %s129 = sphi 0, %s113
  $region4: #{_lambda_.8} parent=0 // loop_header_branch
    %13 = sbr.rel (%p11) target = $region8
  $region5: #{_lambda_.8} parent=0 // loop_body
    %s15 = ssub.s32 %s10, 1
    %s16 = ssub.s32 %s10, 2
    %s17 = sadd.s32 %s10, 1
    %s18 = ssub.s32 %s10, %s17
    %p19 = scmp.eq.s32.totalorder %s18, 0
    %s21 = sadd.s32 %s20, 1
    %s22 = scalar_select %p19, %s20, %s21
    %p25 = pneg %p19
    %p26 = scmp.eq.s32.totalorder %s10, 1
    %p27 = por %p25, %p26
    %p28 = scmp.ne.s32.totalorder %s20, %s23
    %p29 = scmp.eq.s32.totalorder %s10, 0
    %p30 = por %p28, %p29
    %p31 = scmp.ne.s32.totalorder %s20, %s23
    %p32 = scmp.eq.s32.totalorder %s15, 1
    %p33 = por %p31, %p32
    %p34 = scmp.ne.s32.totalorder %s23, %s24
    %p35 = scmp.eq.s32.totalorder %s15, 0
    %p36 = por %p34, %p35
    %p37 = scmp.ne.s32.totalorder %s23, %s24
    %p38 = scmp.eq.s32.totalorder %s16, 1
    %p39 = por %p37, %p38
    %p41 = scmp.ne.s32.totalorder %s24, %s40
    %p42 = scmp.eq.s32.totalorder %s16, 0
    %p43 = por %p41, %p42
    %s45 = sadd.s32 %s44, 1
    %p48 = scmp.eq.s32.totalorder %s10, 1
    %p49 = scmp.ne.s32.totalorder %s44, %s46
    %p50 = scmp.eq.s32.totalorder %s10, 0
    %p51 = por %p49, %p50
    %p52 = scmp.ne.s32.totalorder %s44, %s46
    %p53 = scmp.eq.s32.totalorder %s15, 1
    %p54 = por %p52, %p53
    %p55 = scmp.ne.s32.totalorder %s46, %s47
    %p56 = scmp.eq.s32.totalorder %s15, 0
    %p57 = por %p55, %p56
    %p58 = scmp.ne.s32.totalorder %s46, %s47
    %p59 = scmp.eq.s32.totalorder %s16, 1
    %p60 = por %p58, %p59
    %p62 = scmp.ne.s32.totalorder %s47, %s61
    %p63 = scmp.eq.s32.totalorder %s16, 0
    %p64 = por %p62, %p63
    %s66 = sadd.s32 %s65, 1
    %p69 = scmp.eq.s32.totalorder %s10, 1
    %p70 = scmp.ne.s32.totalorder %s65, %s67
    %p71 = scmp.eq.s32.totalorder %s10, 0
    %p72 = por %p70, %p71
    %p73 = scmp.ne.s32.totalorder %s65, %s67
    %p74 = scmp.eq.s32.totalorder %s15, 1
    %p75 = por %p73, %p74
    %p76 = scmp.ne.s32.totalorder %s67, %s68
    %p77 = scmp.eq.s32.totalorder %s15, 0
    %p78 = por %p76, %p77
    %p79 = scmp.ne.s32.totalorder %s67, %s68
    %p80 = scmp.eq.s32.totalorder %s16, 1
    %p81 = por %p79, %p80
    %p83 = scmp.ne.s32.totalorder %s68, %s82
    %p84 = scmp.eq.s32.totalorder %s16, 0
    %p85 = por %p83, %p84
    %s87 = sadd.s32 %s86, 1
    %p90 = scmp.eq.s32.totalorder %s10, 1
    %p91 = scmp.ne.s32.totalorder %s86, %s88
    %p92 = scmp.eq.s32.totalorder %s10, 0
    %p93 = por %p91, %p92
    %p94 = scmp.ne.s32.totalorder %s86, %s88
    %p95 = scmp.eq.s32.totalorder %s15, 1
    %p96 = por %p94, %p95
    %p97 = scmp.ne.s32.totalorder %s88, %s89
    %p98 = scmp.eq.s32.totalorder %s15, 0
    %p99 = por %p97, %p98
    %p100 = scmp.ne.s32.totalorder %s88, %s89
    %p101 = scmp.eq.s32.totalorder %s16, 1
    %p102 = por %p100, %p101
    %p104 = scmp.ne.s32.totalorder %s89, %s103
    %p105 = scmp.eq.s32.totalorder %s16, 0
    %p106 = por %p104, %p105
    %s107 = ssub.s32 %s10, %s17
    %p108 = scmp.eq.s32.totalorder %s107, 0
    %s110 = sadd.s32 %s109, 1
    %s111 = scalar_select %p108, %s109, %s110
    %p114 = pneg %p108
    %p115 = scmp.eq.s32.totalorder %s10, 1
    %p116 = por %p114, %p115
    %p117 = scmp.ne.s32.totalorder %s109, %s112
    %p118 = scmp.eq.s32.totalorder %s10, 0
    %p119 = por %p117, %p118
    %p120 = scmp.ne.s32.totalorder %s109, %s112
    %p121 = scmp.eq.s32.totalorder %s15, 1
    %p122 = por %p120, %p121
    %p123 = scmp.ne.s32.totalorder %s112, %s113
    %p124 = scmp.eq.s32.totalorder %s15, 0
    %p125 = por %p123, %p124
    %p126 = scmp.ne.s32.totalorder %s112, %s113
    %p127 = scmp.eq.s32.totalorder %s16, 1
    %p128 = por %p126, %p127
    %p130 = scmp.ne.s32.totalorder %s113, %s129
    %p131 = scmp.eq.s32.totalorder %s16, 0
    %p132 = por %p130, %p131
    %p133 = scmp.le.s32.totalorder 1, %s10
    %p134 = scmp.lt.s32.totalorder %s10, 3
    %p135 = pnand %p133, %p134
    %p136 = pneg %p135
    // Predicated region
    $region9: #{_lambda_.8} parent=5 // pred_check
      _
    $region10: #{_lambda_.8} parent=5 // pred_check_branch
      %138 = sbr.rel (%p135) target = $region12
    $region11: #{_lambda_.8} parent=5 // pred_region
      %s139 = ssub.s32 %s10, 1
      // Predicated region
      $region13: #{_lambda_.8} parent=11 // pred_check
        %p140 = pneg %p57
      $region14: #{_lambda_.8} parent=11 // pred_check_branch
        %142 = sbr.rel (%p140) target = $region16
      $region15: #{_lambda_.8} parent=11 // pred_region
        _
      $region16: #{_lambda_.8} parent=11 // pred_fallthru
        _
      // Predicated region
      $region17: #{_lambda_.8} parent=11 // pred_check
        %p143 = pneg %p78
      $region18: #{_lambda_.8} parent=11 // pred_check_branch
        %145 = sbr.rel (%p143) target = $region20
      $region19: #{_lambda_.8} parent=11 // pred_region
        _
      $region20: #{_lambda_.8} parent=11 // pred_fallthru
        _
      // Predicated region
      $region21: #{_lambda_.8} parent=11 // pred_check
        %p146 = pneg %p99
      $region22: #{_lambda_.8} parent=11 // pred_check_branch
        %148 = sbr.rel (%p146) target = $region24
      $region23: #{_lambda_.8} parent=11 // pred_region
        _
      $region24: #{_lambda_.8} parent=11 // pred_fallthru
        _
    $region12: #{_lambda_.8} parent=5 // pred_fallthru
      _
    %p149 = scmp.lt.s32.totalorder %s10, 2
    // Predicated region
    $region25: #{_lambda_.8} parent=5 // pred_check
      %p150 = pneg %p149
    $region26: #{_lambda_.8} parent=5 // pred_check_branch
      %152 = sbr.rel (%p150) target = $region28
    $region27: #{_lambda_.8} parent=5 // pred_region
      // Predicated region
      $region29: #{_lambda_.8} parent=27 // pred_check
        %p153 = pneg %p30
      $region30: #{_lambda_.8} parent=27 // pred_check_branch
        %155 = sbr.rel (%p153) target = $region32
      $region31: #{_lambda_.8} parent=27 // pred_region
        %s156 = smul.u32 2, %s10
        %p157 = scmp.lt.s32.totalorder %s156, 3
        %s158 = scalar_select %p157, %s156, 3
        %s159 = smul.addr %s158, 2
        %s160 = smul.addr %s159, 4
        %s161 = scalar_lea.vmem %s0, %s160
        %s162 = smul.u32 2, %s10
      $region32: #{_lambda_.8} parent=27 // pred_fallthru
        _
    $region28: #{_lambda_.8} parent=5 // pred_fallthru
      _
    %p163 = scmp.le.s32.totalorder 1, %s10
    %p164 = scmp.lt.s32.totalorder %s10, 3
    %p165 = pnand %p163, %p164
    %p166 = pneg %p165
    // Predicated region
    $region33: #{_lambda_.8} parent=5 // pred_check
      _
    $region34: #{_lambda_.8} parent=5 // pred_check_branch
      %168 = sbr.rel (%p165) target = $region36
    $region35: #{_lambda_.8} parent=5 // pred_region
      %s169 = ssub.s32 %s10, 1
      %s170 = smul.u32 2, %s15
      %p171 = scmp.lt.s32.totalorder %s170, 3
      %s172 = scalar_select %p171, %s170, 3
      %s173 = smul.addr %s172, 2
      %s174 = smul.addr %s173, 4
      %s175 = scalar_lea.vmem %s0, %s174
      %p176 = pneg %p36
      %p177 = pneg %p33
      %p178 = pneg %p57
      %p179 = pneg %p54
      %p180 = pneg %p78
      %p181 = pneg %p75
      %p182 = pneg %p99
      %p183 = pneg %p96
      %p184 = pneg %p125
      %p185 = pneg %p122
      %s186 = smul.u32 2, %s15
      %p187 = scmp.lt.s32.totalorder %s186, 3
      %s188 = scalar_select %p187, %s186, 3
      %s189 = smul.addr %s188, 2
      %s190 = smul.addr %s189, 8
      %s191 = scalar_lea.vmem %s4, %s190
      %s192 = smul.u32 2, %s15
      %p193 = scmp.lt.s32.totalorder %s192, 3
      %s194 = scalar_select %p193, %s192, 3
      %s195 = smul.addr %s194, 2
      %s196 = smul.addr %s195, 4
      %s197 = scalar_lea.vmem %s0, %s196
      %s198 = smul.u32 2, %s15
      %s199 = smul.u32 2, %s15
      %p200 = scmp.lt.s32.totalorder %s199, 3
      %s201 = scalar_select %p200, %s199, 3
      %s202 = smul.addr %s201, 2
      %s203 = smul.addr %s202, 8
      %s204 = scalar_lea.vmem %s4, %s203
      %s205 = smul.u32 2, %s15
      %v206 = vld [vmem:[%s197] sm:$0xff]
      %v207 = vld [vmem:[%s197 + $0x8] sm:$0xff]
      %v208 = vunpack.c.l.bf16 %v206
      %v209 = vunpack.c.h.bf16 %v206
      %v210 = vunpack.c.l.bf16 %v207
      %v211 = vunpack.c.h.bf16 %v207
      %v212 = vld [vmem:[%s1] sm:$0xff]
      %v213 = vld [vmem:[%s1 + $0x8] sm:$0xff]
      %v214 = vld [vmem:[%s1 + $0x10] sm:$0xff]
      %v215 = vld [vmem:[%s1 + $0x18] sm:$0xff]
      %v216 = vadd.f32 %v208, %v212
      %v217 = vadd.f32 %v209, %v213
      %v218 = vadd.f32 %v210, %v214
      %v219 = vadd.f32 %v211, %v215
      %v220 = vld [vmem:[%s2] sm:$0x3]
      %v221 = vld [vmem:[%s3] sm:$0x3]
      %v222 = vadd.f32 %v216, %v217
      %223 = vadd.xlane.f32.xlu0 %v222
      %v224 = vpop.xlane.xlu0 %223
      %v225 = vadd.f32 %v218, %v219
      %226 = vadd.xlane.f32.xlu0 %v225
      %v227 = vpop.xlane.xlu0 %226
      %v228 = vrcp.pop 256.0
      %v229 = vmul.f32 %v224, %v228
      %v230 = vmul.f32 %v227, %v228
      %v231 = vsub.f32 %v216, %v229
      %v232 = vsub.f32 %v217, %v229
      %v233 = vsub.f32 %v218, %v230
      %v234 = vsub.f32 %v219, %v230
      %v235 = vmul.f32 %v231, %v231
      %v236 = vmul.f32 %v232, %v232
      %v237 = vmul.f32 %v233, %v233
      %v238 = vmul.f32 %v234, %v234
      %v239 = vadd.f32 %v235, %v236
      %240 = vadd.xlane.f32.xlu0 %v239
      %v241 = vpop.xlane.xlu0 %240
      %v242 = vadd.f32 %v237, %v238
      %243 = vadd.xlane.f32.xlu0 %v242
      %v244 = vpop.xlane.xlu0 %243
      %v245 = vmul.f32 %v241, %v228
      %v246 = vmul.f32 %v244, %v228
      %v247 = vadd.f32 %v245, 1e-05
      %v248 = vadd.f32 %v246, 1e-05
      %v249 = vrsqrt.pop %v247
      %v250 = vrsqrt.pop %v248
      %v251 = vmul.f32 %v231, %v249
      %v252 = vmul.f32 %v232, %v249
      %v253 = vmul.f32 %v233, %v250
      %v254 = vmul.f32 %v234, %v250
      %v256 = vlaneseq
      %v257 = vshrl.u32 %v256, 7
      %v258 = vsub.s32 0, %v257
      %v259 = vrot.slane %v220, %v258
      %v260 = vlaneseq
      %v261 = vshrl.u32 %v260, 7
      %v262 = vsub.s32 1, %v261
      %v263 = vrot.slane %v220, %v262
      %v266 = vmul.f32 %v251, %v259
      %v267 = vmul.f32 %v252, %v263
      %v268 = vmul.f32 %v253, %v259
      %v269 = vmul.f32 %v254, %v263
      %v271 = vlaneseq
      %v272 = vshrl.u32 %v271, 7
      %v273 = vsub.s32 0, %v272
      %v274 = vrot.slane %v221, %v273
      %v275 = vlaneseq
      %v276 = vshrl.u32 %v275, 7
      %v277 = vsub.s32 1, %v276
      %v278 = vrot.slane %v221, %v277
      %v281 = vadd.f32 %v266, %v274
      %v282 = vadd.f32 %v267, %v278
      %v283 = vadd.f32 %v268, %v274
      %v284 = vadd.f32 %v269, %v278
      %285 = vst [vmem:[%s204] sm:$0xff] %v281
      %286 = vst [vmem:[%s204 + $0x8] sm:$0xff] %v282
      %287 = vst [vmem:[%s204 + $0x10] sm:$0xff] %v283
      %288 = vst [vmem:[%s204 + $0x18] sm:$0xff] %v284
      %s289 = smul.u32 2, %s15
      %p290 = scmp.lt.s32.totalorder %s289, 3
      %s291 = scalar_select %p290, %s289, 3
      %s292 = smul.addr %s291, 2
      %s293 = smul.addr %s292, 8
      %s294 = scalar_lea.vmem %s4, %s293
      // Predicated region
      $region37: #{_lambda_.8} parent=35 // pred_check
        %p295 = pneg %p122
      $region38: #{_lambda_.8} parent=35 // pred_check_branch
        %297 = sbr.rel (%p295) target = $region40
      $region39: #{_lambda_.8} parent=35 // pred_region
        %s298 = smul.u32 2, %s15
      $region40: #{_lambda_.8} parent=35 // pred_fallthru
        _
    $region36: #{_lambda_.8} parent=5 // pred_fallthru
      _
    %p299 = scmp.le.s32.totalorder 2, %s10
    // Predicated region
    $region41: #{_lambda_.8} parent=5 // pred_check
      %p300 = pneg %p299
    $region42: #{_lambda_.8} parent=5 // pred_check_branch
      %302 = sbr.rel (%p300) target = $region44
    $region43: #{_lambda_.8} parent=5 // pred_region
      %s303 = ssub.s32 %s10, 2
      // Predicated region
      $region45: #{_lambda_.8} parent=43 // pred_check
        %p304 = pneg %p128
      $region46: #{_lambda_.8} parent=43 // pred_check_branch
        %306 = sbr.rel (%p304) target = $region48
      $region47: #{_lambda_.8} parent=43 // pred_region
        %s307 = smul.u32 2, %s16
        %p308 = scmp.lt.s32.totalorder %s307, 3
        %s309 = scalar_select %p308, %s307, 3
        %s310 = smul.addr %s309, 2
        %s311 = smul.addr %s310, 8
        %s312 = scalar_lea.vmem %s4, %s311
      $region48: #{_lambda_.8} parent=43 // pred_fallthru
        _
    $region44: #{_lambda_.8} parent=5 // pred_fallthru
      _
  $region6: #{_lambda_.8} parent=0 // loop_footer
    %s14 = sadd.s32 1, %s10
  $region7: #{_lambda_.8} parent=0 // loop_footer_branch
    %9 = sbr.rel target = $region3
  $region8: #{_lambda_.8} parent=0 // loop_exit
    _

// kernel: _lambda_.11
$region0: #{_lambda_.11}
  #allocation0 [shape = 'u32[]', space=smem, size = 0x4, offset = 0x4, fixed_abs, tag = 'smem constant byte address 0x4 - core index']
  #allocation1 [shape = 'u32[144,128]{1,0:T(1,128)}', space=vmem, size = 0x12000, scoped, tag = 'internal scratch']
  #allocation2 [shape = 'bf16[16,256]{1,0:T(8,128)(2,1)}', space=vmem, size = 0x2000, scoped, tag = 'scratch operand']
  #allocation3 [shape = 'f32[16,256]{1,0:T(8,128)}', space=vmem, size = 0x4000, scoped, tag = 'scratch operand']
  %s0 = inlined_call_operand.vmem [shape: f32[32,256], index: 0, kind: input, shape index: {}, may-alias: {0,7}]
  %s1 = inlined_call_operand.vmem [shape: f32[1,256], index: 1, kind: input, shape index: {}]
  %s2 = inlined_call_operand.vmem [shape: f32[1,256], index: 2, kind: input, shape index: {}]
  %s3 = inlined_call_operand.vmem [shape: bf16[256,512], index: 3, kind: input, shape index: {}]
  %s4 = inlined_call_operand.vmem [shape: f32[1,512], index: 4, kind: input, shape index: {}]
  %s5 = inlined_call_operand.vmem [shape: bf16[512,256], index: 5, kind: input, shape index: {}]
  %s6 = inlined_call_operand.vmem [shape: f32[1,256], index: 6, kind: input, shape index: {}]
  %s7 = inlined_call_operand.vmem [shape: f32[32,256], index: 7, kind: output, shape index: {}, may-alias: {0,7}]
  %s8 = sld [smem:[#allocation0]]
  $region107: #{_lambda_.11} parent=0
    _
  %s10 = ssub.s32 1, %s8
  %s11 = scalar_select 0, %s10, %s8
  $region1: #{_lambda_.11} parent=0
    #allocation4 [shape = 'u8[262144]{0}', space=vmem, size = 0x40000, scoped, tag = 'input window, operand 3']
    loop: start=0, step=1, limit=6
    $region2: #{_lambda_.11} parent=1 // loop_pre_header
      _
    $region3: #{_lambda_.11} parent=1 // loop_header
      %s13 = sphi 0, %s17
      %p14 = scmp.ge.s32.totalorder %s13, 6
      %s20 = sphi 0, %s32
      %s21 = sphi 0, %s28
      %s22 = sphi 0, %s20
      %s23 = sphi 0, %s21
      %s24 = sphi 0, %s22
      %s25 = sphi 0, %s23
      %s35 = sphi 0, %s37
      %s38 = sphi 0, %s35
      %s39 = sphi 0, %s38
      %s55 = sphi 0, %s39
      %s59 = sphi 0, %s59
      %s61 = sphi 0, %s59
      %s62 = sphi 0, %s61
      %s76 = sphi 0, %s62
      %s80 = sphi 0, %s80
      %s82 = sphi 0, %s80
      %s83 = sphi 0, %s82
      %s97 = sphi 0, %s83
      %s103 = sphi 0, %s105
      %s106 = sphi 0, %s103
      %s107 = sphi 0, %s106
      %s123 = sphi 0, %s107
      %s129 = sphi 0, %s131
      %s132 = sphi 0, %s129
      %s133 = sphi 0, %s132
      %s149 = sphi 0, %s133
      %s155 = sphi 0, %s157
      %s158 = sphi 0, %s155
      %s159 = sphi 0, %s158
      %s175 = sphi 0, %s159
      %s179 = sphi 0, %s179
      %s181 = sphi 0, %s179
      %s182 = sphi 0, %s181
      %s196 = sphi 0, %s182
      %s202 = sphi 0, %s204
      %s205 = sphi 0, %s202
      %s206 = sphi 0, %s205
      %s222 = sphi 0, %s206
    $region4: #{_lambda_.11} parent=1 // loop_header_branch
      %16 = sbr.rel (%p14) target = $region8
    $region5: #{_lambda_.11} parent=1 // loop_body
      %s18 = ssub.s32 %s13, 1
      %s19 = ssub.s32 %s13, 2
      %s26 = sadd.s32 1, %s21
      %p27 = scmp.ge.s32.totalorder %s26, 2
      %s28 = scalar_select %p27, 0, %s26
      %s29 = sadd.s32 1, %s20
      %s30 = scalar_select %p27, %s29, %s20
      %p31 = scmp.ge.s32.totalorder %s30, 2
      %s32 = scalar_select %p31, 0, %s30
      %s33 = ssub.s32 %s20, %s32
      %p34 = scmp.eq.s32.totalorder %s33, 0
      %s36 = sadd.s32 %s35, 1
      %s37 = scalar_select %p34, %s35, %s36
      %p40 = pneg %p34
      %p41 = scmp.eq.s32.totalorder %s13, 3
      %p42 = por %p40, %p41
      %p43 = scmp.ne.s32.totalorder %s35, %s38
      %p44 = scmp.eq.s32.totalorder %s13, 0
      %p45 = por %p43, %p44
      %p46 = scmp.ne.s32.totalorder %s35, %s38
      %p47 = scmp.eq.s32.totalorder %s18, 3
      %p48 = por %p46, %p47
      %p49 = scmp.ne.s32.totalorder %s38, %s39
      %p50 = scmp.eq.s32.totalorder %s18, 0
      %p51 = por %p49, %p50
      %p52 = scmp.ne.s32.totalorder %s38, %s39
      %p53 = scmp.eq.s32.totalorder %s19, 3
      %p54 = por %p52, %p53
      %p56 = scmp.ne.s32.totalorder %s39, %s55
      %p57 = scmp.eq.s32.totalorder %s19, 0
      %p58 = por %p56, %p57
      %s60 = sadd.s32 %s59, 1
      %p63 = scmp.eq.s32.totalorder %s13, 3
      %p64 = scmp.ne.s32.totalorder %s59, %s61
      %p65 = scmp.eq.s32.totalorder %s13, 0
      %p66 = por %p64, %p65
      %p67 = scmp.ne.s32.totalorder %s59, %s61
      %p68 = scmp.eq.s32.totalorder %s18, 3
      %p69 = por %p67, %p68
      %p70 = scmp.ne.s32.totalorder %s61, %s62
      %p71 = scmp.eq.s32.totalorder %s18, 0
      %p72 = por %p70, %p71
      %p73 = scmp.ne.s32.totalorder %s61, %s62
      %p74 = scmp.eq.s32.totalorder %s19, 3
      %p75 = por %p73, %p74
      %p77 = scmp.ne.s32.totalorder %s62, %s76
      %p78 = scmp.eq.s32.totalorder %s19, 0
      %p79 = por %p77, %p78
      %s81 = sadd.s32 %s80, 1
      %p84 = scmp.eq.s32.totalorder %s13, 3
      %p85 = scmp.ne.s32.totalorder %s80, %s82
      %p86 = scmp.eq.s32.totalorder %s13, 0
      %p87 = por %p85, %p86
      %p88 = scmp.ne.s32.totalorder %s80, %s82
      %p89 = scmp.eq.s32.totalorder %s18, 3
      %p90 = por %p88, %p89
      %p91 = scmp.ne.s32.totalorder %s82, %s83
      %p92 = scmp.eq.s32.totalorder %s18, 0
      %p93 = por %p91, %p92
      %p94 = scmp.ne.s32.totalorder %s82, %s83
      %p95 = scmp.eq.s32.totalorder %s19, 3
      %p96 = por %p94, %p95
      %p98 = scmp.ne.s32.totalorder %s83, %s97
      %p99 = scmp.eq.s32.totalorder %s19, 0
      %p100 = por %p98, %p99
      %s101 = ssub.s32 %s21, %s28
      %p102 = scmp.eq.s32.totalorder %s101, 0
      %s104 = sadd.s32 %s103, 1
      %s105 = scalar_select %p102, %s103, %s104
      %p108 = pneg %p102
      %p109 = scmp.eq.s32.totalorder %s13, 3
      %p110 = por %p108, %p109
      %p111 = scmp.ne.s32.totalorder %s103, %s106
      %p112 = scmp.eq.s32.totalorder %s13, 0
      %p113 = por %p111, %p112
      %p114 = scmp.ne.s32.totalorder %s103, %s106
      %p115 = scmp.eq.s32.totalorder %s18, 3
      %p116 = por %p114, %p115
      %p117 = scmp.ne.s32.totalorder %s106, %s107
      %p118 = scmp.eq.s32.totalorder %s18, 0
      %p119 = por %p117, %p118
      %p120 = scmp.ne.s32.totalorder %s106, %s107
      %p121 = scmp.eq.s32.totalorder %s19, 3
      %p122 = por %p120, %p121
      %p124 = scmp.ne.s32.totalorder %s107, %s123
      %p125 = scmp.eq.s32.totalorder %s19, 0
      %p126 = por %p124, %p125
      %s127 = ssub.s32 %s21, %s28
      %p128 = scmp.eq.s32.totalorder %s127, 0
      %s130 = sadd.s32 %s129, 1
      %s131 = scalar_select %p128, %s129, %s130
      %p134 = pneg %p128
      %p135 = scmp.eq.s32.totalorder %s13, 3
      %p136 = por %p134, %p135
      %p137 = scmp.ne.s32.totalorder %s129, %s132
      %p138 = scmp.eq.s32.totalorder %s13, 0
      %p139 = por %p137, %p138
      %p140 = scmp.ne.s32.totalorder %s129, %s132
      %p141 = scmp.eq.s32.totalorder %s18, 3
      %p142 = por %p140, %p141
      %p143 = scmp.ne.s32.totalorder %s132, %s133
      %p144 = scmp.eq.s32.totalorder %s18, 0
      %p145 = por %p143, %p144
      %p146 = scmp.ne.s32.totalorder %s132, %s133
      %p147 = scmp.eq.s32.totalorder %s19, 3
      %p148 = por %p146, %p147
      %p150 = scmp.ne.s32.totalorder %s133, %s149
      %p151 = scmp.eq.s32.totalorder %s19, 0
      %p152 = por %p150, %p151
      %s153 = ssub.s32 %s21, %s28
      %p154 = scmp.eq.s32.totalorder %s153, 0
      %s156 = sadd.s32 %s155, 1
      %s157 = scalar_select %p154, %s155, %s156
      %p160 = pneg %p154
      %p161 = scmp.eq.s32.totalorder %s13, 3
      %p162 = por %p160, %p161
      %p163 = scmp.ne.s32.totalorder %s155, %s158
      %p164 = scmp.eq.s32.totalorder %s13, 0
      %p165 = por %p163, %p164
      %p166 = scmp.ne.s32.totalorder %s155, %s158
      %p167 = scmp.eq.s32.totalorder %s18, 3
      %p168 = por %p166, %p167
      %p169 = scmp.ne.s32.totalorder %s158, %s159
      %p170 = scmp.eq.s32.totalorder %s18, 0
      %p171 = por %p169, %p170
      %p172 = scmp.ne.s32.totalorder %s158, %s159
      %p173 = scmp.eq.s32.totalorder %s19, 3
      %p174 = por %p172, %p173
      %p176 = scmp.ne.s32.totalorder %s159, %s175
      %p177 = scmp.eq.s32.totalorder %s19, 0
      %p178 = por %p176, %p177
      %s180 = sadd.s32 %s179, 1
      %p183 = scmp.eq.s32.totalorder %s13, 3
      %p184 = scmp.ne.s32.totalorder %s179, %s181
      %p185 = scmp.eq.s32.totalorder %s13, 0
      %p186 = por %p184, %p185
      %p187 = scmp.ne.s32.totalorder %s179, %s181
      %p188 = scmp.eq.s32.totalorder %s18, 3
      %p189 = por %p187, %p188
      %p190 = scmp.ne.s32.totalorder %s181, %s182
      %p191 = scmp.eq.s32.totalorder %s18, 0
      %p192 = por %p190, %p191
      %p193 = scmp.ne.s32.totalorder %s181, %s182
      %p194 = scmp.eq.s32.totalorder %s19, 3
      %p195 = por %p193, %p194
      %p197 = scmp.ne.s32.totalorder %s182, %s196
      %p198 = scmp.eq.s32.totalorder %s19, 0
      %p199 = por %p197, %p198
      %s200 = ssub.s32 %s20, %s32
      %p201 = scmp.eq.s32.totalorder %s200, 0
      %s203 = sadd.s32 %s202, 1
      %s204 = scalar_select %p201, %s202, %s203
      %p207 = pneg %p201
      %p208 = scmp.eq.s32.totalorder %s13, 3
      %p209 = por %p207, %p208
      %p210 = scmp.ne.s32.totalorder %s202, %s205
      %p211 = scmp.eq.s32.totalorder %s13, 0
      %p212 = por %p210, %p211
      %p213 = scmp.ne.s32.totalorder %s202, %s205
      %p214 = scmp.eq.s32.totalorder %s18, 3
      %p215 = por %p213, %p214
      %p216 = scmp.ne.s32.totalorder %s205, %s206
      %p217 = scmp.eq.s32.totalorder %s18, 0
      %p218 = por %p216, %p217
      %p219 = scmp.ne.s32.totalorder %s205, %s206
      %p220 = scmp.eq.s32.totalorder %s19, 3
      %p221 = por %p219, %p220
      %p223 = scmp.ne.s32.totalorder %s206, %s222
      %p224 = scmp.eq.s32.totalorder %s19, 0
      %p225 = por %p223, %p224
      %p226 = scmp.le.s32.totalorder 1, %s13
      %p227 = scmp.lt.s32.totalorder %s13, 5
      %p228 = pnand %p226, %p227
      %p229 = pneg %p228
      // Predicated region
      $region9: #{_lambda_.11} parent=5 // pred_check
        _
      $region10: #{_lambda_.11} parent=5 // pred_check_branch
        %231 = sbr.rel (%p228) target = $region12
      $region11: #{_lambda_.11} parent=5 // pred_region
        %s232 = ssub.s32 %s13, 1
        // Predicated region
        $region13: #{_lambda_.11} parent=11 // pred_check
          %p233 = pneg %p72
        $region14: #{_lambda_.11} parent=11 // pred_check_branch
          %235 = sbr.rel (%p233) target = $region16
        $region15: #{_lambda_.11} parent=11 // pred_region
          _
        $region16: #{_lambda_.11} parent=11 // pred_fallthru
          _
        // Predicated region
        $region17: #{_lambda_.11} parent=11 // pred_check
          %p236 = pneg %p93
        $region18: #{_lambda_.11} parent=11 // pred_check_branch
          %238 = sbr.rel (%p236) target = $region20
        $region19: #{_lambda_.11} parent=11 // pred_region
          _
        $region20: #{_lambda_.11} parent=11 // pred_fallthru
          _
        // Predicated region
        $region21: #{_lambda_.11} parent=11 // pred_check
          %p239 = pneg %p192
        $region22: #{_lambda_.11} parent=11 // pred_check_branch
          %241 = sbr.rel (%p239) target = $region24
        $region23: #{_lambda_.11} parent=11 // pred_region
          _
        $region24: #{_lambda_.11} parent=11 // pred_fallthru
          _
      $region12: #{_lambda_.11} parent=5 // pred_fallthru
        _
      %p242 = scmp.lt.s32.totalorder %s13, 4
      // Predicated region
      $region25: #{_lambda_.11} parent=5 // pred_check
        %p243 = pneg %p242
      $region26: #{_lambda_.11} parent=5 // pred_check_branch
        %245 = sbr.rel (%p243) target = $region28
      $region27: #{_lambda_.11} parent=5 // pred_region
        // Predicated region
        $region29: #{_lambda_.11} parent=27 // pred_check
          %p246 = pneg %p45
        $region30: #{_lambda_.11} parent=27 // pred_check_branch
          %248 = sbr.rel (%p246) target = $region32
        $region31: #{_lambda_.11} parent=27 // pred_region
          %s249 = smul.u32 2, %s20
          %p250 = scmp.lt.s32.totalorder %s249, 3
          %s251 = scalar_select %p250, %s249, 3
          %s252 = smul.addr %s251, 2
          %s253 = smul.addr %s252, 8
          %s254 = scalar_lea.vmem %s0, %s253
          %s255 = smul.u32 2, %s20
        $region32: #{_lambda_.11} parent=27 // pred_fallthru
          _
        // Predicated region
        $region33: #{_lambda_.11} parent=27 // pred_check
          %p256 = pneg %p113
        $region34: #{_lambda_.11} parent=27 // pred_check_branch
          %258 = sbr.rel (%p256) target = $region36
        $region35: #{_lambda_.11} parent=27 // pred_region
          %s259 = sand.u32 %s103, 1
          %s260 = sand.u32 %s103, 1
          %s261 = smul.addr %s260, 256
          %s262 = scalar_lea.vmem [#allocation4], %s261
          %s263 = smul.u32 2, %s21
          %s264 = smul.addr %s263, 4
          %s265 = scalar_lea.vmem %s3, %s264
          // Predicated region
          $region37: #{_lambda_.11} parent=35 // pred_check
            _
          $region38: #{_lambda_.11} parent=35 // pred_check_branch
            %267 = sbr.rel (0) target = $region40
          $region39: #{_lambda_.11} parent=35 // pred_region
            // Predicated region
            $region41: #{_lambda_.11} parent=39 // pred_check
              _
            $region42: #{_lambda_.11} parent=39 // pred_check_branch
              %269 = sbr.rel (0) target = $region44
            $region43: #{_lambda_.11} parent=39 // pred_region
              // Predicated region
              $region56: #{_lambda_.11} parent=43 // pred_check
                _
              $region57: #{_lambda_.11} parent=43 // pred_check_branch
                %347 = sbr.rel (0) target = $region59
              $region58: #{_lambda_.11} parent=43 // pred_region
                loop: start=0, step=1, limit=1
                $region60: #{_lambda_.11} parent=58 // loop_pre_header
                  _
                $region61: #{_lambda_.11} parent=58 // loop_header
                  %s349 = sphi 0, %s353
                  %p350 = scmp.ge.s32.totalorder %s349, 1
                  %s354 = sphi %s265, %s265
                  %s355 = sphi %s262, %s262
                $region62: #{_lambda_.11} parent=58 // loop_header_branch
                  %352 = sbr.rel (%p350) target = $region66
                $region63: #{_lambda_.11} parent=58 // loop_body
                  %v356 = vld [vmem:[%s354] sm:$0xff]
                  %357 = vst [vmem:[%s355] sm:$0xff] %v356
                  %v358 = vld [vmem:[%s354 + $0x10] sm:$0xff]
                  %359 = vst [vmem:[%s355 + $0x8] sm:$0xff] %v358
                  %v360 = vld [vmem:[%s354 + $0x20] sm:$0xff]
                  %361 = vst [vmem:[%s355 + $0x10] sm:$0xff] %v360
                  %v362 = vld [vmem:[%s354 + $0x30] sm:$0xff]
                  %363 = vst [vmem:[%s355 + $0x18] sm:$0xff] %v362
                  %v364 = vld [vmem:[%s354 + $0x40] sm:$0xff]
                  %365 = vst [vmem:[%s355 + $0x20] sm:$0xff] %v364
                  %v366 = vld [vmem:[%s354 + $0x50] sm:$0xff]
                  %367 = vst [vmem:[%s355 + $0x28] sm:$0xff] %v366
                  %v368 = vld [vmem:[%s354 + $0x60] sm:$0xff]
                  %369 = vst [vmem:[%s355 + $0x30] sm:$0xff] %v368
                  %v370 = vld [vmem:[%s354 + $0x70] sm:$0xff]
                  %371 = vst [vmem:[%s355 + $0x38] sm:$0xff] %v370
                  %v372 = vld [vmem:[%s354 + $0x80] sm:$0xff]
                  %373 = vst [vmem:[%s355 + $0x40] sm:$0xff] %v372
                  %v374 = vld [vmem:[%s354 + $0x90] sm:$0xff]
                  %375 = vst [vmem:[%s355 + $0x48] sm:$0xff] %v374
                  %v376 = vld [vmem:[%s354 + $0xa0] sm:$0xff]
                  %377 = vst [vmem:[%s355 + $0x50] sm:$0xff] %v376
                  %v378 = vld [vmem:[%s354 + $0xb0] sm:$0xff]
                  %379 = vst [vmem:[%s355 + $0x58] sm:$0xff] %v378
                  %v380 = vld [vmem:[%s354 + $0xc0] sm:$0xff]
                  %381 = vst [vmem:[%s355 + $0x60] sm:$0xff] %v380
                  %v382 = vld [vmem:[%s354 + $0xd0] sm:$0xff]
                  %383 = vst [vmem:[%s355 + $0x68] sm:$0xff] %v382
                  %v384 = vld [vmem:[%s354 + $0xe0] sm:$0xff]
                  %385 = vst [vmem:[%s355 + $0x70] sm:$0xff] %v384
                  %v386 = vld [vmem:[%s354 + $0xf0] sm:$0xff]
                  %387 = vst [vmem:[%s355 + $0x78] sm:$0xff] %v386
                  %v388 = vld [vmem:[%s354 + $0x100] sm:$0xff]
                  %389 = vst [vmem:[%s355 + $0x80] sm:$0xff] %v388
                  %v390 = vld [vmem:[%s354 + $0x110] sm:$0xff]
                  %391 = vst [vmem:[%s355 + $0x88] sm:$0xff] %v390
                  %v392 = vld [vmem:[%s354 + $0x120] sm:$0xff]
                  %393 = vst [vmem:[%s355 + $0x90] sm:$0xff] %v392
                  %v394 = vld [vmem:[%s354 + $0x130] sm:$0xff]
                  %395 = vst [vmem:[%s355 + $0x98] sm:$0xff] %v394
                  %v396 = vld [vmem:[%s354 + $0x140] sm:$0xff]
                  %397 = vst [vmem:[%s355 + $0xa0] sm:$0xff] %v396
                  %v398 = vld [vmem:[%s354 + $0x150] sm:$0xff]
                  %399 = vst [vmem:[%s355 + $0xa8] sm:$0xff] %v398
                  %v400 = vld [vmem:[%s354 + $0x160] sm:$0xff]
                  %401 = vst [vmem:[%s355 + $0xb0] sm:$0xff] %v400
                  %v402 = vld [vmem:[%s354 + $0x170] sm:$0xff]
                  %403 = vst [vmem:[%s355 + $0xb8] sm:$0xff] %v402
                  %v404 = vld [vmem:[%s354 + $0x180] sm:$0xff]
                  %405 = vst [vmem:[%s355 + $0xc0] sm:$0xff] %v404
                  %v406 = vld [vmem:[%s354 + $0x190] sm:$0xff]
                  %407 = vst [vmem:[%s355 + $0xc8] sm:$0xff] %v406
                  %v408 = vld [vmem:[%s354 + $0x1a0] sm:$0xff]
                  %409 = vst [vmem:[%s355 + $0xd0] sm:$0xff] %v408
                  %v410 = vld [vmem:[%s354 + $0x1b0] sm:$0xff]
                  %411 = vst [vmem:[%s355 + $0xd8] sm:$0xff] %v410
                  %v412 = vld [vmem:[%s354 + $0x1c0] sm:$0xff]
                  %413 = vst [vmem:[%s355 + $0xe0] sm:$0xff] %v412
                  %v414 = vld [vmem:[%s354 + $0x1d0] sm:$0xff]
                  %415 = vst [vmem:[%s355 + $0xe8] sm:$0xff] %v414
                  %v416 = vld [vmem:[%s354 + $0x1e0] sm:$0xff]
                  %417 = vst [vmem:[%s355 + $0xf0] sm:$0xff] %v416
                  %v418 = vld [vmem:[%s354 + $0x1f0] sm:$0xff]
                  %419 = vst [vmem:[%s355 + $0xf8] sm:$0xff] %v418
                $region64: #{_lambda_.11} parent=58 // loop_footer
                  %s353 = sadd.s32 1, %s349
                $region65: #{_lambda_.11} parent=58 // loop_footer_branch
                  %348 = sbr.rel target = $region61
                $region66: #{_lambda_.11} parent=58 // loop_exit
                  _
              $region59: #{_lambda_.11} parent=43 // pred_fallthru
                _
              // Predicated region
              $region67: #{_lambda_.11} parent=43 // pred_check
                _
              $region68: #{_lambda_.11} parent=43 // pred_check_branch
                %421 = sbr.rel target = $region70
              $region69: #{_lambda_.11} parent=43 // pred_region
                _
              $region70: #{_lambda_.11} parent=43 // pred_fallthru
                _
            $region44: #{_lambda_.11} parent=39 // pred_fallthru
              _
            // Predicated region
            $region45: #{_lambda_.11} parent=39 // pred_check
              _
            $region46: #{_lambda_.11} parent=39 // pred_check_branch
              %271 = sbr.rel target = $region48
            $region47: #{_lambda_.11} parent=39 // pred_region
              %s273 = ssub.s32 256, 1
              loop: start=0, step=1, limit=1
              $region49: #{_lambda_.11} parent=47 // loop_pre_header
                _
              $region50: #{_lambda_.11} parent=47 // loop_header
                %s275 = sphi 0, %s279
                %p276 = scmp.ge.s32.totalorder %s275, 1
                %s280 = sphi %s265, %s265
                %s281 = sphi %s262, %s262
              $region51: #{_lambda_.11} parent=47 // loop_header_branch
                %278 = sbr.rel (%p276) target = $region55
              $region52: #{_lambda_.11} parent=47 // loop_body
                %v282 = vld [vmem:[%s280] sm:%s273]
                %283 = vst [vmem:[%s281] sm:%s273] %v282
                %v284 = vld [vmem:[%s280 + $0x10] sm:%s273]
                %285 = vst [vmem:[%s281 + $0x8] sm:%s273] %v284
                %v286 = vld [vmem:[%s280 + $0x20] sm:%s273]
                %287 = vst [vmem:[%s281 + $0x10] sm:%s273] %v286
                %v288 = vld [vmem:[%s280 + $0x30] sm:%s273]
                %289 = vst [vmem:[%s281 + $0x18] sm:%s273] %v288
                %v290 = vld [vmem:[%s280 + $0x40] sm:%s273]
                %291 = vst [vmem:[%s281 + $0x20] sm:%s273] %v290
                %v292 = vld [vmem:[%s280 + $0x50] sm:%s273]
                %293 = vst [vmem:[%s281 + $0x28] sm:%s273] %v292
                %v294 = vld [vmem:[%s280 + $0x60] sm:%s273]
                %295 = vst [vmem:[%s281 + $0x30] sm:%s273] %v294
                %v296 = vld [vmem:[%s280 + $0x70] sm:%s273]
                %297 = vst [vmem:[%s281 + $0x38] sm:%s273] %v296
                %v298 = vld [vmem:[%s280 + $0x80] sm:%s273]
                %299 = vst [vmem:[%s281 + $0x40] sm:%s273] %v298
                %v300 = vld [vmem:[%s280 + $0x90] sm:%s273]
                %301 = vst [vmem:[%s281 + $0x48] sm:%s273] %v300
                %v302 = vld [vmem:[%s280 + $0xa0] sm:%s273]
                %303 = vst [vmem:[%s281 + $0x50] sm:%s273] %v302
                %v304 = vld [vmem:[%s280 + $0xb0] sm:%s273]
                %305 = vst [vmem:[%s281 + $0x58] sm:%s273] %v304
                %v306 = vld [vmem:[%s280 + $0xc0] sm:%s273]
                %307 = vst [vmem:[%s281 + $0x60] sm:%s273] %v306
                %v308 = vld [vmem:[%s280 + $0xd0] sm:%s273]
                %309 = vst [vmem:[%s281 + $0x68] sm:%s273] %v308
                %v310 = vld [vmem:[%s280 + $0xe0] sm:%s273]
                %311 = vst [vmem:[%s281 + $0x70] sm:%s273] %v310
                %v312 = vld [vmem:[%s280 + $0xf0] sm:%s273]
                %313 = vst [vmem:[%s281 + $0x78] sm:%s273] %v312
                %v314 = vld [vmem:[%s280 + $0x100] sm:%s273]
                %315 = vst [vmem:[%s281 + $0x80] sm:%s273] %v314
                %v316 = vld [vmem:[%s280 + $0x110] sm:%s273]
                %317 = vst [vmem:[%s281 + $0x88] sm:%s273] %v316
                %v318 = vld [vmem:[%s280 + $0x120] sm:%s273]
                %319 = vst [vmem:[%s281 + $0x90] sm:%s273] %v318
                %v320 = vld [vmem:[%s280 + $0x130] sm:%s273]
                %321 = vst [vmem:[%s281 + $0x98] sm:%s273] %v320
                %v322 = vld [vmem:[%s280 + $0x140] sm:%s273]
                %323 = vst [vmem:[%s281 + $0xa0] sm:%s273] %v322
                %v324 = vld [vmem:[%s280 + $0x150] sm:%s273]
                %325 = vst [vmem:[%s281 + $0xa8] sm:%s273] %v324
                %v326 = vld [vmem:[%s280 + $0x160] sm:%s273]
                %327 = vst [vmem:[%s281 + $0xb0] sm:%s273] %v326
                %v328 = vld [vmem:[%s280 + $0x170] sm:%s273]
                %329 = vst [vmem:[%s281 + $0xb8] sm:%s273] %v328
                %v330 = vld [vmem:[%s280 + $0x180] sm:%s273]
                %331 = vst [vmem:[%s281 + $0xc0] sm:%s273] %v330
                %v332 = vld [vmem:[%s280 + $0x190] sm:%s273]
                %333 = vst [vmem:[%s281 + $0xc8] sm:%s273] %v332
                %v334 = vld [vmem:[%s280 + $0x1a0] sm:%s273]
                %335 = vst [vmem:[%s281 + $0xd0] sm:%s273] %v334
                %v336 = vld [vmem:[%s280 + $0x1b0] sm:%s273]
                %337 = vst [vmem:[%s281 + $0xd8] sm:%s273] %v336
                %v338 = vld [vmem:[%s280 + $0x1c0] sm:%s273]
                %339 = vst [vmem:[%s281 + $0xe0] sm:%s273] %v338
                %v340 = vld [vmem:[%s280 + $0x1d0] sm:%s273]
                %341 = vst [vmem:[%s281 + $0xe8] sm:%s273] %v340
                %v342 = vld [vmem:[%s280 + $0x1e0] sm:%s273]
                %343 = vst [vmem:[%s281 + $0xf0] sm:%s273] %v342
                %v344 = vld [vmem:[%s280 + $0x1f0] sm:%s273]
                %345 = vst [vmem:[%s281 + $0xf8] sm:%s273] %v344
              $region53: #{_lambda_.11} parent=47 // loop_footer
                %s279 = sadd.s32 1, %s275
              $region54: #{_lambda_.11} parent=47 // loop_footer_branch
                %274 = sbr.rel target = $region50
              $region55: #{_lambda_.11} parent=47 // loop_exit
                _
            $region48: #{_lambda_.11} parent=39 // pred_fallthru
              _
          $region40: #{_lambda_.11} parent=35 // pred_fallthru
            _
          %422 = vnop
        $region36: #{_lambda_.11} parent=27 // pred_fallthru
          _
        // Predicated region
        $region71: #{_lambda_.11} parent=27 // pred_check
          %p423 = pneg %p139
        $region72: #{_lambda_.11} parent=27 // pred_check_branch
          %425 = sbr.rel (%p423) target = $region74
        $region73: #{_lambda_.11} parent=27 // pred_region
          %s426 = smul.u32 2, %s21
          %p427 = scmp.lt.s32.totalorder %s426, 3
          %s428 = scalar_select %p427, %s426, 3
          %s429 = scalar_lea.vmem %s4, %s428
          %s430 = smul.u32 2, %s21
        $region74: #{_lambda_.11} parent=27 // pred_fallthru
          _
        // Predicated region
        $region75: #{_lambda_.11} parent=27 // pred_check
          %p431 = pneg %p165
        $region76: #{_lambda_.11} parent=27 // pred_check_branch
          %433 = sbr.rel (%p431) target = $region78
        $region77: #{_lambda_.11} parent=27 // pred_region
          %s434 = smul.u32 32, %s21
          %p435 = scmp.lt.s32.totalorder %s434, 63
          %s436 = scalar_select %p435, %s434, 63
          %s437 = smul.addr %s436, 2
          %s438 = smul.addr %s437, 4
          %s439 = scalar_lea.vmem %s5, %s438
          %s440 = smul.u32 32, %s21
        $region78: #{_lambda_.11} parent=27 // pred_fallthru
          _
      $region28: #{_lambda_.11} parent=5 // pred_fallthru
        _
      %p441 = scmp.le.s32.totalorder 1, %s13
      %p442 = scmp.lt.s32.totalorder %s13, 5
      %p443 = pnand %p441, %p442
      %p444 = pneg %p443
      // Predicated region
      $region79: #{_lambda_.11} parent=5 // pred_check
        _
      $region80: #{_lambda_.11} parent=5 // pred_check_branch
        %446 = sbr.rel (%p443) target = $region82
      $region81: #{_lambda_.11} parent=5 // pred_region
        %s447 = ssub.s32 %s13, 1
        %s448 = sand.u32 %s106, 1
        %s449 = sand.u32 %s106, 1
        %s450 = smul.addr %s449, 256
        %s451 = scalar_lea.vmem [#allocation4], %s450
        // Predicated region
        $region83: #{_lambda_.11} parent=81 // pred_check
          %p452 = pneg %p119
        $region84: #{_lambda_.11} parent=81 // pred_check_branch
          %454 = sbr.rel (%p452) target = $region86
        $region85: #{_lambda_.11} parent=81 // pred_region
          _
        $region86: #{_lambda_.11} parent=81 // pred_fallthru
          _
        %s455 = smul.u32 2, %s22
        %p456 = scmp.lt.s32.totalorder %s455, 3
        %s457 = scalar_select %p456, %s455, 3
        %s458 = smul.addr %s457, 2
        %s459 = smul.addr %s458, 8
        %s460 = scalar_lea.vmem %s0, %s459
        %p461 = pneg %p51
        %p462 = pneg %p48
        %p463 = pneg %p72
        %p464 = pneg %p69
        %p465 = pneg %p93
        %p466 = pneg %p90
        %s467 = sand.u32 %s106, 1
        %s468 = sand.u32 %s106, 1
        %s469 = smul.addr %s468, 256
        %s470 = scalar_lea.vmem [#allocation4], %s469
        %p471 = pneg %p119
        %p472 = pneg %p116
        %s473 = smul.u32 2, %s23
        %p474 = scmp.lt.s32.totalorder %s473, 3
        %s475 = scalar_select %p474, %s473, 3
        %s476 = scalar_lea.vmem %s4, %s475
        %p477 = pneg %p145
        %p478 = pneg %p142
        %s479 = smul.u32 32, %s23
        %p480 = scmp.lt.s32.totalorder %s479, 63
        %s481 = scalar_select %p480, %s479, 63
        %s482 = smul.addr %s481, 2
        %s483 = smul.addr %s482, 4
        %s484 = scalar_lea.vmem %s5, %s483
        %p485 = pneg %p171
        %p486 = pneg %p168
        %p487 = pneg %p192
        %p488 = pneg %p189
        %p489 = pneg %p218
        %p490 = pneg %p215
        %s491 = smul.u32 2, %s22
        %p492 = scmp.lt.s32.totalorder %s491, 3
        %s493 = scalar_select %p492, %s491, 3
        %s494 = smul.addr %s493, 2
        %s495 = smul.addr %s494, 8
        %s496 = scalar_lea.vmem %s7, %s495
        %s497 = smul.u32 2, %s22
        %p498 = scmp.lt.s32.totalorder %s497, 3
        %s499 = scalar_select %p498, %s497, 3
        %s500 = smul.addr %s499, 2
        %s501 = smul.addr %s500, 8
        %s502 = scalar_lea.vmem %s0, %s501
        %s503 = smul.u32 2, %s22
        %s504 = smul.u32 2, %s23
        %s505 = smul.u32 2, %s23
        %p506 = scmp.lt.s32.totalorder %s505, 3
        %s507 = scalar_select %p506, %s505, 3
        %s508 = scalar_lea.vmem %s4, %s507
        %s509 = smul.u32 2, %s23
        %s510 = smul.u32 32, %s23
        %p511 = scmp.lt.s32.totalorder %s510, 63
        %s512 = scalar_select %p511, %s510, 63
        %s513 = smul.addr %s512, 2
        %s514 = smul.addr %s513, 4
        %s515 = scalar_lea.vmem %s5, %s514
        %s516 = smul.u32 32, %s23
        %s517 = smul.u32 2, %s22
        %p518 = scmp.lt.s32.totalorder %s517, 3
        %s519 = scalar_select %p518, %s517, 3
        %s520 = smul.addr %s519, 2
        %s521 = smul.addr %s520, 8
        %s522 = scalar_lea.vmem %s7, %s521
        %s523 = smul.u32 2, %s22
        %p524 = scmp.eq.s32.totalorder %s23, 0
        // Predicated region
        $region87: #{_lambda_.11} parent=81 // pred_check
          %p525 = pneg %p524
        $region88: #{_lambda_.11} parent=81 // pred_check_branch
          %527 = sbr.rel (%p525) target = $region90
        $region89: #{_lambda_.11} parent=81 // pred_region
          %v528 = vld [vmem:[%s502] sm:$0xff]
          %v529 = vld [vmem:[%s502 + $0x8] sm:$0xff]
          %v530 = vld [vmem:[%s502 + $0x10] sm:$0xff]
          %v531 = vld [vmem:[%s502 + $0x18] sm:$0xff]
          %v532 = vld [vmem:[%s1] sm:$0x3]
          %v533 = vld [vmem:[%s2] sm:$0x3]
          %v534 = vadd.f32 %v528, %v529
          %535 = vadd.xlane.f32.xlu0 %v534
          %v536 = vpop.xlane.xlu0 %535
          %v537 = vadd.f32 %v530, %v531
          %538 = vadd.xlane.f32.xlu0 %v537
          %v539 = vpop.xlane.xlu0 %538
          %v540 = vrcp.pop 256.0
          %v541 = vmul.f32 %v536, %v540
          %v542 = vmul.f32 %v539, %v540
          %v543 = vsub.f32 %v528, %v541
          %v544 = vsub.f32 %v529, %v541
          %v545 = vsub.f32 %v530, %v542
          %v546 = vsub.f32 %v531, %v542
          %v547 = vmul.f32 %v543, %v543
          %v548 = vmul.f32 %v544, %v544
          %v549 = vmul.f32 %v545, %v545
          %v550 = vmul.f32 %v546, %v546
          %v551 = vadd.f32 %v547, %v548
          %552 = vadd.xlane.f32.xlu0 %v551
          %v553 = vpop.xlane.xlu0 %552
          %v554 = vadd.f32 %v549, %v550
          %555 = vadd.xlane.f32.xlu0 %v554
          %v556 = vpop.xlane.xlu0 %555
          %v557 = vmul.f32 %v553, %v540
          %v558 = vmul.f32 %v556, %v540
          %v559 = vadd.f32 %v557, 1e-05
          %v560 = vadd.f32 %v558, 1e-05
          %v561 = vrsqrt.pop %v559
          %v562 = vrsqrt.pop %v560
          %v563 = vmul.f32 %v543, %v561
          %v564 = vmul.f32 %v544, %v561
          %v565 = vmul.f32 %v545, %v562
          %v566 = vmul.f32 %v546, %v562
          %v568 = vlaneseq
          %v569 = vshrl.u32 %v568, 7
          %v570 = vsub.s32 0, %v569
          %v571 = vrot.slane %v532, %v570
          %v572 = vlaneseq
          %v573 = vshrl.u32 %v572, 7
          %v574 = vsub.s32 1, %v573
          %v575 = vrot.slane %v532, %v574
          %v578 = vmul.f32 %v563, %v571
          %v579 = vmul.f32 %v564, %v575
          %v580 = vmul.f32 %v565, %v571
          %v581 = vmul.f32 %v566, %v575
          %v583 = vlaneseq
          %v584 = vshrl.u32 %v583, 7
          %v585 = vsub.s32 0, %v584
          %v586 = vrot.slane %v533, %v585
          %v587 = vlaneseq
          %v588 = vshrl.u32 %v587, 7
          %v589 = vsub.s32 1, %v588
          %v590 = vrot.slane %v533, %v589
          %v593 = vadd.f32 %v578, %v586
          %v594 = vadd.f32 %v579, %v590
          %v595 = vadd.f32 %v580, %v586
          %v596 = vadd.f32 %v581, %v590
          %v597 = vpack.c.bf16 %v595, %v593
          %v598 = vpack.c.bf16 %v596, %v594
          %v601 = vunpack.c.l.b16 %v597
          %v602 = vunpack.c.l.b16 %v598
          %v603 = vunpack.c.h.b16 %v597
          %v604 = vunpack.c.h.b16 %v598
          %v605 = vpack.c.b16 %v602, %v601
          %v606 = vpack.c.b16 %v604, %v603
          %609 = vst [vmem:[#allocation2] sm:$0xff] %v605
          %610 = vst [vmem:[#allocation2 + $0x8] sm:$0xff] %v606
          %611 = vst [vmem:[#allocation3] sm:$0xff] 0.0
          %612 = vst [vmem:[#allocation3 + $0x8] sm:$0xff] 0.0
          %613 = vst [vmem:[#allocation3 + $0x10] sm:$0xff] 0.0
          %614 = vst [vmem:[#allocation3 + $0x18] sm:$0xff] 0.0
        $region90: #{_lambda_.11} parent=81 // pred_fallthru
          _
        %v615 = vld [vmem:[#allocation2] sm:$0xff]
        %v616 = vld [vmem:[#allocation2 + $0x8] sm:$0xff]
        %v617 = vld [vmem:[%s451] sm:$0xff]
        %v618 = vld [vmem:[%s451 + $0x8] sm:$0xff]
        %v619 = vld [vmem:[%s451 + $0x10] sm:$0xff]
        %v620 = vld [vmem:[%s451 + $0x18] sm:$0xff]
        %v621 = vld [vmem:[%s451 + $0x20] sm:$0xff]
        %v622 = vld [vmem:[%s451 + $0x28] sm:$0xff]
        %v623 = vld [vmem:[%s451 + $0x30] sm:$0xff]
        %v624 = vld [vmem:[%s451 + $0x38] sm:$0xff]
        %v625 = vld [vmem:[%s451 + $0x40] sm:$0xff]
        %v626 = vld [vmem:[%s451 + $0x48] sm:$0xff]
        %v627 = vld [vmem:[%s451 + $0x50] sm:$0xff]
        %v628 = vld [vmem:[%s451 + $0x58] sm:$0xff]
        %v629 = vld [vmem:[%s451 + $0x60] sm:$0xff]
        %v630 = vld [vmem:[%s451 + $0x68] sm:$0xff]
        %v631 = vld [vmem:[%s451 + $0x70] sm:$0xff]
        %v632 = vld [vmem:[%s451 + $0x78] sm:$0xff]
        %v633 = vld [vmem:[%s451 + $0x80] sm:$0xff]
        %v634 = vld [vmem:[%s451 + $0x88] sm:$0xff]
        %v635 = vld [vmem:[%s451 + $0x90] sm:$0xff]
        %v636 = vld [vmem:[%s451 + $0x98] sm:$0xff]
        %v637 = vld [vmem:[%s451 + $0xa0] sm:$0xff]
        %v638 = vld [vmem:[%s451 + $0xa8] sm:$0xff]
        %v639 = vld [vmem:[%s451 + $0xb0] sm:$0xff]
        %v640 = vld [vmem:[%s451 + $0xb8] sm:$0xff]
        %v641 = vld [vmem:[%s451 + $0xc0] sm:$0xff]
        %v642 = vld [vmem:[%s451 + $0xc8] sm:$0xff]
        %v643 = vld [vmem:[%s451 + $0xd0] sm:$0xff]
        %v644 = vld [vmem:[%s451 + $0xd8] sm:$0xff]
        %v645 = vld [vmem:[%s451 + $0xe0] sm:$0xff]
        %v646 = vld [vmem:[%s451 + $0xe8] sm:$0xff]
        %v647 = vld [vmem:[%s451 + $0xf0] sm:$0xff]
        %v648 = vld [vmem:[%s451 + $0xf8] sm:$0xff]
        %v649 = vld [vmem:[%s508] sm:$0x3]
        %v651 = vlaneseq
        %v652 = vshrl.u32 %v651, 7
        %v653 = vsub.s32 0, %v652
        %v654 = vrot.slane %v649, %v653
        %v655 = vlaneseq
        %v656 = vshrl.u32 %v655, 7
        %v657 = vsub.s32 1, %v656
        %v658 = vrot.slane %v649, %v657
        %v663 = vunpack.c.l.b16 %v615
        %v664 = vunpack.c.h.b16 %v615
        %v665 = vunpack.c.l.b16 %v616
        %v666 = vunpack.c.h.b16 %v616
        %v667 = vpack.c.b16 %v665, %v663
        %v668 = vpack.c.b16 %v666, %v664
        %v703 = vunpack.c.l.b16 %v617
        %v704 = vunpack.c.h.b16 %v617
        %v705 = vunpack.c.l.b16 %v618
        %v706 = vunpack.c.h.b16 %v618
        %v707 = vunpack.c.l.b16 %v619
        %v708 = vunpack.c.h.b16 %v619
        %v709 = vunpack.c.l.b16 %v620
        %v710 = vunpack.c.h.b16 %v620
        %v711 = vunpack.c.l.b16 %v621
        %v712 = vunpack.c.h.b16 %v621
        %v713 = vunpack.c.l.b16 %v622
        %v714 = vunpack.c.h.b16 %v622
        %v715 = vunpack.c.l.b16 %v623
        %v716 = vunpack.c.h.b16 %v623
        %v717 = vunpack.c.l.b16 %v624
        %v718 = vunpack.c.h.b16 %v624
        %v719 = vunpack.c.l.b16 %v625
        %v720 = vunpack.c.h.b16 %v625
        %v721 = vunpack.c.l.b16 %v626
        %v722 = vunpack.c.h.b16 %v626
        %v723 = vunpack.c.l.b16 %v627
        %v724 = vunpack.c.h.b16 %v627
        %v725 = vunpack.c.l.b16 %v628
        %v726 = vunpack.c.h.b16 %v628
        %v727 = vunpack.c.l.b16 %v629
        %v728 = vunpack.c.h.b16 %v629
        %v729 = vunpack.c.l.b16 %v630
        %v730 = vunpack.c.h.b16 %v630
        %v731 = vunpack.c.l.b16 %v631
        %v732 = vunpack.c.h.b16 %v631
        %v733 = vunpack.c.l.b16 %v632
        %v734 = vunpack.c.h.b16 %v632
        %v735 = vunpack.c.l.b16 %v633
        %v736 = vunpack.c.h.b16 %v633
        %v737 = vunpack.c.l.b16 %v634
        %v738 = vunpack.c.h.b16 %v634
        %v739 = vunpack.c.l.b16 %v635
        %v740 = vunpack.c.h.b16 %v635
        %v741 = vunpack.c.l.b16 %v636
        %v742 = vunpack.c.h.b16 %v636
        %v743 = vunpack.c.l.b16 %v637
        %v744 = vunpack.c.h.b16 %v637
        %v745 = vunpack.c.l.b16 %v638
        %v746 = vunpack.c.h.b16 %v638
        %v747 = vunpack.c.l.b16 %v639
        %v748 = vunpack.c.h.b16 %v639
        %v749 = vunpack.c.l.b16 %v640
        %v750 = vunpack.c.h.b16 %v640
        %v751 = vunpack.c.l.b16 %v641
        %v752 = vunpack.c.h.b16 %v641
        %v753 = vunpack.c.l.b16 %v642
        %v754 = vunpack.c.h.b16 %v642
        %v755 = vunpack.c.l.b16 %v643
        %v756 = vunpack.c.h.b16 %v643
        %v757 = vunpack.c.l.b16 %v644
        %v758 = vunpack.c.h.b16 %v644
        %v759 = vunpack.c.l.b16 %v645
        %v760 = vunpack.c.h.b16 %v645
        %v761 = vunpack.c.l.b16 %v646
        %v762 = vunpack.c.h.b16 %v646
        %v763 = vunpack.c.l.b16 %v647
        %v764 = vunpack.c.h.b16 %v647
        %v765 = vunpack.c.l.b16 %v648
        %v766 = vunpack.c.h.b16 %v648
        %v767 = vpack.c.b16 %v705, %v703
        %v768 = vpack.c.b16 %v706, %v704
        %v769 = vpack.c.b16 %v709, %v707
        %v770 = vpack.c.b16 %v710, %v708
        %v771 = vpack.c.b16 %v713, %v711
        %v772 = vpack.c.b16 %v714, %v712
        %v773 = vpack.c.b16 %v717, %v715
        %v774 = vpack.c.b16 %v718, %v716
        %v775 = vpack.c.b16 %v721, %v719
        %v776 = vpack.c.b16 %v722, %v720
        %v777 = vpack.c.b16 %v725, %v723
        %v778 = vpack.c.b16 %v726, %v724
        %v779 = vpack.c.b16 %v729, %v727
        %v780 = vpack.c.b16 %v730, %v728
        %v781 = vpack.c.b16 %v733, %v731
        %v782 = vpack.c.b16 %v734, %v732
        %v783 = vpack.c.b16 %v737, %v735
        %v784 = vpack.c.b16 %v738, %v736
        %v785 = vpack.c.b16 %v741, %v739
        %v786 = vpack.c.b16 %v742, %v740
        %v787 = vpack.c.b16 %v745, %v743
        %v788 = vpack.c.b16 %v746, %v744
        %v789 = vpack.c.b16 %v749, %v747
        %v790 = vpack.c.b16 %v750, %v748
        %v791 = vpack.c.b16 %v753, %v751
        %v792 = vpack.c.b16 %v754, %v752
        %v793 = vpack.c.b16 %v757, %v755
        %v794 = vpack.c.b16 %v758, %v756
        %v795 = vpack.c.b16 %v761, %v759
        %v796 = vpack.c.b16 %v762, %v760
        %v797 = vpack.c.b16 %v765, %v763
        %v798 = vpack.c.b16 %v766, %v764
        %831 = vmatprep.subr.bf16.mxu0 %v782
        %832 = vmatpush1.bf16.msra.mxu0 %v781
        %833 = vmatprep.subr.bf16.mxu0 %v780
        %834 = vmatpush1.bf16.msra.mxu0 %v779
        %835 = vmatprep.subr.bf16.mxu0 %v778
        %836 = vmatpush1.bf16.msra.mxu0 %v777
        %837 = vmatprep.subr.bf16.mxu0 %v776
        %838 = vmatpush1.bf16.msra.mxu0 %v775
        %839 = vmatprep.subr.bf16.mxu0 %v774
        %840 = vmatpush1.bf16.msra.mxu0 %v773
        %841 = vmatprep.subr.bf16.mxu0 %v772
        %842 = vmatpush1.bf16.msra.mxu0 %v771
        %843 = vmatprep.subr.bf16.mxu0 %v770
        %844 = vmatpush1.bf16.msra.mxu0 %v769
        %845 = vmatprep.subr.bf16.mxu0 %v768
        %846 = vmatpush1.bf16.msra.mxu0 %v767
        %847 = vmatprep.subr.bf16.mxu0 %v798
        %848 = vmatpush2.bf16.msra.mxu0 %v797
        %849 = vmatprep.subr.bf16.mxu0 %v796
        %850 = vmatpush2.bf16.msra.mxu0 %v795
        %851 = vmatprep.subr.bf16.mxu0 %v794
        %852 = vmatpush2.bf16.msra.mxu0 %v793
        %853 = vmatprep.subr.bf16.mxu0 %v792
        %854 = vmatpush2.bf16.msra.mxu0 %v791
        %855 = vmatprep.subr.bf16.mxu0 %v790
        %856 = vmatpush2.bf16.msra.mxu0 %v789
        %857 = vmatprep.subr.bf16.mxu0 %v788
        %858 = vmatpush2.bf16.msra.mxu0 %v787
        %859 = vmatprep.subr.bf16.mxu0 %v786
        %860 = vmatpush2.bf16.msra.mxu0 %v785
        %861 = vmatprep.subr.bf16.mxu0 %v784
        %862 = vmatpush2.bf16.msra.mxu0 %v783
        %863 = vmatprep.mubr.bf16.mxu0 %v668
        %864 = vmatmul.mubr.bf16.gmra.mxu0 %v667
        %v865 = vpop.f32.mrf.mxu0
        %v866 = vadd.f32 %v654, %v865
        %v867 = vpop.f32.mrf.mxu0
        %v868 = vadd.f32 %v658, %v867
        %v869 = vpop.f32.mrf.mxu0
        %v870 = vadd.f32 %v654, %v869
        %v871 = vpop.f32.mrf.mxu0
        %v872 = vadd.f32 %v658, %v871
        %873 = vdwg.mxu0
        %v874 = vmul.f32 %v866, 0.5
        %v875 = vmul.f32 %v868, 0.5
        %v876 = vmul.f32 %v870, 0.5
        %v877 = vmul.f32 %v872, 0.5
        %v878 = vmul.f32 %v866, 0.70710677
        %v879 = vmul.f32 %v868, 0.70710677
        %v880 = vmul.f32 %v870, 0.70710677
        %v881 = vmul.f32 %v872, 0.70710677
        %v882 = verf.f32.pop %v878
        %v883 = verf.f32.pop %v879
        %v884 = verf.f32.pop %v880
        %v885 = verf.f32.pop %v881
        %v886 = vadd.f32 %v882, 1.0
        %v887 = vadd.f32 %v883, 1.0
        %v888 = vadd.f32 %v884, 1.0
        %v889 = vadd.f32 %v885, 1.0
        %v890 = vmul.f32 %v874, %v886
        %v891 = vmul.f32 %v875, %v887
        %v892 = vmul.f32 %v876, %v888
        %v893 = vmul.f32 %v877, %v889
        %v894 = vpack.c.bf16 %v892, %v890
        %v895 = vpack.c.bf16 %v893, %v891
        %v896 = vld [vmem:[#allocation3] sm:$0xff]
        %v897 = vld [vmem:[#allocation3 + $0x8] sm:$0xff]
        %v898 = vld [vmem:[#allocation3 + $0x10] sm:$0xff]
        %v899 = vld [vmem:[#allocation3 + $0x18] sm:$0xff]
        %v900 = vld [vmem:[%s515] sm:$0xff]
        %v901 = vld [vmem:[%s515 + $0x8] sm:$0xff]
        %v902 = vld [vmem:[%s515 + $0x10] sm:$0xff]
        %v903 = vld [vmem:[%s515 + $0x18] sm:$0xff]
        %v904 = vld [vmem:[%s515 + $0x20] sm:$0xff]
        %v905 = vld [vmem:[%s515 + $0x28] sm:$0xff]
        %v906 = vld [vmem:[%s515 + $0x30] sm:$0xff]
        %v907 = vld [vmem:[%s515 + $0x38] sm:$0xff]
        %v908 = vld [vmem:[%s515 + $0x40] sm:$0xff]
        %v909 = vld [vmem:[%s515 + $0x48] sm:$0xff]
        %v910 = vld [vmem:[%s515 + $0x50] sm:$0xff]
        %v911 = vld [vmem:[%s515 + $0x58] sm:$0xff]
        %v912 = vld [vmem:[%s515 + $0x60] sm:$0xff]
        %v913 = vld [vmem:[%s515 + $0x68] sm:$0xff]
        %v914 = vld [vmem:[%s515 + $0x70] sm:$0xff]
        %v915 = vld [vmem:[%s515 + $0x78] sm:$0xff]
        %v916 = vld [vmem:[%s515 + $0x80] sm:$0xff]
        %v917 = vld [vmem:[%s515 + $0x88] sm:$0xff]
        %v918 = vld [vmem:[%s515 + $0x90] sm:$0xff]
        %v919 = vld [vmem:[%s515 + $0x98] sm:$0xff]
        %v920 = vld [vmem:[%s515 + $0xa0] sm:$0xff]
        %v921 = vld [vmem:[%s515 + $0xa8] sm:$0xff]
        %v922 = vld [vmem:[%s515 + $0xb0] sm:$0xff]
        %v923 = vld [vmem:[%s515 + $0xb8] sm:$0xff]
        %v924 = vld [vmem:[%s515 + $0xc0] sm:$0xff]
        %v925 = vld [vmem:[%s515 + $0xc8] sm:$0xff]
        %v926 = vld [vmem:[%s515 + $0xd0] sm:$0xff]
        %v927 = vld [vmem:[%s515 + $0xd8] sm:$0xff]
        %v928 = vld [vmem:[%s515 + $0xe0] sm:$0xff]
        %v929 = vld [vmem:[%s515 + $0xe8] sm:$0xff]
        %v930 = vld [vmem:[%s515 + $0xf0] sm:$0xff]
        %v931 = vld [vmem:[%s515 + $0xf8] sm:$0xff]
        %v964 = vunpack.c.l.b16 %v900
        %v965 = vunpack.c.h.b16 %v900
        %v966 = vunpack.c.l.b16 %v901
        %v967 = vunpack.c.h.b16 %v901
        %v968 = vunpack.c.l.b16 %v902
        %v969 = vunpack.c.h.b16 %v902
        %v970 = vunpack.c.l.b16 %v903
        %v971 = vunpack.c.h.b16 %v903
        %v972 = vunpack.c.l.b16 %v904
        %v973 = vunpack.c.h.b16 %v904
        %v974 = vunpack.c.l.b16 %v905
        %v975 = vunpack.c.h.b16 %v905
        %v976 = vunpack.c.l.b16 %v906
        %v977 = vunpack.c.h.b16 %v906
        %v978 = vunpack.c.l.b16 %v907
        %v979 = vunpack.c.h.b16 %v907
        %v980 = vunpack.c.l.b16 %v908
        %v981 = vunpack.c.h.b16 %v908
        %v982 = vunpack.c.l.b16 %v909
        %v983 = vunpack.c.h.b16 %v909
        %v984 = vunpack.c.l.b16 %v910
        %v985 = vunpack.c.h.b16 %v910
        %v986 = vunpack.c.l.b16 %v911
        %v987 = vunpack.c.h.b16 %v911
        %v988 = vunpack.c.l.b16 %v912
        %v989 = vunpack.c.h.b16 %v912
        %v990 = vunpack.c.l.b16 %v913
        %v991 = vunpack.c.h.b16 %v913
        %v992 = vunpack.c.l.b16 %v914
        %v993 = vunpack.c.h.b16 %v914
        %v994 = vunpack.c.l.b16 %v915
        %v995 = vunpack.c.h.b16 %v915
        %v996 = vunpack.c.l.b16 %v916
        %v997 = vunpack.c.h.b16 %v916
        %v998 = vunpack.c.l.b16 %v917
        %v999 = vunpack.c.h.b16 %v917
        %v1000 = vunpack.c.l.b16 %v918
        %v1001 = vunpack.c.h.b16 %v918
        %v1002 = vunpack.c.l.b16 %v919
        %v1003 = vunpack.c.h.b16 %v919
        %v1004 = vunpack.c.l.b16 %v920
        %v1005 = vunpack.c.h.b16 %v920
        %v1006 = vunpack.c.l.b16 %v921
        %v1007 = vunpack.c.h.b16 %v921
        %v1008 = vunpack.c.l.b16 %v922
        %v1009 = vunpack.c.h.b16 %v922
        %v1010 = vunpack.c.l.b16 %v923
        %v1011 = vunpack.c.h.b16 %v923
        %v1012 = vunpack.c.l.b16 %v924
        %v1013 = vunpack.c.h.b16 %v924
        %v1014 = vunpack.c.l.b16 %v925
        %v1015 = vunpack.c.h.b16 %v925
        %v1016 = vunpack.c.l.b16 %v926
        %v1017 = vunpack.c.h.b16 %v926
        %v1018 = vunpack.c.l.b16 %v927
        %v1019 = vunpack.c.h.b16 %v927
        %v1020 = vunpack.c.l.b16 %v928
        %v1021 = vunpack.c.h.b16 %v928
        %v1022 = vunpack.c.l.b16 %v929
        %v1023 = vunpack.c.h.b16 %v929
        %v1024 = vunpack.c.l.b16 %v930
        %v1025 = vunpack.c.h.b16 %v930
        %v1026 = vunpack.c.l.b16 %v931
        %v1027 = vunpack.c.h.b16 %v931
        %v1028 = vpack.c.b16 %v966, %v964
        %v1029 = vpack.c.b16 %v967, %v965
        %v1030 = vpack.c.b16 %v970, %v968
        %v1031 = vpack.c.b16 %v971, %v969
        %v1032 = vpack.c.b16 %v974, %v972
        %v1033 = vpack.c.b16 %v975, %v973
        %v1034 = vpack.c.b16 %v978, %v976
        %v1035 = vpack.c.b16 %v979, %v977
        %v1036 = vpack.c.b16 %v982, %v980
        %v1037 = vpack.c.b16 %v983, %v981
        %v1038 = vpack.c.b16 %v986, %v984
        %v1039 = vpack.c.b16 %v987, %v985
        %v1040 = vpack.c.b16 %v990, %v988
        %v1041 = vpack.c.b16 %v991, %v989
        %v1042 = vpack.c.b16 %v994, %v992
        %v1043 = vpack.c.b16 %v995, %v993
        %v1044 = vpack.c.b16 %v998, %v996
        %v1045 = vpack.c.b16 %v999, %v997
        %v1046 = vpack.c.b16 %v1002, %v1000
        %v1047 = vpack.c.b16 %v1003, %v1001
        %v1048 = vpack.c.b16 %v1006, %v1004
        %v1049 = vpack.c.b16 %v1007, %v1005
        %v1050 = vpack.c.b16 %v1010, %v1008
        %v1051 = vpack.c.b16 %v1011, %v1009
        %v1052 = vpack.c.b16 %v1014, %v1012
        %v1053 = vpack.c.b16 %v1015, %v1013
        %v1054 = vpack.c.b16 %v1018, %v1016
        %v1055 = vpack.c.b16 %v1019, %v1017
        %v1056 = vpack.c.b16 %v1022, %v1020
        %v1057 = vpack.c.b16 %v1023, %v1021
        %v1058 = vpack.c.b16 %v1026, %v1024
        %v1059 = vpack.c.b16 %v1027, %v1025
        %1092 = vmatprep.subr.bf16.mxu0 %v1043
        %1093 = vmatpush1.bf16.msra.mxu0 %v1042
        %1094 = vmatprep.subr.bf16.mxu0 %v1041
        %1095 = vmatpush1.bf16.msra.mxu0 %v1040
        %1096 = vmatprep.subr.bf16.mxu0 %v1039
        %1097 = vmatpush1.bf16.msra.mxu0 %v1038
        %1098 = vmatprep.subr.bf16.mxu0 %v1037
        %1099 = vmatpush1.bf16.msra.mxu0 %v1036
        %1100 = vmatprep.subr.bf16.mxu0 %v1035
        %1101 = vmatpush1.bf16.msra.mxu0 %v1034
        %1102 = vmatprep.subr.bf16.mxu0 %v1033
        %1103 = vmatpush1.bf16.msra.mxu0 %v1032
        %1104 = vmatprep.subr.bf16.mxu0 %v1031
        %1105 = vmatpush1.bf16.msra.mxu0 %v1030
        %1106 = vmatprep.subr.bf16.mxu0 %v1029
        %1107 = vmatpush1.bf16.msra.mxu0 %v1028
        %1108 = vmatprep.subr.bf16.mxu0 %v1059
        %1109 = vmatpush2.bf16.msra.mxu0 %v1058
        %1110 = vmatprep.subr.bf16.mxu0 %v1057
        %1111 = vmatpush2.bf16.msra.mxu0 %v1056
        %1112 = vmatprep.subr.bf16.mxu0 %v1055
        %1113 = vmatpush2.bf16.msra.mxu0 %v1054
        %1114 = vmatprep.subr.bf16.mxu0 %v1053
        %1115 = vmatpush2.bf16.msra.mxu0 %v1052
        %1116 = vmatprep.subr.bf16.mxu0 %v1051
        %1117 = vmatpush2.bf16.msra.mxu0 %v1050
        %1118 = vmatprep.subr.bf16.mxu0 %v1049
        %1119 = vmatpush2.bf16.msra.mxu0 %v1048
        %1120 = vmatprep.subr.bf16.mxu0 %v1047
        %1121 = vmatpush2.bf16.msra.mxu0 %v1046
        %1122 = vmatprep.subr.bf16.mxu0 %v1045
        %1123 = vmatpush2.bf16.msra.mxu0 %v1044
        %1124 = vmatprep.mubr.bf16.mxu0 %v895
        %1125 = vmatmul.mubr.bf16.gmra.mxu0 %v894
        %v1126 = vpop.f32.mrf.mxu0
        %v1127 = vadd.f32 0.0, %v1126
        %v1128 = vpop.f32.mrf.mxu0
        %v1129 = vadd.f32 0.0, %v1128
        %v1130 = vpop.f32.mrf.mxu0
        %v1131 = vadd.f32 0.0, %v1130
        %v1132 = vpop.f32.mrf.mxu0
        %v1133 = vadd.f32 0.0, %v1132
        %1134 = vdwg.mxu0
        %v1135 = vadd.f32 %v896, %v1127
        %v1136 = vadd.f32 %v897, %v1129
        %v1137 = vadd.f32 %v898, %v1131
        %v1138 = vadd.f32 %v899, %v1133
        %1139 = vst [vmem:[#allocation3] sm:$0xff] %v1135
        %1140 = vst [vmem:[#allocation3 + $0x8] sm:$0xff] %v1136
        %1141 = vst [vmem:[#allocation3 + $0x10] sm:$0xff] %v1137
        %1142 = vst [vmem:[#allocation3 + $0x18] sm:$0xff] %v1138
        %p1143 = scmp.eq.s32.totalorder %s23, 1
        // Predicated region
        $region91: #{_lambda_.11} parent=81 // pred_check
          %p1144 = pneg %p1143
        $region92: #{_lambda_.11} parent=81 // pred_check_branch
          %1146 = sbr.rel (%p1144) target = $region94
        $region93: #{_lambda_.11} parent=81 // pred_region
          %v1147 = vld [vmem:[#allocation3] sm:$0xff]
          %v1148 = vld [vmem:[#allocation3 + $0x8] sm:$0xff]
          %v1149 = vld [vmem:[#allocation3 + $0x10] sm:$0xff]
          %v1150 = vld [vmem:[#allocation3 + $0x18] sm:$0xff]
          %v1151 = vld [vmem:[%s6] sm:$0x3]
          %v1153 = vlaneseq
          %v1154 = vshrl.u32 %v1153, 7
          %v1155 = vsub.s32 0, %v1154
          %v1156 = vrot.slane %v1151, %v1155
          %v1157 = vlaneseq
          %v1158 = vshrl.u32 %v1157, 7
          %v1159 = vsub.s32 1, %v1158
          %v1160 = vrot.slane %v1151, %v1159
          %v1163 = vadd.f32 %v1147, %v1156
          %v1164 = vadd.f32 %v1148, %v1160
          %v1165 = vadd.f32 %v1149, %v1156
          %v1166 = vadd.f32 %v1150, %v1160
          %v1167 = vld [vmem:[%s502] sm:$0xff]
          %v1168 = vld [vmem:[%s502 + $0x8] sm:$0xff]
          %v1169 = vld [vmem:[%s502 + $0x10] sm:$0xff]
          %v1170 = vld [vmem:[%s502 + $0x18] sm:$0xff]
          %v1171 = vadd.f32 %v1167, %v1163
          %v1172 = vadd.f32 %v1168, %v1164
          %v1173 = vadd.f32 %v1169, %v1165
          %v1174 = vadd.f32 %v1170, %v1166
          %1175 = vst [vmem:[%s522] sm:$0xff] %v1171
          %1176 = vst [vmem:[%s522 + $0x8] sm:$0xff] %v1172
          %1177 = vst [vmem:[%s522 + $0x10] sm:$0xff] %v1173
          %1178 = vst [vmem:[%s522 + $0x18] sm:$0xff] %v1174
        $region94: #{_lambda_.11} parent=81 // pred_fallthru
          _
        %s1179 = smul.u32 2, %s22
        %p1180 = scmp.lt.s32.totalorder %s1179, 3
        %s1181 = scalar_select %p1180, %s1179, 3
        %s1182 = smul.addr %s1181, 2
        %s1183 = smul.addr %s1182, 8
        %s1184 = scalar_lea.vmem %s7, %s1183
        // Predicated region
        $region95: #{_lambda_.11} parent=81 // pred_check
          %p1185 = pneg %p215
        $region96: #{_lambda_.11} parent=81 // pred_check_branch
          %1187 = sbr.rel (%p1185) target = $region98
        $region97: #{_lambda_.11} parent=81 // pred_region
          %s1188 = smul.u32 2, %s22
        $region98: #{_lambda_.11} parent=81 // pred_fallthru
          _
      $region82: #{_lambda_.11} parent=5 // pred_fallthru
        _
      %p1189 = scmp.le.s32.totalorder 2, %s13
      // Predicated region
      $region99: #{_lambda_.11} parent=5 // pred_check
        %p1190 = pneg %p1189
      $region100: #{_lambda_.11} parent=5 // pred_check_branch
        %1192 = sbr.rel (%p1190) target = $region102
      $region101: #{_lambda_.11} parent=5 // pred_region
        %s1193 = ssub.s32 %s13, 2
        // Predicated region
        $region103: #{_lambda_.11} parent=101 // pred_check
          %p1194 = pneg %p221
        $region104: #{_lambda_.11} parent=101 // pred_check_branch
          %1196 = sbr.rel (%p1194) target = $region106
        $region105: #{_lambda_.11} parent=101 // pred_region
          %s1197 = smul.u32 2, %s24
          %p1198 = scmp.lt.s32.totalorder %s1197, 3
          %s1199 = scalar_select %p1198, %s1197, 3
          %s1200 = smul.addr %s1199, 2
          %s1201 = smul.addr %s1200, 8
          %s1202 = scalar_lea.vmem %s7, %s1201
        $region106: #{_lambda_.11} parent=101 // pred_fallthru
          _
      $region102: #{_lambda_.11} parent=5 // pred_fallthru
        _
    $region6: #{_lambda_.11} parent=1 // loop_footer
      %s17 = sadd.s32 1, %s13
    $region7: #{_lambda_.11} parent=1 // loop_footer_branch
      %12 = sbr.rel target = $region3
    $region8: #{_lambda_.11} parent=1 // loop_exit
      _

// kernel: _lambda_.9
$region0: #{_lambda_.9}
  #allocation0 [shape = 'u32[]', space=smem, size = 0x4, offset = 0x4, fixed_abs, tag = 'smem constant byte address 0x4 - core index']
  #allocation1 [shape = 'u32[144,128]{1,0:T(1,128)}', space=vmem, size = 0x12000, scoped, tag = 'internal scratch']
  #allocation2 [shape = 'f32[16,256]{1,0:T(8,128)}', space=vmem, size = 0x4000, scoped, tag = 'scratch operand']
  %s0 = inlined_call_operand.vmem [shape: f32[32,256], index: 0, kind: input, shape index: {}, may-alias: {0,7}]
  %s1 = inlined_call_operand.vmem [shape: f32[1,256], index: 1, kind: input, shape index: {}]
  %s2 = inlined_call_operand.vmem [shape: f32[1,256], index: 2, kind: input, shape index: {}]
  %s3 = inlined_call_operand.hbm [shape: bf16[256,768], index: 3, kind: input, shape index: {}]
  %s4 = inlined_call_operand.vmem [shape: f32[1,768], index: 4, kind: input, shape index: {}]
  %s5 = inlined_call_operand.vmem [shape: bf16[256,256], index: 5, kind: input, shape index: {}]
  %s6 = inlined_call_operand.vmem [shape: f32[1,256], index: 6, kind: input, shape index: {}]
  %s7 = inlined_call_operand.vmem [shape: f32[32,256], index: 7, kind: output, shape index: {}, may-alias: {0,7}]
  %s8 = sld [smem:[#allocation0]]
  $region65: #{_lambda_.9} parent=0
    _
  %s10 = ssub.s32 1, %s8
  %s11 = scalar_select 0, %s10, %s8
  $region1: #{_lambda_.9} parent=0
    #allocation3 [shape = 'u8[393216]{0}', space=vmem, size = 0x60000, scoped, tag = 'input window, operand 3, single buffered']
    #allocation4 [shape = 's32[2]{0}', space=sflag, size = 0x8, scoped, tag = 'scoped memory for _lambda_.9']
    %12 = vsyncpa [#allocation4], 0
    loop: start=0, step=1, limit=4
    $region2: #{_lambda_.9} parent=1 // loop_pre_header
      _
    $region3: #{_lambda_.9} parent=1 // loop_header
      %s14 = sphi 0, %s18
      %p15 = scmp.ge.s32.totalorder %s14, 4
      %s24 = sphi 0, %s26
      %s27 = sphi 0, %s24
      %s28 = sphi 0, %s27
      %s44 = sphi 0, %s28
      %s48 = sphi 0, %s48
      %s50 = sphi 0, %s48
      %s51 = sphi 0, %s50
      %s65 = sphi 0, %s51
      %s69 = sphi 0, %s69
      %s71 = sphi 0, %s69
      %s72 = sphi 0, %s71
      %s86 = sphi 0, %s72
      %s90 = sphi 0, %s90
      %s92 = sphi 0, %s90
      %s93 = sphi 0, %s92
      %s107 = sphi 0, %s93
      %s111 = sphi 0, %s111
      %s113 = sphi 0, %s111
      %s114 = sphi 0, %s113
      %s128 = sphi 0, %s114
      %s132 = sphi 0, %s132
      %s134 = sphi 0, %s132
      %s135 = sphi 0, %s134
      %s149 = sphi 0, %s135
      %s153 = sphi 0, %s153
      %s155 = sphi 0, %s153
      %s156 = sphi 0, %s155
      %s170 = sphi 0, %s156
      %s176 = sphi 0, %s178
      %s179 = sphi 0, %s176
      %s180 = sphi 0, %s179
      %s196 = sphi 0, %s180
    $region4: #{_lambda_.9} parent=1 // loop_header_branch
      %17 = sbr.rel (%p15) target = $region8
    $region5: #{_lambda_.9} parent=1 // loop_body
      %s19 = ssub.s32 %s14, 1
      %s20 = ssub.s32 %s14, 2
      %s21 = sadd.s32 %s14, 1
      %s22 = ssub.s32 %s14, %s21
      %p23 = scmp.eq.s32.totalorder %s22, 0
      %s25 = sadd.s32 %s24, 1
      %s26 = scalar_select %p23, %s24, %s25
      %p29 = pneg %p23
      %p30 = scmp.eq.s32.totalorder %s14, 1
      %p31 = por %p29, %p30
      %p32 = scmp.ne.s32.totalorder %s24, %s27
      %p33 = scmp.eq.s32.totalorder %s14, 0
      %p34 = por %p32, %p33
      %p35 = scmp.ne.s32.totalorder %s24, %s27
      %p36 = scmp.eq.s32.totalorder %s19, 1
      %p37 = por %p35, %p36
      %p38 = scmp.ne.s32.totalorder %s27, %s28
      %p39 = scmp.eq.s32.totalorder %s19, 0
      %p40 = por %p38, %p39
      %p41 = scmp.ne.s32.totalorder %s27, %s28
      %p42 = scmp.eq.s32.totalorder %s20, 1
      %p43 = por %p41, %p42
      %p45 = scmp.ne.s32.totalorder %s28, %s44
      %p46 = scmp.eq.s32.totalorder %s20, 0
      %p47 = por %p45, %p46
      %s49 = sadd.s32 %s48, 1
      %p52 = scmp.eq.s32.totalorder %s14, 1
      %p53 = scmp.ne.s32.totalorder %s48, %s50
      %p54 = scmp.eq.s32.totalorder %s14, 0
      %p55 = por %p53, %p54
      %p56 = scmp.ne.s32.totalorder %s48, %s50
      %p57 = scmp.eq.s32.totalorder %s19, 1
      %p58 = por %p56, %p57
      %p59 = scmp.ne.s32.totalorder %s50, %s51
      %p60 = scmp.eq.s32.totalorder %s19, 0
      %p61 = por %p59, %p60
      %p62 = scmp.ne.s32.totalorder %s50, %s51
      %p63 = scmp.eq.s32.totalorder %s20, 1
      %p64 = por %p62, %p63
      %p66 = scmp.ne.s32.totalorder %s51, %s65
      %p67 = scmp.eq.s32.totalorder %s20, 0
      %p68 = por %p66, %p67
      %s70 = sadd.s32 %s69, 1
      %p73 = scmp.eq.s32.totalorder %s14, 1
      %p74 = scmp.ne.s32.totalorder %s69, %s71
      %p75 = scmp.eq.s32.totalorder %s14, 0
      %p76 = por %p74, %p75
      %p77 = scmp.ne.s32.totalorder %s69, %s71
      %p78 = scmp.eq.s32.totalorder %s19, 1
      %p79 = por %p77, %p78
      %p80 = scmp.ne.s32.totalorder %s71, %s72
      %p81 = scmp.eq.s32.totalorder %s19, 0
      %p82 = por %p80, %p81
      %p83 = scmp.ne.s32.totalorder %s71, %s72
      %p84 = scmp.eq.s32.totalorder %s20, 1
      %p85 = por %p83, %p84
      %p87 = scmp.ne.s32.totalorder %s72, %s86
      %p88 = scmp.eq.s32.totalorder %s20, 0
      %p89 = por %p87, %p88
      %s91 = sadd.s32 %s90, 1
      %p94 = scmp.eq.s32.totalorder %s14, 1
      %p95 = scmp.ne.s32.totalorder %s90, %s92
      %p96 = scmp.eq.s32.totalorder %s14, 0
      %p97 = por %p95, %p96
      %p98 = scmp.ne.s32.totalorder %s90, %s92
      %p99 = scmp.eq.s32.totalorder %s19, 1
      %p100 = por %p98, %p99
      %p101 = scmp.ne.s32.totalorder %s92, %s93
      %p102 = scmp.eq.s32.totalorder %s19, 0
      %p103 = por %p101, %p102
      %p104 = scmp.ne.s32.totalorder %s92, %s93
      %p105 = scmp.eq.s32.totalorder %s20, 1
      %p106 = por %p104, %p105
      %p108 = scmp.ne.s32.totalorder %s93, %s107
      %p109 = scmp.eq.s32.totalorder %s20, 0
      %p110 = por %p108, %p109
      %s112 = sadd.s32 %s111, 1
      %p115 = scmp.eq.s32.totalorder %s14, 1
      %p116 = scmp.ne.s32.totalorder %s111, %s113
      %p117 = scmp.eq.s32.totalorder %s14, 0
      %p118 = por %p116, %p117
      %p119 = scmp.ne.s32.totalorder %s111, %s113
      %p120 = scmp.eq.s32.totalorder %s19, 1
      %p121 = por %p119, %p120
      %p122 = scmp.ne.s32.totalorder %s113, %s114
      %p123 = scmp.eq.s32.totalorder %s19, 0
      %p124 = por %p122, %p123
      %p125 = scmp.ne.s32.totalorder %s113, %s114
      %p126 = scmp.eq.s32.totalorder %s20, 1
      %p127 = por %p125, %p126
      %p129 = scmp.ne.s32.totalorder %s114, %s128
      %p130 = scmp.eq.s32.totalorder %s20, 0
      %p131 = por %p129, %p130
      %s133 = sadd.s32 %s132, 1
      %p136 = scmp.eq.s32.totalorder %s14, 1
      %p137 = scmp.ne.s32.totalorder %s132, %s134
      %p138 = scmp.eq.s32.totalorder %s14, 0
      %p139 = por %p137, %p138
      %p140 = scmp.ne.s32.totalorder %s132, %s134
      %p141 = scmp.eq.s32.totalorder %s19, 1
      %p142 = por %p140, %p141
      %p143 = scmp.ne.s32.totalorder %s134, %s135
      %p144 = scmp.eq.s32.totalorder %s19, 0
      %p145 = por %p143, %p144
      %p146 = scmp.ne.s32.totalorder %s134, %s135
      %p147 = scmp.eq.s32.totalorder %s20, 1
      %p148 = por %p146, %p147
      %p150 = scmp.ne.s32.totalorder %s135, %s149
      %p151 = scmp.eq.s32.totalorder %s20, 0
      %p152 = por %p150, %p151
      %s154 = sadd.s32 %s153, 1
      %p157 = scmp.eq.s32.totalorder %s14, 1
      %p158 = scmp.ne.s32.totalorder %s153, %s155
      %p159 = scmp.eq.s32.totalorder %s14, 0
      %p160 = por %p158, %p159
      %p161 = scmp.ne.s32.totalorder %s153, %s155
      %p162 = scmp.eq.s32.totalorder %s19, 1
      %p163 = por %p161, %p162
      %p164 = scmp.ne.s32.totalorder %s155, %s156
      %p165 = scmp.eq.s32.totalorder %s19, 0
      %p166 = por %p164, %p165
      %p167 = scmp.ne.s32.totalorder %s155, %s156
      %p168 = scmp.eq.s32.totalorder %s20, 1
      %p169 = por %p167, %p168
      %p171 = scmp.ne.s32.totalorder %s156, %s170
      %p172 = scmp.eq.s32.totalorder %s20, 0
      %p173 = por %p171, %p172
      %s174 = ssub.s32 %s14, %s21
      %p175 = scmp.eq.s32.totalorder %s174, 0
      %s177 = sadd.s32 %s176, 1
      %s178 = scalar_select %p175, %s176, %s177
      %p181 = pneg %p175
      %p182 = scmp.eq.s32.totalorder %s14, 1
      %p183 = por %p181, %p182
      %p184 = scmp.ne.s32.totalorder %s176, %s179
      %p185 = scmp.eq.s32.totalorder %s14, 0
      %p186 = por %p184, %p185
      %p187 = scmp.ne.s32.totalorder %s176, %s179
      %p188 = scmp.eq.s32.totalorder %s19, 1
      %p189 = por %p187, %p188
      %p190 = scmp.ne.s32.totalorder %s179, %s180
      %p191 = scmp.eq.s32.totalorder %s19, 0
      %p192 = por %p190, %p191
      %p193 = scmp.ne.s32.totalorder %s179, %s180
      %p194 = scmp.eq.s32.totalorder %s20, 1
      %p195 = por %p193, %p194
      %p197 = scmp.ne.s32.totalorder %s180, %s196
      %p198 = scmp.eq.s32.totalorder %s20, 0
      %p199 = por %p197, %p198
      %p200 = scmp.le.s32.totalorder 1, %s14
      %p201 = scmp.lt.s32.totalorder %s14, 3
      %p202 = pnand %p200, %p201
      %p203 = pneg %p202
      // Predicated region
      $region9: #{_lambda_.9} parent=5 // pred_check
        _
      $region10: #{_lambda_.9} parent=5 // pred_check_branch
        %205 = sbr.rel (%p202) target = $region12
      $region11: #{_lambda_.9} parent=5 // pred_region
        %s206 = ssub.s32 %s14, 1
        // Predicated region
        $region13: #{_lambda_.9} parent=11 // pred_check
          %p207 = pneg %p61
        $region14: #{_lambda_.9} parent=11 // pred_check_branch
          %209 = sbr.rel (%p207) target = $region16
        $region15: #{_lambda_.9} parent=11 // pred_region
          _
        $region16: #{_lambda_.9} parent=11 // pred_fallthru
          _
        // Predicated region
        $region17: #{_lambda_.9} parent=11 // pred_check
          %p210 = pneg %p82
        $region18: #{_lambda_.9} parent=11 // pred_check_branch
          %212 = sbr.rel (%p210) target = $region20
        $region19: #{_lambda_.9} parent=11 // pred_region
          _
        $region20: #{_lambda_.9} parent=11 // pred_fallthru
          _
        // Predicated region
        $region21: #{_lambda_.9} parent=11 // pred_check
          %p213 = pneg %p103
        $region22: #{_lambda_.9} parent=11 // pred_check_branch
          %215 = sbr.rel (%p213) target = $region24
        $region23: #{_lambda_.9} parent=11 // pred_region
          %s217 = ssub.s32 12288, 12288
          %218 = vsyncadd [#allocation4], %s217
          %s219 = sshll.u32 [#allocation3], 4
          %s220 = int_to_ptr.vmem [resolvable:$true] %s219
          %225 = dma.hbm_to_vmem [thread:$0]  %s3, 12288, %s220, [#allocation4], 384, 384, 24
        $region24: #{_lambda_.9} parent=11 // pred_fallthru
          _
        // Predicated region
        $region25: #{_lambda_.9} parent=11 // pred_check
          %p226 = pneg %p124
        $region26: #{_lambda_.9} parent=11 // pred_check_branch
          %228 = sbr.rel (%p226) target = $region28
        $region27: #{_lambda_.9} parent=11 // pred_region
          _
        $region28: #{_lambda_.9} parent=11 // pred_fallthru
          _
        // Predicated region
        $region29: #{_lambda_.9} parent=11 // pred_check
          %p229 = pneg %p145
        $region30: #{_lambda_.9} parent=11 // pred_check_branch
          %231 = sbr.rel (%p229) target = $region32
        $region31: #{_lambda_.9} parent=11 // pred_region
          _
        $region32: #{_lambda_.9} parent=11 // pred_fallthru
          _
        // Predicated region
        $region33: #{_lambda_.9} parent=11 // pred_check
          %p232 = pneg %p166
        $region34: #{_lambda_.9} parent=11 // pred_check_branch
          %234 = sbr.rel (%p232) target = $region36
        $region35: #{_lambda_.9} parent=11 // pred_region
          _
        $region36: #{_lambda_.9} parent=11 // pred_fallthru
          _
      $region12: #{_lambda_.9} parent=5 // pred_fallthru
        _
      %p235 = scmp.lt.s32.totalorder %s14, 2
      // Predicated region
      $region37: #{_lambda_.9} parent=5 // pred_check
        %p236 = pneg %p235
      $region38: #{_lambda_.9} parent=5 // pred_check_branch
        %238 = sbr.rel (%p236) target = $region40
      $region39: #{_lambda_.9} parent=5 // pred_region
        // Predicated region
        $region41: #{_lambda_.9} parent=39 // pred_check
          %p239 = pneg %p34
        $region42: #{_lambda_.9} parent=39 // pred_check_branch
          %241 = sbr.rel (%p239) target = $region44
        $region43: #{_lambda_.9} parent=39 // pred_region
          %s242 = smul.u32 2, %s14
          %p243 = scmp.lt.s32.totalorder %s242, 3
          %s244 = scalar_select %p243, %s242, 3
          %s245 = smul.addr %s244, 2
          %s246 = smul.addr %s245, 8
          %s247 = scalar_lea.vmem %s0, %s246
          %s248 = smul.u32 2, %s14
        $region44: #{_lambda_.9} parent=39 // pred_fallthru
          _
      $region40: #{_lambda_.9} parent=5 // pred_fallthru
        _
      %p249 = scmp.le.s32.totalorder 1, %s14
      %p250 = scmp.lt.s32.totalorder %s14, 3
      %p251 = pnand %p249, %p250
      %p252 = pneg %p251
      // Predicated region
      $region45: #{_lambda_.9} parent=5 // pred_check
        _
      $region46: #{_lambda_.9} parent=5 // pred_check_branch
        %254 = sbr.rel (%p251) target = $region48
      $region47: #{_lambda_.9} parent=5 // pred_region
        %s255 = ssub.s32 %s14, 1
        // Predicated region
        $region49: #{_lambda_.9} parent=47 // pred_check
          %p256 = pneg %p103
        $region50: #{_lambda_.9} parent=47 // pred_check_branch
          %258 = sbr.rel (%p256) target = $region52
        $region51: #{_lambda_.9} parent=47 // pred_region
          %259 = dma.done [#allocation4], 12288
        $region52: #{_lambda_.9} parent=47 // pred_fallthru
          _
        %s260 = smul.u32 2, %s19
        %p261 = scmp.lt.s32.totalorder %s260, 3
        %s262 = scalar_select %p261, %s260, 3
        %s263 = smul.addr %s262, 2
        %s264 = smul.addr %s263, 8
        %s265 = scalar_lea.vmem %s0, %s264
        %p266 = pneg %p40
        %p267 = pneg %p37
        %p268 = pneg %p61
        %p269 = pneg %p58
        %p270 = pneg %p82
        %p271 = pneg %p79
        %p272 = pneg %p103
        %p273 = pneg %p100
        %p274 = pneg %p124
        %p275 = pneg %p121
        %p276 = pneg %p145
        %p277 = pneg %p142
        %p278 = pneg %p166
        %p279 = pneg %p163
        %p280 = pneg %p192
        %p281 = pneg %p189
        %s282 = smul.u32 2, %s19
        %p283 = scmp.lt.s32.totalorder %s282, 3
        %s284 = scalar_select %p283, %s282, 3
        %s285 = smul.addr %s284, 2
        %s286 = smul.addr %s285, 8
        %s287 = scalar_lea.vmem %s7, %s286
        %s288 = smul.u32 2, %s19
        %p289 = scmp.lt.s32.totalorder %s288, 3
        %s290 = scalar_select %p289, %s288, 3
        %s291 = smul.addr %s290, 2
        %s292 = smul.addr %s291, 8
        %s293 = scalar_lea.vmem %s0, %s292
        %s294 = smul.u32 2, %s19
        %s295 = smul.u32 2, %s19
        %p296 = scmp.lt.s32.totalorder %s295, 3
        %s297 = scalar_select %p296, %s295, 3
        %s298 = smul.addr %s297, 2
        %s299 = smul.addr %s298, 8
        %s300 = scalar_lea.vmem %s7, %s299
        %s301 = smul.u32 2, %s19
        %v303 = vld [vmem:[%s293] sm:$0xff]
        %v304 = vld [vmem:[%s293 + $0x8] sm:$0xff]
        %v305 = vld [vmem:[%s293 + $0x10] sm:$0xff]
        %v306 = vld [vmem:[%s293 + $0x18] sm:$0xff]
        %v307 = vld [vmem:[%s1] sm:$0x3]
        %v308 = vld [vmem:[%s2] sm:$0x3]
        %v309 = vadd.f32 %v303, %v304
        %310 = vadd.xlane.f32.xlu0 %v309
        %v311 = vpop.xlane.xlu0 %310
        %v312 = vadd.f32 %v305, %v306
        %313 = vadd.xlane.f32.xlu0 %v312
        %v314 = vpop.xlane.xlu0 %313
        %v315 = vrcp.pop 256.0
        %v316 = vmul.f32 %v311, %v315
        %v317 = vmul.f32 %v314, %v315
        %v318 = vsub.f32 %v303, %v316
        %v319 = vsub.f32 %v304, %v316
        %v320 = vsub.f32 %v305, %v317
        %v321 = vsub.f32 %v306, %v317
        %v322 = vmul.f32 %v318, %v318
        %v323 = vmul.f32 %v319, %v319
        %v324 = vmul.f32 %v320, %v320
        %v325 = vmul.f32 %v321, %v321
        %v326 = vadd.f32 %v322, %v323
        %327 = vadd.xlane.f32.xlu0 %v326
        %v328 = vpop.xlane.xlu0 %327
        %v329 = vadd.f32 %v324, %v325
        %330 = vadd.xlane.f32.xlu0 %v329
        %v331 = vpop.xlane.xlu0 %330
        %v332 = vmul.f32 %v328, %v315
        %v333 = vmul.f32 %v331, %v315
        %v334 = vadd.f32 %v332, 1e-05
        %v335 = vadd.f32 %v333, 1e-05
        %v336 = vrsqrt.pop %v334
        %v337 = vrsqrt.pop %v335
        %v338 = vmul.f32 %v318, %v336
        %v339 = vmul.f32 %v319, %v336
        %v340 = vmul.f32 %v320, %v337
        %v341 = vmul.f32 %v321, %v337
        %v343 = vlaneseq
        %v344 = vshrl.u32 %v343, 7
        %v345 = vsub.s32 0, %v344
        %v346 = vrot.slane %v307, %v345
        %v347 = vlaneseq
        %v348 = vshrl.u32 %v347, 7
        %v349 = vsub.s32 1, %v348
        %v350 = vrot.slane %v307, %v349
        %v353 = vmul.f32 %v338, %v346
        %v354 = vmul.f32 %v339, %v350
        %v355 = vmul.f32 %v340, %v346
        %v356 = vmul.f32 %v341, %v350
        %v358 = vlaneseq
        %v359 = vshrl.u32 %v358, 7
        %v360 = vsub.s32 0, %v359
        %v361 = vrot.slane %v308, %v360
        %v362 = vlaneseq
        %v363 = vshrl.u32 %v362, 7
        %v364 = vsub.s32 1, %v363
        %v365 = vrot.slane %v308, %v364
        %v368 = vadd.f32 %v353, %v361
        %v369 = vadd.f32 %v354, %v365
        %v370 = vadd.f32 %v355, %v361
        %v371 = vadd.f32 %v356, %v365
        %v372 = vpack.c.bf16 %v370, %v368
        %v373 = vpack.c.bf16 %v371, %v369
        %v374 = vld [vmem:[#allocation3] sm:$0xff]
        %v375 = vld [vmem:[#allocation3 + $0x8] sm:$0xff]
        %v376 = vld [vmem:[#allocation3 + $0x10] sm:$0xff]
        %v377 = vld [vmem:[#allocation3 + $0x18] sm:$0xff]
        %v378 = vld [vmem:[#allocation3 + $0x20] sm:$0xff]
        %v379 = vld [vmem:[#allocation3 + $0x28] sm:$0xff]
        %v380 = vld [vmem:[#allocation3 + $0x30] sm:$0xff]
        %v381 = vld [vmem:[#allocation3 + $0x38] sm:$0xff]
        %v382 = vld [vmem:[#allocation3 + $0x40] sm:$0xff]
        %v383 = vld [vmem:[#allocation3 + $0x48] sm:$0xff]
        %v384 = vld [vmem:[#allocation3 + $0x50] sm:$0xff]
        %v385 = vld [vmem:[#allocation3 + $0x58] sm:$0xff]
        %v386 = vld [vmem:[#allocation3 + $0x60] sm:$0xff]
        %v387 = vld [vmem:[#allocation3 + $0x68] sm:$0xff]
        %v388 = vld [vmem:[#allocation3 + $0x70] sm:$0xff]
        %v389 = vld [vmem:[#allocation3 + $0x78] sm:$0xff]
        %v390 = vld [vmem:[#allocation3 + $0x80] sm:$0xff]
        %v391 = vld [vmem:[#allocation3 + $0x88] sm:$0xff]
        %v392 = vld [vmem:[#allocation3 + $0x90] sm:$0xff]
        %v393 = vld [vmem:[#allocation3 + $0x98] sm:$0xff]
        %v394 = vld [vmem:[#allocation3 + $0xa0] sm:$0xff]
        %v395 = vld [vmem:[#allocation3 + $0xa8] sm:$0xff]
        %v396 = vld [vmem:[#allocation3 + $0xb0] sm:$0xff]
        %v397 = vld [vmem:[#allocation3 + $0xb8] sm:$0xff]
        %v398 = vld [vmem:[#allocation3 + $0xc0] sm:$0xff]
        %v399 = vld [vmem:[#allocation3 + $0xc8] sm:$0xff]
        %v400 = vld [vmem:[#allocation3 + $0xd0] sm:$0xff]
        %v401 = vld [vmem:[#allocation3 + $0xd8] sm:$0xff]
        %v402 = vld [vmem:[#allocation3 + $0xe0] sm:$0xff]
        %v403 = vld [vmem:[#allocation3 + $0xe8] sm:$0xff]
        %v404 = vld [vmem:[#allocation3 + $0xf0] sm:$0xff]
        %v405 = vld [vmem:[#allocation3 + $0xf8] sm:$0xff]
        %v406 = vld [vmem:[#allocation3 + $0x100] sm:$0xff]
        %v407 = vld [vmem:[#allocation3 + $0x108] sm:$0xff]
        %v408 = vld [vmem:[#allocation3 + $0x110] sm:$0xff]
        %v409 = vld [vmem:[#allocation3 + $0x118] sm:$0xff]
        %v410 = vld [vmem:[#allocation3 + $0x120] sm:$0xff]
        %v411 = vld [vmem:[#allocation3 + $0x128] sm:$0xff]
        %v412 = vld [vmem:[#allocation3 + $0x130] sm:$0xff]
        %v413 = vld [vmem:[#allocation3 + $0x138] sm:$0xff]
        %v414 = vld [vmem:[#allocation3 + $0x140] sm:$0xff]
        %v415 = vld [vmem:[#allocation3 + $0x148] sm:$0xff]
        %v416 = vld [vmem:[#allocation3 + $0x150] sm:$0xff]
        %v417 = vld [vmem:[#allocation3 + $0x158] sm:$0xff]
        %v418 = vld [vmem:[#allocation3 + $0x160] sm:$0xff]
        %v419 = vld [vmem:[#allocation3 + $0x168] sm:$0xff]
        %v420 = vld [vmem:[#allocation3 + $0x170] sm:$0xff]
        %v421 = vld [vmem:[#allocation3 + $0x178] sm:$0xff]
        %v422 = vld [vmem:[#allocation3 + $0x180] sm:$0xff]
        %v423 = vld [vmem:[#allocation3 + $0x188] sm:$0xff]
        %v424 = vld [vmem:[#allocation3 + $0x190] sm:$0xff]
        %v425 = vld [vmem:[#allocation3 + $0x198] sm:$0xff]
        %v426 = vld [vmem:[#allocation3 + $0x1a0] sm:$0xff]
        %v427 = vld [vmem:[#allocation3 + $0x1a8] sm:$0xff]
        %v428 = vld [vmem:[#allocation3 + $0x1b0] sm:$0xff]
        %v429 = vld [vmem:[#allocation3 + $0x1b8] sm:$0xff]
        %v430 = vld [vmem:[#allocation3 + $0x1c0] sm:$0xff]
        %v431 = vld [vmem:[#allocation3 + $0x1c8] sm:$0xff]
        %v432 = vld [vmem:[#allocation3 + $0x1d0] sm:$0xff]
        %v433 = vld [vmem:[#allocation3 + $0x1d8] sm:$0xff]
        %v434 = vld [vmem:[#allocation3 + $0x1e0] sm:$0xff]
        %v435 = vld [vmem:[#allocation3 + $0x1e8] sm:$0xff]
        %v436 = vld [vmem:[#allocation3 + $0x1f0] sm:$0xff]
        %v437 = vld [vmem:[#allocation3 + $0x1f8] sm:$0xff]
        %v438 = vld [vmem:[#allocation3 + $0x200] sm:$0xff]
        %v439 = vld [vmem:[#allocation3 + $0x208] sm:$0xff]
        %v440 = vld [vmem:[#allocation3 + $0x210] sm:$0xff]
        %v441 = vld [vmem:[#allocation3 + $0x218] sm:$0xff]
        %v442 = vld [vmem:[#allocation3 + $0x220] sm:$0xff]
        %v443 = vld [vmem:[#allocation3 + $0x228] sm:$0xff]
        %v444 = vld [vmem:[#allocation3 + $0x230] sm:$0xff]
        %v445 = vld [vmem:[#allocation3 + $0x238] sm:$0xff]
        %v446 = vld [vmem:[#allocation3 + $0x240] sm:$0xff]
        %v447 = vld [vmem:[#allocation3 + $0x248] sm:$0xff]
        %v448 = vld [vmem:[#allocation3 + $0x250] sm:$0xff]
        %v449 = vld [vmem:[#allocation3 + $0x258] sm:$0xff]
        %v450 = vld [vmem:[#allocation3 + $0x260] sm:$0xff]
        %v451 = vld [vmem:[#allocation3 + $0x268] sm:$0xff]
        %v452 = vld [vmem:[#allocation3 + $0x270] sm:$0xff]
        %v453 = vld [vmem:[#allocation3 + $0x278] sm:$0xff]
        %v454 = vld [vmem:[#allocation3 + $0x280] sm:$0xff]
        %v455 = vld [vmem:[#allocation3 + $0x288] sm:$0xff]
        %v456 = vld [vmem:[#allocation3 + $0x290] sm:$0xff]
        %v457 = vld [vmem:[#allocation3 + $0x298] sm:$0xff]
        %v458 = vld [vmem:[#allocation3 + $0x2a0] sm:$0xff]
        %v459 = vld [vmem:[#allocation3 + $0x2a8] sm:$0xff]
        %v460 = vld [vmem:[#allocation3 + $0x2b0] sm:$0xff]
        %v461 = vld [vmem:[#allocation3 + $0x2b8] sm:$0xff]
        %v462 = vld [vmem:[#allocation3 + $0x2c0] sm:$0xff]
        %v463 = vld [vmem:[#allocation3 + $0x2c8] sm:$0xff]
        %v464 = vld [vmem:[#allocation3 + $0x2d0] sm:$0xff]
        %v465 = vld [vmem:[#allocation3 + $0x2d8] sm:$0xff]
        %v466 = vld [vmem:[#allocation3 + $0x2e0] sm:$0xff]
        %v467 = vld [vmem:[#allocation3 + $0x2e8] sm:$0xff]
        %v468 = vld [vmem:[#allocation3 + $0x2f0] sm:$0xff]
        %v469 = vld [vmem:[#allocation3 + $0x2f8] sm:$0xff]
        %v470 = vld [vmem:[%s4] sm:$0x3f]
        %v472 = vlaneseq
        %v473 = vshrl.u32 %v472, 7
        %v474 = vsub.s32 0, %v473
        %v475 = vrot.slane %v470, %v474
        %v476 = vlaneseq
        %v477 = vshrl.u32 %v476, 7
        %v478 = vsub.s32 1, %v477
        %v479 = vrot.slane %v470, %v478
        %v480 = vlaneseq
        %v481 = vshrl.u32 %v480, 7
        %v482 = vsub.s32 2, %v481
        %v483 = vrot.slane %v470, %v482
        %v484 = vlaneseq
        %v485 = vshrl.u32 %v484, 7
        %v486 = vsub.s32 3, %v485
        %v487 = vrot.slane %v470, %v486
        %v488 = vlaneseq
        %v489 = vshrl.u32 %v488, 7
        %v490 = vsub.s32 4, %v489
        %v491 = vrot.slane %v470, %v490
        %v492 = vlaneseq
        %v493 = vshrl.u32 %v492, 7
        %v494 = vsub.s32 5, %v493
        %v495 = vrot.slane %v470, %v494
        %v598 = vunpack.c.l.b16 %v374
        %v599 = vunpack.c.h.b16 %v374
        %v600 = vunpack.c.l.b16 %v375
        %v601 = vunpack.c.h.b16 %v375
        %v602 = vunpack.c.l.b16 %v376
        %v603 = vunpack.c.h.b16 %v376
        %v604 = vunpack.c.l.b16 %v377
        %v605 = vunpack.c.h.b16 %v377
        %v606 = vunpack.c.l.b16 %v378
        %v607 = vunpack.c.h.b16 %v378
        %v608 = vunpack.c.l.b16 %v379
        %v609 = vunpack.c.h.b16 %v379
        %v610 = vunpack.c.l.b16 %v380
        %v611 = vunpack.c.h.b16 %v380
        %v612 = vunpack.c.l.b16 %v381
        %v613 = vunpack.c.h.b16 %v381
        %v614 = vunpack.c.l.b16 %v382
        %v615 = vunpack.c.h.b16 %v382
        %v616 = vunpack.c.l.b16 %v383
        %v617 = vunpack.c.h.b16 %v383
        %v618 = vunpack.c.l.b16 %v384
        %v619 = vunpack.c.h.b16 %v384
        %v620 = vunpack.c.l.b16 %v385
        %v621 = vunpack.c.h.b16 %v385
        %v622 = vunpack.c.l.b16 %v386
        %v623 = vunpack.c.h.b16 %v386
        %v624 = vunpack.c.l.b16 %v387
        %v625 = vunpack.c.h.b16 %v387
        %v626 = vunpack.c.l.b16 %v388
        %v627 = vunpack.c.h.b16 %v388
        %v628 = vunpack.c.l.b16 %v389
        %v629 = vunpack.c.h.b16 %v389
        %v630 = vunpack.c.l.b16 %v390
        %v631 = vunpack.c.h.b16 %v390
        %v632 = vunpack.c.l.b16 %v391
        %v633 = vunpack.c.h.b16 %v391
        %v634 = vunpack.c.l.b16 %v392
        %v635 = vunpack.c.h.b16 %v392
        %v636 = vunpack.c.l.b16 %v393
        %v637 = vunpack.c.h.b16 %v393
        %v638 = vunpack.c.l.b16 %v394
        %v639 = vunpack.c.h.b16 %v394
        %v640 = vunpack.c.l.b16 %v395
        %v641 = vunpack.c.h.b16 %v395
        %v642 = vunpack.c.l.b16 %v396
        %v643 = vunpack.c.h.b16 %v396
        %v644 = vunpack.c.l.b16 %v397
        %v645 = vunpack.c.h.b16 %v397
        %v646 = vunpack.c.l.b16 %v398
        %v647 = vunpack.c.h.b16 %v398
        %v648 = vunpack.c.l.b16 %v399
        %v649 = vunpack.c.h.b16 %v399
        %v650 = vunpack.c.l.b16 %v400
        %v651 = vunpack.c.h.b16 %v400
        %v652 = vunpack.c.l.b16 %v401
        %v653 = vunpack.c.h.b16 %v401
        %v654 = vunpack.c.l.b16 %v402
        %v655 = vunpack.c.h.b16 %v402
        %v656 = vunpack.c.l.b16 %v403
        %v657 = vunpack.c.h.b16 %v403
        %v658 = vunpack.c.l.b16 %v404
        %v659 = vunpack.c.h.b16 %v404
        %v660 = vunpack.c.l.b16 %v405
        %v661 = vunpack.c.h.b16 %v405
        %v662 = vunpack.c.l.b16 %v406
        %v663 = vunpack.c.h.b16 %v406
        %v664 = vunpack.c.l.b16 %v407
        %v665 = vunpack.c.h.b16 %v407
        %v666 = vunpack.c.l.b16 %v408
        %v667 = vunpack.c.h.b16 %v408
        %v668 = vunpack.c.l.b16 %v409
        %v669 = vunpack.c.h.b16 %v409
        %v670 = vunpack.c.l.b16 %v410
        %v671 = vunpack.c.h.b16 %v410
        %v672 = vunpack.c.l.b16 %v411
        %v673 = vunpack.c.h.b16 %v411
        %v674 = vunpack.c.l.b16 %v412
        %v675 = vunpack.c.h.b16 %v412
        %v676 = vunpack.c.l.b16 %v413
        %v677 = vunpack.c.h.b16 %v413
        %v678 = vunpack.c.l.b16 %v414
        %v679 = vunpack.c.h.b16 %v414
        %v680 = vunpack.c.l.b16 %v415
        %v681 = vunpack.c.h.b16 %v415
        %v682 = vunpack.c.l.b16 %v416
        %v683 = vunpack.c.h.b16 %v416
        %v684 = vunpack.c.l.b16 %v417
        %v685 = vunpack.c.h.b16 %v417
        %v686 = vunpack.c.l.b16 %v418
        %v687 = vunpack.c.h.b16 %v418
        %v688 = vunpack.c.l.b16 %v419
        %v689 = vunpack.c.h.b16 %v419
        %v690 = vunpack.c.l.b16 %v420
        %v691 = vunpack.c.h.b16 %v420
        %v692 = vunpack.c.l.b16 %v421
        %v693 = vunpack.c.h.b16 %v421
        %v694 = vunpack.c.l.b16 %v422
        %v695 = vunpack.c.h.b16 %v422
        %v696 = vunpack.c.l.b16 %v423
        %v697 = vunpack.c.h.b16 %v423
        %v698 = vunpack.c.l.b16 %v424
        %v699 = vunpack.c.h.b16 %v424
        %v700 = vunpack.c.l.b16 %v425
        %v701 = vunpack.c.h.b16 %v425
        %v702 = vunpack.c.l.b16 %v426
        %v703 = vunpack.c.h.b16 %v426
        %v704 = vunpack.c.l.b16 %v427
        %v705 = vunpack.c.h.b16 %v427
        %v706 = vunpack.c.l.b16 %v428
        %v707 = vunpack.c.h.b16 %v428
        %v708 = vunpack.c.l.b16 %v429
        %v709 = vunpack.c.h.b16 %v429
        %v710 = vunpack.c.l.b16 %v430
        %v711 = vunpack.c.h.b16 %v430
        %v712 = vunpack.c.l.b16 %v431
        %v713 = vunpack.c.h.b16 %v431
        %v714 = vunpack.c.l.b16 %v432
        %v715 = vunpack.c.h.b16 %v432
        %v716 = vunpack.c.l.b16 %v433
        %v717 = vunpack.c.h.b16 %v433
        %v718 = vunpack.c.l.b16 %v434
        %v719 = vunpack.c.h.b16 %v434
        %v720 = vunpack.c.l.b16 %v435
        %v721 = vunpack.c.h.b16 %v435
        %v722 = vunpack.c.l.b16 %v436
        %v723 = vunpack.c.h.b16 %v436
        %v724 = vunpack.c.l.b16 %v437
        %v725 = vunpack.c.h.b16 %v437
        %v726 = vunpack.c.l.b16 %v438
        %v727 = vunpack.c.h.b16 %v438
        %v728 = vunpack.c.l.b16 %v439
        %v729 = vunpack.c.h.b16 %v439
        %v730 = vunpack.c.l.b16 %v440
        %v731 = vunpack.c.h.b16 %v440
        %v732 = vunpack.c.l.b16 %v441
        %v733 = vunpack.c.h.b16 %v441
        %v734 = vunpack.c.l.b16 %v442
        %v735 = vunpack.c.h.b16 %v442
        %v736 = vunpack.c.l.b16 %v443
        %v737 = vunpack.c.h.b16 %v443
        %v738 = vunpack.c.l.b16 %v444
        %v739 = vunpack.c.h.b16 %v444
        %v740 = vunpack.c.l.b16 %v445
        %v741 = vunpack.c.h.b16 %v445
        %v742 = vunpack.c.l.b16 %v446
        %v743 = vunpack.c.h.b16 %v446
        %v744 = vunpack.c.l.b16 %v447
        %v745 = vunpack.c.h.b16 %v447
        %v746 = vunpack.c.l.b16 %v448
        %v747 = vunpack.c.h.b16 %v448
        %v748 = vunpack.c.l.b16 %v449
        %v749 = vunpack.c.h.b16 %v449
        %v750 = vunpack.c.l.b16 %v450
        %v751 = vunpack.c.h.b16 %v450
        %v752 = vunpack.c.l.b16 %v451
        %v753 = vunpack.c.h.b16 %v451
        %v754 = vunpack.c.l.b16 %v452
        %v755 = vunpack.c.h.b16 %v452
        %v756 = vunpack.c.l.b16 %v453
        %v757 = vunpack.c.h.b16 %v453
        %v758 = vunpack.c.l.b16 %v454
        %v759 = vunpack.c.h.b16 %v454
        %v760 = vunpack.c.l.b16 %v455
        %v761 = vunpack.c.h.b16 %v455
        %v762 = vunpack.c.l.b16 %v456
        %v763 = vunpack.c.h.b16 %v456
        %v764 = vunpack.c.l.b16 %v457
        %v765 = vunpack.c.h.b16 %v457
        %v766 = vunpack.c.l.b16 %v458
        %v767 = vunpack.c.h.b16 %v458
        %v768 = vunpack.c.l.b16 %v459
        %v769 = vunpack.c.h.b16 %v459
        %v770 = vunpack.c.l.b16 %v460
        %v771 = vunpack.c.h.b16 %v460
        %v772 = vunpack.c.l.b16 %v461
        %v773 = vunpack.c.h.b16 %v461
        %v774 = vunpack.c.l.b16 %v462
        %v775 = vunpack.c.h.b16 %v462
        %v776 = vunpack.c.l.b16 %v463
        %v777 = vunpack.c.h.b16 %v463
        %v778 = vunpack.c.l.b16 %v464
        %v779 = vunpack.c.h.b16 %v464
        %v780 = vunpack.c.l.b16 %v465
        %v781 = vunpack.c.h.b16 %v465
        %v782 = vunpack.c.l.b16 %v466
        %v783 = vunpack.c.h.b16 %v466
        %v784 = vunpack.c.l.b16 %v467
        %v785 = vunpack.c.h.b16 %v467
        %v786 = vunpack.c.l.b16 %v468
        %v787 = vunpack.c.h.b16 %v468
        %v788 = vunpack.c.l.b16 %v469
        %v789 = vunpack.c.h.b16 %v469
        %v790 = vpack.c.b16 %v604, %v598
        %v791 = vpack.c.b16 %v605, %v599
        %v792 = vpack.c.b16 %v606, %v600
        %v793 = vpack.c.b16 %v607, %v601
        %v794 = vpack.c.b16 %v608, %v602
        %v795 = vpack.c.b16 %v609, %v603
        %v796 = vpack.c.b16 %v616, %v610
        %v797 = vpack.c.b16 %v617, %v611
        %v798 = vpack.c.b16 %v618, %v612
        %v799 = vpack.c.b16 %v619, %v613
        %v800 = vpack.c.b16 %v620, %v614
        %v801 = vpack.c.b16 %v621, %v615
        %v802 = vpack.c.b16 %v628, %v622
        %v803 = vpack.c.b16 %v629, %v623
        %v804 = vpack.c.b16 %v630, %v624
        %v805 = vpack.c.b16 %v631, %v625
        %v806 = vpack.c.b16 %v632, %v626
        %v807 = vpack.c.b16 %v633, %v627
        %v808 = vpack.c.b16 %v640, %v634
        %v809 = vpack.c.b16 %v641, %v635
        %v810 = vpack.c.b16 %v642, %v636
        %v811 = vpack.c.b16 %v643, %v637
        %v812 = vpack.c.b16 %v644, %v638
        %v813 = vpack.c.b16 %v645, %v639
        %v814 = vpack.c.b16 %v652, %v646
        %v815 = vpack.c.b16 %v653, %v647
        %v816 = vpack.c.b16 %v654, %v648
        %v817 = vpack.c.b16 %v655, %v649
        %v818 = vpack.c.b16 %v656, %v650
        %v819 = vpack.c.b16 %v657, %v651
        %v820 = vpack.c.b16 %v664, %v658
        %v821 = vpack.c.b16 %v665, %v659
        %v822 = vpack.c.b16 %v666, %v660
        %v823 = vpack.c.b16 %v667, %v661
        %v824 = vpack.c.b16 %v668, %v662
        %v825 = vpack.c.b16 %v669, %v663
        %v826 = vpack.c.b16 %v676, %v670
        %v827 = vpack.c.b16 %v677, %v671
        %v828 = vpack.c.b16 %v678, %v672
        %v829 = vpack.c.b16 %v679, %v673
        %v830 = vpack.c.b16 %v680, %v674
        %v831 = vpack.c.b16 %v681, %v675
        %v832 = vpack.c.b16 %v688, %v682
        %v833 = vpack.c.b16 %v689, %v683
        %v834 = vpack.c.b16 %v690, %v684
        %v835 = vpack.c.b16 %v691, %v685
        %v836 = vpack.c.b16 %v692, %v686
        %v837 = vpack.c.b16 %v693, %v687
        %v838 = vpack.c.b16 %v700, %v694
        %v839 = vpack.c.b16 %v701, %v695
        %v840 = vpack.c.b16 %v702, %v696
        %v841 = vpack.c.b16 %v703, %v697
        %v842 = vpack.c.b16 %v704, %v698
        %v843 = vpack.c.b16 %v705, %v699
        %v844 = vpack.c.b16 %v712, %v706
        %v845 = vpack.c.b16 %v713, %v707
        %v846 = vpack.c.b16 %v714, %v708
        %v847 = vpack.c.b16 %v715, %v709
        %v848 = vpack.c.b16 %v716, %v710
        %v849 = vpack.c.b16 %v717, %v711
        %v850 = vpack.c.b16 %v724, %v718
        %v851 = vpack.c.b16 %v725, %v719
        %v852 = vpack.c.b16 %v726, %v720
        %v853 = vpack.c.b16 %v727, %v721
        %v854 = vpack.c.b16 %v728, %v722
        %v855 = vpack.c.b16 %v729, %v723
        %v856 = vpack.c.b16 %v736, %v730
        %v857 = vpack.c.b16 %v737, %v731
        %v858 = vpack.c.b16 %v738, %v732
        %v859 = vpack.c.b16 %v739, %v733
        %v860 = vpack.c.b16 %v740, %v734
        %v861 = vpack.c.b16 %v741, %v735
        %v862 = vpack.c.b16 %v748, %v742
        %v863 = vpack.c.b16 %v749, %v743
        %v864 = vpack.c.b16 %v750, %v744
        %v865 = vpack.c.b16 %v751, %v745
        %v866 = vpack.c.b16 %v752, %v746
        %v867 = vpack.c.b16 %v753, %v747
        %v868 = vpack.c.b16 %v760, %v754
        %v869 = vpack.c.b16 %v761, %v755
        %v870 = vpack.c.b16 %v762, %v756
        %v871 = vpack.c.b16 %v763, %v757
        %v872 = vpack.c.b16 %v764, %v758
        %v873 = vpack.c.b16 %v765, %v759
        %v874 = vpack.c.b16 %v772, %v766
        %v875 = vpack.c.b16 %v773, %v767
        %v876 = vpack.c.b16 %v774, %v768
        %v877 = vpack.c.b16 %v775, %v769
        %v878 = vpack.c.b16 %v776, %v770
        %v879 = vpack.c.b16 %v777, %v771
        %v880 = vpack.c.b16 %v784, %v778
        %v881 = vpack.c.b16 %v785, %v779
        %v882 = vpack.c.b16 %v786, %v780
        %v883 = vpack.c.b16 %v787, %v781
        %v884 = vpack.c.b16 %v788, %v782
        %v885 = vpack.c.b16 %v789, %v783
        %982 = vmatprep.subr.bf16.mxu0 %v833
        %983 = vmatpush1.bf16.msra.mxu0 %v832
        %984 = vmatprep.subr.bf16.mxu0 %v827
        %985 = vmatpush1.bf16.msra.mxu0 %v826
        %986 = vmatprep.subr.bf16.mxu0 %v821
        %987 = vmatpush1.bf16.msra.mxu0 %v820
        %988 = vmatprep.subr.bf16.mxu0 %v815
        %989 = vmatpush1.bf16.msra.mxu0 %v814
        %990 = vmatprep.subr.bf16.mxu0 %v809
        %991 = vmatpush1.bf16.msra.mxu0 %v808
        %992 = vmatprep.subr.bf16.mxu0 %v803
        %993 = vmatpush1.bf16.msra.mxu0 %v802
        %994 = vmatprep.subr.bf16.mxu0 %v797
        %995 = vmatpush1.bf16.msra.mxu0 %v796
        %996 = vmatprep.subr.bf16.mxu0 %v791
        %997 = vmatpush1.bf16.msra.mxu0 %v790
        %998 = vmatprep.subr.bf16.mxu0 %v881
        %999 = vmatpush2.bf16.msra.mxu0 %v880
        %1000 = vmatprep.subr.bf16.mxu0 %v875
        %1001 = vmatpush2.bf16.msra.mxu0 %v874
        %1002 = vmatprep.subr.bf16.mxu0 %v869
        %1003 = vmatpush2.bf16.msra.mxu0 %v868
        %1004 = vmatprep.subr.bf16.mxu0 %v863
        %1005 = vmatpush2.bf16.msra.mxu0 %v862
        %1006 = vmatprep.subr.bf16.mxu0 %v857
        %1007 = vmatpush2.bf16.msra.mxu0 %v856
        %1008 = vmatprep.subr.bf16.mxu0 %v851
        %1009 = vmatpush2.bf16.msra.mxu0 %v850
        %1010 = vmatprep.subr.bf16.mxu0 %v845
        %1011 = vmatpush2.bf16.msra.mxu0 %v844
        %1012 = vmatprep.subr.bf16.mxu0 %v839
        %1013 = vmatpush2.bf16.msra.mxu0 %v838
        %1014 = vmatprep.mubr.bf16.mxu0 %v373
        %1015 = vmatmul.mubr.bf16.gmra.mxu0 %v372
        %v1016 = vpop.f32.mrf.mxu0
        %v1017 = vadd.f32 %v475, %v1016
        %v1018 = vpop.f32.mrf.mxu0
        %v1019 = vadd.f32 %v479, %v1018
        %v1020 = vpop.f32.mrf.mxu0
        %v1021 = vadd.f32 %v475, %v1020
        %v1022 = vpop.f32.mrf.mxu0
        %v1023 = vadd.f32 %v479, %v1022
        %1024 = vdwg.mxu0
        %1025 = vmatprep.subr.bf16.mxu0 %v835
        %1026 = vmatpush1.bf16.msra.mxu0 %v834
        %1027 = vmatprep.subr.bf16.mxu0 %v829
        %1028 = vmatpush1.bf16.msra.mxu0 %v828
        %1029 = vmatprep.subr.bf16.mxu0 %v823
        %1030 = vmatpush1.bf16.msra.mxu0 %v822
        %1031 = vmatprep.subr.bf16.mxu0 %v817
        %1032 = vmatpush1.bf16.msra.mxu0 %v816
        %1033 = vmatprep.subr.bf16.mxu0 %v811
        %1034 = vmatpush1.bf16.msra.mxu0 %v810
        %1035 = vmatprep.subr.bf16.mxu0 %v805
        %1036 = vmatpush1.bf16.msra.mxu0 %v804
        %1037 = vmatprep.subr.bf16.mxu0 %v799
        %1038 = vmatpush1.bf16.msra.mxu0 %v798
        %1039 = vmatprep.subr.bf16.mxu0 %v793
        %1040 = vmatpush1.bf16.msra.mxu0 %v792
        %1041 = vmatprep.subr.bf16.mxu0 %v883
        %1042 = vmatpush2.bf16.msra.mxu0 %v882
        %1043 = vmatprep.subr.bf16.mxu0 %v877
        %1044 = vmatpush2.bf16.msra.mxu0 %v876
        %1045 = vmatprep.subr.bf16.mxu0 %v871
        %1046 = vmatpush2.bf16.msra.mxu0 %v870
        %1047 = vmatprep.subr.bf16.mxu0 %v865
        %1048 = vmatpush2.bf16.msra.mxu0 %v864
        %1049 = vmatprep.subr.bf16.mxu0 %v859
        %1050 = vmatpush2.bf16.msra.mxu0 %v858
        %1051 = vmatprep.subr.bf16.mxu0 %v853
        %1052 = vmatpush2.bf16.msra.mxu0 %v852
        %1053 = vmatprep.subr.bf16.mxu0 %v847
        %1054 = vmatpush2.bf16.msra.mxu0 %v846
        %1055 = vmatprep.subr.bf16.mxu0 %v841
        %1056 = vmatpush2.bf16.msra.mxu0 %v840
        %1057 = vmatprep.mubr.bf16.mxu0 %v373
        %1058 = vmatmul.mubr.bf16.gmra.mxu0 %v372
        %v1059 = vpop.f32.mrf.mxu0
        %v1060 = vadd.f32 %v483, %v1059
        %v1061 = vpop.f32.mrf.mxu0
        %v1062 = vadd.f32 %v487, %v1061
        %v1063 = vpop.f32.mrf.mxu0
        %v1064 = vadd.f32 %v483, %v1063
        %v1065 = vpop.f32.mrf.mxu0
        %v1066 = vadd.f32 %v487, %v1065
        %1067 = vdwg.mxu0
        %1068 = vmatprep.subr.bf16.mxu0 %v837
        %1069 = vmatpush1.bf16.msra.mxu0 %v836
        %1070 = vmatprep.subr.bf16.mxu0 %v831
        %1071 = vmatpush1.bf16.msra.mxu0 %v830
        %1072 = vmatprep.subr.bf16.mxu0 %v825
        %1073 = vmatpush1.bf16.msra.mxu0 %v824
        %1074 = vmatprep.subr.bf16.mxu0 %v819
        %1075 = vmatpush1.bf16.msra.mxu0 %v818
        %1076 = vmatprep.subr.bf16.mxu0 %v813
        %1077 = vmatpush1.bf16.msra.mxu0 %v812
        %1078 = vmatprep.subr.bf16.mxu0 %v807
        %1079 = vmatpush1.bf16.msra.mxu0 %v806
        %1080 = vmatprep.subr.bf16.mxu0 %v801
        %1081 = vmatpush1.bf16.msra.mxu0 %v800
        %1082 = vmatprep.subr.bf16.mxu0 %v795
        %1083 = vmatpush1.bf16.msra.mxu0 %v794
        %1084 = vmatprep.subr.bf16.mxu0 %v885
        %1085 = vmatpush2.bf16.msra.mxu0 %v884
        %1086 = vmatprep.subr.bf16.mxu0 %v879
        %1087 = vmatpush2.bf16.msra.mxu0 %v878
        %1088 = vmatprep.subr.bf16.mxu0 %v873
        %1089 = vmatpush2.bf16.msra.mxu0 %v872
        %1090 = vmatprep.subr.bf16.mxu0 %v867
        %1091 = vmatpush2.bf16.msra.mxu0 %v866
        %1092 = vmatprep.subr.bf16.mxu0 %v861
        %1093 = vmatpush2.bf16.msra.mxu0 %v860
        %1094 = vmatprep.subr.bf16.mxu0 %v855
        %1095 = vmatpush2.bf16.msra.mxu0 %v854
        %1096 = vmatprep.subr.bf16.mxu0 %v849
        %1097 = vmatpush2.bf16.msra.mxu0 %v848
        %1098 = vmatprep.subr.bf16.mxu0 %v843
        %1099 = vmatpush2.bf16.msra.mxu0 %v842
        %1100 = vmatprep.mubr.bf16.mxu0 %v373
        %1101 = vmatmul.mubr.bf16.gmra.mxu0 %v372
        %v1102 = vpop.f32.mrf.mxu0
        %v1103 = vadd.f32 %v491, %v1102
        %v1104 = vpop.f32.mrf.mxu0
        %v1105 = vadd.f32 %v495, %v1104
        %v1106 = vpop.f32.mrf.mxu0
        %v1107 = vadd.f32 %v491, %v1106
        %v1108 = vpop.f32.mrf.mxu0
        %v1109 = vadd.f32 %v495, %v1108
        %1110 = vdwg.mxu0
        %v1111 = vpack.c.bf16 %v1021, %v1017
        %v1112 = vpack.c.bf16 %v1023, %v1019
        %v1113 = vpack.c.bf16 %v1064, %v1060
        %v1114 = vpack.c.bf16 %v1066, %v1062
        %v1115 = vpack.c.bf16 %v1107, %v1103
        %v1116 = vpack.c.bf16 %v1109, %v1105
        %v1117 = vlaneseq
        %v1118 = vshrl.u32 %v1117, 7
        %v1119 = vlaneseq
        %v1120 = vand.u32 %v1119, 127
        %vm1121 = vcmp.gt.s32.totalorder %v1120, %v1118
        %v1122 = vsel %vm1121, -1e+30, 0.0
        %1123 = vmatprep.subr.bf16.mxu0 0
        %1124 = vmatpush1.bf16.xpose.msra.mxu0 0
        %1125 = vmatprep.subr.bf16.mxu0 0
        %1126 = vmatpush1.bf16.xpose.msra.mxu0 0
        %1127 = vmatprep.subr.bf16.mxu0 0
        %1128 = vmatpush1.bf16.xpose.msra.mxu0 0
        %1129 = vmatprep.subr.bf16.mxu0 0
        %1130 = vmatpush1.bf16.xpose.msra.mxu0 0
        %1131 = vmatprep.subr.bf16.mxu0 0
        %1132 = vmatpush1.bf16.xpose.msra.mxu0 0
        %1133 = vmatprep.subr.bf16.mxu0 0
        %1134 = vmatpush1.bf16.xpose.msra.mxu0 0
        %1135 = vmatprep.subr.bf16.mxu0 0
        %1136 = vmatpush1.bf16.xpose.msra.mxu0 0
        %1137 = vmatprep.subr.bf16.mxu0 0
        %1138 = vmatpush1.bf16.xpose.msra.mxu0 %v1113
        %1139 = vmatprep.subr.bf16.mxu0 0
        %1140 = vmatpush2.bf16.xpose.msra.mxu0 0
        %1141 = vmatprep.subr.bf16.mxu0 0
        %1142 = vmatpush2.bf16.xpose.msra.mxu0 0
        %1143 = vmatprep.subr.bf16.mxu0 0
        %1144 = vmatpush2.bf16.xpose.msra.mxu0 0
        %1145 = vmatprep.subr.bf16.mxu0 0
        %1146 = vmatpush2.bf16.xpose.msra.mxu0 0
        %1147 = vmatprep.subr.bf16.mxu0 0
        %1148 = vmatpush2.bf16.xpose.msra.mxu0 0
        %1149 = vmatprep.subr.bf16.mxu0 0
        %1150 = vmatpush2.bf16.xpose.msra.mxu0 0
        %1151 = vmatprep.subr.bf16.mxu0 0
        %1152 = vmatpush2.bf16.xpose.msra.mxu0 0
        %1153 = vmatprep.subr.bf16.mxu0 0
        %1154 = vmatpush2.bf16.xpose.msra.mxu0 0
        %1155 = vmatprep.mubr.bf16.mxu0 0
        %1156 = vmatmul.mubr.bf16.gmra.mxu0 %v1111
        %v1157 = vpop.f32.mrf.mxu0
        %v1158 = vadd.f32 0.0, %v1157
        %v1159 = vpop.f32.mrf.mxu0
        %v1160 = vpop.f32.mrf.mxu0
        %v1161 = vpop.f32.mrf.mxu0
        %1162 = vdwg.mxu0
        %v1163 = vmul.f32 %v1158, 0.088388346
        %v1164 = vadd.f32 %v1163, %v1122
        %vm1165 = vcmask 64512
        %v1166 = vsel %vm1165, %v1164, -inf
        %1167 = vmax.xlane.f32.xlu0 %v1166
        %v1168 = vpop.xlane.xlu0 %1167
        %v1169 = vsub.f32 %v1164, %v1168
        %v1170 = vmul.f32 %v1169, 1.442695
        %v1171 = vpow.pop %v1170
        %v1172 = vsel %vm1165, %v1171, 0.0
        %1173 = vadd.xlane.f32.xlu0 %v1172
        %v1174 = vpop.xlane.xlu0 %1173
        %v1175 = vrcp.pop %v1174
        %v1176 = vmul.f32 %v1171, %v1175
        %v1177 = vpack.c.bf16 %v1176, %v1176
        %v1179 = vsel %vm1165, %v1177, 0
        %vm1181 = vcmask 1043456
        %v1183 = vsel %vm1181, %v1115, 0
        %1185 = vmatprep.subr.bf16.mxu0 0
        %1186 = vmatpush1.bf16.msra.mxu0 0
        %1187 = vmatprep.subr.bf16.mxu0 0
        %1188 = vmatpush1.bf16.msra.mxu0 0
        %1189 = vmatprep.subr.bf16.mxu0 0
        %1190 = vmatpush1.bf16.msra.mxu0 0
        %1191 = vmatprep.subr.bf16.mxu0 0
        %1192 = vmatpush1.bf16.msra.mxu0 0
        %1193 = vmatprep.subr.bf16.mxu0 0
        %1194 = vmatpush1.bf16.msra.mxu0 0
        %1195 = vmatprep.subr.bf16.mxu0 0
        %1196 = vmatpush1.bf16.msra.mxu0 0
        %1197 = vmatprep.subr.bf16.mxu0 0
        %1198 = vmatpush1.bf16.msra.mxu0 0
        %1199 = vmatprep.subr.bf16.mxu0 0
        %1200 = vmatpush1.bf16.msra.mxu0 %v1183
        %1201 = vmatprep.subr.bf16.mxu0 0
        %1202 = vmatpush2.bf16.msra.mxu0 0
        %1203 = vmatprep.subr.bf16.mxu0 0
        %1204 = vmatpush2.bf16.msra.mxu0 0
        %1205 = vmatprep.subr.bf16.mxu0 0
        %1206 = vmatpush2.bf16.msra.mxu0 0
        %1207 = vmatprep.subr.bf16.mxu0 0
        %1208 = vmatpush2.bf16.msra.mxu0 0
        %1209 = vmatprep.subr.bf16.mxu0 0
        %1210 = vmatpush2.bf16.msra.mxu0 0
        %1211 = vmatprep.subr.bf16.mxu0 0
        %1212 = vmatpush2.bf16.msra.mxu0 0
        %1213 = vmatprep.subr.bf16.mxu0 0
        %1214 = vmatpush2.bf16.msra.mxu0 0
        %1215 = vmatprep.subr.bf16.mxu0 0
        %1216 = vmatpush2.bf16.msra.mxu0 0
        %1217 = vmatprep.mubr.bf16.mxu0 0
        %1218 = vmatmul.mubr.bf16.gmra.mxu0 %v1179
        %v1219 = vpop.f32.mrf.mxu0
        %v1220 = vadd.f32 0.0, %v1219
        %v1221 = vpop.f32.mrf.mxu0
        %v1222 = vpop.f32.mrf.mxu0
        %v1223 = vpop.f32.mrf.mxu0
        %1224 = vdwg.mxu0
        %1225 = vst [vmem:[#allocation2] sm:$0xff] %v1220
        %1226 = vmatprep.subr.bf16.mxu0 0
        %1227 = vmatpush1.bf16.xpose.msra.mxu0 0
        %1228 = vmatprep.subr.bf16.mxu0 0
        %1229 = vmatpush1.bf16.xpose.msra.mxu0 0
        %1230 = vmatprep.subr.bf16.mxu0 0
        %1231 = vmatpush1.bf16.xpose.msra.mxu0 0
        %1232 = vmatprep.subr.bf16.mxu0 0
        %1233 = vmatpush1.bf16.xpose.msra.mxu0 0
        %1234 = vmatprep.subr.bf16.mxu0 0
        %1235 = vmatpush1.bf16.xpose.msra.mxu0 0
        %1236 = vmatprep.subr.bf16.mxu0 0
        %1237 = vmatpush1.bf16.xpose.msra.mxu0 0
        %1238 = vmatprep.subr.bf16.mxu0 0
        %1239 = vmatpush1.bf16.xpose.msra.mxu0 0
        %1240 = vmatprep.subr.bf16.mxu0 0
        %1241 = vmatpush1.bf16.xpose.msra.mxu0 %v1114
        %1242 = vmatprep.subr.bf16.mxu0 0
        %1243 = vmatpush2.bf16.xpose.msra.mxu0 0
        %1244 = vmatprep.subr.bf16.mxu0 0
        %1245 = vmatpush2.bf16.xpose.msra.mxu0 0
        %1246 = vmatprep.subr.bf16.mxu0 0
        %1247 = vmatpush2.bf16.xpose.msra.mxu0 0
        %1248 = vmatprep.subr.bf16.mxu0 0
        %1249 = vmatpush2.bf16.xpose.msra.mxu0 0
        %1250 = vmatprep.subr.bf16.mxu0 0
        %1251 = vmatpush2.bf16.xpose.msra.mxu0 0
        %1252 = vmatprep.subr.bf16.mxu0 0
        %1253 = vmatpush2.bf16.xpose.msra.mxu0 0
        %1254 = vmatprep.subr.bf16.mxu0 0
        %1255 = vmatpush2.bf16.xpose.msra.mxu0 0
        %1256 = vmatprep.subr.bf16.mxu0 0
        %1257 = vmatpush2.bf16.xpose.msra.mxu0 0
        %1258 = vmatprep.mubr.bf16.mxu0 0
        %1259 = vmatmul.mubr.bf16.gmra.mxu0 %v1112
        %v1260 = vpop.f32.mrf.mxu0
        %v1261 = vadd.f32 0.0, %v1260
        %v1262 = vpop.f32.mrf.mxu0
        %v1263 = vpop.f32.mrf.mxu0
        %v1264 = vpop.f32.mrf.mxu0
        %1265 = vdwg.mxu0
        %v1266 = vmul.f32 %v1261, 0.088388346
        %v1267 = vadd.f32 %v1266, %v1122
        %v1268 = vsel %vm1165, %v1267, -inf
        %1269 = vmax.xlane.f32.xlu0 %v1268
        %v1270 = vpop.xlane.xlu0 %1269
        %v1271 = vsub.f32 %v1267, %v1270
        %v1272 = vmul.f32 %v1271, 1.442695
        %v1273 = vpow.pop %v1272
        %v1274 = vsel %vm1165, %v1273, 0.0
        %1275 = vadd.xlane.f32.xlu0 %v1274
        %v1276 = vpop.xlane.xlu0 %1275
        %v1277 = vrcp.pop %v1276
        %v1278 = vmul.f32 %v1273, %v1277
        %v1279 = vpack.c.bf16 %v1278, %v1278
        %v1281 = vsel %vm1165, %v1279, 0
        %v1284 = vsel %vm1181, %v1116, 0
        %1286 = vmatprep.subr.bf16.mxu0 0
        %1287 = vmatpush1.bf16.msra.mxu0 0
        %1288 = vmatprep.subr.bf16.mxu0 0
        %1289 = vmatpush1.bf16.msra.mxu0 0
        %1290 = vmatprep.subr.bf16.mxu0 0
        %1291 = vmatpush1.bf16.msra.mxu0 0
        %1292 = vmatprep.subr.bf16.mxu0 0
        %1293 = vmatpush1.bf16.msra.mxu0 0
        %1294 = vmatprep.subr.bf16.mxu0 0
        %1295 = vmatpush1.bf16.msra.mxu0 0
        %1296 = vmatprep.subr.bf16.mxu0 0
        %1297 = vmatpush1.bf16.msra.mxu0 0
        %1298 = vmatprep.subr.bf16.mxu0 0
        %1299 = vmatpush1.bf16.msra.mxu0 0
        %1300 = vmatprep.subr.bf16.mxu0 0
        %1301 = vmatpush1.bf16.msra.mxu0 %v1284
        %1302 = vmatprep.subr.bf16.mxu0 0
        %1303 = vmatpush2.bf16.msra.mxu0 0
        %1304 = vmatprep.subr.bf16.mxu0 0
        %1305 = vmatpush2.bf16.msra.mxu0 0
        %1306 = vmatprep.subr.bf16.mxu0 0
        %1307 = vmatpush2.bf16.msra.mxu0 0
        %1308 = vmatprep.subr.bf16.mxu0 0
        %1309 = vmatpush2.bf16.msra.mxu0 0
        %1310 = vmatprep.subr.bf16.mxu0 0
        %1311 = vmatpush2.bf16.msra.mxu0 0
        %1312 = vmatprep.subr.bf16.mxu0 0
        %1313 = vmatpush2.bf16.msra.mxu0 0
        %1314 = vmatprep.subr.bf16.mxu0 0
        %1315 = vmatpush2.bf16.msra.mxu0 0
        %1316 = vmatprep.subr.bf16.mxu0 0
        %1317 = vmatpush2.bf16.msra.mxu0 0
        %1318 = vmatprep.mubr.bf16.mxu0 0
        %1319 = vmatmul.mubr.bf16.gmra.mxu0 %v1281
        %v1320 = vpop.f32.mrf.mxu0
        %v1321 = vadd.f32 0.0, %v1320
        %v1322 = vpop.f32.mrf.mxu0
        %v1323 = vpop.f32.mrf.mxu0
        %v1324 = vpop.f32.mrf.mxu0
        %1325 = vdwg.mxu0
        %1326 = vst [vmem:[#allocation2 + $0x8] sm:$0xff] %v1321
        %v1328 = vrot.slane %v1111, 4
        %v1331 = vrot.slane %v1113, 4
        %1333 = vmatprep.subr.bf16.mxu0 0
        %1334 = vmatpush1.bf16.xpose.msra.mxu0 0
        %1335 = vmatprep.subr.bf16.mxu0 0
        %1336 = vmatpush1.bf16.xpose.msra.mxu0 0
        %1337 = vmatprep.subr.bf16.mxu0 0
        %1338 = vmatpush1.bf16.xpose.msra.mxu0 0
        %1339 = vmatprep.subr.bf16.mxu0 0
        %1340 = vmatpush1.bf16.xpose.msra.mxu0 0
        %1341 = vmatprep.subr.bf16.mxu0 0
        %1342 = vmatpush1.bf16.xpose.msra.mxu0 0
        %1343 = vmatprep.subr.bf16.mxu0 0
        %1344 = vmatpush1.bf16.xpose.msra.mxu0 0
        %1345 = vmatprep.subr.bf16.mxu0 0
        %1346 = vmatpush1.bf16.xpose.msra.mxu0 0
        %1347 = vmatprep.subr.bf16.mxu0 0
        %1348 = vmatpush1.bf16.xpose.msra.mxu0 %v1331
        %1349 = vmatprep.subr.bf16.mxu0 0
        %1350 = vmatpush2.bf16.xpose.msra.mxu0 0
        %1351 = vmatprep.subr.bf16.mxu0 0
        %1352 = vmatpush2.bf16.xpose.msra.mxu0 0
        %1353 = vmatprep.subr.bf16.mxu0 0
        %1354 = vmatpush2.bf16.xpose.msra.mxu0 0
        %1355 = vmatprep.subr.bf16.mxu0 0
        %1356 = vmatpush2.bf16.xpose.msra.mxu0 0
        %1357 = vmatprep.subr.bf16.mxu0 0
        %1358 = vmatpush2.bf16.xpose.msra.mxu0 0
        %1359 = vmatprep.subr.bf16.mxu0 0
        %1360 = vmatpush2.bf16.xpose.msra.mxu0 0
        %1361 = vmatprep.subr.bf16.mxu0 0
        %1362 = vmatpush2.bf16.xpose.msra.mxu0 0
        %1363 = vmatprep.subr.bf16.mxu0 0
        %1364 = vmatpush2.bf16.xpose.msra.mxu0 0
        %1365 = vmatprep.mubr.bf16.mxu0 0
        %1366 = vmatmul.mubr.bf16.gmra.mxu0 %v1328
        %v1367 = vpop.f32.mrf.mxu0
        %v1368 = vadd.f32 0.0, %v1367
        %v1369 = vpop.f32.mrf.mxu0
        %v1370 = vpop.f32.mrf.mxu0
        %v1371 = vpop.f32.mrf.mxu0
        %1372 = vdwg.mxu0
        %v1373 = vmul.f32 %v1368, 0.088388346
        %v1374 = vadd.f32 %v1373, %v1122
        %v1375 = vsel %vm1165, %v1374, -inf
        %1376 = vmax.xlane.f32.xlu0 %v1375
        %v1377 = vpop.xlane.xlu0 %1376
        %v1378 = vsub.f32 %v1374, %v1377
        %v1379 = vmul.f32 %v1378, 1.442695
        %v1380 = vpow.pop %v1379
        %v1381 = vsel %vm1165, %v1380, 0.0
        %1382 = vadd.xlane.f32.xlu0 %v1381
        %v1383 = vpop.xlane.xlu0 %1382
        %v1384 = vrcp.pop %v1383
        %v1385 = vmul.f32 %v1380, %v1384
        %v1386 = vpack.c.bf16 %v1385, %v1385
        %v1388 = vrot.slane %v1115, 4
        %v1390 = vsel %vm1165, %v1386, 0
        %v1393 = vsel %vm1181, %v1388, 0
        %1395 = vmatprep.subr.bf16.mxu0 0
        %1396 = vmatpush1.bf16.msra.mxu0 0
        %1397 = vmatprep.subr.bf16.mxu0 0
        %1398 = vmatpush1.bf16.msra.mxu0 0
        %1399 = vmatprep.subr.bf16.mxu0 0
        %1400 = vmatpush1.bf16.msra.mxu0 0
        %1401 = vmatprep.subr.bf16.mxu0 0
        %1402 = vmatpush1.bf16.msra.mxu0 0
        %1403 = vmatprep.subr.bf16.mxu0 0
        %1404 = vmatpush1.bf16.msra.mxu0 0
        %1405 = vmatprep.subr.bf16.mxu0 0
        %1406 = vmatpush1.bf16.msra.mxu0 0
        %1407 = vmatprep.subr.bf16.mxu0 0
        %1408 = vmatpush1.bf16.msra.mxu0 0
        %1409 = vmatprep.subr.bf16.mxu0 0
        %1410 = vmatpush1.bf16.msra.mxu0 %v1393
        %1411 = vmatprep.subr.bf16.mxu0 0
        %1412 = vmatpush2.bf16.msra.mxu0 0
        %1413 = vmatprep.subr.bf16.mxu0 0
        %1414 = vmatpush2.bf16.msra.mxu0 0
        %1415 = vmatprep.subr.bf16.mxu0 0
        %1416 = vmatpush2.bf16.msra.mxu0 0
        %1417 = vmatprep.subr.bf16.mxu0 0
        %1418 = vmatpush2.bf16.msra.mxu0 0
        %1419 = vmatprep.subr.bf16.mxu0 0
        %1420 = vmatpush2.bf16.msra.mxu0 0
        %1421 = vmatprep.subr.bf16.mxu0 0
        %1422 = vmatpush2.bf16.msra.mxu0 0
        %1423 = vmatprep.subr.bf16.mxu0 0
        %1424 = vmatpush2.bf16.msra.mxu0 0
        %1425 = vmatprep.subr.bf16.mxu0 0
        %1426 = vmatpush2.bf16.msra.mxu0 0
        %1427 = vmatprep.mubr.bf16.mxu0 0
        %1428 = vmatmul.mubr.bf16.gmra.mxu0 %v1390
        %v1429 = vpop.f32.mrf.mxu0
        %v1430 = vadd.f32 0.0, %v1429
        %v1431 = vpop.f32.mrf.mxu0
        %v1432 = vpop.f32.mrf.mxu0
        %v1433 = vpop.f32.mrf.mxu0
        %1434 = vdwg.mxu0
        %1435 = vst [vmem:[#allocation2 + $0x10] sm:$0xff] %v1430
        %v1437 = vrot.slane %v1112, 4
        %v1440 = vrot.slane %v1114, 4
        %1442 = vmatprep.subr.bf16.mxu0 0
        %1443 = vmatpush1.bf16.xpose.msra.mxu0 0
        %1444 = vmatprep.subr.bf16.mxu0 0
        %1445 = vmatpush1.bf16.xpose.msra.mxu0 0
        %1446 = vmatprep.subr.bf16.mxu0 0
        %1447 = vmatpush1.bf16.xpose.msra.mxu0 0
        %1448 = vmatprep.subr.bf16.mxu0 0
        %1449 = vmatpush1.bf16.xpose.msra.mxu0 0
        %1450 = vmatprep.subr.bf16.mxu0 0
        %1451 = vmatpush1.bf16.xpose.msra.mxu0 0
        %1452 = vmatprep.subr.bf16.mxu0 0
        %1453 = vmatpush1.bf16.xpose.msra.mxu0 0
        %1454 = vmatprep.subr.bf16.mxu0 0
        %1455 = vmatpush1.bf16.xpose.msra.mxu0 0
        %1456 = vmatprep.subr.bf16.mxu0 0
        %1457 = vmatpush1.bf16.xpose.msra.mxu0 %v1440
        %1458 = vmatprep.subr.bf16.mxu0 0
        %1459 = vmatpush2.bf16.xpose.msra.mxu0 0
        %1460 = vmatprep.subr.bf16.mxu0 0
        %1461 = vmatpush2.bf16.xpose.msra.mxu0 0
        %1462 = vmatprep.subr.bf16.mxu0 0
        %1463 = vmatpush2.bf16.xpose.msra.mxu0 0
        %1464 = vmatprep.subr.bf16.mxu0 0
        %1465 = vmatpush2.bf16.xpose.msra.mxu0 0
        %1466 = vmatprep.subr.bf16.mxu0 0
        %1467 = vmatpush2.bf16.xpose.msra.mxu0 0
        %1468 = vmatprep.subr.bf16.mxu0 0
        %1469 = vmatpush2.bf16.xpose.msra.mxu0 0
        %1470 = vmatprep.subr.bf16.mxu0 0
        %1471 = vmatpush2.bf16.xpose.msra.mxu0 0
        %1472 = vmatprep.subr.bf16.mxu0 0
        %1473 = vmatpush2.bf16.xpose.msra.mxu0 0
        %1474 = vmatprep.mubr.bf16.mxu0 0
        %1475 = vmatmul.mubr.bf16.gmra.mxu0 %v1437
        %v1476 = vpop.f32.mrf.mxu0
        %v1477 = vadd.f32 0.0, %v1476
        %v1478 = vpop.f32.mrf.mxu0
        %v1479 = vpop.f32.mrf.mxu0
        %v1480 = vpop.f32.mrf.mxu0
        %1481 = vdwg.mxu0
        %v1482 = vmul.f32 %v1477, 0.088388346
        %v1483 = vadd.f32 %v1482, %v1122
        %v1484 = vsel %vm1165, %v1483, -inf
        %1485 = vmax.xlane.f32.xlu0 %v1484
        %v1486 = vpop.xlane.xlu0 %1485
        %v1487 = vsub.f32 %v1483, %v1486
        %v1488 = vmul.f32 %v1487, 1.442695
        %v1489 = vpow.pop %v1488
        %v1490 = vsel %vm1165, %v1489, 0.0
        %1491 = vadd.xlane.f32.xlu0 %v1490
        %v1492 = vpop.xlane.xlu0 %1491
        %v1493 = vrcp.pop %v1492
        %v1494 = vmul.f32 %v1489, %v1493
        %v1495 = vpack.c.bf16 %v1494, %v1494
        %v1497 = vrot.slane %v1116, 4
        %v1499 = vsel %vm1165, %v1495, 0
        %v1502 = vsel %vm1181, %v1497, 0
        %1504 = vmatprep.subr.bf16.mxu0 0
        %1505 = vmatpush1.bf16.msra.mxu0 0
        %1506 = vmatprep.subr.bf16.mxu0 0
        %1507 = vmatpush1.bf16.msra.mxu0 0
        %1508 = vmatprep.subr.bf16.mxu0 0
        %1509 = vmatpush1.bf16.msra.mxu0 0
        %1510 = vmatprep.subr.bf16.mxu0 0
        %1511 = vmatpush1.bf16.msra.mxu0 0
        %1512 = vmatprep.subr.bf16.mxu0 0
        %1513 = vmatpush1.bf16.msra.mxu0 0
        %1514 = vmatprep.subr.bf16.mxu0 0
        %1515 = vmatpush1.bf16.msra.mxu0 0
        %1516 = vmatprep.subr.bf16.mxu0 0
        %1517 = vmatpush1.bf16.msra.mxu0 0
        %1518 = vmatprep.subr.bf16.mxu0 0
        %1519 = vmatpush1.bf16.msra.mxu0 %v1502
        %1520 = vmatprep.subr.bf16.mxu0 0
        %1521 = vmatpush2.bf16.msra.mxu0 0
        %1522 = vmatprep.subr.bf16.mxu0 0
        %1523 = vmatpush2.bf16.msra.mxu0 0
        %1524 = vmatprep.subr.bf16.mxu0 0
        %1525 = vmatpush2.bf16.msra.mxu0 0
        %1526 = vmatprep.subr.bf16.mxu0 0
        %1527 = vmatpush2.bf16.msra.mxu0 0
        %1528 = vmatprep.subr.bf16.mxu0 0
        %1529 = vmatpush2.bf16.msra.mxu0 0
        %1530 = vmatprep.subr.bf16.mxu0 0
        %1531 = vmatpush2.bf16.msra.mxu0 0
        %1532 = vmatprep.subr.bf16.mxu0 0
        %1533 = vmatpush2.bf16.msra.mxu0 0
        %1534 = vmatprep.subr.bf16.mxu0 0
        %1535 = vmatpush2.bf16.msra.mxu0 0
        %1536 = vmatprep.mubr.bf16.mxu0 0
        %1537 = vmatmul.mubr.bf16.gmra.mxu0 %v1499
        %v1538 = vpop.f32.mrf.mxu0
        %v1539 = vadd.f32 0.0, %v1538
        %v1540 = vpop.f32.mrf.mxu0
        %v1541 = vpop.f32.mrf.mxu0
        %v1542 = vpop.f32.mrf.mxu0
        %1543 = vdwg.mxu0
        %1544 = vst [vmem:[#allocation2 + $0x18] sm:$0xff] %v1539
        %v1545 = vld [vmem:[#allocation2] sm:$0xff]
        %v1546 = vld [vmem:[#allocation2 + $0x8] sm:$0xff]
        %v1547 = vld [vmem:[#allocation2 + $0x10] sm:$0xff]
        %v1548 = vld [vmem:[#allocation2 + $0x18] sm:$0xff]
        %v1549 = vpack.c.bf16 %v1547, %v1545
        %v1550 = vpack.c.bf16 %v1548, %v1546
        %v1551 = vld [vmem:[%s5] sm:$0xff]
        %v1552 = vld [vmem:[%s5 + $0x8] sm:$0xff]
        %v1553 = vld [vmem:[%s5 + $0x10] sm:$0xff]
        %v1554 = vld [vmem:[%s5 + $0x18] sm:$0xff]
        %v1555 = vld [vmem:[%s5 + $0x20] sm:$0xff]
        %v1556 = vld [vmem:[%s5 + $0x28] sm:$0xff]
        %v1557 = vld [vmem:[%s5 + $0x30] sm:$0xff]
        %v1558 = vld [vmem:[%s5 + $0x38] sm:$0xff]
        %v1559 = vld [vmem:[%s5 + $0x40] sm:$0xff]
        %v1560 = vld [vmem:[%s5 + $0x48] sm:$0xff]
        %v1561 = vld [vmem:[%s5 + $0x50] sm:$0xff]
        %v1562 = vld [vmem:[%s5 + $0x58] sm:$0xff]
        %v1563 = vld [vmem:[%s5 + $0x60] sm:$0xff]
        %v1564 = vld [vmem:[%s5 + $0x68] sm:$0xff]
        %v1565 = vld [vmem:[%s5 + $0x70] sm:$0xff]
        %v1566 = vld [vmem:[%s5 + $0x78] sm:$0xff]
        %v1567 = vld [vmem:[%s5 + $0x80] sm:$0xff]
        %v1568 = vld [vmem:[%s5 + $0x88] sm:$0xff]
        %v1569 = vld [vmem:[%s5 + $0x90] sm:$0xff]
        %v1570 = vld [vmem:[%s5 + $0x98] sm:$0xff]
        %v1571 = vld [vmem:[%s5 + $0xa0] sm:$0xff]
        %v1572 = vld [vmem:[%s5 + $0xa8] sm:$0xff]
        %v1573 = vld [vmem:[%s5 + $0xb0] sm:$0xff]
        %v1574 = vld [vmem:[%s5 + $0xb8] sm:$0xff]
        %v1575 = vld [vmem:[%s5 + $0xc0] sm:$0xff]
        %v1576 = vld [vmem:[%s5 + $0xc8] sm:$0xff]
        %v1577 = vld [vmem:[%s5 + $0xd0] sm:$0xff]
        %v1578 = vld [vmem:[%s5 + $0xd8] sm:$0xff]
        %v1579 = vld [vmem:[%s5 + $0xe0] sm:$0xff]
        %v1580 = vld [vmem:[%s5 + $0xe8] sm:$0xff]
        %v1581 = vld [vmem:[%s5 + $0xf0] sm:$0xff]
        %v1582 = vld [vmem:[%s5 + $0xf8] sm:$0xff]
        %v1583 = vld [vmem:[%s6] sm:$0x3]
        %v1585 = vlaneseq
        %v1586 = vshrl.u32 %v1585, 7
        %v1587 = vsub.s32 0, %v1586
        %v1588 = vrot.slane %v1583, %v1587
        %v1589 = vlaneseq
        %v1590 = vshrl.u32 %v1589, 7
        %v1591 = vsub.s32 1, %v1590
        %v1592 = vrot.slane %v1583, %v1591
        %v1627 = vunpack.c.l.b16 %v1551
        %v1628 = vunpack.c.h.b16 %v1551
        %v1629 = vunpack.c.l.b16 %v1552
        %v1630 = vunpack.c.h.b16 %v1552
        %v1631 = vunpack.c.l.b16 %v1553
        %v1632 = vunpack.c.h.b16 %v1553
        %v1633 = vunpack.c.l.b16 %v1554
        %v1634 = vunpack.c.h.b16 %v1554
        %v1635 = vunpack.c.l.b16 %v1555
        %v1636 = vunpack.c.h.b16 %v1555
        %v1637 = vunpack.c.l.b16 %v1556
        %v1638 = vunpack.c.h.b16 %v1556
        %v1639 = vunpack.c.l.b16 %v1557
        %v1640 = vunpack.c.h.b16 %v1557
        %v1641 = vunpack.c.l.b16 %v1558
        %v1642 = vunpack.c.h.b16 %v1558
        %v1643 = vunpack.c.l.b16 %v1559
        %v1644 = vunpack.c.h.b16 %v1559
        %v1645 = vunpack.c.l.b16 %v1560
        %v1646 = vunpack.c.h.b16 %v1560
        %v1647 = vunpack.c.l.b16 %v1561
        %v1648 = vunpack.c.h.b16 %v1561
        %v1649 = vunpack.c.l.b16 %v1562
        %v1650 = vunpack.c.h.b16 %v1562
        %v1651 = vunpack.c.l.b16 %v1563
        %v1652 = vunpack.c.h.b16 %v1563
        %v1653 = vunpack.c.l.b16 %v1564
        %v1654 = vunpack.c.h.b16 %v1564
        %v1655 = vunpack.c.l.b16 %v1565
        %v1656 = vunpack.c.h.b16 %v1565
        %v1657 = vunpack.c.l.b16 %v1566
        %v1658 = vunpack.c.h.b16 %v1566
        %v1659 = vunpack.c.l.b16 %v1567
        %v1660 = vunpack.c.h.b16 %v1567
        %v1661 = vunpack.c.l.b16 %v1568
        %v1662 = vunpack.c.h.b16 %v1568
        %v1663 = vunpack.c.l.b16 %v1569
        %v1664 = vunpack.c.h.b16 %v1569
        %v1665 = vunpack.c.l.b16 %v1570
        %v1666 = vunpack.c.h.b16 %v1570
        %v1667 = vunpack.c.l.b16 %v1571
        %v1668 = vunpack.c.h.b16 %v1571
        %v1669 = vunpack.c.l.b16 %v1572
        %v1670 = vunpack.c.h.b16 %v1572
        %v1671 = vunpack.c.l.b16 %v1573
        %v1672 = vunpack.c.h.b16 %v1573
        %v1673 = vunpack.c.l.b16 %v1574
        %v1674 = vunpack.c.h.b16 %v1574
        %v1675 = vunpack.c.l.b16 %v1575
        %v1676 = vunpack.c.h.b16 %v1575
        %v1677 = vunpack.c.l.b16 %v1576
        %v1678 = vunpack.c.h.b16 %v1576
        %v1679 = vunpack.c.l.b16 %v1577
        %v1680 = vunpack.c.h.b16 %v1577
        %v1681 = vunpack.c.l.b16 %v1578
        %v1682 = vunpack.c.h.b16 %v1578
        %v1683 = vunpack.c.l.b16 %v1579
        %v1684 = vunpack.c.h.b16 %v1579
        %v1685 = vunpack.c.l.b16 %v1580
        %v1686 = vunpack.c.h.b16 %v1580
        %v1687 = vunpack.c.l.b16 %v1581
        %v1688 = vunpack.c.h.b16 %v1581
        %v1689 = vunpack.c.l.b16 %v1582
        %v1690 = vunpack.c.h.b16 %v1582
        %v1691 = vpack.c.b16 %v1629, %v1627
        %v1692 = vpack.c.b16 %v1630, %v1628
        %v1693 = vpack.c.b16 %v1633, %v1631
        %v1694 = vpack.c.b16 %v1634, %v1632
        %v1695 = vpack.c.b16 %v1637, %v1635
        %v1696 = vpack.c.b16 %v1638, %v1636
        %v1697 = vpack.c.b16 %v1641, %v1639
        %v1698 = vpack.c.b16 %v1642, %v1640
        %v1699 = vpack.c.b16 %v1645, %v1643
        %v1700 = vpack.c.b16 %v1646, %v1644
        %v1701 = vpack.c.b16 %v1649, %v1647
        %v1702 = vpack.c.b16 %v1650, %v1648
        %v1703 = vpack.c.b16 %v1653, %v1651
        %v1704 = vpack.c.b16 %v1654, %v1652
        %v1705 = vpack.c.b16 %v1657, %v1655
        %v1706 = vpack.c.b16 %v1658, %v1656
        %v1707 = vpack.c.b16 %v1661, %v1659
        %v1708 = vpack.c.b16 %v1662, %v1660
        %v1709 = vpack.c.b16 %v1665, %v1663
        %v1710 = vpack.c.b16 %v1666, %v1664
        %v1711 = vpack.c.b16 %v1669, %v1667
        %v1712 = vpack.c.b16 %v1670, %v1668
        %v1713 = vpack.c.b16 %v1673, %v1671
        %v1714 = vpack.c.b16 %v1674, %v1672
        %v1715 = vpack.c.b16 %v1677, %v1675
        %v1716 = vpack.c.b16 %v1678, %v1676
        %v1717 = vpack.c.b16 %v1681, %v1679
        %v1718 = vpack.c.b16 %v1682, %v1680
        %v1719 = vpack.c.b16 %v1685, %v1683
        %v1720 = vpack.c.b16 %v1686, %v1684
        %v1721 = vpack.c.b16 %v1689, %v1687
        %v1722 = vpack.c.b16 %v1690, %v1688
        %1755 = vmatprep.subr.bf16.mxu0 %v1706
        %1756 = vmatpush1.bf16.msra.mxu0 %v1705
        %1757 = vmatprep.subr.bf16.mxu0 %v1704
        %1758 = vmatpush1.bf16.msra.mxu0 %v1703
        %1759 = vmatprep.subr.bf16.mxu0 %v1702
        %1760 = vmatpush1.bf16.msra.mxu0 %v1701
        %1761 = vmatprep.subr.bf16.mxu0 %v1700
        %1762 = vmatpush1.bf16.msra.mxu0 %v1699
        %1763 = vmatprep.subr.bf16.mxu0 %v1698
        %1764 = vmatpush1.bf16.msra.mxu0 %v1697
        %1765 = vmatprep.subr.bf16.mxu0 %v1696
        %1766 = vmatpush1.bf16.msra.mxu0 %v1695
        %1767 = vmatprep.subr.bf16.mxu0 %v1694
        %1768 = vmatpush1.bf16.msra.mxu0 %v1693
        %1769 = vmatprep.subr.bf16.mxu0 %v1692
        %1770 = vmatpush1.bf16.msra.mxu0 %v1691
        %1771 = vmatprep.subr.bf16.mxu0 %v1722
        %1772 = vmatpush2.bf16.msra.mxu0 %v1721
        %1773 = vmatprep.subr.bf16.mxu0 %v1720
        %1774 = vmatpush2.bf16.msra.mxu0 %v1719
        %1775 = vmatprep.subr.bf16.mxu0 %v1718
        %1776 = vmatpush2.bf16.msra.mxu0 %v1717
        %1777 = vmatprep.subr.bf16.mxu0 %v1716
        %1778 = vmatpush2.bf16.msra.mxu0 %v1715
        %1779 = vmatprep.subr.bf16.mxu0 %v1714
        %1780 = vmatpush2.bf16.msra.mxu0 %v1713
        %1781 = vmatprep.subr.bf16.mxu0 %v1712
        %1782 = vmatpush2.bf16.msra.mxu0 %v1711
        %1783 = vmatprep.subr.bf16.mxu0 %v1710
        %1784 = vmatpush2.bf16.msra.mxu0 %v1709
        %1785 = vmatprep.subr.bf16.mxu0 %v1708
        %1786 = vmatpush2.bf16.msra.mxu0 %v1707
        %1787 = vmatprep.mubr.bf16.mxu0 %v1550
        %1788 = vmatmul.mubr.bf16.gmra.mxu0 %v1549
        %v1789 = vpop.f32.mrf.mxu0
        %v1790 = vadd.f32 %v1588, %v1789
        %v1791 = vpop.f32.mrf.mxu0
        %v1792 = vadd.f32 %v1592, %v1791
        %v1793 = vpop.f32.mrf.mxu0
        %v1794 = vadd.f32 %v1588, %v1793
        %v1795 = vpop.f32.mrf.mxu0
        %v1796 = vadd.f32 %v1592, %v1795
        %1797 = vdwg.mxu0
        %v1798 = vadd.f32 %v303, %v1790
        %v1799 = vadd.f32 %v304, %v1792
        %v1800 = vadd.f32 %v305, %v1794
        %v1801 = vadd.f32 %v306, %v1796
        %1802 = vst [vmem:[%s300] sm:$0xff] %v1798
        %1803 = vst [vmem:[%s300 + $0x8] sm:$0xff] %v1799
        %1804 = vst [vmem:[%s300 + $0x10] sm:$0xff] %v1800
        %1805 = vst [vmem:[%s300 + $0x18] sm:$0xff] %v1801
        %s1806 = smul.u32 2, %s19
        %p1807 = scmp.lt.s32.totalorder %s1806, 3
        %s1808 = scalar_select %p1807, %s1806, 3
        %s1809 = smul.addr %s1808, 2
        %s1810 = smul.addr %s1809, 8
        %s1811 = scalar_lea.vmem %s7, %s1810
        // Predicated region
        $region53: #{_lambda_.9} parent=47 // pred_check
          %p1812 = pneg %p189
        $region54: #{_lambda_.9} parent=47 // pred_check_branch
          %1814 = sbr.rel (%p1812) target = $region56
        $region55: #{_lambda_.9} parent=47 // pred_region
          %s1815 = smul.u32 2, %s19
        $region56: #{_lambda_.9} parent=47 // pred_fallthru
          _
      $region48: #{_lambda_.9} parent=5 // pred_fallthru
        _
      %p1816 = scmp.le.s32.totalorder 2, %s14
      // Predicated region
      $region57: #{_lambda_.9} parent=5 // pred_check
        %p1817 = pneg %p1816
      $region58: #{_lambda_.9} parent=5 // pred_check_branch
        %1819 = sbr.rel (%p1817) target = $region60
      $region59: #{_lambda_.9} parent=5 // pred_region
        %s1820 = ssub.s32 %s14, 2
        // Predicated region
        $region61: #{_lambda_.9} parent=59 // pred_check
          %p1821 = pneg %p195
        $region62: #{_lambda_.9} parent=59 // pred_check_branch
          %1823 = sbr.rel (%p1821) target = $region64
        $region63: #{_lambda_.9} parent=59 // pred_region
          %s1824 = smul.u32 2, %s20
          %p1825 = scmp.lt.s32.totalorder %s1824, 3
          %s1826 = scalar_select %p1825, %s1824, 3
          %s1827 = smul.addr %s1826, 2
          %s1828 = smul.addr %s1827, 8
          %s1829 = scalar_lea.vmem %s7, %s1828
        $region64: #{_lambda_.9} parent=59 // pred_fallthru
          _
      $region60: #{_lambda_.9} parent=5 // pred_fallthru
        _
    $region6: #{_lambda_.9} parent=1 // loop_footer
      %s18 = sadd.s32 1, %s14
    $region7: #{_lambda_.9} parent=1 // loop_footer_branch
      %13 = sbr.rel target = $region3
    $region8: #{_lambda_.9} parent=1 // loop_exit
      _
    %1830 = vsyncpa [#allocation4], 1
    %s1831 = scalar_lea.sflag [#allocation4], 1
    %1832 = vsyncpa %s1831, 1

// kernel: _lambda_.10
$region0: #{_lambda_.10}
  #allocation0 [shape = 'u32[]', space=smem, size = 0x4, offset = 0x4, fixed_abs, tag = 'smem constant byte address 0x4 - core index']
  #allocation1 [shape = 'u32[144,128]{1,0:T(1,128)}', space=vmem, size = 0x12000, scoped, tag = 'internal scratch']
  #allocation2 [shape = 'f32[16,256]{1,0:T(8,128)}', space=vmem, size = 0x4000, scoped, tag = 'scratch operand']
  %s0 = inlined_call_operand.vmem [shape: f32[32,256], index: 0, kind: input, shape index: {}, may-alias: {0,10}]
  %s1 = inlined_call_operand.vmem [shape: bf16[64,256], index: 1, kind: input, shape index: {}]
  %s2 = inlined_call_operand.vmem [shape: f32[1,256], index: 2, kind: input, shape index: {}]
  %s3 = inlined_call_operand.vmem [shape: f32[1,256], index: 3, kind: input, shape index: {}]
  %s4 = inlined_call_operand.vmem [shape: bf16[256,256], index: 4, kind: input, shape index: {}]
  %s5 = inlined_call_operand.vmem [shape: f32[1,256], index: 5, kind: input, shape index: {}]
  %s6 = inlined_call_operand.vmem [shape: bf16[256,512], index: 6, kind: input, shape index: {}]
  %s7 = inlined_call_operand.vmem [shape: f32[1,512], index: 7, kind: input, shape index: {}]
  %s8 = inlined_call_operand.vmem [shape: bf16[256,256], index: 8, kind: input, shape index: {}]
  %s9 = inlined_call_operand.vmem [shape: f32[1,256], index: 9, kind: input, shape index: {}]
  %s10 = inlined_call_operand.vmem [shape: f32[32,256], index: 10, kind: output, shape index: {}, may-alias: {0,10}]
  %s11 = sld [smem:[#allocation0]]
  $region73: #{_lambda_.10} parent=0
    _
  %s13 = ssub.s32 1, %s11
  %s14 = scalar_select 0, %s13, %s11
  loop: start=0, step=1, limit=4
  $region2: #{_lambda_.10} parent=0 // loop_pre_header
    _
  $region3: #{_lambda_.10} parent=0 // loop_header
    %s16 = sphi 0, %s20
    %p17 = scmp.ge.s32.totalorder %s16, 4
    %s26 = sphi 0, %s28
    %s29 = sphi 0, %s26
    %s30 = sphi 0, %s29
    %s46 = sphi 0, %s30
    %s52 = sphi 0, %s54
    %s55 = sphi 0, %s52
    %s56 = sphi 0, %s55
    %s72 = sphi 0, %s56
    %s76 = sphi 0, %s76
    %s78 = sphi 0, %s76
    %s79 = sphi 0, %s78
    %s93 = sphi 0, %s79
    %s97 = sphi 0, %s97
    %s99 = sphi 0, %s97
    %s100 = sphi 0, %s99
    %s114 = sphi 0, %s100
    %s118 = sphi 0, %s118
    %s120 = sphi 0, %s118
    %s121 = sphi 0, %s120
    %s135 = sphi 0, %s121
    %s139 = sphi 0, %s139
    %s141 = sphi 0, %s139
    %s142 = sphi 0, %s141
    %s156 = sphi 0, %s142
    %s160 = sphi 0, %s160
    %s162 = sphi 0, %s160
    %s163 = sphi 0, %s162
    %s177 = sphi 0, %s163
    %s181 = sphi 0, %s181
    %s183 = sphi 0, %s181
    %s184 = sphi 0, %s183
    %s198 = sphi 0, %s184
    %s202 = sphi 0, %s202
    %s204 = sphi 0, %s202
    %s205 = sphi 0, %s204
    %s219 = sphi 0, %s205
    %s223 = sphi 0, %s223
    %s225 = sphi 0, %s223
    %s226 = sphi 0, %s225
    %s240 = sphi 0, %s226
    %s246 = sphi 0, %s248
    %s249 = sphi 0, %s246
    %s250 = sphi 0, %s249
    %s266 = sphi 0, %s250
  $region4: #{_lambda_.10} parent=0 // loop_header_branch
    %19 = sbr.rel (%p17) target = $region8
  $region5: #{_lambda_.10} parent=0 // loop_body
    %s21 = ssub.s32 %s16, 1
    %s22 = ssub.s32 %s16, 2
    %s23 = sadd.s32 %s16, 1
    %s24 = ssub.s32 %s16, %s23
    %p25 = scmp.eq.s32.totalorder %s24, 0
    %s27 = sadd.s32 %s26, 1
    %s28 = scalar_select %p25, %s26, %s27
    %p31 = pneg %p25
    %p32 = scmp.eq.s32.totalorder %s16, 1
    %p33 = por %p31, %p32
    %p34 = scmp.ne.s32.totalorder %s26, %s29
    %p35 = scmp.eq.s32.totalorder %s16, 0
    %p36 = por %p34, %p35
    %p37 = scmp.ne.s32.totalorder %s26, %s29
    %p38 = scmp.eq.s32.totalorder %s21, 1
    %p39 = por %p37, %p38
    %p40 = scmp.ne.s32.totalorder %s29, %s30
    %p41 = scmp.eq.s32.totalorder %s21, 0
    %p42 = por %p40, %p41
    %p43 = scmp.ne.s32.totalorder %s29, %s30
    %p44 = scmp.eq.s32.totalorder %s22, 1
    %p45 = por %p43, %p44
    %p47 = scmp.ne.s32.totalorder %s30, %s46
    %p48 = scmp.eq.s32.totalorder %s22, 0
    %p49 = por %p47, %p48
    %s50 = ssub.s32 %s16, %s23
    %p51 = scmp.eq.s32.totalorder %s50, 0
    %s53 = sadd.s32 %s52, 1
    %s54 = scalar_select %p51, %s52, %s53
    %p57 = pneg %p51
    %p58 = scmp.eq.s32.totalorder %s16, 1
    %p59 = por %p57, %p58
    %p60 = scmp.ne.s32.totalorder %s52, %s55
    %p61 = scmp.eq.s32.totalorder %s16, 0
    %p62 = por %p60, %p61
    %p63 = scmp.ne.s32.totalorder %s52, %s55
    %p64 = scmp.eq.s32.totalorder %s21, 1
    %p65 = por %p63, %p64
    %p66 = scmp.ne.s32.totalorder %s55, %s56
    %p67 = scmp.eq.s32.totalorder %s21, 0
    %p68 = por %p66, %p67
    %p69 = scmp.ne.s32.totalorder %s55, %s56
    %p70 = scmp.eq.s32.totalorder %s22, 1
    %p71 = por %p69, %p70
    %p73 = scmp.ne.s32.totalorder %s56, %s72
    %p74 = scmp.eq.s32.totalorder %s22, 0
    %p75 = por %p73, %p74
    %s77 = sadd.s32 %s76, 1
    %p80 = scmp.eq.s32.totalorder %s16, 1
    %p81 = scmp.ne.s32.totalorder %s76, %s78
    %p82 = scmp.eq.s32.totalorder %s16, 0
    %p83 = por %p81, %p82
    %p84 = scmp.ne.s32.totalorder %s76, %s78
    %p85 = scmp.eq.s32.totalorder %s21, 1
    %p86 = por %p84, %p85
    %p87 = scmp.ne.s32.totalorder %s78, %s79
    %p88 = scmp.eq.s32.totalorder %s21, 0
    %p89 = por %p87, %p88
    %p90 = scmp.ne.s32.totalorder %s78, %s79
    %p91 = scmp.eq.s32.totalorder %s22, 1
    %p92 = por %p90, %p91
    %p94 = scmp.ne.s32.totalorder %s79, %s93
    %p95 = scmp.eq.s32.totalorder %s22, 0
    %p96 = por %p94, %p95
    %s98 = sadd.s32 %s97, 1
    %p101 = scmp.eq.s32.totalorder %s16, 1
    %p102 = scmp.ne.s32.totalorder %s97, %s99
    %p103 = scmp.eq.s32.totalorder %s16, 0
    %p104 = por %p102, %p103
    %p105 = scmp.ne.s32.totalorder %s97, %s99
    %p106 = scmp.eq.s32.totalorder %s21, 1
    %p107 = por %p105, %p106
    %p108 = scmp.ne.s32.totalorder %s99, %s100
    %p109 = scmp.eq.s32.totalorder %s21, 0
    %p110 = por %p108, %p109
    %p111 = scmp.ne.s32.totalorder %s99, %s100
    %p112 = scmp.eq.s32.totalorder %s22, 1
    %p113 = por %p111, %p112
    %p115 = scmp.ne.s32.totalorder %s100, %s114
    %p116 = scmp.eq.s32.totalorder %s22, 0
    %p117 = por %p115, %p116
    %s119 = sadd.s32 %s118, 1
    %p122 = scmp.eq.s32.totalorder %s16, 1
    %p123 = scmp.ne.s32.totalorder %s118, %s120
    %p124 = scmp.eq.s32.totalorder %s16, 0
    %p125 = por %p123, %p124
    %p126 = scmp.ne.s32.totalorder %s118, %s120
    %p127 = scmp.eq.s32.totalorder %s21, 1
    %p128 = por %p126, %p127
    %p129 = scmp.ne.s32.totalorder %s120, %s121
    %p130 = scmp.eq.s32.totalorder %s21, 0
    %p131 = por %p129, %p130
    %p132 = scmp.ne.s32.totalorder %s120, %s121
    %p133 = scmp.eq.s32.totalorder %s22, 1
    %p134 = por %p132, %p133
    %p136 = scmp.ne.s32.totalorder %s121, %s135
    %p137 = scmp.eq.s32.totalorder %s22, 0
    %p138 = por %p136, %p137
    %s140 = sadd.s32 %s139, 1
    %p143 = scmp.eq.s32.totalorder %s16, 1
    %p144 = scmp.ne.s32.totalorder %s139, %s141
    %p145 = scmp.eq.s32.totalorder %s16, 0
    %p146 = por %p144, %p145
    %p147 = scmp.ne.s32.totalorder %s139, %s141
    %p148 = scmp.eq.s32.totalorder %s21, 1
    %p149 = por %p147, %p148
    %p150 = scmp.ne.s32.totalorder %s141, %s142
    %p151 = scmp.eq.s32.totalorder %s21, 0
    %p152 = por %p150, %p151
    %p153 = scmp.ne.s32.totalorder %s141, %s142
    %p154 = scmp.eq.s32.totalorder %s22, 1
    %p155 = por %p153, %p154
    %p157 = scmp.ne.s32.totalorder %s142, %s156
    %p158 = scmp.eq.s32.totalorder %s22, 0
    %p159 = por %p157, %p158
    %s161 = sadd.s32 %s160, 1
    %p164 = scmp.eq.s32.totalorder %s16, 1
    %p165 = scmp.ne.s32.totalorder %s160, %s162
    %p166 = scmp.eq.s32.totalorder %s16, 0
    %p167 = por %p165, %p166
    %p168 = scmp.ne.s32.totalorder %s160, %s162
    %p169 = scmp.eq.s32.totalorder %s21, 1
    %p170 = por %p168, %p169
    %p171 = scmp.ne.s32.totalorder %s162, %s163
    %p172 = scmp.eq.s32.totalorder %s21, 0
    %p173 = por %p171, %p172
    %p174 = scmp.ne.s32.totalorder %s162, %s163
    %p175 = scmp.eq.s32.totalorder %s22, 1
    %p176 = por %p174, %p175
    %p178 = scmp.ne.s32.totalorder %s163, %s177
    %p179 = scmp.eq.s32.totalorder %s22, 0
    %p180 = por %p178, %p179
    %s182 = sadd.s32 %s181, 1
    %p185 = scmp.eq.s32.totalorder %s16, 1
    %p186 = scmp.ne.s32.totalorder %s181, %s183
    %p187 = scmp.eq.s32.totalorder %s16, 0
    %p188 = por %p186, %p187
    %p189 = scmp.ne.s32.totalorder %s181, %s183
    %p190 = scmp.eq.s32.totalorder %s21, 1
    %p191 = por %p189, %p190
    %p192 = scmp.ne.s32.totalorder %s183, %s184
    %p193 = scmp.eq.s32.totalorder %s21, 0
    %p194 = por %p192, %p193
    %p195 = scmp.ne.s32.totalorder %s183, %s184
    %p196 = scmp.eq.s32.totalorder %s22, 1
    %p197 = por %p195, %p196
    %p199 = scmp.ne.s32.totalorder %s184, %s198
    %p200 = scmp.eq.s32.totalorder %s22, 0
    %p201 = por %p199, %p200
    %s203 = sadd.s32 %s202, 1
    %p206 = scmp.eq.s32.totalorder %s16, 1
    %p207 = scmp.ne.s32.totalorder %s202, %s204
    %p208 = scmp.eq.s32.totalorder %s16, 0
    %p209 = por %p207, %p208
    %p210 = scmp.ne.s32.totalorder %s202, %s204
    %p211 = scmp.eq.s32.totalorder %s21, 1
    %p212 = por %p210, %p211
    %p213 = scmp.ne.s32.totalorder %s204, %s205
    %p214 = scmp.eq.s32.totalorder %s21, 0
    %p215 = por %p213, %p214
    %p216 = scmp.ne.s32.totalorder %s204, %s205
    %p217 = scmp.eq.s32.totalorder %s22, 1
    %p218 = por %p216, %p217
    %p220 = scmp.ne.s32.totalorder %s205, %s219
    %p221 = scmp.eq.s32.totalorder %s22, 0
    %p222 = por %p220, %p221
    %s224 = sadd.s32 %s223, 1
    %p227 = scmp.eq.s32.totalorder %s16, 1
    %p228 = scmp.ne.s32.totalorder %s223, %s225
    %p229 = scmp.eq.s32.totalorder %s16, 0
    %p230 = por %p228, %p229
    %p231 = scmp.ne.s32.totalorder %s223, %s225
    %p232 = scmp.eq.s32.totalorder %s21, 1
    %p233 = por %p231, %p232
    %p234 = scmp.ne.s32.totalorder %s225, %s226
    %p235 = scmp.eq.s32.totalorder %s21, 0
    %p236 = por %p234, %p235
    %p237 = scmp.ne.s32.totalorder %s225, %s226
    %p238 = scmp.eq.s32.totalorder %s22, 1
    %p239 = por %p237, %p238
    %p241 = scmp.ne.s32.totalorder %s226, %s240
    %p242 = scmp.eq.s32.totalorder %s22, 0
    %p243 = por %p241, %p242
    %s244 = ssub.s32 %s16, %s23
    %p245 = scmp.eq.s32.totalorder %s244, 0
    %s247 = sadd.s32 %s246, 1
    %s248 = scalar_select %p245, %s246, %s247
    %p251 = pneg %p245
    %p252 = scmp.eq.s32.totalorder %s16, 1
    %p253 = por %p251, %p252
    %p254 = scmp.ne.s32.totalorder %s246, %s249
    %p255 = scmp.eq.s32.totalorder %s16, 0
    %p256 = por %p254, %p255
    %p257 = scmp.ne.s32.totalorder %s246, %s249
    %p258 = scmp.eq.s32.totalorder %s21, 1
    %p259 = por %p257, %p258
    %p260 = scmp.ne.s32.totalorder %s249, %s250
    %p261 = scmp.eq.s32.totalorder %s21, 0
    %p262 = por %p260, %p261
    %p263 = scmp.ne.s32.totalorder %s249, %s250
    %p264 = scmp.eq.s32.totalorder %s22, 1
    %p265 = por %p263, %p264
    %p267 = scmp.ne.s32.totalorder %s250, %s266
    %p268 = scmp.eq.s32.totalorder %s22, 0
    %p269 = por %p267, %p268
    %p270 = scmp.le.s32.totalorder 1, %s16
    %p271 = scmp.lt.s32.totalorder %s16, 3
    %p272 = pnand %p270, %p271
    %p273 = pneg %p272
    // Predicated region
    $region9: #{_lambda_.10} parent=5 // pred_check
      _
    $region10: #{_lambda_.10} parent=5 // pred_check_branch
      %275 = sbr.rel (%p272) target = $region12
    $region11: #{_lambda_.10} parent=5 // pred_region
      %s276 = ssub.s32 %s16, 1
      // Predicated region
      $region13: #{_lambda_.10} parent=11 // pred_check
        %p277 = pneg %p89
      $region14: #{_lambda_.10} parent=11 // pred_check_branch
        %279 = sbr.rel (%p277) target = $region16
      $region15: #{_lambda_.10} parent=11 // pred_region
        _
      $region16: #{_lambda_.10} parent=11 // pred_fallthru
        _
      // Predicated region
      $region17: #{_lambda_.10} parent=11 // pred_check
        %p280 = pneg %p110
      $region18: #{_lambda_.10} parent=11 // pred_check_branch
        %282 = sbr.rel (%p280) target = $region20
      $region19: #{_lambda_.10} parent=11 // pred_region
        _
      $region20: #{_lambda_.10} parent=11 // pred_fallthru
        _
      // Predicated region
      $region21: #{_lambda_.10} parent=11 // pred_check
        %p283 = pneg %p131
      $region22: #{_lambda_.10} parent=11 // pred_check_branch
        %285 = sbr.rel (%p283) target = $region24
      $region23: #{_lambda_.10} parent=11 // pred_region
        _
      $region24: #{_lambda_.10} parent=11 // pred_fallthru
        _
      // Predicated region
      $region25: #{_lambda_.10} parent=11 // pred_check
        %p286 = pneg %p152
      $region26: #{_lambda_.10} parent=11 // pred_check_branch
        %288 = sbr.rel (%p286) target = $region28
      $region27: #{_lambda_.10} parent=11 // pred_region
        _
      $region28: #{_lambda_.10} parent=11 // pred_fallthru
        _
      // Predicated region
      $region29: #{_lambda_.10} parent=11 // pred_check
        %p289 = pneg %p173
      $region30: #{_lambda_.10} parent=11 // pred_check_branch
        %291 = sbr.rel (%p289) target = $region32
      $region31: #{_lambda_.10} parent=11 // pred_region
        _
      $region32: #{_lambda_.10} parent=11 // pred_fallthru
        _
      // Predicated region
      $region33: #{_lambda_.10} parent=11 // pred_check
        %p292 = pneg %p194
      $region34: #{_lambda_.10} parent=11 // pred_check_branch
        %294 = sbr.rel (%p292) target = $region36
      $region35: #{_lambda_.10} parent=11 // pred_region
        _
      $region36: #{_lambda_.10} parent=11 // pred_fallthru
        _
      // Predicated region
      $region37: #{_lambda_.10} parent=11 // pred_check
        %p295 = pneg %p215
      $region38: #{_lambda_.10} parent=11 // pred_check_branch
        %297 = sbr.rel (%p295) target = $region40
      $region39: #{_lambda_.10} parent=11 // pred_region
        _
      $region40: #{_lambda_.10} parent=11 // pred_fallthru
        _
      // Predicated region
      $region41: #{_lambda_.10} parent=11 // pred_check
        %p298 = pneg %p236
      $region42: #{_lambda_.10} parent=11 // pred_check_branch
        %300 = sbr.rel (%p298) target = $region44
      $region43: #{_lambda_.10} parent=11 // pred_region
        _
      $region44: #{_lambda_.10} parent=11 // pred_fallthru
        _
    $region12: #{_lambda_.10} parent=5 // pred_fallthru
      _
    %p301 = scmp.lt.s32.totalorder %s16, 2
    // Predicated region
    $region45: #{_lambda_.10} parent=5 // pred_check
      %p302 = pneg %p301
    $region46: #{_lambda_.10} parent=5 // pred_check_branch
      %304 = sbr.rel (%p302) target = $region48
    $region47: #{_lambda_.10} parent=5 // pred_region
      // Predicated region
      $region49: #{_lambda_.10} parent=47 // pred_check
        %p305 = pneg %p36
      $region50: #{_lambda_.10} parent=47 // pred_check_branch
        %307 = sbr.rel (%p305) target = $region52
      $region51: #{_lambda_.10} parent=47 // pred_region
        %s308 = smul.u32 2, %s16
        %p309 = scmp.lt.s32.totalorder %s308, 3
        %s310 = scalar_select %p309, %s308, 3
        %s311 = smul.addr %s310, 2
        %s312 = smul.addr %s311, 8
        %s313 = scalar_lea.vmem %s0, %s312
        %s314 = smul.u32 2, %s16
      $region52: #{_lambda_.10} parent=47 // pred_fallthru
        _
      // Predicated region
      $region53: #{_lambda_.10} parent=47 // pred_check
        %p315 = pneg %p62
      $region54: #{_lambda_.10} parent=47 // pred_check_branch
        %317 = sbr.rel (%p315) target = $region56
      $region55: #{_lambda_.10} parent=47 // pred_region
        %s318 = smul.u32 4, %s16
        %p319 = scmp.lt.s32.totalorder %s318, 7
        %s320 = scalar_select %p319, %s318, 7
        %s321 = smul.addr %s320, 2
        %s322 = smul.addr %s321, 4
        %s323 = scalar_lea.vmem %s1, %s322
        %s324 = smul.u32 4, %s16
      $region56: #{_lambda_.10} parent=47 // pred_fallthru
        _
    $region48: #{_lambda_.10} parent=5 // pred_fallthru
      _
    %p325 = scmp.le.s32.totalorder 1, %s16
    %p326 = scmp.lt.s32.totalorder %s16, 3
    %p327 = pnand %p325, %p326
    %p328 = pneg %p327
    // Predicated region
    $region57: #{_lambda_.10} parent=5 // pred_check
      _
    $region58: #{_lambda_.10} parent=5 // pred_check_branch
      %330 = sbr.rel (%p327) target = $region60
    $region59: #{_lambda_.10} parent=5 // pred_region
      %s331 = ssub.s32 %s16, 1
      %s332 = smul.u32 2, %s21
      %p333 = scmp.lt.s32.totalorder %s332, 3
      %s334 = scalar_select %p333, %s332, 3
      %s335 = smul.addr %s334, 2
      %s336 = smul.addr %s335, 8
      %s337 = scalar_lea.vmem %s0, %s336
      %p338 = pneg %p42
      %p339 = pneg %p39
      %s340 = smul.u32 4, %s21
      %p341 = scmp.lt.s32.totalorder %s340, 7
      %s342 = scalar_select %p341, %s340, 7
      %s343 = smul.addr %s342, 2
      %s344 = smul.addr %s343, 4
      %s345 = scalar_lea.vmem %s1, %s344
      %p346 = pneg %p68
      %p347 = pneg %p65
      %p348 = pneg %p89
      %p349 = pneg %p86
      %p350 = pneg %p110
      %p351 = pneg %p107
      %p352 = pneg %p131
      %p353 = pneg %p128
      %p354 = pneg %p152
      %p355 = pneg %p149
      %p356 = pneg %p173
      %p357 = pneg %p170
      %p358 = pneg %p194
      %p359 = pneg %p191
      %p360 = pneg %p215
      %p361 = pneg %p212
      %p362 = pneg %p236
      %p363 = pneg %p233
      %p364 = pneg %p262
      %p365 = pneg %p259
      %s366 = smul.u32 2, %s21
      %p367 = scmp.lt.s32.totalorder %s366, 3
      %s368 = scalar_select %p367, %s366, 3
      %s369 = smul.addr %s368, 2
      %s370 = smul.addr %s369, 8
      %s371 = scalar_lea.vmem %s10, %s370
      %s372 = smul.u32 2, %s21
      %p373 = scmp.lt.s32.totalorder %s372, 3
      %s374 = scalar_select %p373, %s372, 3
      %s375 = smul.addr %s374, 2
      %s376 = smul.addr %s375, 8
      %s377 = scalar_lea.vmem %s0, %s376
      %s378 = smul.u32 2, %s21
      %s379 = smul.u32 4, %s21
      %p380 = scmp.lt.s32.totalorder %s379, 7
      %s381 = scalar_select %p380, %s379, 7
      %s382 = smul.addr %s381, 2
      %s383 = smul.addr %s382, 4
      %s384 = scalar_lea.vmem %s1, %s383
      %s385 = smul.u32 4, %s21
      %s386 = smul.u32 2, %s21
      %p387 = scmp.lt.s32.totalorder %s386, 3
      %s388 = scalar_select %p387, %s386, 3
      %s389 = smul.addr %s388, 2
      %s390 = smul.addr %s389, 8
      %s391 = scalar_lea.vmem %s10, %s390
      %s392 = smul.u32 2, %s21
      %v394 = vld [vmem:[%s377] sm:$0xff]
      %v395 = vld [vmem:[%s377 + $0x8] sm:$0xff]
      %v396 = vld [vmem:[%s377 + $0x10] sm:$0xff]
      %v397 = vld [vmem:[%s377 + $0x18] sm:$0xff]
      %v398 = vld [vmem:[%s384] sm:$0xff]
      %v399 = vld [vmem:[%s384 + $0x8] sm:$0xff]
      %v400 = vld [vmem:[%s384 + $0x10] sm:$0xff]
      %v401 = vld [vmem:[%s384 + $0x18] sm:$0xff]
      %v402 = vld [vmem:[%s2] sm:$0x3]
      %v403 = vld [vmem:[%s3] sm:$0x3]
      %v404 = vadd.f32 %v394, %v395
      %405 = vadd.xlane.f32.xlu0 %v404
      %v406 = vpop.xlane.xlu0 %405
      %v407 = vadd.f32 %v396, %v397
      %408 = vadd.xlane.f32.xlu0 %v407
      %v409 = vpop.xlane.xlu0 %408
      %v410 = vrcp.pop 256.0
      %v411 = vmul.f32 %v406, %v410
      %v412 = vmul.f32 %v409, %v410
      %v413 = vsub.f32 %v394, %v411
      %v414 = vsub.f32 %v395, %v411
      %v415 = vsub.f32 %v396, %v412
      %v416 = vsub.f32 %v397, %v412
      %v417 = vmul.f32 %v413, %v413
      %v418 = vmul.f32 %v414, %v414
      %v419 = vmul.f32 %v415, %v415
      %v420 = vmul.f32 %v416, %v416
      %v421 = vadd.f32 %v417, %v418
      %422 = vadd.xlane.f32.xlu0 %v421
      %v423 = vpop.xlane.xlu0 %422
      %v424 = vadd.f32 %v419, %v420
      %425 = vadd.xlane.f32.xlu0 %v424
      %v426 = vpop.xlane.xlu0 %425
      %v427 = vmul.f32 %v423, %v410
      %v428 = vmul.f32 %v426, %v410
      %v429 = vadd.f32 %v427, 1e-05
      %v430 = vadd.f32 %v428, 1e-05
      %v431 = vrsqrt.pop %v429
      %v432 = vrsqrt.pop %v430
      %v433 = vmul.f32 %v413, %v431
      %v434 = vmul.f32 %v414, %v431
      %v435 = vmul.f32 %v415, %v432
      %v436 = vmul.f32 %v416, %v432
      %v438 = vlaneseq
      %v439 = vshrl.u32 %v438, 7
      %v440 = vsub.s32 0, %v439
      %v441 = vrot.slane %v402, %v440
      %v442 = vlaneseq
      %v443 = vshrl.u32 %v442, 7
      %v444 = vsub.s32 1, %v443
      %v445 = vrot.slane %v402, %v444
      %v448 = vmul.f32 %v433, %v441
      %v449 = vmul.f32 %v434, %v445
      %v450 = vmul.f32 %v435, %v441
      %v451 = vmul.f32 %v436, %v445
      %v453 = vlaneseq
      %v454 = vshrl.u32 %v453, 7
      %v455 = vsub.s32 0, %v454
      %v456 = vrot.slane %v403, %v455
      %v457 = vlaneseq
      %v458 = vshrl.u32 %v457, 7
      %v459 = vsub.s32 1, %v458
      %v460 = vrot.slane %v403, %v459
      %v463 = vadd.f32 %v448, %v456
      %v464 = vadd.f32 %v449, %v460
      %v465 = vadd.f32 %v450, %v456
      %v466 = vadd.f32 %v451, %v460
      %v467 = vpack.c.bf16 %v465, %v463
      %v468 = vpack.c.bf16 %v466, %v464
      %v469 = vld [vmem:[%s4] sm:$0xff]
      %v470 = vld [vmem:[%s4 + $0x8] sm:$0xff]
      %v471 = vld [vmem:[%s4 + $0x10] sm:$0xff]
      %v472 = vld [vmem:[%s4 + $0x18] sm:$0xff]
      %v473 = vld [vmem:[%s4 + $0x20] sm:$0xff]
      %v474 = vld [vmem:[%s4 + $0x28] sm:$0xff]
      %v475 = vld [vmem:[%s4 + $0x30] sm:$0xff]
      %v476 = vld [vmem:[%s4 + $0x38] sm:$0xff]
      %v477 = vld [vmem:[%s4 + $0x40] sm:$0xff]
      %v478 = vld [vmem:[%s4 + $0x48] sm:$0xff]
      %v479 = vld [vmem:[%s4 + $0x50] sm:$0xff]
      %v480 = vld [vmem:[%s4 + $0x58] sm:$0xff]
      %v481 = vld [vmem:[%s4 + $0x60] sm:$0xff]
      %v482 = vld [vmem:[%s4 + $0x68] sm:$0xff]
      %v483 = vld [vmem:[%s4 + $0x70] sm:$0xff]
      %v484 = vld [vmem:[%s4 + $0x78] sm:$0xff]
      %v485 = vld [vmem:[%s4 + $0x80] sm:$0xff]
      %v486 = vld [vmem:[%s4 + $0x88] sm:$0xff]
      %v487 = vld [vmem:[%s4 + $0x90] sm:$0xff]
      %v488 = vld [vmem:[%s4 + $0x98] sm:$0xff]
      %v489 = vld [vmem:[%s4 + $0xa0] sm:$0xff]
      %v490 = vld [vmem:[%s4 + $0xa8] sm:$0xff]
      %v491 = vld [vmem:[%s4 + $0xb0] sm:$0xff]
      %v492 = vld [vmem:[%s4 + $0xb8] sm:$0xff]
      %v493 = vld [vmem:[%s4 + $0xc0] sm:$0xff]
      %v494 = vld [vmem:[%s4 + $0xc8] sm:$0xff]
      %v495 = vld [vmem:[%s4 + $0xd0] sm:$0xff]
      %v496 = vld [vmem:[%s4 + $0xd8] sm:$0xff]
      %v497 = vld [vmem:[%s4 + $0xe0] sm:$0xff]
      %v498 = vld [vmem:[%s4 + $0xe8] sm:$0xff]
      %v499 = vld [vmem:[%s4 + $0xf0] sm:$0xff]
      %v500 = vld [vmem:[%s4 + $0xf8] sm:$0xff]
      %v501 = vld [vmem:[%s5] sm:$0x3]
      %v503 = vlaneseq
      %v504 = vshrl.u32 %v503, 7
      %v505 = vsub.s32 0, %v504
      %v506 = vrot.slane %v501, %v505
      %v507 = vlaneseq
      %v508 = vshrl.u32 %v507, 7
      %v509 = vsub.s32 1, %v508
      %v510 = vrot.slane %v501, %v509
      %v545 = vunpack.c.l.b16 %v469
      %v546 = vunpack.c.h.b16 %v469
      %v547 = vunpack.c.l.b16 %v470
      %v548 = vunpack.c.h.b16 %v470
      %v549 = vunpack.c.l.b16 %v471
      %v550 = vunpack.c.h.b16 %v471
      %v551 = vunpack.c.l.b16 %v472
      %v552 = vunpack.c.h.b16 %v472
      %v553 = vunpack.c.l.b16 %v473
      %v554 = vunpack.c.h.b16 %v473
      %v555 = vunpack.c.l.b16 %v474
      %v556 = vunpack.c.h.b16 %v474
      %v557 = vunpack.c.l.b16 %v475
      %v558 = vunpack.c.h.b16 %v475
      %v559 = vunpack.c.l.b16 %v476
      %v560 = vunpack.c.h.b16 %v476
      %v561 = vunpack.c.l.b16 %v477
      %v562 = vunpack.c.h.b16 %v477
      %v563 = vunpack.c.l.b16 %v478
      %v564 = vunpack.c.h.b16 %v478
      %v565 = vunpack.c.l.b16 %v479
      %v566 = vunpack.c.h.b16 %v479
      %v567 = vunpack.c.l.b16 %v480
      %v568 = vunpack.c.h.b16 %v480
      %v569 = vunpack.c.l.b16 %v481
      %v570 = vunpack.c.h.b16 %v481
      %v571 = vunpack.c.l.b16 %v482
      %v572 = vunpack.c.h.b16 %v482
      %v573 = vunpack.c.l.b16 %v483
      %v574 = vunpack.c.h.b16 %v483
      %v575 = vunpack.c.l.b16 %v484
      %v576 = vunpack.c.h.b16 %v484
      %v577 = vunpack.c.l.b16 %v485
      %v578 = vunpack.c.h.b16 %v485
      %v579 = vunpack.c.l.b16 %v486
      %v580 = vunpack.c.h.b16 %v486
      %v581 = vunpack.c.l.b16 %v487
      %v582 = vunpack.c.h.b16 %v487
      %v583 = vunpack.c.l.b16 %v488
      %v584 = vunpack.c.h.b16 %v488
      %v585 = vunpack.c.l.b16 %v489
      %v586 = vunpack.c.h.b16 %v489
      %v587 = vunpack.c.l.b16 %v490
      %v588 = vunpack.c.h.b16 %v490
      %v589 = vunpack.c.l.b16 %v491
      %v590 = vunpack.c.h.b16 %v491
      %v591 = vunpack.c.l.b16 %v492
      %v592 = vunpack.c.h.b16 %v492
      %v593 = vunpack.c.l.b16 %v493
      %v594 = vunpack.c.h.b16 %v493
      %v595 = vunpack.c.l.b16 %v494
      %v596 = vunpack.c.h.b16 %v494
      %v597 = vunpack.c.l.b16 %v495
      %v598 = vunpack.c.h.b16 %v495
      %v599 = vunpack.c.l.b16 %v496
      %v600 = vunpack.c.h.b16 %v496
      %v601 = vunpack.c.l.b16 %v497
      %v602 = vunpack.c.h.b16 %v497
      %v603 = vunpack.c.l.b16 %v498
      %v604 = vunpack.c.h.b16 %v498
      %v605 = vunpack.c.l.b16 %v499
      %v606 = vunpack.c.h.b16 %v499
      %v607 = vunpack.c.l.b16 %v500
      %v608 = vunpack.c.h.b16 %v500
      %v609 = vpack.c.b16 %v547, %v545
      %v610 = vpack.c.b16 %v548, %v546
      %v611 = vpack.c.b16 %v551, %v549
      %v612 = vpack.c.b16 %v552, %v550
      %v613 = vpack.c.b16 %v555, %v553
      %v614 = vpack.c.b16 %v556, %v554
      %v615 = vpack.c.b16 %v559, %v557
      %v616 = vpack.c.b16 %v560, %v558
      %v617 = vpack.c.b16 %v563, %v561
      %v618 = vpack.c.b16 %v564, %v562
      %v619 = vpack.c.b16 %v567, %v565
      %v620 = vpack.c.b16 %v568, %v566
      %v621 = vpack.c.b16 %v571, %v569
      %v622 = vpack.c.b16 %v572, %v570
      %v623 = vpack.c.b16 %v575, %v573
      %v624 = vpack.c.b16 %v576, %v574
      %v625 = vpack.c.b16 %v579, %v577
      %v626 = vpack.c.b16 %v580, %v578
      %v627 = vpack.c.b16 %v583, %v581
      %v628 = vpack.c.b16 %v584, %v582
      %v629 = vpack.c.b16 %v587, %v585
      %v630 = vpack.c.b16 %v588, %v586
      %v631 = vpack.c.b16 %v591, %v589
      %v632 = vpack.c.b16 %v592, %v590
      %v633 = vpack.c.b16 %v595, %v593
      %v634 = vpack.c.b16 %v596, %v594
      %v635 = vpack.c.b16 %v599, %v597
      %v636 = vpack.c.b16 %v600, %v598
      %v637 = vpack.c.b16 %v603, %v601
      %v638 = vpack.c.b16 %v604, %v602
      %v639 = vpack.c.b16 %v607, %v605
      %v640 = vpack.c.b16 %v608, %v606
      %673 = vmatprep.subr.bf16.mxu0 %v624
      %674 = vmatpush1.bf16.msra.mxu0 %v623
      %675 = vmatprep.subr.bf16.mxu0 %v622
      %676 = vmatpush1.bf16.msra.mxu0 %v621
      %677 = vmatprep.subr.bf16.mxu0 %v620
      %678 = vmatpush1.bf16.msra.mxu0 %v619
      %679 = vmatprep.subr.bf16.mxu0 %v618
      %680 = vmatpush1.bf16.msra.mxu0 %v617
      %681 = vmatprep.subr.bf16.mxu0 %v616
      %682 = vmatpush1.bf16.msra.mxu0 %v615
      %683 = vmatprep.subr.bf16.mxu0 %v614
      %684 = vmatpush1.bf16.msra.mxu0 %v613
      %685 = vmatprep.subr.bf16.mxu0 %v612
      %686 = vmatpush1.bf16.msra.mxu0 %v611
      %687 = vmatprep.subr.bf16.mxu0 %v610
      %688 = vmatpush1.bf16.msra.mxu0 %v609
      %689 = vmatprep.subr.bf16.mxu0 %v640
      %690 = vmatpush2.bf16.msra.mxu0 %v639
      %691 = vmatprep.subr.bf16.mxu0 %v638
      %692 = vmatpush2.bf16.msra.mxu0 %v637
      %693 = vmatprep.subr.bf16.mxu0 %v636
      %694 = vmatpush2.bf16.msra.mxu0 %v635
      %695 = vmatprep.subr.bf16.mxu0 %v634
      %696 = vmatpush2.bf16.msra.mxu0 %v633
      %697 = vmatprep.subr.bf16.mxu0 %v632
      %698 = vmatpush2.bf16.msra.mxu0 %v631
      %699 = vmatprep.subr.bf16.mxu0 %v630
      %700 = vmatpush2.bf16.msra.mxu0 %v629
      %701 = vmatprep.subr.bf16.mxu0 %v628
      %702 = vmatpush2.bf16.msra.mxu0 %v627
      %703 = vmatprep.subr.bf16.mxu0 %v626
      %704 = vmatpush2.bf16.msra.mxu0 %v625
      %705 = vmatprep.mubr.bf16.mxu0 %v468
      %706 = vmatmul.mubr.bf16.gmra.mxu0 %v467
      %v707 = vpop.f32.mrf.mxu0
      %v708 = vadd.f32 %v506, %v707
      %v709 = vpop.f32.mrf.mxu0
      %v710 = vadd.f32 %v510, %v709
      %v711 = vpop.f32.mrf.mxu0
      %v712 = vadd.f32 %v506, %v711
      %v713 = vpop.f32.mrf.mxu0
      %v714 = vadd.f32 %v510, %v713
      %715 = vdwg.mxu0
      %v716 = vpack.c.bf16 %v712, %v708
      %v717 = vpack.c.bf16 %v714, %v710
      %v718 = vld [vmem:[%s6] sm:$0xff]
      %v719 = vld [vmem:[%s6 + $0x8] sm:$0xff]
      %v720 = vld [vmem:[%s6 + $0x10] sm:$0xff]
      %v721 = vld [vmem:[%s6 + $0x18] sm:$0xff]
      %v722 = vld [vmem:[%s6 + $0x20] sm:$0xff]
      %v723 = vld [vmem:[%s6 + $0x28] sm:$0xff]
      %v724 = vld [vmem:[%s6 + $0x30] sm:$0xff]
      %v725 = vld [vmem:[%s6 + $0x38] sm:$0xff]
      %v726 = vld [vmem:[%s6 + $0x40] sm:$0xff]
      %v727 = vld [vmem:[%s6 + $0x48] sm:$0xff]
      %v728 = vld [vmem:[%s6 + $0x50] sm:$0xff]
      %v729 = vld [vmem:[%s6 + $0x58] sm:$0xff]
      %v730 = vld [vmem:[%s6 + $0x60] sm:$0xff]
      %v731 = vld [vmem:[%s6 + $0x68] sm:$0xff]
      %v732 = vld [vmem:[%s6 + $0x70] sm:$0xff]
      %v733 = vld [vmem:[%s6 + $0x78] sm:$0xff]
      %v734 = vld [vmem:[%s6 + $0x80] sm:$0xff]
      %v735 = vld [vmem:[%s6 + $0x88] sm:$0xff]
      %v736 = vld [vmem:[%s6 + $0x90] sm:$0xff]
      %v737 = vld [vmem:[%s6 + $0x98] sm:$0xff]
      %v738 = vld [vmem:[%s6 + $0xa0] sm:$0xff]
      %v739 = vld [vmem:[%s6 + $0xa8] sm:$0xff]
      %v740 = vld [vmem:[%s6 + $0xb0] sm:$0xff]
      %v741 = vld [vmem:[%s6 + $0xb8] sm:$0xff]
      %v742 = vld [vmem:[%s6 + $0xc0] sm:$0xff]
      %v743 = vld [vmem:[%s6 + $0xc8] sm:$0xff]
      %v744 = vld [vmem:[%s6 + $0xd0] sm:$0xff]
      %v745 = vld [vmem:[%s6 + $0xd8] sm:$0xff]
      %v746 = vld [vmem:[%s6 + $0xe0] sm:$0xff]
      %v747 = vld [vmem:[%s6 + $0xe8] sm:$0xff]
      %v748 = vld [vmem:[%s6 + $0xf0] sm:$0xff]
      %v749 = vld [vmem:[%s6 + $0xf8] sm:$0xff]
      %v750 = vld [vmem:[%s6 + $0x100] sm:$0xff]
      %v751 = vld [vmem:[%s6 + $0x108] sm:$0xff]
      %v752 = vld [vmem:[%s6 + $0x110] sm:$0xff]
      %v753 = vld [vmem:[%s6 + $0x118] sm:$0xff]
      %v754 = vld [vmem:[%s6 + $0x120] sm:$0xff]
      %v755 = vld [vmem:[%s6 + $0x128] sm:$0xff]
      %v756 = vld [vmem:[%s6 + $0x130] sm:$0xff]
      %v757 = vld [vmem:[%s6 + $0x138] sm:$0xff]
      %v758 = vld [vmem:[%s6 + $0x140] sm:$0xff]
      %v759 = vld [vmem:[%s6 + $0x148] sm:$0xff]
      %v760 = vld [vmem:[%s6 + $0x150] sm:$0xff]
      %v761 = vld [vmem:[%s6 + $0x158] sm:$0xff]
      %v762 = vld [vmem:[%s6 + $0x160] sm:$0xff]
      %v763 = vld [vmem:[%s6 + $0x168] sm:$0xff]
      %v764 = vld [vmem:[%s6 + $0x170] sm:$0xff]
      %v765 = vld [vmem:[%s6 + $0x178] sm:$0xff]
      %v766 = vld [vmem:[%s6 + $0x180] sm:$0xff]
      %v767 = vld [vmem:[%s6 + $0x188] sm:$0xff]
      %v768 = vld [vmem:[%s6 + $0x190] sm:$0xff]
      %v769 = vld [vmem:[%s6 + $0x198] sm:$0xff]
      %v770 = vld [vmem:[%s6 + $0x1a0] sm:$0xff]
      %v771 = vld [vmem:[%s6 + $0x1a8] sm:$0xff]
      %v772 = vld [vmem:[%s6 + $0x1b0] sm:$0xff]
      %v773 = vld [vmem:[%s6 + $0x1b8] sm:$0xff]
      %v774 = vld [vmem:[%s6 + $0x1c0] sm:$0xff]
      %v775 = vld [vmem:[%s6 + $0x1c8] sm:$0xff]
      %v776 = vld [vmem:[%s6 + $0x1d0] sm:$0xff]
      %v777 = vld [vmem:[%s6 + $0x1d8] sm:$0xff]
      %v778 = vld [vmem:[%s6 + $0x1e0] sm:$0xff]
      %v779 = vld [vmem:[%s6 + $0x1e8] sm:$0xff]
      %v780 = vld [vmem:[%s6 + $0x1f0] sm:$0xff]
      %v781 = vld [vmem:[%s6 + $0x1f8] sm:$0xff]
      %v782 = vld [vmem:[%s7] sm:$0xf]
      %v784 = vlaneseq
      %v785 = vshrl.u32 %v784, 7
      %v786 = vsub.s32 0, %v785
      %v787 = vrot.slane %v782, %v786
      %v788 = vlaneseq
      %v789 = vshrl.u32 %v788, 7
      %v790 = vsub.s32 1, %v789
      %v791 = vrot.slane %v782, %v790
      %v792 = vlaneseq
      %v793 = vshrl.u32 %v792, 7
      %v794 = vsub.s32 2, %v793
      %v795 = vrot.slane %v782, %v794
      %v796 = vlaneseq
      %v797 = vshrl.u32 %v796, 7
      %v798 = vsub.s32 3, %v797
      %v799 = vrot.slane %v782, %v798
      %v808 = vunpack.c.l.b16 %v398
      %v809 = vunpack.c.h.b16 %v398
      %v810 = vunpack.c.l.b16 %v399
      %v811 = vunpack.c.h.b16 %v399
      %v812 = vunpack.c.l.b16 %v400
      %v813 = vunpack.c.h.b16 %v400
      %v814 = vunpack.c.l.b16 %v401
      %v815 = vunpack.c.h.b16 %v401
      %v816 = vpack.c.b16 %v810, %v808
      %v817 = vpack.c.b16 %v811, %v809
      %v818 = vpack.c.b16 %v814, %v812
      %v819 = vpack.c.b16 %v815, %v813
      %v888 = vunpack.c.l.b16 %v718
      %v889 = vunpack.c.h.b16 %v718
      %v890 = vunpack.c.l.b16 %v719
      %v891 = vunpack.c.h.b16 %v719
      %v892 = vunpack.c.l.b16 %v720
      %v893 = vunpack.c.h.b16 %v720
      %v894 = vunpack.c.l.b16 %v721
      %v895 = vunpack.c.h.b16 %v721
      %v896 = vunpack.c.l.b16 %v722
      %v897 = vunpack.c.h.b16 %v722
      %v898 = vunpack.c.l.b16 %v723
      %v899 = vunpack.c.h.b16 %v723
      %v900 = vunpack.c.l.b16 %v724
      %v901 = vunpack.c.h.b16 %v724
      %v902 = vunpack.c.l.b16 %v725
      %v903 = vunpack.c.h.b16 %v725
      %v904 = vunpack.c.l.b16 %v726
      %v905 = vunpack.c.h.b16 %v726
      %v906 = vunpack.c.l.b16 %v727
      %v907 = vunpack.c.h.b16 %v727
      %v908 = vunpack.c.l.b16 %v728
      %v909 = vunpack.c.h.b16 %v728
      %v910 = vunpack.c.l.b16 %v729
      %v911 = vunpack.c.h.b16 %v729
      %v912 = vunpack.c.l.b16 %v730
      %v913 = vunpack.c.h.b16 %v730
      %v914 = vunpack.c.l.b16 %v731
      %v915 = vunpack.c.h.b16 %v731
      %v916 = vunpack.c.l.b16 %v732
      %v917 = vunpack.c.h.b16 %v732
      %v918 = vunpack.c.l.b16 %v733
      %v919 = vunpack.c.h.b16 %v733
      %v920 = vunpack.c.l.b16 %v734
      %v921 = vunpack.c.h.b16 %v734
      %v922 = vunpack.c.l.b16 %v735
      %v923 = vunpack.c.h.b16 %v735
      %v924 = vunpack.c.l.b16 %v736
      %v925 = vunpack.c.h.b16 %v736
      %v926 = vunpack.c.l.b16 %v737
      %v927 = vunpack.c.h.b16 %v737
      %v928 = vunpack.c.l.b16 %v738
      %v929 = vunpack.c.h.b16 %v738
      %v930 = vunpack.c.l.b16 %v739
      %v931 = vunpack.c.h.b16 %v739
      %v932 = vunpack.c.l.b16 %v740
      %v933 = vunpack.c.h.b16 %v740
      %v934 = vunpack.c.l.b16 %v741
      %v935 = vunpack.c.h.b16 %v741
      %v936 = vunpack.c.l.b16 %v742
      %v937 = vunpack.c.h.b16 %v742
      %v938 = vunpack.c.l.b16 %v743
      %v939 = vunpack.c.h.b16 %v743
      %v940 = vunpack.c.l.b16 %v744
      %v941 = vunpack.c.h.b16 %v744
      %v942 = vunpack.c.l.b16 %v745
      %v943 = vunpack.c.h.b16 %v745
      %v944 = vunpack.c.l.b16 %v746
      %v945 = vunpack.c.h.b16 %v746
      %v946 = vunpack.c.l.b16 %v747
      %v947 = vunpack.c.h.b16 %v747
      %v948 = vunpack.c.l.b16 %v748
      %v949 = vunpack.c.h.b16 %v748
      %v950 = vunpack.c.l.b16 %v749
      %v951 = vunpack.c.h.b16 %v749
      %v952 = vunpack.c.l.b16 %v750
      %v953 = vunpack.c.h.b16 %v750
      %v954 = vunpack.c.l.b16 %v751
      %v955 = vunpack.c.h.b16 %v751
      %v956 = vunpack.c.l.b16 %v752
      %v957 = vunpack.c.h.b16 %v752
      %v958 = vunpack.c.l.b16 %v753
      %v959 = vunpack.c.h.b16 %v753
      %v960 = vunpack.c.l.b16 %v754
      %v961 = vunpack.c.h.b16 %v754
      %v962 = vunpack.c.l.b16 %v755
      %v963 = vunpack.c.h.b16 %v755
      %v964 = vunpack.c.l.b16 %v756
      %v965 = vunpack.c.h.b16 %v756
      %v966 = vunpack.c.l.b16 %v757
      %v967 = vunpack.c.h.b16 %v757
      %v968 = vunpack.c.l.b16 %v758
      %v969 = vunpack.c.h.b16 %v758
      %v970 = vunpack.c.l.b16 %v759
      %v971 = vunpack.c.h.b16 %v759
      %v972 = vunpack.c.l.b16 %v760
      %v973 = vunpack.c.h.b16 %v760
      %v974 = vunpack.c.l.b16 %v761
      %v975 = vunpack.c.h.b16 %v761
      %v976 = vunpack.c.l.b16 %v762
      %v977 = vunpack.c.h.b16 %v762
      %v978 = vunpack.c.l.b16 %v763
      %v979 = vunpack.c.h.b16 %v763
      %v980 = vunpack.c.l.b16 %v764
      %v981 = vunpack.c.h.b16 %v764
      %v982 = vunpack.c.l.b16 %v765
      %v983 = vunpack.c.h.b16 %v765
      %v984 = vunpack.c.l.b16 %v766
      %v985 = vunpack.c.h.b16 %v766
      %v986 = vunpack.c.l.b16 %v767
      %v987 = vunpack.c.h.b16 %v767
      %v988 = vunpack.c.l.b16 %v768
      %v989 = vunpack.c.h.b16 %v768
      %v990 = vunpack.c.l.b16 %v769
      %v991 = vunpack.c.h.b16 %v769
      %v992 = vunpack.c.l.b16 %v770
      %v993 = vunpack.c.h.b16 %v770
      %v994 = vunpack.c.l.b16 %v771
      %v995 = vunpack.c.h.b16 %v771
      %v996 = vunpack.c.l.b16 %v772
      %v997 = vunpack.c.h.b16 %v772
      %v998 = vunpack.c.l.b16 %v773
      %v999 = vunpack.c.h.b16 %v773
      %v1000 = vunpack.c.l.b16 %v774
      %v1001 = vunpack.c.h.b16 %v774
      %v1002 = vunpack.c.l.b16 %v775
      %v1003 = vunpack.c.h.b16 %v775
      %v1004 = vunpack.c.l.b16 %v776
      %v1005 = vunpack.c.h.b16 %v776
      %v1006 = vunpack.c.l.b16 %v777
      %v1007 = vunpack.c.h.b16 %v777
      %v1008 = vunpack.c.l.b16 %v778
      %v1009 = vunpack.c.h.b16 %v778
      %v1010 = vunpack.c.l.b16 %v779
      %v1011 = vunpack.c.h.b16 %v779
      %v1012 = vunpack.c.l.b16 %v780
      %v1013 = vunpack.c.h.b16 %v780
      %v1014 = vunpack.c.l.b16 %v781
      %v1015 = vunpack.c.h.b16 %v781
      %v1016 = vpack.c.b16 %v892, %v888
      %v1017 = vpack.c.b16 %v893, %v889
      %v1018 = vpack.c.b16 %v894, %v890
      %v1019 = vpack.c.b16 %v895, %v891
      %v1020 = vpack.c.b16 %v900, %v896
      %v1021 = vpack.c.b16 %v901, %v897
      %v1022 = vpack.c.b16 %v902, %v898
      %v1023 = vpack.c.b16 %v903, %v899
      %v1024 = vpack.c.b16 %v908, %v904
      %v1025 = vpack.c.b16 %v909, %v905
      %v1026 = vpack.c.b16 %v910, %v906
      %v1027 = vpack.c.b16 %v911, %v907
      %v1028 = vpack.c.b16 %v916, %v912
      %v1029 = vpack.c.b16 %v917, %v913
      %v1030 = vpack.c.b16 %v918, %v914
      %v1031 = vpack.c.b16 %v919, %v915
      %v1032 = vpack.c.b16 %v924, %v920
      %v1033 = vpack.c.b16 %v925, %v921
      %v1034 = vpack.c.b16 %v926, %v922
      %v1035 = vpack.c.b16 %v927, %v923
      %v1036 = vpack.c.b16 %v932, %v928
      %v1037 = vpack.c.b16 %v933, %v929
      %v1038 = vpack.c.b16 %v934, %v930
      %v1039 = vpack.c.b16 %v935, %v931
      %v1040 = vpack.c.b16 %v940, %v936
      %v1041 = vpack.c.b16 %v941, %v937
      %v1042 = vpack.c.b16 %v942, %v938
      %v1043 = vpack.c.b16 %v943, %v939
      %v1044 = vpack.c.b16 %v948, %v944
      %v1045 = vpack.c.b16 %v949, %v945
      %v1046 = vpack.c.b16 %v950, %v946
      %v1047 = vpack.c.b16 %v951, %v947
      %v1048 = vpack.c.b16 %v956, %v952
      %v1049 = vpack.c.b16 %v957, %v953
      %v1050 = vpack.c.b16 %v958, %v954
      %v1051 = vpack.c.b16 %v959, %v955
      %v1052 = vpack.c.b16 %v964, %v960
      %v1053 = vpack.c.b16 %v965, %v961
      %v1054 = vpack.c.b16 %v966, %v962
      %v1055 = vpack.c.b16 %v967, %v963
      %v1056 = vpack.c.b16 %v972, %v968
      %v1057 = vpack.c.b16 %v973, %v969
      %v1058 = vpack.c.b16 %v974, %v970
      %v1059 = vpack.c.b16 %v975, %v971
      %v1060 = vpack.c.b16 %v980, %v976
      %v1061 = vpack.c.b16 %v981, %v977
      %v1062 = vpack.c.b16 %v982, %v978
      %v1063 = vpack.c.b16 %v983, %v979
      %v1064 = vpack.c.b16 %v988, %v984
      %v1065 = vpack.c.b16 %v989, %v985
      %v1066 = vpack.c.b16 %v990, %v986
      %v1067 = vpack.c.b16 %v991, %v987
      %v1068 = vpack.c.b16 %v996, %v992
      %v1069 = vpack.c.b16 %v997, %v993
      %v1070 = vpack.c.b16 %v998, %v994
      %v1071 = vpack.c.b16 %v999, %v995
      %v1072 = vpack.c.b16 %v1004, %v1000
      %v1073 = vpack.c.b16 %v1005, %v1001
      %v1074 = vpack.c.b16 %v1006, %v1002
      %v1075 = vpack.c.b16 %v1007, %v1003
      %v1076 = vpack.c.b16 %v1012, %v1008
      %v1077 = vpack.c.b16 %v1013, %v1009
      %v1078 = vpack.c.b16 %v1014, %v1010
      %v1079 = vpack.c.b16 %v1015, %v1011
      %1144 = vmatprep.subr.bf16.mxu0 %v1045
      %1145 = vmatpush1.bf16.msra.mxu0 %v1044
      %1146 = vmatprep.subr.bf16.mxu0 %v1041
      %1147 = vmatpush1.bf16.msra.mxu0 %v1040
      %1148 = vmatprep.subr.bf16.mxu0 %v1037
      %1149 = vmatpush1.bf16.msra.mxu0 %v1036
      %1150 = vmatprep.subr.bf16.mxu0 %v1033
      %1151 = vmatpush1.bf16.msra.mxu0 %v1032
      %1152 = vmatprep.subr.bf16.mxu0 %v1029
      %1153 = vmatpush1.bf16.msra.mxu0 %v1028
      %1154 = vmatprep.subr.bf16.mxu0 %v1025
      %1155 = vmatpush1.bf16.msra.mxu0 %v1024
      %1156 = vmatprep.subr.bf16.mxu0 %v1021
      %1157 = vmatpush1.bf16.msra.mxu0 %v1020
      %1158 = vmatprep.subr.bf16.mxu0 %v1017
      %1159 = vmatpush1.bf16.msra.mxu0 %v1016
      %1160 = vmatprep.subr.bf16.mxu0 %v1077
      %1161 = vmatpush2.bf16.msra.mxu0 %v1076
      %1162 = vmatprep.subr.bf16.mxu0 %v1073
      %1163 = vmatpush2.bf16.msra.mxu0 %v1072
      %1164 = vmatprep.subr.bf16.mxu0 %v1069
      %1165 = vmatpush2.bf16.msra.mxu0 %v1068
      %1166 = vmatprep.subr.bf16.mxu0 %v1065
      %1167 = vmatpush2.bf16.msra.mxu0 %v1064
      %1168 = vmatprep.subr.bf16.mxu0 %v1061
      %1169 = vmatpush2.bf16.msra.mxu0 %v1060
      %1170 = vmatprep.subr.bf16.mxu0 %v1057
      %1171 = vmatpush2.bf16.msra.mxu0 %v1056
      %1172 = vmatprep.subr.bf16.mxu0 %v1053
      %1173 = vmatpush2.bf16.msra.mxu0 %v1052
      %1174 = vmatprep.subr.bf16.mxu0 %v1049
      %1175 = vmatpush2.bf16.msra.mxu0 %v1048
      %1176 = vmatprep.mubr.bf16.mxu0 %v817
      %1177 = vmatmul.mubr.bf16.gmra.mxu0 %v816
      %v1178 = vpop.f32.mrf.mxu0
      %v1179 = vadd.f32 %v787, %v1178
      %v1180 = vpop.f32.mrf.mxu0
      %v1181 = vadd.f32 %v791, %v1180
      %v1182 = vpop.f32.mrf.mxu0
      %v1183 = vadd.f32 %v787, %v1182
      %v1184 = vpop.f32.mrf.mxu0
      %v1185 = vadd.f32 %v791, %v1184
      %1186 = vmatprep.mubr.bf16.mxu0 %v819
      %1187 = vmatmul.mubr.bf16.gmra.mxu0 %v818
      %v1188 = vpop.f32.mrf.mxu0
      %v1189 = vadd.f32 %v787, %v1188
      %v1190 = vpop.f32.mrf.mxu0
      %v1191 = vadd.f32 %v791, %v1190
      %v1192 = vpop.f32.mrf.mxu0
      %v1193 = vadd.f32 %v787, %v1192
      %v1194 = vpop.f32.mrf.mxu0
      %v1195 = vadd.f32 %v791, %v1194
      %1196 = vdwg.mxu0
      %1197 = vmatprep.subr.bf16.mxu0 %v1047
      %1198 = vmatpush1.bf16.msra.mxu0 %v1046
      %1199 = vmatprep.subr.bf16.mxu0 %v1043
      %1200 = vmatpush1.bf16.msra.mxu0 %v1042
      %1201 = vmatprep.subr.bf16.mxu0 %v1039
      %1202 = vmatpush1.bf16.msra.mxu0 %v1038
      %1203 = vmatprep.subr.bf16.mxu0 %v1035
      %1204 = vmatpush1.bf16.msra.mxu0 %v1034
      %1205 = vmatprep.subr.bf16.mxu0 %v1031
      %1206 = vmatpush1.bf16.msra.mxu0 %v1030
      %1207 = vmatprep.subr.bf16.mxu0 %v1027
      %1208 = vmatpush1.bf16.msra.mxu0 %v1026
      %1209 = vmatprep.subr.bf16.mxu0 %v1023
      %1210 = vmatpush1.bf16.msra.mxu0 %v1022
      %1211 = vmatprep.subr.bf16.mxu0 %v1019
      %1212 = vmatpush1.bf16.msra.mxu0 %v1018
      %1213 = vmatprep.subr.bf16.mxu0 %v1079
      %1214 = vmatpush2.bf16.msra.mxu0 %v1078
      %1215 = vmatprep.subr.bf16.mxu0 %v1075
      %1216 = vmatpush2.bf16.msra.mxu0 %v1074
      %1217 = vmatprep.subr.bf16.mxu0 %v1071
      %1218 = vmatpush2.bf16.msra.mxu0 %v1070
      %1219 = vmatprep.subr.bf16.mxu0 %v1067
      %1220 = vmatpush2.bf16.msra.mxu0 %v1066
      %1221 = vmatprep.subr.bf16.mxu0 %v1063
      %1222 = vmatpush2.bf16.msra.mxu0 %v1062
      %1223 = vmatprep.subr.bf16.mxu0 %v1059
      %1224 = vmatpush2.bf16.msra.mxu0 %v1058
      %1225 = vmatprep.subr.bf16.mxu0 %v1055
      %1226 = vmatpush2.bf16.msra.mxu0 %v1054
      %1227 = vmatprep.subr.bf16.mxu0 %v1051
      %1228 = vmatpush2.bf16.msra.mxu0 %v1050
      %1229 = vmatprep.mubr.bf16.mxu0 %v817
      %1230 = vmatmul.mubr.bf16.gmra.mxu0 %v816
      %v1231 = vpop.f32.mrf.mxu0
      %v1232 = vadd.f32 %v795, %v1231
      %v1233 = vpop.f32.mrf.mxu0
      %v1234 = vadd.f32 %v799, %v1233
      %v1235 = vpop.f32.mrf.mxu0
      %v1236 = vadd.f32 %v795, %v1235
      %v1237 = vpop.f32.mrf.mxu0
      %v1238 = vadd.f32 %v799, %v1237
      %1239 = vmatprep.mubr.bf16.mxu0 %v819
      %1240 = vmatmul.mubr.bf16.gmra.mxu0 %v818
      %v1241 = vpop.f32.mrf.mxu0
      %v1242 = vadd.f32 %v795, %v1241
      %v1243 = vpop.f32.mrf.mxu0
      %v1244 = vadd.f32 %v799, %v1243
      %v1245 = vpop.f32.mrf.mxu0
      %v1246 = vadd.f32 %v795, %v1245
      %v1247 = vpop.f32.mrf.mxu0
      %v1248 = vadd.f32 %v799, %v1247
      %1249 = vdwg.mxu0
      %v1250 = vpack.c.bf16 %v1183, %v1179
      %v1251 = vpack.c.bf16 %v1185, %v1181
      %v1252 = vpack.c.bf16 %v1236, %v1232
      %v1253 = vpack.c.bf16 %v1238, %v1234
      %v1254 = vpack.c.bf16 %v1193, %v1189
      %v1255 = vpack.c.bf16 %v1195, %v1191
      %v1256 = vpack.c.bf16 %v1246, %v1242
      %v1257 = vpack.c.bf16 %v1248, %v1244
      %1258 = vmatprep.subr.bf16.mxu0 0
      %1259 = vmatpush1.bf16.xpose.msra.mxu0 0
      %1260 = vmatprep.subr.bf16.mxu0 0
      %1261 = vmatpush1.bf16.xpose.msra.mxu0 0
      %1262 = vmatprep.subr.bf16.mxu0 0
      %1263 = vmatpush1.bf16.xpose.msra.mxu0 0
      %1264 = vmatprep.subr.bf16.mxu0 0
      %1265 = vmatpush1.bf16.xpose.msra.mxu0 0
      %1266 = vmatprep.subr.bf16.mxu0 0
      %1267 = vmatpush1.bf16.xpose.msra.mxu0 0
      %1268 = vmatprep.subr.bf16.mxu0 0
      %1269 = vmatpush1.bf16.xpose.msra.mxu0 0
      %1270 = vmatprep.subr.bf16.mxu0 0
      %1271 = vmatpush1.bf16.xpose.msra.mxu0 0
      %1272 = vmatprep.subr.bf16.mxu0 0
      %1273 = vmatpush1.bf16.xpose.msra.mxu0 %v1250
      %1274 = vmatprep.subr.bf16.mxu0 0
      %1275 = vmatpush2.bf16.xpose.msra.mxu0 0
      %1276 = vmatprep.subr.bf16.mxu0 0
      %1277 = vmatpush2.bf16.xpose.msra.mxu0 0
      %1278 = vmatprep.subr.bf16.mxu0 0
      %1279 = vmatpush2.bf16.xpose.msra.mxu0 0
      %1280 = vmatprep.subr.bf16.mxu0 0
      %1281 = vmatpush2.bf16.xpose.msra.mxu0 0
      %1282 = vmatprep.subr.bf16.mxu0 0
      %1283 = vmatpush2.bf16.xpose.msra.mxu0 0
      %1284 = vmatprep.subr.bf16.mxu0 0
      %1285 = vmatpush2.bf16.xpose.msra.mxu0 0
      %1286 = vmatprep.subr.bf16.mxu0 0
      %1287 = vmatpush2.bf16.xpose.msra.mxu0 0
      %1288 = vmatprep.subr.bf16.mxu0 0
      %1289 = vmatpush2.bf16.xpose.msra.mxu0 0
      %1290 = vmatprep.mubr.bf16.mxu0 0
      %1291 = vmatmul.mubr.bf16.gmra.mxu0 %v716
      %v1292 = vpop.f32.mrf.mxu0
      %v1293 = vadd.f32 0.0, %v1292
      %v1294 = vpop.f32.mrf.mxu0
      %v1295 = vpop.f32.mrf.mxu0
      %v1296 = vpop.f32.mrf.mxu0
      %1297 = vdwg.mxu0
      %v1298 = vmul.f32 %v1293, 0.088388346
      %vm1299 = vcmask 130048
      %v1300 = vsel %vm1299, %v1298, -inf
      %1301 = vmax.xlane.f32.xlu0 %v1300
      %v1302 = vpop.xlane.xlu0 %1301
      %v1303 = vsub.f32 %v1298, %v1302
      %v1304 = vmul.f32 %v1303, 1.442695
      %v1305 = vpow.pop %v1304
      %v1306 = vsel %vm1299, %v1305, 0.0
      %1307 = vadd.xlane.f32.xlu0 %v1306
      %v1308 = vpop.xlane.xlu0 %1307
      %v1309 = vrcp.pop %v1308
      %v1310 = vmul.f32 %v1305, %v1309
      %v1311 = vpack.c.bf16 %v1310, %v1310
      %v1313 = vsel %vm1299, %v1311, 0
      %1315 = vmatprep.subr.bf16.mxu0 0
      %1316 = vmatpush1.bf16.msra.mxu0 0
      %1317 = vmatprep.subr.bf16.mxu0 0
      %1318 = vmatpush1.bf16.msra.mxu0 0
      %1319 = vmatprep.subr.bf16.mxu0 0
      %1320 = vmatpush1.bf16.msra.mxu0 0
      %1321 = vmatprep.subr.bf16.mxu0 0
      %1322 = vmatpush1.bf16.msra.mxu0 0
      %1323 = vmatprep.subr.bf16.mxu0 0
      %1324 = vmatpush1.bf16.msra.mxu0 0
      %1325 = vmatprep.subr.bf16.mxu0 0
      %1326 = vmatpush1.bf16.msra.mxu0 0
      %1327 = vmatprep.subr.bf16.mxu0 0
      %1328 = vmatpush1.bf16.msra.mxu0 0
      %1329 = vmatprep.subr.bf16.mxu0 0
      %1330 = vmatpush1.bf16.msra.mxu0 %v1252
      %1331 = vmatprep.subr.bf16.mxu0 0
      %1332 = vmatpush2.bf16.msra.mxu0 0
      %1333 = vmatprep.subr.bf16.mxu0 0
      %1334 = vmatpush2.bf16.msra.mxu0 0
      %1335 = vmatprep.subr.bf16.mxu0 0
      %1336 = vmatpush2.bf16.msra.mxu0 0
      %1337 = vmatprep.subr.bf16.mxu0 0
      %1338 = vmatpush2.bf16.msra.mxu0 0
      %1339 = vmatprep.subr.bf16.mxu0 0
      %1340 = vmatpush2.bf16.msra.mxu0 0
      %1341 = vmatprep.subr.bf16.mxu0 0
      %1342 = vmatpush2.bf16.msra.mxu0 0
      %1343 = vmatprep.subr.bf16.mxu0 0
      %1344 = vmatpush2.bf16.msra.mxu0 0
      %1345 = vmatprep.subr.bf16.mxu0 0
      %1346 = vmatpush2.bf16.msra.mxu0 0
      %1347 = vmatprep.mubr.bf16.mxu0 0
      %1348 = vmatmul.mubr.bf16.gmra.mxu0 %v1313
      %v1349 = vpop.f32.mrf.mxu0
      %v1350 = vadd.f32 0.0, %v1349
      %v1351 = vpop.f32.mrf.mxu0
      %v1352 = vpop.f32.mrf.mxu0
      %v1353 = vpop.f32.mrf.mxu0
      %1354 = vdwg.mxu0
      %1355 = vst [vmem:[#allocation2] sm:$0xff] %v1350
      %1356 = vmatprep.subr.bf16.mxu0 0
      %1357 = vmatpush1.bf16.xpose.msra.mxu0 0
      %1358 = vmatprep.subr.bf16.mxu0 0
      %1359 = vmatpush1.bf16.xpose.msra.mxu0 0
      %1360 = vmatprep.subr.bf16.mxu0 0
      %1361 = vmatpush1.bf16.xpose.msra.mxu0 0
      %1362 = vmatprep.subr.bf16.mxu0 0
      %1363 = vmatpush1.bf16.xpose.msra.mxu0 0
      %1364 = vmatprep.subr.bf16.mxu0 0
      %1365 = vmatpush1.bf16.xpose.msra.mxu0 0
      %1366 = vmatprep.subr.bf16.mxu0 0
      %1367 = vmatpush1.bf16.xpose.msra.mxu0 0
      %1368 = vmatprep.subr.bf16.mxu0 0
      %1369 = vmatpush1.bf16.xpose.msra.mxu0 0
      %1370 = vmatprep.subr.bf16.mxu0 0
      %1371 = vmatpush1.bf16.xpose.msra.mxu0 %v1251
      %1372 = vmatprep.subr.bf16.mxu0 0
      %1373 = vmatpush2.bf16.xpose.msra.mxu0 0
      %1374 = vmatprep.subr.bf16.mxu0 0
      %1375 = vmatpush2.bf16.xpose.msra.mxu0 0
      %1376 = vmatprep.subr.bf16.mxu0 0
      %1377 = vmatpush2.bf16.xpose.msra.mxu0 0
      %1378 = vmatprep.subr.bf16.mxu0 0
      %1379 = vmatpush2.bf16.xpose.msra.mxu0 0
      %1380 = vmatprep.subr.bf16.mxu0 0
      %1381 = vmatpush2.bf16.xpose.msra.mxu0 0
      %1382 = vmatprep.subr.bf16.mxu0 0
      %1383 = vmatpush2.bf16.xpose.msra.mxu0 0
      %1384 = vmatprep.subr.bf16.mxu0 0
      %1385 = vmatpush2.bf16.xpose.msra.mxu0 0
      %1386 = vmatprep.subr.bf16.mxu0 0
      %1387 = vmatpush2.bf16.xpose.msra.mxu0 0
      %1388 = vmatprep.mubr.bf16.mxu0 0
      %1389 = vmatmul.mubr.bf16.gmra.mxu0 %v717
      %v1390 = vpop.f32.mrf.mxu0
      %v1391 = vadd.f32 0.0, %v1390
      %v1392 = vpop.f32.mrf.mxu0
      %v1393 = vpop.f32.mrf.mxu0
      %v1394 = vpop.f32.mrf.mxu0
      %1395 = vdwg.mxu0
      %v1396 = vmul.f32 %v1391, 0.088388346
      %v1397 = vsel %vm1299, %v1396, -inf
      %1398 = vmax.xlane.f32.xlu0 %v1397
      %v1399 = vpop.xlane.xlu0 %1398
      %v1400 = vsub.f32 %v1396, %v1399
      %v1401 = vmul.f32 %v1400, 1.442695
      %v1402 = vpow.pop %v1401
      %v1403 = vsel %vm1299, %v1402, 0.0
      %1404 = vadd.xlane.f32.xlu0 %v1403
      %v1405 = vpop.xlane.xlu0 %1404
      %v1406 = vrcp.pop %v1405
      %v1407 = vmul.f32 %v1402, %v1406
      %v1408 = vpack.c.bf16 %v1407, %v1407
      %v1410 = vsel %vm1299, %v1408, 0
      %1412 = vmatprep.subr.bf16.mxu0 0
      %1413 = vmatpush1.bf16.msra.mxu0 0
      %1414 = vmatprep.subr.bf16.mxu0 0
      %1415 = vmatpush1.bf16.msra.mxu0 0
      %1416 = vmatprep.subr.bf16.mxu0 0
      %1417 = vmatpush1.bf16.msra.mxu0 0
      %1418 = vmatprep.subr.bf16.mxu0 0
      %1419 = vmatpush1.bf16.msra.mxu0 0
      %1420 = vmatprep.subr.bf16.mxu0 0
      %1421 = vmatpush1.bf16.msra.mxu0 0
      %1422 = vmatprep.subr.bf16.mxu0 0
      %1423 = vmatpush1.bf16.msra.mxu0 0
      %1424 = vmatprep.subr.bf16.mxu0 0
      %1425 = vmatpush1.bf16.msra.mxu0 0
      %1426 = vmatprep.subr.bf16.mxu0 0
      %1427 = vmatpush1.bf16.msra.mxu0 %v1253
      %1428 = vmatprep.subr.bf16.mxu0 0
      %1429 = vmatpush2.bf16.msra.mxu0 0
      %1430 = vmatprep.subr.bf16.mxu0 0
      %1431 = vmatpush2.bf16.msra.mxu0 0
      %1432 = vmatprep.subr.bf16.mxu0 0
      %1433 = vmatpush2.bf16.msra.mxu0 0
      %1434 = vmatprep.subr.bf16.mxu0 0
      %1435 = vmatpush2.bf16.msra.mxu0 0
      %1436 = vmatprep.subr.bf16.mxu0 0
      %1437 = vmatpush2.bf16.msra.mxu0 0
      %1438 = vmatprep.subr.bf16.mxu0 0
      %1439 = vmatpush2.bf16.msra.mxu0 0
      %1440 = vmatprep.subr.bf16.mxu0 0
      %1441 = vmatpush2.bf16.msra.mxu0 0
      %1442 = vmatprep.subr.bf16.mxu0 0
      %1443 = vmatpush2.bf16.msra.mxu0 0
      %1444 = vmatprep.mubr.bf16.mxu0 0
      %1445 = vmatmul.mubr.bf16.gmra.mxu0 %v1410
      %v1446 = vpop.f32.mrf.mxu0
      %v1447 = vadd.f32 0.0, %v1446
      %v1448 = vpop.f32.mrf.mxu0
      %v1449 = vpop.f32.mrf.mxu0
      %v1450 = vpop.f32.mrf.mxu0
      %1451 = vdwg.mxu0
      %1452 = vst [vmem:[#allocation2 + $0x8] sm:$0xff] %v1447
      %v1454 = vrot.slane %v716, 4
      %1456 = vmatprep.subr.bf16.mxu0 0
      %1457 = vmatpush1.bf16.xpose.msra.mxu0 0
      %1458 = vmatprep.subr.bf16.mxu0 0
      %1459 = vmatpush1.bf16.xpose.msra.mxu0 0
      %1460 = vmatprep.subr.bf16.mxu0 0
      %1461 = vmatpush1.bf16.xpose.msra.mxu0 0
      %1462 = vmatprep.subr.bf16.mxu0 0
      %1463 = vmatpush1.bf16.xpose.msra.mxu0 0
      %1464 = vmatprep.subr.bf16.mxu0 0
      %1465 = vmatpush1.bf16.xpose.msra.mxu0 0
      %1466 = vmatprep.subr.bf16.mxu0 0
      %1467 = vmatpush1.bf16.xpose.msra.mxu0 0
      %1468 = vmatprep.subr.bf16.mxu0 0
      %1469 = vmatpush1.bf16.xpose.msra.mxu0 0
      %1470 = vmatprep.subr.bf16.mxu0 0
      %1471 = vmatpush1.bf16.xpose.msra.mxu0 %v1254
      %1472 = vmatprep.subr.bf16.mxu0 0
      %1473 = vmatpush2.bf16.xpose.msra.mxu0 0
      %1474 = vmatprep.subr.bf16.mxu0 0
      %1475 = vmatpush2.bf16.xpose.msra.mxu0 0
      %1476 = vmatprep.subr.bf16.mxu0 0
      %1477 = vmatpush2.bf16.xpose.msra.mxu0 0
      %1478 = vmatprep.subr.bf16.mxu0 0
      %1479 = vmatpush2.bf16.xpose.msra.mxu0 0
      %1480 = vmatprep.subr.bf16.mxu0 0
      %1481 = vmatpush2.bf16.xpose.msra.mxu0 0
      %1482 = vmatprep.subr.bf16.mxu0 0
      %1483 = vmatpush2.bf16.xpose.msra.mxu0 0
      %1484 = vmatprep.subr.bf16.mxu0 0
      %1485 = vmatpush2.bf16.xpose.msra.mxu0 0
      %1486 = vmatprep.subr.bf16.mxu0 0
      %1487 = vmatpush2.bf16.xpose.msra.mxu0 0
      %1488 = vmatprep.mubr.bf16.mxu0 0
      %1489 = vmatmul.mubr.bf16.gmra.mxu0 %v1454
      %v1490 = vpop.f32.mrf.mxu0
      %v1491 = vadd.f32 0.0, %v1490
      %v1492 = vpop.f32.mrf.mxu0
      %v1493 = vpop.f32.mrf.mxu0
      %v1494 = vpop.f32.mrf.mxu0
      %1495 = vdwg.mxu0
      %v1496 = vmul.f32 %v1491, 0.088388346
      %v1497 = vsel %vm1299, %v1496, -inf
      %1498 = vmax.xlane.f32.xlu0 %v1497
      %v1499 = vpop.xlane.xlu0 %1498
      %v1500 = vsub.f32 %v1496, %v1499
      %v1501 = vmul.f32 %v1500, 1.442695
      %v1502 = vpow.pop %v1501
      %v1503 = vsel %vm1299, %v1502, 0.0
      %1504 = vadd.xlane.f32.xlu0 %v1503
      %v1505 = vpop.xlane.xlu0 %1504
      %v1506 = vrcp.pop %v1505
      %v1507 = vmul.f32 %v1502, %v1506
      %v1508 = vpack.c.bf16 %v1507, %v1507
      %v1510 = vsel %vm1299, %v1508, 0
      %1512 = vmatprep.subr.bf16.mxu0 0
      %1513 = vmatpush1.bf16.msra.mxu0 0
      %1514 = vmatprep.subr.bf16.mxu0 0
      %1515 = vmatpush1.bf16.msra.mxu0 0
      %1516 = vmatprep.subr.bf16.mxu0 0
      %1517 = vmatpush1.bf16.msra.mxu0 0
      %1518 = vmatprep.subr.bf16.mxu0 0
      %1519 = vmatpush1.bf16.msra.mxu0 0
      %1520 = vmatprep.subr.bf16.mxu0 0
      %1521 = vmatpush1.bf16.msra.mxu0 0
      %1522 = vmatprep.subr.bf16.mxu0 0
      %1523 = vmatpush1.bf16.msra.mxu0 0
      %1524 = vmatprep.subr.bf16.mxu0 0
      %1525 = vmatpush1.bf16.msra.mxu0 0
      %1526 = vmatprep.subr.bf16.mxu0 0
      %1527 = vmatpush1.bf16.msra.mxu0 %v1256
      %1528 = vmatprep.subr.bf16.mxu0 0
      %1529 = vmatpush2.bf16.msra.mxu0 0
      %1530 = vmatprep.subr.bf16.mxu0 0
      %1531 = vmatpush2.bf16.msra.mxu0 0
      %1532 = vmatprep.subr.bf16.mxu0 0
      %1533 = vmatpush2.bf16.msra.mxu0 0
      %1534 = vmatprep.subr.bf16.mxu0 0
      %1535 = vmatpush2.bf16.msra.mxu0 0
      %1536 = vmatprep.subr.bf16.mxu0 0
      %1537 = vmatpush2.bf16.msra.mxu0 0
      %1538 = vmatprep.subr.bf16.mxu0 0
      %1539 = vmatpush2.bf16.msra.mxu0 0
      %1540 = vmatprep.subr.bf16.mxu0 0
      %1541 = vmatpush2.bf16.msra.mxu0 0
      %1542 = vmatprep.subr.bf16.mxu0 0
      %1543 = vmatpush2.bf16.msra.mxu0 0
      %1544 = vmatprep.mubr.bf16.mxu0 0
      %1545 = vmatmul.mubr.bf16.gmra.mxu0 %v1510
      %v1546 = vpop.f32.mrf.mxu0
      %v1547 = vadd.f32 0.0, %v1546
      %v1548 = vpop.f32.mrf.mxu0
      %v1549 = vpop.f32.mrf.mxu0
      %v1550 = vpop.f32.mrf.mxu0
      %1551 = vdwg.mxu0
      %1552 = vst [vmem:[#allocation2 + $0x10] sm:$0xff] %v1547
      %v1554 = vrot.slane %v717, 4
      %1556 = vmatprep.subr.bf16.mxu0 0
      %1557 = vmatpush1.bf16.xpose.msra.mxu0 0
      %1558 = vmatprep.subr.bf16.mxu0 0
      %1559 = vmatpush1.bf16.xpose.msra.mxu0 0
      %1560 = vmatprep.subr.bf16.mxu0 0
      %1561 = vmatpush1.bf16.xpose.msra.mxu0 0
      %1562 = vmatprep.subr.bf16.mxu0 0
      %1563 = vmatpush1.bf16.xpose.msra.mxu0 0
      %1564 = vmatprep.subr.bf16.mxu0 0
      %1565 = vmatpush1.bf16.xpose.msra.mxu0 0
      %1566 = vmatprep.subr.bf16.mxu0 0
      %1567 = vmatpush1.bf16.xpose.msra.mxu0 0
      %1568 = vmatprep.subr.bf16.mxu0 0
      %1569 = vmatpush1.bf16.xpose.msra.mxu0 0
      %1570 = vmatprep.subr.bf16.mxu0 0
      %1571 = vmatpush1.bf16.xpose.msra.mxu0 %v1255
      %1572 = vmatprep.subr.bf16.mxu0 0
      %1573 = vmatpush2.bf16.xpose.msra.mxu0 0
      %1574 = vmatprep.subr.bf16.mxu0 0
      %1575 = vmatpush2.bf16.xpose.msra.mxu0 0
      %1576 = vmatprep.subr.bf16.mxu0 0
      %1577 = vmatpush2.bf16.xpose.msra.mxu0 0
      %1578 = vmatprep.subr.bf16.mxu0 0
      %1579 = vmatpush2.bf16.xpose.msra.mxu0 0
      %1580 = vmatprep.subr.bf16.mxu0 0
      %1581 = vmatpush2.bf16.xpose.msra.mxu0 0
      %1582 = vmatprep.subr.bf16.mxu0 0
      %1583 = vmatpush2.bf16.xpose.msra.mxu0 0
      %1584 = vmatprep.subr.bf16.mxu0 0
      %1585 = vmatpush2.bf16.xpose.msra.mxu0 0
      %1586 = vmatprep.subr.bf16.mxu0 0
      %1587 = vmatpush2.bf16.xpose.msra.mxu0 0
      %1588 = vmatprep.mubr.bf16.mxu0 0
      %1589 = vmatmul.mubr.bf16.gmra.mxu0 %v1554
      %v1590 = vpop.f32.mrf.mxu0
      %v1591 = vadd.f32 0.0, %v1590
      %v1592 = vpop.f32.mrf.mxu0
      %v1593 = vpop.f32.mrf.mxu0
      %v1594 = vpop.f32.mrf.mxu0
      %1595 = vdwg.mxu0
      %v1596 = vmul.f32 %v1591, 0.088388346
      %v1597 = vsel %vm1299, %v1596, -inf
      %1598 = vmax.xlane.f32.xlu0 %v1597
      %v1599 = vpop.xlane.xlu0 %1598
      %v1600 = vsub.f32 %v1596, %v1599
      %v1601 = vmul.f32 %v1600, 1.442695
      %v1602 = vpow.pop %v1601
      %v1603 = vsel %vm1299, %v1602, 0.0
      %1604 = vadd.xlane.f32.xlu0 %v1603
      %v1605 = vpop.xlane.xlu0 %1604
      %v1606 = vrcp.pop %v1605
      %v1607 = vmul.f32 %v1602, %v1606
      %v1608 = vpack.c.bf16 %v1607, %v1607
      %v1610 = vsel %vm1299, %v1608, 0
      %1612 = vmatprep.subr.bf16.mxu0 0
      %1613 = vmatpush1.bf16.msra.mxu0 0
      %1614 = vmatprep.subr.bf16.mxu0 0
      %1615 = vmatpush1.bf16.msra.mxu0 0
      %1616 = vmatprep.subr.bf16.mxu0 0
      %1617 = vmatpush1.bf16.msra.mxu0 0
      %1618 = vmatprep.subr.bf16.mxu0 0
      %1619 = vmatpush1.bf16.msra.mxu0 0
      %1620 = vmatprep.subr.bf16.mxu0 0
      %1621 = vmatpush1.bf16.msra.mxu0 0
      %1622 = vmatprep.subr.bf16.mxu0 0
      %1623 = vmatpush1.bf16.msra.mxu0 0
      %1624 = vmatprep.subr.bf16.mxu0 0
      %1625 = vmatpush1.bf16.msra.mxu0 0
      %1626 = vmatprep.subr.bf16.mxu0 0
      %1627 = vmatpush1.bf16.msra.mxu0 %v1257
      %1628 = vmatprep.subr.bf16.mxu0 0
      %1629 = vmatpush2.bf16.msra.mxu0 0
      %1630 = vmatprep.subr.bf16.mxu0 0
      %1631 = vmatpush2.bf16.msra.mxu0 0
      %1632 = vmatprep.subr.bf16.mxu0 0
      %1633 = vmatpush2.bf16.msra.mxu0 0
      %1634 = vmatprep.subr.bf16.mxu0 0
      %1635 = vmatpush2.bf16.msra.mxu0 0
      %1636 = vmatprep.subr.bf16.mxu0 0
      %1637 = vmatpush2.bf16.msra.mxu0 0
      %1638 = vmatprep.subr.bf16.mxu0 0
      %1639 = vmatpush2.bf16.msra.mxu0 0
      %1640 = vmatprep.subr.bf16.mxu0 0
      %1641 = vmatpush2.bf16.msra.mxu0 0
      %1642 = vmatprep.subr.bf16.mxu0 0
      %1643 = vmatpush2.bf16.msra.mxu0 0
      %1644 = vmatprep.mubr.bf16.mxu0 0
      %1645 = vmatmul.mubr.bf16.gmra.mxu0 %v1610
      %v1646 = vpop.f32.mrf.mxu0
      %v1647 = vadd.f32 0.0, %v1646
      %v1648 = vpop.f32.mrf.mxu0
      %v1649 = vpop.f32.mrf.mxu0
      %v1650 = vpop.f32.mrf.mxu0
      %1651 = vdwg.mxu0
      %1652 = vst [vmem:[#allocation2 + $0x18] sm:$0xff] %v1647
      %v1653 = vld [vmem:[#allocation2] sm:$0xff]
      %v1654 = vld [vmem:[#allocation2 + $0x8] sm:$0xff]
      %v1655 = vld [vmem:[#allocation2 + $0x10] sm:$0xff]
      %v1656 = vld [vmem:[#allocation2 + $0x18] sm:$0xff]
      %v1657 = vpack.c.bf16 %v1655, %v1653
      %v1658 = vpack.c.bf16 %v1656, %v1654
      %v1659 = vld [vmem:[%s8] sm:$0xff]
      %v1660 = vld [vmem:[%s8 + $0x8] sm:$0xff]
      %v1661 = vld [vmem:[%s8 + $0x10] sm:$0xff]
      %v1662 = vld [vmem:[%s8 + $0x18] sm:$0xff]
      %v1663 = vld [vmem:[%s8 + $0x20] sm:$0xff]
      %v1664 = vld [vmem:[%s8 + $0x28] sm:$0xff]
      %v1665 = vld [vmem:[%s8 + $0x30] sm:$0xff]
      %v1666 = vld [vmem:[%s8 + $0x38] sm:$0xff]
      %v1667 = vld [vmem:[%s8 + $0x40] sm:$0xff]
      %v1668 = vld [vmem:[%s8 + $0x48] sm:$0xff]
      %v1669 = vld [vmem:[%s8 + $0x50] sm:$0xff]
      %v1670 = vld [vmem:[%s8 + $0x58] sm:$0xff]
      %v1671 = vld [vmem:[%s8 + $0x60] sm:$0xff]
      %v1672 = vld [vmem:[%s8 + $0x68] sm:$0xff]
      %v1673 = vld [vmem:[%s8 + $0x70] sm:$0xff]
      %v1674 = vld [vmem:[%s8 + $0x78] sm:$0xff]
      %v1675 = vld [vmem:[%s8 + $0x80] sm:$0xff]
      %v1676 = vld [vmem:[%s8 + $0x88] sm:$0xff]
      %v1677 = vld [vmem:[%s8 + $0x90] sm:$0xff]
      %v1678 = vld [vmem:[%s8 + $0x98] sm:$0xff]
      %v1679 = vld [vmem:[%s8 + $0xa0] sm:$0xff]
      %v1680 = vld [vmem:[%s8 + $0xa8] sm:$0xff]
      %v1681 = vld [vmem:[%s8 + $0xb0] sm:$0xff]
      %v1682 = vld [vmem:[%s8 + $0xb8] sm:$0xff]
      %v1683 = vld [vmem:[%s8 + $0xc0] sm:$0xff]
      %v1684 = vld [vmem:[%s8 + $0xc8] sm:$0xff]
      %v1685 = vld [vmem:[%s8 + $0xd0] sm:$0xff]
      %v1686 = vld [vmem:[%s8 + $0xd8] sm:$0xff]
      %v1687 = vld [vmem:[%s8 + $0xe0] sm:$0xff]
      %v1688 = vld [vmem:[%s8 + $0xe8] sm:$0xff]
      %v1689 = vld [vmem:[%s8 + $0xf0] sm:$0xff]
      %v1690 = vld [vmem:[%s8 + $0xf8] sm:$0xff]
      %v1691 = vld [vmem:[%s9] sm:$0x3]
      %v1693 = vlaneseq
      %v1694 = vshrl.u32 %v1693, 7
      %v1695 = vsub.s32 0, %v1694
      %v1696 = vrot.slane %v1691, %v1695
      %v1697 = vlaneseq
      %v1698 = vshrl.u32 %v1697, 7
      %v1699 = vsub.s32 1, %v1698
      %v1700 = vrot.slane %v1691, %v1699
      %v1735 = vunpack.c.l.b16 %v1659
      %v1736 = vunpack.c.h.b16 %v1659
      %v1737 = vunpack.c.l.b16 %v1660
      %v1738 = vunpack.c.h.b16 %v1660
      %v1739 = vunpack.c.l.b16 %v1661
      %v1740 = vunpack.c.h.b16 %v1661
      %v1741 = vunpack.c.l.b16 %v1662
      %v1742 = vunpack.c.h.b16 %v1662
      %v1743 = vunpack.c.l.b16 %v1663
      %v1744 = vunpack.c.h.b16 %v1663
      %v1745 = vunpack.c.l.b16 %v1664
      %v1746 = vunpack.c.h.b16 %v1664
      %v1747 = vunpack.c.l.b16 %v1665
      %v1748 = vunpack.c.h.b16 %v1665
      %v1749 = vunpack.c.l.b16 %v1666
      %v1750 = vunpack.c.h.b16 %v1666
      %v1751 = vunpack.c.l.b16 %v1667
      %v1752 = vunpack.c.h.b16 %v1667
      %v1753 = vunpack.c.l.b16 %v1668
      %v1754 = vunpack.c.h.b16 %v1668
      %v1755 = vunpack.c.l.b16 %v1669
      %v1756 = vunpack.c.h.b16 %v1669
      %v1757 = vunpack.c.l.b16 %v1670
      %v1758 = vunpack.c.h.b16 %v1670
      %v1759 = vunpack.c.l.b16 %v1671
      %v1760 = vunpack.c.h.b16 %v1671
      %v1761 = vunpack.c.l.b16 %v1672
      %v1762 = vunpack.c.h.b16 %v1672
      %v1763 = vunpack.c.l.b16 %v1673
      %v1764 = vunpack.c.h.b16 %v1673
      %v1765 = vunpack.c.l.b16 %v1674
      %v1766 = vunpack.c.h.b16 %v1674
      %v1767 = vunpack.c.l.b16 %v1675
      %v1768 = vunpack.c.h.b16 %v1675
      %v1769 = vunpack.c.l.b16 %v1676
      %v1770 = vunpack.c.h.b16 %v1676
      %v1771 = vunpack.c.l.b16 %v1677
      %v1772 = vunpack.c.h.b16 %v1677
      %v1773 = vunpack.c.l.b16 %v1678
      %v1774 = vunpack.c.h.b16 %v1678
      %v1775 = vunpack.c.l.b16 %v1679
      %v1776 = vunpack.c.h.b16 %v1679
      %v1777 = vunpack.c.l.b16 %v1680
      %v1778 = vunpack.c.h.b16 %v1680
      %v1779 = vunpack.c.l.b16 %v1681
      %v1780 = vunpack.c.h.b16 %v1681
      %v1781 = vunpack.c.l.b16 %v1682
      %v1782 = vunpack.c.h.b16 %v1682
      %v1783 = vunpack.c.l.b16 %v1683
      %v1784 = vunpack.c.h.b16 %v1683
      %v1785 = vunpack.c.l.b16 %v1684
      %v1786 = vunpack.c.h.b16 %v1684
      %v1787 = vunpack.c.l.b16 %v1685
      %v1788 = vunpack.c.h.b16 %v1685
      %v1789 = vunpack.c.l.b16 %v1686
      %v1790 = vunpack.c.h.b16 %v1686
      %v1791 = vunpack.c.l.b16 %v1687
      %v1792 = vunpack.c.h.b16 %v1687
      %v1793 = vunpack.c.l.b16 %v1688
      %v1794 = vunpack.c.h.b16 %v1688
      %v1795 = vunpack.c.l.b16 %v1689
      %v1796 = vunpack.c.h.b16 %v1689
      %v1797 = vunpack.c.l.b16 %v1690
      %v1798 = vunpack.c.h.b16 %v1690
      %v1799 = vpack.c.b16 %v1737, %v1735
      %v1800 = vpack.c.b16 %v1738, %v1736
      %v1801 = vpack.c.b16 %v1741, %v1739
      %v1802 = vpack.c.b16 %v1742, %v1740
      %v1803 = vpack.c.b16 %v1745, %v1743
      %v1804 = vpack.c.b16 %v1746, %v1744
      %v1805 = vpack.c.b16 %v1749, %v1747
      %v1806 = vpack.c.b16 %v1750, %v1748
      %v1807 = vpack.c.b16 %v1753, %v1751
      %v1808 = vpack.c.b16 %v1754, %v1752
      %v1809 = vpack.c.b16 %v1757, %v1755
      %v1810 = vpack.c.b16 %v1758, %v1756
      %v1811 = vpack.c.b16 %v1761, %v1759
      %v1812 = vpack.c.b16 %v1762, %v1760
      %v1813 = vpack.c.b16 %v1765, %v1763
      %v1814 = vpack.c.b16 %v1766, %v1764
      %v1815 = vpack.c.b16 %v1769, %v1767
      %v1816 = vpack.c.b16 %v1770, %v1768
      %v1817 = vpack.c.b16 %v1773, %v1771
      %v1818 = vpack.c.b16 %v1774, %v1772
      %v1819 = vpack.c.b16 %v1777, %v1775
      %v1820 = vpack.c.b16 %v1778, %v1776
      %v1821 = vpack.c.b16 %v1781, %v1779
      %v1822 = vpack.c.b16 %v1782, %v1780
      %v1823 = vpack.c.b16 %v1785, %v1783
      %v1824 = vpack.c.b16 %v1786, %v1784
      %v1825 = vpack.c.b16 %v1789, %v1787
      %v1826 = vpack.c.b16 %v1790, %v1788
      %v1827 = vpack.c.b16 %v1793, %v1791
      %v1828 = vpack.c.b16 %v1794, %v1792
      %v1829 = vpack.c.b16 %v1797, %v1795
      %v1830 = vpack.c.b16 %v1798, %v1796
      %1863 = vmatprep.subr.bf16.mxu0 %v1814
      %1864 = vmatpush1.bf16.msra.mxu0 %v1813
      %1865 = vmatprep.subr.bf16.mxu0 %v1812
      %1866 = vmatpush1.bf16.msra.mxu0 %v1811
      %1867 = vmatprep.subr.bf16.mxu0 %v1810
      %1868 = vmatpush1.bf16.msra.mxu0 %v1809
      %1869 = vmatprep.subr.bf16.mxu0 %v1808
      %1870 = vmatpush1.bf16.msra.mxu0 %v1807
      %1871 = vmatprep.subr.bf16.mxu0 %v1806
      %1872 = vmatpush1.bf16.msra.mxu0 %v1805
      %1873 = vmatprep.subr.bf16.mxu0 %v1804
      %1874 = vmatpush1.bf16.msra.mxu0 %v1803
      %1875 = vmatprep.subr.bf16.mxu0 %v1802
      %1876 = vmatpush1.bf16.msra.mxu0 %v1801
      %1877 = vmatprep.subr.bf16.mxu0 %v1800
      %1878 = vmatpush1.bf16.msra.mxu0 %v1799
      %1879 = vmatprep.subr.bf16.mxu0 %v1830
      %1880 = vmatpush2.bf16.msra.mxu0 %v1829
      %1881 = vmatprep.subr.bf16.mxu0 %v1828
      %1882 = vmatpush2.bf16.msra.mxu0 %v1827
      %1883 = vmatprep.subr.bf16.mxu0 %v1826
      %1884 = vmatpush2.bf16.msra.mxu0 %v1825
      %1885 = vmatprep.subr.bf16.mxu0 %v1824
      %1886 = vmatpush2.bf16.msra.mxu0 %v1823
      %1887 = vmatprep.subr.bf16.mxu0 %v1822
      %1888 = vmatpush2.bf16.msra.mxu0 %v1821
      %1889 = vmatprep.subr.bf16.mxu0 %v1820
      %1890 = vmatpush2.bf16.msra.mxu0 %v1819
      %1891 = vmatprep.subr.bf16.mxu0 %v1818
      %1892 = vmatpush2.bf16.msra.mxu0 %v1817
      %1893 = vmatprep.subr.bf16.mxu0 %v1816
      %1894 = vmatpush2.bf16.msra.mxu0 %v1815
      %1895 = vmatprep.mubr.bf16.mxu0 %v1658
      %1896 = vmatmul.mubr.bf16.gmra.mxu0 %v1657
      %v1897 = vpop.f32.mrf.mxu0
      %v1898 = vadd.f32 %v1696, %v1897
      %v1899 = vpop.f32.mrf.mxu0
      %v1900 = vadd.f32 %v1700, %v1899
      %v1901 = vpop.f32.mrf.mxu0
      %v1902 = vadd.f32 %v1696, %v1901
      %v1903 = vpop.f32.mrf.mxu0
      %v1904 = vadd.f32 %v1700, %v1903
      %1905 = vdwg.mxu0
      %v1906 = vadd.f32 %v394, %v1898
      %v1907 = vadd.f32 %v395, %v1900
      %v1908 = vadd.f32 %v396, %v1902
      %v1909 = vadd.f32 %v397, %v1904
      %1910 = vst [vmem:[%s391] sm:$0xff] %v1906
      %1911 = vst [vmem:[%s391 + $0x8] sm:$0xff] %v1907
      %1912 = vst [vmem:[%s391 + $0x10] sm:$0xff] %v1908
      %1913 = vst [vmem:[%s391 + $0x18] sm:$0xff] %v1909
      %s1914 = smul.u32 2, %s21
      %p1915 = scmp.lt.s32.totalorder %s1914, 3
      %s1916 = scalar_select %p1915, %s1914, 3
      %s1917 = smul.addr %s1916, 2
      %s1918 = smul.addr %s1917, 8
      %s1919 = scalar_lea.vmem %s10, %s1918
      // Predicated region
      $region61: #{_lambda_.10} parent=59 // pred_check
        %p1920 = pneg %p259
      $region62: #{_lambda_.10} parent=59 // pred_check_branch
        %1922 = sbr.rel (%p1920) target = $region64
      $region63: #{_lambda_.10} parent=59 // pred_region
        %s1923 = smul.u32 2, %s21
      $region64: #{_lambda_.10} parent=59 // pred_fallthru
        _
    $region60: #{_lambda_.10} parent=5 // pred_fallthru
      _
    %p1924 = scmp.le.s32.totalorder 2, %s16
    // Predicated region
    $region65: #{_lambda_.10} parent=5 // pred_check
      %p1925 = pneg %p1924
    $region66: #{_lambda_.10} parent=5 // pred_check_branch
      %1927 = sbr.rel (%p1925) target = $region68
    $region67: #{_lambda_.10} parent=5 // pred_region
      %s1928 = ssub.s32 %s16, 2
      // Predicated region
      $region69: #{_lambda_.10} parent=67 // pred_check
        %p1929 = pneg %p265
      $region70: #{_lambda_.10} parent=67 // pred_check_branch
        %1931 = sbr.rel (%p1929) target = $region72
      $region71: #{_lambda_.10} parent=67 // pred_region
        %s1932 = smul.u32 2, %s22
        %p1933 = scmp.lt.s32.totalorder %s1932, 3
        %s1934 = scalar_select %p1933, %s1932, 3
        %s1935 = smul.addr %s1934, 2
        %s1936 = smul.addr %s1935, 8
        %s1937 = scalar_lea.vmem %s10, %s1936
      $region72: #{_lambda_.10} parent=67 // pred_fallthru
        _
    $region68: #{_lambda_.10} parent=5 // pred_fallthru
      _
  $region6: #{_lambda_.10} parent=0 // loop_footer
    %s20 = sadd.s32 1, %s16
  $region7: #{_lambda_.10} parent=0 // loop_footer_branch
    %15 = sbr.rel target = $region3
  $region8: #{_lambda_.10} parent=0 // loop_exit
    _

// kernel: _lambda_.12
$region0: #{_lambda_.12}
  #allocation0 [shape = 'u32[]', space=smem, size = 0x4, offset = 0x4, fixed_abs, tag = 'smem constant byte address 0x4 - core index']
  #allocation1 [shape = 'u32[144,128]{1,0:T(1,128)}', space=vmem, size = 0x12000, scoped, tag = 'internal scratch']
  #allocation2 [shape = 'f32[16,256]{1,0:T(8,128)}', space=vmem, size = 0x4000, scoped, tag = 'scratch operand']
  %s0 = inlined_call_operand.vmem [shape: f32[32,256], index: 0, kind: input, shape index: {}, may-alias: {0,7}]
  %s1 = inlined_call_operand.vmem [shape: f32[1,256], index: 1, kind: input, shape index: {}]
  %s2 = inlined_call_operand.vmem [shape: f32[1,256], index: 2, kind: input, shape index: {}]
  %s3 = inlined_call_operand.vmem [shape: bf16[256,768], index: 3, kind: input, shape index: {}]
  %s4 = inlined_call_operand.vmem [shape: f32[1,768], index: 4, kind: input, shape index: {}]
  %s5 = inlined_call_operand.vmem [shape: bf16[256,256], index: 5, kind: input, shape index: {}]
  %s6 = inlined_call_operand.vmem [shape: f32[1,256], index: 6, kind: input, shape index: {}]
  %s7 = inlined_call_operand.vmem [shape: f32[32,256], index: 7, kind: output, shape index: {}, may-alias: {0,7}]
  %s8 = sld [smem:[#allocation0]]
  $region61: #{_lambda_.12} parent=0
    _
  %s10 = ssub.s32 1, %s8
  %s11 = scalar_select 0, %s10, %s8
  loop: start=0, step=1, limit=4
  $region2: #{_lambda_.12} parent=0 // loop_pre_header
    _
  $region3: #{_lambda_.12} parent=0 // loop_header
    %s13 = sphi 0, %s17
    %p14 = scmp.ge.s32.totalorder %s13, 4
    %s23 = sphi 0, %s25
    %s26 = sphi 0, %s23
    %s27 = sphi 0, %s26
    %s43 = sphi 0, %s27
    %s47 = sphi 0, %s47
    %s49 = sphi 0, %s47
    %s50 = sphi 0, %s49
    %s64 = sphi 0, %s50
    %s68 = sphi 0, %s68
    %s70 = sphi 0, %s68
    %s71 = sphi 0, %s70
    %s85 = sphi 0, %s71
    %s89 = sphi 0, %s89
    %s91 = sphi 0, %s89
    %s92 = sphi 0, %s91
    %s106 = sphi 0, %s92
    %s110 = sphi 0, %s110
    %s112 = sphi 0, %s110
    %s113 = sphi 0, %s112
    %s127 = sphi 0, %s113
    %s131 = sphi 0, %s131
    %s133 = sphi 0, %s131
    %s134 = sphi 0, %s133
    %s148 = sphi 0, %s134
    %s152 = sphi 0, %s152
    %s154 = sphi 0, %s152
    %s155 = sphi 0, %s154
    %s169 = sphi 0, %s155
    %s175 = sphi 0, %s177
    %s178 = sphi 0, %s175
    %s179 = sphi 0, %s178
    %s195 = sphi 0, %s179
  $region4: #{_lambda_.12} parent=0 // loop_header_branch
    %16 = sbr.rel (%p14) target = $region8
  $region5: #{_lambda_.12} parent=0 // loop_body
    %s18 = ssub.s32 %s13, 1
    %s19 = ssub.s32 %s13, 2
    %s20 = sadd.s32 %s13, 1
    %s21 = ssub.s32 %s13, %s20
    %p22 = scmp.eq.s32.totalorder %s21, 0
    %s24 = sadd.s32 %s23, 1
    %s25 = scalar_select %p22, %s23, %s24
    %p28 = pneg %p22
    %p29 = scmp.eq.s32.totalorder %s13, 1
    %p30 = por %p28, %p29
    %p31 = scmp.ne.s32.totalorder %s23, %s26
    %p32 = scmp.eq.s32.totalorder %s13, 0
    %p33 = por %p31, %p32
    %p34 = scmp.ne.s32.totalorder %s23, %s26
    %p35 = scmp.eq.s32.totalorder %s18, 1
    %p36 = por %p34, %p35
    %p37 = scmp.ne.s32.totalorder %s26, %s27
    %p38 = scmp.eq.s32.totalorder %s18, 0
    %p39 = por %p37, %p38
    %p40 = scmp.ne.s32.totalorder %s26, %s27
    %p41 = scmp.eq.s32.totalorder %s19, 1
    %p42 = por %p40, %p41
    %p44 = scmp.ne.s32.totalorder %s27, %s43
    %p45 = scmp.eq.s32.totalorder %s19, 0
    %p46 = por %p44, %p45
    %s48 = sadd.s32 %s47, 1
    %p51 = scmp.eq.s32.totalorder %s13, 1
    %p52 = scmp.ne.s32.totalorder %s47, %s49
    %p53 = scmp.eq.s32.totalorder %s13, 0
    %p54 = por %p52, %p53
    %p55 = scmp.ne.s32.totalorder %s47, %s49
    %p56 = scmp.eq.s32.totalorder %s18, 1
    %p57 = por %p55, %p56
    %p58 = scmp.ne.s32.totalorder %s49, %s50
    %p59 = scmp.eq.s32.totalorder %s18, 0
    %p60 = por %p58, %p59
    %p61 = scmp.ne.s32.totalorder %s49, %s50
    %p62 = scmp.eq.s32.totalorder %s19, 1
    %p63 = por %p61, %p62
    %p65 = scmp.ne.s32.totalorder %s50, %s64
    %p66 = scmp.eq.s32.totalorder %s19, 0
    %p67 = por %p65, %p66
    %s69 = sadd.s32 %s68, 1
    %p72 = scmp.eq.s32.totalorder %s13, 1
    %p73 = scmp.ne.s32.totalorder %s68, %s70
    %p74 = scmp.eq.s32.totalorder %s13, 0
    %p75 = por %p73, %p74
    %p76 = scmp.ne.s32.totalorder %s68, %s70
    %p77 = scmp.eq.s32.totalorder %s18, 1
    %p78 = por %p76, %p77
    %p79 = scmp.ne.s32.totalorder %s70, %s71
    %p80 = scmp.eq.s32.totalorder %s18, 0
    %p81 = por %p79, %p80
    %p82 = scmp.ne.s32.totalorder %s70, %s71
    %p83 = scmp.eq.s32.totalorder %s19, 1
    %p84 = por %p82, %p83
    %p86 = scmp.ne.s32.totalorder %s71, %s85
    %p87 = scmp.eq.s32.totalorder %s19, 0
    %p88 = por %p86, %p87
    %s90 = sadd.s32 %s89, 1
    %p93 = scmp.eq.s32.totalorder %s13, 1
    %p94 = scmp.ne.s32.totalorder %s89, %s91
    %p95 = scmp.eq.s32.totalorder %s13, 0
    %p96 = por %p94, %p95
    %p97 = scmp.ne.s32.totalorder %s89, %s91
    %p98 = scmp.eq.s32.totalorder %s18, 1
    %p99 = por %p97, %p98
    %p100 = scmp.ne.s32.totalorder %s91, %s92
    %p101 = scmp.eq.s32.totalorder %s18, 0
    %p102 = por %p100, %p101
    %p103 = scmp.ne.s32.totalorder %s91, %s92
    %p104 = scmp.eq.s32.totalorder %s19, 1
    %p105 = por %p103, %p104
    %p107 = scmp.ne.s32.totalorder %s92, %s106
    %p108 = scmp.eq.s32.totalorder %s19, 0
    %p109 = por %p107, %p108
    %s111 = sadd.s32 %s110, 1
    %p114 = scmp.eq.s32.totalorder %s13, 1
    %p115 = scmp.ne.s32.totalorder %s110, %s112
    %p116 = scmp.eq.s32.totalorder %s13, 0
    %p117 = por %p115, %p116
    %p118 = scmp.ne.s32.totalorder %s110, %s112
    %p119 = scmp.eq.s32.totalorder %s18, 1
    %p120 = por %p118, %p119
    %p121 = scmp.ne.s32.totalorder %s112, %s113
    %p122 = scmp.eq.s32.totalorder %s18, 0
    %p123 = por %p121, %p122
    %p124 = scmp.ne.s32.totalorder %s112, %s113
    %p125 = scmp.eq.s32.totalorder %s19, 1
    %p126 = por %p124, %p125
    %p128 = scmp.ne.s32.totalorder %s113, %s127
    %p129 = scmp.eq.s32.totalorder %s19, 0
    %p130 = por %p128, %p129
    %s132 = sadd.s32 %s131, 1
    %p135 = scmp.eq.s32.totalorder %s13, 1
    %p136 = scmp.ne.s32.totalorder %s131, %s133
    %p137 = scmp.eq.s32.totalorder %s13, 0
    %p138 = por %p136, %p137
    %p139 = scmp.ne.s32.totalorder %s131, %s133
    %p140 = scmp.eq.s32.totalorder %s18, 1
    %p141 = por %p139, %p140
    %p142 = scmp.ne.s32.totalorder %s133, %s134
    %p143 = scmp.eq.s32.totalorder %s18, 0
    %p144 = por %p142, %p143
    %p145 = scmp.ne.s32.totalorder %s133, %s134
    %p146 = scmp.eq.s32.totalorder %s19, 1
    %p147 = por %p145, %p146
    %p149 = scmp.ne.s32.totalorder %s134, %s148
    %p150 = scmp.eq.s32.totalorder %s19, 0
    %p151 = por %p149, %p150
    %s153 = sadd.s32 %s152, 1
    %p156 = scmp.eq.s32.totalorder %s13, 1
    %p157 = scmp.ne.s32.totalorder %s152, %s154
    %p158 = scmp.eq.s32.totalorder %s13, 0
    %p159 = por %p157, %p158
    %p160 = scmp.ne.s32.totalorder %s152, %s154
    %p161 = scmp.eq.s32.totalorder %s18, 1
    %p162 = por %p160, %p161
    %p163 = scmp.ne.s32.totalorder %s154, %s155
    %p164 = scmp.eq.s32.totalorder %s18, 0
    %p165 = por %p163, %p164
    %p166 = scmp.ne.s32.totalorder %s154, %s155
    %p167 = scmp.eq.s32.totalorder %s19, 1
    %p168 = por %p166, %p167
    %p170 = scmp.ne.s32.totalorder %s155, %s169
    %p171 = scmp.eq.s32.totalorder %s19, 0
    %p172 = por %p170, %p171
    %s173 = ssub.s32 %s13, %s20
    %p174 = scmp.eq.s32.totalorder %s173, 0
    %s176 = sadd.s32 %s175, 1
    %s177 = scalar_select %p174, %s175, %s176
    %p180 = pneg %p174
    %p181 = scmp.eq.s32.totalorder %s13, 1
    %p182 = por %p180, %p181
    %p183 = scmp.ne.s32.totalorder %s175, %s178
    %p184 = scmp.eq.s32.totalorder %s13, 0
    %p185 = por %p183, %p184
    %p186 = scmp.ne.s32.totalorder %s175, %s178
    %p187 = scmp.eq.s32.totalorder %s18, 1
    %p188 = por %p186, %p187
    %p189 = scmp.ne.s32.totalorder %s178, %s179
    %p190 = scmp.eq.s32.totalorder %s18, 0
    %p191 = por %p189, %p190
    %p192 = scmp.ne.s32.totalorder %s178, %s179
    %p193 = scmp.eq.s32.totalorder %s19, 1
    %p194 = por %p192, %p193
    %p196 = scmp.ne.s32.totalorder %s179, %s195
    %p197 = scmp.eq.s32.totalorder %s19, 0
    %p198 = por %p196, %p197
    %p199 = scmp.le.s32.totalorder 1, %s13
    %p200 = scmp.lt.s32.totalorder %s13, 3
    %p201 = pnand %p199, %p200
    %p202 = pneg %p201
    // Predicated region
    $region9: #{_lambda_.12} parent=5 // pred_check
      _
    $region10: #{_lambda_.12} parent=5 // pred_check_branch
      %204 = sbr.rel (%p201) target = $region12
    $region11: #{_lambda_.12} parent=5 // pred_region
      %s205 = ssub.s32 %s13, 1
      // Predicated region
      $region13: #{_lambda_.12} parent=11 // pred_check
        %p206 = pneg %p60
      $region14: #{_lambda_.12} parent=11 // pred_check_branch
        %208 = sbr.rel (%p206) target = $region16
      $region15: #{_lambda_.12} parent=11 // pred_region
        _
      $region16: #{_lambda_.12} parent=11 // pred_fallthru
        _
      // Predicated region
      $region17: #{_lambda_.12} parent=11 // pred_check
        %p209 = pneg %p81
      $region18: #{_lambda_.12} parent=11 // pred_check_branch
        %211 = sbr.rel (%p209) target = $region20
      $region19: #{_lambda_.12} parent=11 // pred_region
        _
      $region20: #{_lambda_.12} parent=11 // pred_fallthru
        _
      // Predicated region
      $region21: #{_lambda_.12} parent=11 // pred_check
        %p212 = pneg %p102
      $region22: #{_lambda_.12} parent=11 // pred_check_branch
        %214 = sbr.rel (%p212) target = $region24
      $region23: #{_lambda_.12} parent=11 // pred_region
        _
      $region24: #{_lambda_.12} parent=11 // pred_fallthru
        _
      // Predicated region
      $region25: #{_lambda_.12} parent=11 // pred_check
        %p215 = pneg %p123
      $region26: #{_lambda_.12} parent=11 // pred_check_branch
        %217 = sbr.rel (%p215) target = $region28
      $region27: #{_lambda_.12} parent=11 // pred_region
        _
      $region28: #{_lambda_.12} parent=11 // pred_fallthru
        _
      // Predicated region
      $region29: #{_lambda_.12} parent=11 // pred_check
        %p218 = pneg %p144
      $region30: #{_lambda_.12} parent=11 // pred_check_branch
        %220 = sbr.rel (%p218) target = $region32
      $region31: #{_lambda_.12} parent=11 // pred_region
        _
      $region32: #{_lambda_.12} parent=11 // pred_fallthru
        _
      // Predicated region
      $region33: #{_lambda_.12} parent=11 // pred_check
        %p221 = pneg %p165
      $region34: #{_lambda_.12} parent=11 // pred_check_branch
        %223 = sbr.rel (%p221) target = $region36
      $region35: #{_lambda_.12} parent=11 // pred_region
        _
      $region36: #{_lambda_.12} parent=11 // pred_fallthru
        _
    $region12: #{_lambda_.12} parent=5 // pred_fallthru
      _
    %p224 = scmp.lt.s32.totalorder %s13, 2
    // Predicated region
    $region37: #{_lambda_.12} parent=5 // pred_check
      %p225 = pneg %p224
    $region38: #{_lambda_.12} parent=5 // pred_check_branch
      %227 = sbr.rel (%p225) target = $region40
    $region39: #{_lambda_.12} parent=5 // pred_region
      // Predicated region
      $region41: #{_lambda_.12} parent=39 // pred_check
        %p228 = pneg %p33
      $region42: #{_lambda_.12} parent=39 // pred_check_branch
        %230 = sbr.rel (%p228) target = $region44
      $region43: #{_lambda_.12} parent=39 // pred_region
        %s231 = smul.u32 2, %s13
        %p232 = scmp.lt.s32.totalorder %s231, 3
        %s233 = scalar_select %p232, %s231, 3
        %s234 = smul.addr %s233, 2
        %s235 = smul.addr %s234, 8
        %s236 = scalar_lea.vmem %s0, %s235
        %s237 = smul.u32 2, %s13
      $region44: #{_lambda_.12} parent=39 // pred_fallthru
        _
    $region40: #{_lambda_.12} parent=5 // pred_fallthru
      _
    %p238 = scmp.le.s32.totalorder 1, %s13
    %p239 = scmp.lt.s32.totalorder %s13, 3
    %p240 = pnand %p238, %p239
    %p241 = pneg %p240
    // Predicated region
    $region45: #{_lambda_.12} parent=5 // pred_check
      _
    $region46: #{_lambda_.12} parent=5 // pred_check_branch
      %243 = sbr.rel (%p240) target = $region48
    $region47: #{_lambda_.12} parent=5 // pred_region
      %s244 = ssub.s32 %s13, 1
      %s245 = smul.u32 2, %s18
      %p246 = scmp.lt.s32.totalorder %s245, 3
      %s247 = scalar_select %p246, %s245, 3
      %s248 = smul.addr %s247, 2
      %s249 = smul.addr %s248, 8
      %s250 = scalar_lea.vmem %s0, %s249
      %p251 = pneg %p39
      %p252 = pneg %p36
      %p253 = pneg %p60
      %p254 = pneg %p57
      %p255 = pneg %p81
      %p256 = pneg %p78
      %p257 = pneg %p102
      %p258 = pneg %p99
      %p259 = pneg %p123
      %p260 = pneg %p120
      %p261 = pneg %p144
      %p262 = pneg %p141
      %p263 = pneg %p165
      %p264 = pneg %p162
      %p265 = pneg %p191
      %p266 = pneg %p188
      %s267 = smul.u32 2, %s18
      %p268 = scmp.lt.s32.totalorder %s267, 3
      %s269 = scalar_select %p268, %s267, 3
      %s270 = smul.addr %s269, 2
      %s271 = smul.addr %s270, 8
      %s272 = scalar_lea.vmem %s7, %s271
      %s273 = smul.u32 2, %s18
      %p274 = scmp.lt.s32.totalorder %s273, 3
      %s275 = scalar_select %p274, %s273, 3
      %s276 = smul.addr %s275, 2
      %s277 = smul.addr %s276, 8
      %s278 = scalar_lea.vmem %s0, %s277
      %s279 = smul.u32 2, %s18
      %s280 = smul.u32 2, %s18
      %p281 = scmp.lt.s32.totalorder %s280, 3
      %s282 = scalar_select %p281, %s280, 3
      %s283 = smul.addr %s282, 2
      %s284 = smul.addr %s283, 8
      %s285 = scalar_lea.vmem %s7, %s284
      %s286 = smul.u32 2, %s18
      %v288 = vld [vmem:[%s278] sm:$0xff]
      %v289 = vld [vmem:[%s278 + $0x8] sm:$0xff]
      %v290 = vld [vmem:[%s278 + $0x10] sm:$0xff]
      %v291 = vld [vmem:[%s278 + $0x18] sm:$0xff]
      %v292 = vld [vmem:[%s1] sm:$0x3]
      %v293 = vld [vmem:[%s2] sm:$0x3]
      %v294 = vadd.f32 %v288, %v289
      %295 = vadd.xlane.f32.xlu0 %v294
      %v296 = vpop.xlane.xlu0 %295
      %v297 = vadd.f32 %v290, %v291
      %298 = vadd.xlane.f32.xlu0 %v297
      %v299 = vpop.xlane.xlu0 %298
      %v300 = vrcp.pop 256.0
      %v301 = vmul.f32 %v296, %v300
      %v302 = vmul.f32 %v299, %v300
      %v303 = vsub.f32 %v288, %v301
      %v304 = vsub.f32 %v289, %v301
      %v305 = vsub.f32 %v290, %v302
      %v306 = vsub.f32 %v291, %v302
      %v307 = vmul.f32 %v303, %v303
      %v308 = vmul.f32 %v304, %v304
      %v309 = vmul.f32 %v305, %v305
      %v310 = vmul.f32 %v306, %v306
      %v311 = vadd.f32 %v307, %v308
      %312 = vadd.xlane.f32.xlu0 %v311
      %v313 = vpop.xlane.xlu0 %312
      %v314 = vadd.f32 %v309, %v310
      %315 = vadd.xlane.f32.xlu0 %v314
      %v316 = vpop.xlane.xlu0 %315
      %v317 = vmul.f32 %v313, %v300
      %v318 = vmul.f32 %v316, %v300
      %v319 = vadd.f32 %v317, 1e-05
      %v320 = vadd.f32 %v318, 1e-05
      %v321 = vrsqrt.pop %v319
      %v322 = vrsqrt.pop %v320
      %v323 = vmul.f32 %v303, %v321
      %v324 = vmul.f32 %v304, %v321
      %v325 = vmul.f32 %v305, %v322
      %v326 = vmul.f32 %v306, %v322
      %v328 = vlaneseq
      %v329 = vshrl.u32 %v328, 7
      %v330 = vsub.s32 0, %v329
      %v331 = vrot.slane %v292, %v330
      %v332 = vlaneseq
      %v333 = vshrl.u32 %v332, 7
      %v334 = vsub.s32 1, %v333
      %v335 = vrot.slane %v292, %v334
      %v338 = vmul.f32 %v323, %v331
      %v339 = vmul.f32 %v324, %v335
      %v340 = vmul.f32 %v325, %v331
      %v341 = vmul.f32 %v326, %v335
      %v343 = vlaneseq
      %v344 = vshrl.u32 %v343, 7
      %v345 = vsub.s32 0, %v344
      %v346 = vrot.slane %v293, %v345
      %v347 = vlaneseq
      %v348 = vshrl.u32 %v347, 7
      %v349 = vsub.s32 1, %v348
      %v350 = vrot.slane %v293, %v349
      %v353 = vadd.f32 %v338, %v346
      %v354 = vadd.f32 %v339, %v350
      %v355 = vadd.f32 %v340, %v346
      %v356 = vadd.f32 %v341, %v350
      %v357 = vpack.c.bf16 %v355, %v353
      %v358 = vpack.c.bf16 %v356, %v354
      %v359 = vld [vmem:[%s3] sm:$0xff]
      %v360 = vld [vmem:[%s3 + $0x8] sm:$0xff]
      %v361 = vld [vmem:[%s3 + $0x10] sm:$0xff]
      %v362 = vld [vmem:[%s3 + $0x18] sm:$0xff]
      %v363 = vld [vmem:[%s3 + $0x20] sm:$0xff]
      %v364 = vld [vmem:[%s3 + $0x28] sm:$0xff]
      %v365 = vld [vmem:[%s3 + $0x30] sm:$0xff]
      %v366 = vld [vmem:[%s3 + $0x38] sm:$0xff]
      %v367 = vld [vmem:[%s3 + $0x40] sm:$0xff]
      %v368 = vld [vmem:[%s3 + $0x48] sm:$0xff]
      %v369 = vld [vmem:[%s3 + $0x50] sm:$0xff]
      %v370 = vld [vmem:[%s3 + $0x58] sm:$0xff]
      %v371 = vld [vmem:[%s3 + $0x60] sm:$0xff]
      %v372 = vld [vmem:[%s3 + $0x68] sm:$0xff]
      %v373 = vld [vmem:[%s3 + $0x70] sm:$0xff]
      %v374 = vld [vmem:[%s3 + $0x78] sm:$0xff]
      %v375 = vld [vmem:[%s3 + $0x80] sm:$0xff]
      %v376 = vld [vmem:[%s3 + $0x88] sm:$0xff]
      %v377 = vld [vmem:[%s3 + $0x90] sm:$0xff]
      %v378 = vld [vmem:[%s3 + $0x98] sm:$0xff]
      %v379 = vld [vmem:[%s3 + $0xa0] sm:$0xff]
      %v380 = vld [vmem:[%s3 + $0xa8] sm:$0xff]
      %v381 = vld [vmem:[%s3 + $0xb0] sm:$0xff]
      %v382 = vld [vmem:[%s3 + $0xb8] sm:$0xff]
      %v383 = vld [vmem:[%s3 + $0xc0] sm:$0xff]
      %v384 = vld [vmem:[%s3 + $0xc8] sm:$0xff]
      %v385 = vld [vmem:[%s3 + $0xd0] sm:$0xff]
      %v386 = vld [vmem:[%s3 + $0xd8] sm:$0xff]
      %v387 = vld [vmem:[%s3 + $0xe0] sm:$0xff]
      %v388 = vld [vmem:[%s3 + $0xe8] sm:$0xff]
      %v389 = vld [vmem:[%s3 + $0xf0] sm:$0xff]
      %v390 = vld [vmem:[%s3 + $0xf8] sm:$0xff]
      %v391 = vld [vmem:[%s3 + $0x100] sm:$0xff]
      %v392 = vld [vmem:[%s3 + $0x108] sm:$0xff]
      %v393 = vld [vmem:[%s3 + $0x110] sm:$0xff]
      %v394 = vld [vmem:[%s3 + $0x118] sm:$0xff]
      %v395 = vld [vmem:[%s3 + $0x120] sm:$0xff]
      %v396 = vld [vmem:[%s3 + $0x128] sm:$0xff]
      %v397 = vld [vmem:[%s3 + $0x130] sm:$0xff]
      %v398 = vld [vmem:[%s3 + $0x138] sm:$0xff]
      %v399 = vld [vmem:[%s3 + $0x140] sm:$0xff]
      %v400 = vld [vmem:[%s3 + $0x148] sm:$0xff]
      %v401 = vld [vmem:[%s3 + $0x150] sm:$0xff]
      %v402 = vld [vmem:[%s3 + $0x158] sm:$0xff]
      %v403 = vld [vmem:[%s3 + $0x160] sm:$0xff]
      %v404 = vld [vmem:[%s3 + $0x168] sm:$0xff]
      %v405 = vld [vmem:[%s3 + $0x170] sm:$0xff]
      %v406 = vld [vmem:[%s3 + $0x178] sm:$0xff]
      %v407 = vld [vmem:[%s3 + $0x180] sm:$0xff]
      %v408 = vld [vmem:[%s3 + $0x188] sm:$0xff]
      %v409 = vld [vmem:[%s3 + $0x190] sm:$0xff]
      %v410 = vld [vmem:[%s3 + $0x198] sm:$0xff]
      %v411 = vld [vmem:[%s3 + $0x1a0] sm:$0xff]
      %v412 = vld [vmem:[%s3 + $0x1a8] sm:$0xff]
      %v413 = vld [vmem:[%s3 + $0x1b0] sm:$0xff]
      %v414 = vld [vmem:[%s3 + $0x1b8] sm:$0xff]
      %v415 = vld [vmem:[%s3 + $0x1c0] sm:$0xff]
      %v416 = vld [vmem:[%s3 + $0x1c8] sm:$0xff]
      %v417 = vld [vmem:[%s3 + $0x1d0] sm:$0xff]
      %v418 = vld [vmem:[%s3 + $0x1d8] sm:$0xff]
      %v419 = vld [vmem:[%s3 + $0x1e0] sm:$0xff]
      %v420 = vld [vmem:[%s3 + $0x1e8] sm:$0xff]
      %v421 = vld [vmem:[%s3 + $0x1f0] sm:$0xff]
      %v422 = vld [vmem:[%s3 + $0x1f8] sm:$0xff]
      %v423 = vld [vmem:[%s3 + $0x200] sm:$0xff]
      %v424 = vld [vmem:[%s3 + $0x208] sm:$0xff]
      %v425 = vld [vmem:[%s3 + $0x210] sm:$0xff]
      %v426 = vld [vmem:[%s3 + $0x218] sm:$0xff]
      %v427 = vld [vmem:[%s3 + $0x220] sm:$0xff]
      %v428 = vld [vmem:[%s3 + $0x228] sm:$0xff]
      %v429 = vld [vmem:[%s3 + $0x230] sm:$0xff]
      %v430 = vld [vmem:[%s3 + $0x238] sm:$0xff]
      %v431 = vld [vmem:[%s3 + $0x240] sm:$0xff]
      %v432 = vld [vmem:[%s3 + $0x248] sm:$0xff]
      %v433 = vld [vmem:[%s3 + $0x250] sm:$0xff]
      %v434 = vld [vmem:[%s3 + $0x258] sm:$0xff]
      %v435 = vld [vmem:[%s3 + $0x260] sm:$0xff]
      %v436 = vld [vmem:[%s3 + $0x268] sm:$0xff]
      %v437 = vld [vmem:[%s3 + $0x270] sm:$0xff]
      %v438 = vld [vmem:[%s3 + $0x278] sm:$0xff]
      %v439 = vld [vmem:[%s3 + $0x280] sm:$0xff]
      %v440 = vld [vmem:[%s3 + $0x288] sm:$0xff]
      %v441 = vld [vmem:[%s3 + $0x290] sm:$0xff]
      %v442 = vld [vmem:[%s3 + $0x298] sm:$0xff]
      %v443 = vld [vmem:[%s3 + $0x2a0] sm:$0xff]
      %v444 = vld [vmem:[%s3 + $0x2a8] sm:$0xff]
      %v445 = vld [vmem:[%s3 + $0x2b0] sm:$0xff]
      %v446 = vld [vmem:[%s3 + $0x2b8] sm:$0xff]
      %v447 = vld [vmem:[%s3 + $0x2c0] sm:$0xff]
      %v448 = vld [vmem:[%s3 + $0x2c8] sm:$0xff]
      %v449 = vld [vmem:[%s3 + $0x2d0] sm:$0xff]
      %v450 = vld [vmem:[%s3 + $0x2d8] sm:$0xff]
      %v451 = vld [vmem:[%s3 + $0x2e0] sm:$0xff]
      %v452 = vld [vmem:[%s3 + $0x2e8] sm:$0xff]
      %v453 = vld [vmem:[%s3 + $0x2f0] sm:$0xff]
      %v454 = vld [vmem:[%s3 + $0x2f8] sm:$0xff]
      %v455 = vld [vmem:[%s4] sm:$0x3f]
      %v457 = vlaneseq
      %v458 = vshrl.u32 %v457, 7
      %v459 = vsub.s32 0, %v458
      %v460 = vrot.slane %v455, %v459
      %v461 = vlaneseq
      %v462 = vshrl.u32 %v461, 7
      %v463 = vsub.s32 1, %v462
      %v464 = vrot.slane %v455, %v463
      %v465 = vlaneseq
      %v466 = vshrl.u32 %v465, 7
      %v467 = vsub.s32 2, %v466
      %v468 = vrot.slane %v455, %v467
      %v469 = vlaneseq
      %v470 = vshrl.u32 %v469, 7
      %v471 = vsub.s32 3, %v470
      %v472 = vrot.slane %v455, %v471
      %v473 = vlaneseq
      %v474 = vshrl.u32 %v473, 7
      %v475 = vsub.s32 4, %v474
      %v476 = vrot.slane %v455, %v475
      %v477 = vlaneseq
      %v478 = vshrl.u32 %v477, 7
      %v479 = vsub.s32 5, %v478
      %v480 = vrot.slane %v455, %v479
      %v583 = vunpack.c.l.b16 %v359
      %v584 = vunpack.c.h.b16 %v359
      %v585 = vunpack.c.l.b16 %v360
      %v586 = vunpack.c.h.b16 %v360
      %v587 = vunpack.c.l.b16 %v361
      %v588 = vunpack.c.h.b16 %v361
      %v589 = vunpack.c.l.b16 %v362
      %v590 = vunpack.c.h.b16 %v362
      %v591 = vunpack.c.l.b16 %v363
      %v592 = vunpack.c.h.b16 %v363
      %v593 = vunpack.c.l.b16 %v364
      %v594 = vunpack.c.h.b16 %v364
      %v595 = vunpack.c.l.b16 %v365
      %v596 = vunpack.c.h.b16 %v365
      %v597 = vunpack.c.l.b16 %v366
      %v598 = vunpack.c.h.b16 %v366
      %v599 = vunpack.c.l.b16 %v367
      %v600 = vunpack.c.h.b16 %v367
      %v601 = vunpack.c.l.b16 %v368
      %v602 = vunpack.c.h.b16 %v368
      %v603 = vunpack.c.l.b16 %v369
      %v604 = vunpack.c.h.b16 %v369
      %v605 = vunpack.c.l.b16 %v370
      %v606 = vunpack.c.h.b16 %v370
      %v607 = vunpack.c.l.b16 %v371
      %v608 = vunpack.c.h.b16 %v371
      %v609 = vunpack.c.l.b16 %v372
      %v610 = vunpack.c.h.b16 %v372
      %v611 = vunpack.c.l.b16 %v373
      %v612 = vunpack.c.h.b16 %v373
      %v613 = vunpack.c.l.b16 %v374
      %v614 = vunpack.c.h.b16 %v374
      %v615 = vunpack.c.l.b16 %v375
      %v616 = vunpack.c.h.b16 %v375
      %v617 = vunpack.c.l.b16 %v376
      %v618 = vunpack.c.h.b16 %v376
      %v619 = vunpack.c.l.b16 %v377
      %v620 = vunpack.c.h.b16 %v377
      %v621 = vunpack.c.l.b16 %v378
      %v622 = vunpack.c.h.b16 %v378
      %v623 = vunpack.c.l.b16 %v379
      %v624 = vunpack.c.h.b16 %v379
      %v625 = vunpack.c.l.b16 %v380
      %v626 = vunpack.c.h.b16 %v380
      %v627 = vunpack.c.l.b16 %v381
      %v628 = vunpack.c.h.b16 %v381
      %v629 = vunpack.c.l.b16 %v382
      %v630 = vunpack.c.h.b16 %v382
      %v631 = vunpack.c.l.b16 %v383
      %v632 = vunpack.c.h.b16 %v383
      %v633 = vunpack.c.l.b16 %v384
      %v634 = vunpack.c.h.b16 %v384
      %v635 = vunpack.c.l.b16 %v385
      %v636 = vunpack.c.h.b16 %v385
      %v637 = vunpack.c.l.b16 %v386
      %v638 = vunpack.c.h.b16 %v386
      %v639 = vunpack.c.l.b16 %v387
      %v640 = vunpack.c.h.b16 %v387
      %v641 = vunpack.c.l.b16 %v388
      %v642 = vunpack.c.h.b16 %v388
      %v643 = vunpack.c.l.b16 %v389
      %v644 = vunpack.c.h.b16 %v389
      %v645 = vunpack.c.l.b16 %v390
      %v646 = vunpack.c.h.b16 %v390
      %v647 = vunpack.c.l.b16 %v391
      %v648 = vunpack.c.h.b16 %v391
      %v649 = vunpack.c.l.b16 %v392
      %v650 = vunpack.c.h.b16 %v392
      %v651 = vunpack.c.l.b16 %v393
      %v652 = vunpack.c.h.b16 %v393
      %v653 = vunpack.c.l.b16 %v394
      %v654 = vunpack.c.h.b16 %v394
      %v655 = vunpack.c.l.b16 %v395
      %v656 = vunpack.c.h.b16 %v395
      %v657 = vunpack.c.l.b16 %v396
      %v658 = vunpack.c.h.b16 %v396
      %v659 = vunpack.c.l.b16 %v397
      %v660 = vunpack.c.h.b16 %v397
      %v661 = vunpack.c.l.b16 %v398
      %v662 = vunpack.c.h.b16 %v398
      %v663 = vunpack.c.l.b16 %v399
      %v664 = vunpack.c.h.b16 %v399
      %v665 = vunpack.c.l.b16 %v400
      %v666 = vunpack.c.h.b16 %v400
      %v667 = vunpack.c.l.b16 %v401
      %v668 = vunpack.c.h.b16 %v401
      %v669 = vunpack.c.l.b16 %v402
      %v670 = vunpack.c.h.b16 %v402
      %v671 = vunpack.c.l.b16 %v403
      %v672 = vunpack.c.h.b16 %v403
      %v673 = vunpack.c.l.b16 %v404
      %v674 = vunpack.c.h.b16 %v404
      %v675 = vunpack.c.l.b16 %v405
      %v676 = vunpack.c.h.b16 %v405
      %v677 = vunpack.c.l.b16 %v406
      %v678 = vunpack.c.h.b16 %v406
      %v679 = vunpack.c.l.b16 %v407
      %v680 = vunpack.c.h.b16 %v407
      %v681 = vunpack.c.l.b16 %v408
      %v682 = vunpack.c.h.b16 %v408
      %v683 = vunpack.c.l.b16 %v409
      %v684 = vunpack.c.h.b16 %v409
      %v685 = vunpack.c.l.b16 %v410
      %v686 = vunpack.c.h.b16 %v410
      %v687 = vunpack.c.l.b16 %v411
      %v688 = vunpack.c.h.b16 %v411
      %v689 = vunpack.c.l.b16 %v412
      %v690 = vunpack.c.h.b16 %v412
      %v691 = vunpack.c.l.b16 %v413
      %v692 = vunpack.c.h.b16 %v413
      %v693 = vunpack.c.l.b16 %v414
      %v694 = vunpack.c.h.b16 %v414
      %v695 = vunpack.c.l.b16 %v415
      %v696 = vunpack.c.h.b16 %v415
      %v697 = vunpack.c.l.b16 %v416
      %v698 = vunpack.c.h.b16 %v416
      %v699 = vunpack.c.l.b16 %v417
      %v700 = vunpack.c.h.b16 %v417
      %v701 = vunpack.c.l.b16 %v418
      %v702 = vunpack.c.h.b16 %v418
      %v703 = vunpack.c.l.b16 %v419
      %v704 = vunpack.c.h.b16 %v419
      %v705 = vunpack.c.l.b16 %v420
      %v706 = vunpack.c.h.b16 %v420
      %v707 = vunpack.c.l.b16 %v421
      %v708 = vunpack.c.h.b16 %v421
      %v709 = vunpack.c.l.b16 %v422
      %v710 = vunpack.c.h.b16 %v422
      %v711 = vunpack.c.l.b16 %v423
      %v712 = vunpack.c.h.b16 %v423
      %v713 = vunpack.c.l.b16 %v424
      %v714 = vunpack.c.h.b16 %v424
      %v715 = vunpack.c.l.b16 %v425
      %v716 = vunpack.c.h.b16 %v425
      %v717 = vunpack.c.l.b16 %v426
      %v718 = vunpack.c.h.b16 %v426
      %v719 = vunpack.c.l.b16 %v427
      %v720 = vunpack.c.h.b16 %v427
      %v721 = vunpack.c.l.b16 %v428
      %v722 = vunpack.c.h.b16 %v428
      %v723 = vunpack.c.l.b16 %v429
      %v724 = vunpack.c.h.b16 %v429
      %v725 = vunpack.c.l.b16 %v430
      %v726 = vunpack.c.h.b16 %v430
      %v727 = vunpack.c.l.b16 %v431
      %v728 = vunpack.c.h.b16 %v431
      %v729 = vunpack.c.l.b16 %v432
      %v730 = vunpack.c.h.b16 %v432
      %v731 = vunpack.c.l.b16 %v433
      %v732 = vunpack.c.h.b16 %v433
      %v733 = vunpack.c.l.b16 %v434
      %v734 = vunpack.c.h.b16 %v434
      %v735 = vunpack.c.l.b16 %v435
      %v736 = vunpack.c.h.b16 %v435
      %v737 = vunpack.c.l.b16 %v436
      %v738 = vunpack.c.h.b16 %v436
      %v739 = vunpack.c.l.b16 %v437
      %v740 = vunpack.c.h.b16 %v437
      %v741 = vunpack.c.l.b16 %v438
      %v742 = vunpack.c.h.b16 %v438
      %v743 = vunpack.c.l.b16 %v439
      %v744 = vunpack.c.h.b16 %v439
      %v745 = vunpack.c.l.b16 %v440
      %v746 = vunpack.c.h.b16 %v440
      %v747 = vunpack.c.l.b16 %v441
      %v748 = vunpack.c.h.b16 %v441
      %v749 = vunpack.c.l.b16 %v442
      %v750 = vunpack.c.h.b16 %v442
      %v751 = vunpack.c.l.b16 %v443
      %v752 = vunpack.c.h.b16 %v443
      %v753 = vunpack.c.l.b16 %v444
      %v754 = vunpack.c.h.b16 %v444
      %v755 = vunpack.c.l.b16 %v445
      %v756 = vunpack.c.h.b16 %v445
      %v757 = vunpack.c.l.b16 %v446
      %v758 = vunpack.c.h.b16 %v446
      %v759 = vunpack.c.l.b16 %v447
      %v760 = vunpack.c.h.b16 %v447
      %v761 = vunpack.c.l.b16 %v448
      %v762 = vunpack.c.h.b16 %v448
      %v763 = vunpack.c.l.b16 %v449
      %v764 = vunpack.c.h.b16 %v449
      %v765 = vunpack.c.l.b16 %v450
      %v766 = vunpack.c.h.b16 %v450
      %v767 = vunpack.c.l.b16 %v451
      %v768 = vunpack.c.h.b16 %v451
      %v769 = vunpack.c.l.b16 %v452
      %v770 = vunpack.c.h.b16 %v452
      %v771 = vunpack.c.l.b16 %v453
      %v772 = vunpack.c.h.b16 %v453
      %v773 = vunpack.c.l.b16 %v454
      %v774 = vunpack.c.h.b16 %v454
      %v775 = vpack.c.b16 %v589, %v583
      %v776 = vpack.c.b16 %v590, %v584
      %v777 = vpack.c.b16 %v591, %v585
      %v778 = vpack.c.b16 %v592, %v586
      %v779 = vpack.c.b16 %v593, %v587
      %v780 = vpack.c.b16 %v594, %v588
      %v781 = vpack.c.b16 %v601, %v595
      %v782 = vpack.c.b16 %v602, %v596
      %v783 = vpack.c.b16 %v603, %v597
      %v784 = vpack.c.b16 %v604, %v598
      %v785 = vpack.c.b16 %v605, %v599
      %v786 = vpack.c.b16 %v606, %v600
      %v787 = vpack.c.b16 %v613, %v607
      %v788 = vpack.c.b16 %v614, %v608
      %v789 = vpack.c.b16 %v615, %v609
      %v790 = vpack.c.b16 %v616, %v610
      %v791 = vpack.c.b16 %v617, %v611
      %v792 = vpack.c.b16 %v618, %v612
      %v793 = vpack.c.b16 %v625, %v619
      %v794 = vpack.c.b16 %v626, %v620
      %v795 = vpack.c.b16 %v627, %v621
      %v796 = vpack.c.b16 %v628, %v622
      %v797 = vpack.c.b16 %v629, %v623
      %v798 = vpack.c.b16 %v630, %v624
      %v799 = vpack.c.b16 %v637, %v631
      %v800 = vpack.c.b16 %v638, %v632
      %v801 = vpack.c.b16 %v639, %v633
      %v802 = vpack.c.b16 %v640, %v634
      %v803 = vpack.c.b16 %v641, %v635
      %v804 = vpack.c.b16 %v642, %v636
      %v805 = vpack.c.b16 %v649, %v643
      %v806 = vpack.c.b16 %v650, %v644
      %v807 = vpack.c.b16 %v651, %v645
      %v808 = vpack.c.b16 %v652, %v646
      %v809 = vpack.c.b16 %v653, %v647
      %v810 = vpack.c.b16 %v654, %v648
      %v811 = vpack.c.b16 %v661, %v655
      %v812 = vpack.c.b16 %v662, %v656
      %v813 = vpack.c.b16 %v663, %v657
      %v814 = vpack.c.b16 %v664, %v658
      %v815 = vpack.c.b16 %v665, %v659
      %v816 = vpack.c.b16 %v666, %v660
      %v817 = vpack.c.b16 %v673, %v667
      %v818 = vpack.c.b16 %v674, %v668
      %v819 = vpack.c.b16 %v675, %v669
      %v820 = vpack.c.b16 %v676, %v670
      %v821 = vpack.c.b16 %v677, %v671
      %v822 = vpack.c.b16 %v678, %v672
      %v823 = vpack.c.b16 %v685, %v679
      %v824 = vpack.c.b16 %v686, %v680
      %v825 = vpack.c.b16 %v687, %v681
      %v826 = vpack.c.b16 %v688, %v682
      %v827 = vpack.c.b16 %v689, %v683
      %v828 = vpack.c.b16 %v690, %v684
      %v829 = vpack.c.b16 %v697, %v691
      %v830 = vpack.c.b16 %v698, %v692
      %v831 = vpack.c.b16 %v699, %v693
      %v832 = vpack.c.b16 %v700, %v694
      %v833 = vpack.c.b16 %v701, %v695
      %v834 = vpack.c.b16 %v702, %v696
      %v835 = vpack.c.b16 %v709, %v703
      %v836 = vpack.c.b16 %v710, %v704
      %v837 = vpack.c.b16 %v711, %v705
      %v838 = vpack.c.b16 %v712, %v706
      %v839 = vpack.c.b16 %v713, %v707
      %v840 = vpack.c.b16 %v714, %v708
      %v841 = vpack.c.b16 %v721, %v715
      %v842 = vpack.c.b16 %v722, %v716
      %v843 = vpack.c.b16 %v723, %v717
      %v844 = vpack.c.b16 %v724, %v718
      %v845 = vpack.c.b16 %v725, %v719
      %v846 = vpack.c.b16 %v726, %v720
      %v847 = vpack.c.b16 %v733, %v727
      %v848 = vpack.c.b16 %v734, %v728
      %v849 = vpack.c.b16 %v735, %v729
      %v850 = vpack.c.b16 %v736, %v730
      %v851 = vpack.c.b16 %v737, %v731
      %v852 = vpack.c.b16 %v738, %v732
      %v853 = vpack.c.b16 %v745, %v739
      %v854 = vpack.c.b16 %v746, %v740
      %v855 = vpack.c.b16 %v747, %v741
      %v856 = vpack.c.b16 %v748, %v742
      %v857 = vpack.c.b16 %v749, %v743
      %v858 = vpack.c.b16 %v750, %v744
      %v859 = vpack.c.b16 %v757, %v751
      %v860 = vpack.c.b16 %v758, %v752
      %v861 = vpack.c.b16 %v759, %v753
      %v862 = vpack.c.b16 %v760, %v754
      %v863 = vpack.c.b16 %v761, %v755
      %v864 = vpack.c.b16 %v762, %v756
      %v865 = vpack.c.b16 %v769, %v763
      %v866 = vpack.c.b16 %v770, %v764
      %v867 = vpack.c.b16 %v771, %v765
      %v868 = vpack.c.b16 %v772, %v766
      %v869 = vpack.c.b16 %v773, %v767
      %v870 = vpack.c.b16 %v774, %v768
      %967 = vmatprep.subr.bf16.mxu0 %v818
      %968 = vmatpush1.bf16.msra.mxu0 %v817
      %969 = vmatprep.subr.bf16.mxu0 %v812
      %970 = vmatpush1.bf16.msra.mxu0 %v811
      %971 = vmatprep.subr.bf16.mxu0 %v806
      %972 = vmatpush1.bf16.msra.mxu0 %v805
      %973 = vmatprep.subr.bf16.mxu0 %v800
      %974 = vmatpush1.bf16.msra.mxu0 %v799
      %975 = vmatprep.subr.bf16.mxu0 %v794
      %976 = vmatpush1.bf16.msra.mxu0 %v793
      %977 = vmatprep.subr.bf16.mxu0 %v788
      %978 = vmatpush1.bf16.msra.mxu0 %v787
      %979 = vmatprep.subr.bf16.mxu0 %v782
      %980 = vmatpush1.bf16.msra.mxu0 %v781
      %981 = vmatprep.subr.bf16.mxu0 %v776
      %982 = vmatpush1.bf16.msra.mxu0 %v775
      %983 = vmatprep.subr.bf16.mxu0 %v866
      %984 = vmatpush2.bf16.msra.mxu0 %v865
      %985 = vmatprep.subr.bf16.mxu0 %v860
      %986 = vmatpush2.bf16.msra.mxu0 %v859
      %987 = vmatprep.subr.bf16.mxu0 %v854
      %988 = vmatpush2.bf16.msra.mxu0 %v853
      %989 = vmatprep.subr.bf16.mxu0 %v848
      %990 = vmatpush2.bf16.msra.mxu0 %v847
      %991 = vmatprep.subr.bf16.mxu0 %v842
      %992 = vmatpush2.bf16.msra.mxu0 %v841
      %993 = vmatprep.subr.bf16.mxu0 %v836
      %994 = vmatpush2.bf16.msra.mxu0 %v835
      %995 = vmatprep.subr.bf16.mxu0 %v830
      %996 = vmatpush2.bf16.msra.mxu0 %v829
      %997 = vmatprep.subr.bf16.mxu0 %v824
      %998 = vmatpush2.bf16.msra.mxu0 %v823
      %999 = vmatprep.mubr.bf16.mxu0 %v358
      %1000 = vmatmul.mubr.bf16.gmra.mxu0 %v357
      %v1001 = vpop.f32.mrf.mxu0
      %v1002 = vadd.f32 %v460, %v1001
      %v1003 = vpop.f32.mrf.mxu0
      %v1004 = vadd.f32 %v464, %v1003
      %v1005 = vpop.f32.mrf.mxu0
      %v1006 = vadd.f32 %v460, %v1005
      %v1007 = vpop.f32.mrf.mxu0
      %v1008 = vadd.f32 %v464, %v1007
      %1009 = vdwg.mxu0
      %1010 = vmatprep.subr.bf16.mxu0 %v820
      %1011 = vmatpush1.bf16.msra.mxu0 %v819
      %1012 = vmatprep.subr.bf16.mxu0 %v814
      %1013 = vmatpush1.bf16.msra.mxu0 %v813
      %1014 = vmatprep.subr.bf16.mxu0 %v808
      %1015 = vmatpush1.bf16.msra.mxu0 %v807
      %1016 = vmatprep.subr.bf16.mxu0 %v802
      %1017 = vmatpush1.bf16.msra.mxu0 %v801
      %1018 = vmatprep.subr.bf16.mxu0 %v796
      %1019 = vmatpush1.bf16.msra.mxu0 %v795
      %1020 = vmatprep.subr.bf16.mxu0 %v790
      %1021 = vmatpush1.bf16.msra.mxu0 %v789
      %1022 = vmatprep.subr.bf16.mxu0 %v784
      %1023 = vmatpush1.bf16.msra.mxu0 %v783
      %1024 = vmatprep.subr.bf16.mxu0 %v778
      %1025 = vmatpush1.bf16.msra.mxu0 %v777
      %1026 = vmatprep.subr.bf16.mxu0 %v868
      %1027 = vmatpush2.bf16.msra.mxu0 %v867
      %1028 = vmatprep.subr.bf16.mxu0 %v862
      %1029 = vmatpush2.bf16.msra.mxu0 %v861
      %1030 = vmatprep.subr.bf16.mxu0 %v856
      %1031 = vmatpush2.bf16.msra.mxu0 %v855
      %1032 = vmatprep.subr.bf16.mxu0 %v850
      %1033 = vmatpush2.bf16.msra.mxu0 %v849
      %1034 = vmatprep.subr.bf16.mxu0 %v844
      %1035 = vmatpush2.bf16.msra.mxu0 %v843
      %1036 = vmatprep.subr.bf16.mxu0 %v838
      %1037 = vmatpush2.bf16.msra.mxu0 %v837
      %1038 = vmatprep.subr.bf16.mxu0 %v832
      %1039 = vmatpush2.bf16.msra.mxu0 %v831
      %1040 = vmatprep.subr.bf16.mxu0 %v826
      %1041 = vmatpush2.bf16.msra.mxu0 %v825
      %1042 = vmatprep.mubr.bf16.mxu0 %v358
      %1043 = vmatmul.mubr.bf16.gmra.mxu0 %v357
      %v1044 = vpop.f32.mrf.mxu0
      %v1045 = vadd.f32 %v468, %v1044
      %v1046 = vpop.f32.mrf.mxu0
      %v1047 = vadd.f32 %v472, %v1046
      %v1048 = vpop.f32.mrf.mxu0
      %v1049 = vadd.f32 %v468, %v1048
      %v1050 = vpop.f32.mrf.mxu0
      %v1051 = vadd.f32 %v472, %v1050
      %1052 = vdwg.mxu0
      %1053 = vmatprep.subr.bf16.mxu0 %v822
      %1054 = vmatpush1.bf16.msra.mxu0 %v821
      %1055 = vmatprep.subr.bf16.mxu0 %v816
      %1056 = vmatpush1.bf16.msra.mxu0 %v815
      %1057 = vmatprep.subr.bf16.mxu0 %v810
      %1058 = vmatpush1.bf16.msra.mxu0 %v809
      %1059 = vmatprep.subr.bf16.mxu0 %v804
      %1060 = vmatpush1.bf16.msra.mxu0 %v803
      %1061 = vmatprep.subr.bf16.mxu0 %v798
      %1062 = vmatpush1.bf16.msra.mxu0 %v797
      %1063 = vmatprep.subr.bf16.mxu0 %v792
      %1064 = vmatpush1.bf16.msra.mxu0 %v791
      %1065 = vmatprep.subr.bf16.mxu0 %v786
      %1066 = vmatpush1.bf16.msra.mxu0 %v785
      %1067 = vmatprep.subr.bf16.mxu0 %v780
      %1068 = vmatpush1.bf16.msra.mxu0 %v779
      %1069 = vmatprep.subr.bf16.mxu0 %v870
      %1070 = vmatpush2.bf16.msra.mxu0 %v869
      %1071 = vmatprep.subr.bf16.mxu0 %v864
      %1072 = vmatpush2.bf16.msra.mxu0 %v863
      %1073 = vmatprep.subr.bf16.mxu0 %v858
      %1074 = vmatpush2.bf16.msra.mxu0 %v857
      %1075 = vmatprep.subr.bf16.mxu0 %v852
      %1076 = vmatpush2.bf16.msra.mxu0 %v851
      %1077 = vmatprep.subr.bf16.mxu0 %v846
      %1078 = vmatpush2.bf16.msra.mxu0 %v845
      %1079 = vmatprep.subr.bf16.mxu0 %v840
      %1080 = vmatpush2.bf16.msra.mxu0 %v839
      %1081 = vmatprep.subr.bf16.mxu0 %v834
      %1082 = vmatpush2.bf16.msra.mxu0 %v833
      %1083 = vmatprep.subr.bf16.mxu0 %v828
      %1084 = vmatpush2.bf16.msra.mxu0 %v827
      %1085 = vmatprep.mubr.bf16.mxu0 %v358
      %1086 = vmatmul.mubr.bf16.gmra.mxu0 %v357
      %v1087 = vpop.f32.mrf.mxu0
      %v1088 = vadd.f32 %v476, %v1087
      %v1089 = vpop.f32.mrf.mxu0
      %v1090 = vadd.f32 %v480, %v1089
      %v1091 = vpop.f32.mrf.mxu0
      %v1092 = vadd.f32 %v476, %v1091
      %v1093 = vpop.f32.mrf.mxu0
      %v1094 = vadd.f32 %v480, %v1093
      %1095 = vdwg.mxu0
      %v1096 = vpack.c.bf16 %v1006, %v1002
      %v1097 = vpack.c.bf16 %v1008, %v1004
      %v1098 = vpack.c.bf16 %v1049, %v1045
      %v1099 = vpack.c.bf16 %v1051, %v1047
      %v1100 = vpack.c.bf16 %v1092, %v1088
      %v1101 = vpack.c.bf16 %v1094, %v1090
      %v1102 = vlaneseq
      %v1103 = vshrl.u32 %v1102, 7
      %v1104 = vlaneseq
      %v1105 = vand.u32 %v1104, 127
      %vm1106 = vcmp.gt.s32.totalorder %v1105, %v1103
      %v1107 = vsel %vm1106, -1e+30, 0.0
      %1108 = vmatprep.subr.bf16.mxu0 0
      %1109 = vmatpush1.bf16.xpose.msra.mxu0 0
      %1110 = vmatprep.subr.bf16.mxu0 0
      %1111 = vmatpush1.bf16.xpose.msra.mxu0 0
      %1112 = vmatprep.subr.bf16.mxu0 0
      %1113 = vmatpush1.bf16.xpose.msra.mxu0 0
      %1114 = vmatprep.subr.bf16.mxu0 0
      %1115 = vmatpush1.bf16.xpose.msra.mxu0 0
      %1116 = vmatprep.subr.bf16.mxu0 0
      %1117 = vmatpush1.bf16.xpose.msra.mxu0 0
      %1118 = vmatprep.subr.bf16.mxu0 0
      %1119 = vmatpush1.bf16.xpose.msra.mxu0 0
      %1120 = vmatprep.subr.bf16.mxu0 0
      %1121 = vmatpush1.bf16.xpose.msra.mxu0 0
      %1122 = vmatprep.subr.bf16.mxu0 0
      %1123 = vmatpush1.bf16.xpose.msra.mxu0 %v1098
      %1124 = vmatprep.subr.bf16.mxu0 0
      %1125 = vmatpush2.bf16.xpose.msra.mxu0 0
      %1126 = vmatprep.subr.bf16.mxu0 0
      %1127 = vmatpush2.bf16.xpose.msra.mxu0 0
      %1128 = vmatprep.subr.bf16.mxu0 0
      %1129 = vmatpush2.bf16.xpose.msra.mxu0 0
      %1130 = vmatprep.subr.bf16.mxu0 0
      %1131 = vmatpush2.bf16.xpose.msra.mxu0 0
      %1132 = vmatprep.subr.bf16.mxu0 0
      %1133 = vmatpush2.bf16.xpose.msra.mxu0 0
      %1134 = vmatprep.subr.bf16.mxu0 0
      %1135 = vmatpush2.bf16.xpose.msra.mxu0 0
      %1136 = vmatprep.subr.bf16.mxu0 0
      %1137 = vmatpush2.bf16.xpose.msra.mxu0 0
      %1138 = vmatprep.subr.bf16.mxu0 0
      %1139 = vmatpush2.bf16.xpose.msra.mxu0 0
      %1140 = vmatprep.mubr.bf16.mxu0 0
      %1141 = vmatmul.mubr.bf16.gmra.mxu0 %v1096
      %v1142 = vpop.f32.mrf.mxu0
      %v1143 = vadd.f32 0.0, %v1142
      %v1144 = vpop.f32.mrf.mxu0
      %v1145 = vpop.f32.mrf.mxu0
      %v1146 = vpop.f32.mrf.mxu0
      %1147 = vdwg.mxu0
      %v1148 = vmul.f32 %v1143, 0.088388346
      %v1149 = vadd.f32 %v1148, %v1107
      %vm1150 = vcmask 64512
      %v1151 = vsel %vm1150, %v1149, -inf
      %1152 = vmax.xlane.f32.xlu0 %v1151
      %v1153 = vpop.xlane.xlu0 %1152
      %v1154 = vsub.f32 %v1149, %v1153
      %v1155 = vmul.f32 %v1154, 1.442695
      %v1156 = vpow.pop %v1155
      %v1157 = vsel %vm1150, %v1156, 0.0
      %1158 = vadd.xlane.f32.xlu0 %v1157
      %v1159 = vpop.xlane.xlu0 %1158
      %v1160 = vrcp.pop %v1159
      %v1161 = vmul.f32 %v1156, %v1160
      %v1162 = vpack.c.bf16 %v1161, %v1161
      %v1164 = vsel %vm1150, %v1162, 0
      %vm1166 = vcmask 1043456
      %v1168 = vsel %vm1166, %v1100, 0
      %1170 = vmatprep.subr.bf16.mxu0 0
      %1171 = vmatpush1.bf16.msra.mxu0 0
      %1172 = vmatprep.subr.bf16.mxu0 0
      %1173 = vmatpush1.bf16.msra.mxu0 0
      %1174 = vmatprep.subr.bf16.mxu0 0
      %1175 = vmatpush1.bf16.msra.mxu0 0
      %1176 = vmatprep.subr.bf16.mxu0 0
      %1177 = vmatpush1.bf16.msra.mxu0 0
      %1178 = vmatprep.subr.bf16.mxu0 0
      %1179 = vmatpush1.bf16.msra.mxu0 0
      %1180 = vmatprep.subr.bf16.mxu0 0
      %1181 = vmatpush1.bf16.msra.mxu0 0
      %1182 = vmatprep.subr.bf16.mxu0 0
      %1183 = vmatpush1.bf16.msra.mxu0 0
      %1184 = vmatprep.subr.bf16.mxu0 0
      %1185 = vmatpush1.bf16.msra.mxu0 %v1168
      %1186 = vmatprep.subr.bf16.mxu0 0
      %1187 = vmatpush2.bf16.msra.mxu0 0
      %1188 = vmatprep.subr.bf16.mxu0 0
      %1189 = vmatpush2.bf16.msra.mxu0 0
      %1190 = vmatprep.subr.bf16.mxu0 0
      %1191 = vmatpush2.bf16.msra.mxu0 0
      %1192 = vmatprep.subr.bf16.mxu0 0
      %1193 = vmatpush2.bf16.msra.mxu0 0
      %1194 = vmatprep.subr.bf16.mxu0 0
      %1195 = vmatpush2.bf16.msra.mxu0 0
      %1196 = vmatprep.subr.bf16.mxu0 0
      %1197 = vmatpush2.bf16.msra.mxu0 0
      %1198 = vmatprep.subr.bf16.mxu0 0
      %1199 = vmatpush2.bf16.msra.mxu0 0
      %1200 = vmatprep.subr.bf16.mxu0 0
      %1201 = vmatpush2.bf16.msra.mxu0 0
      %1202 = vmatprep.mubr.bf16.mxu0 0
      %1203 = vmatmul.mubr.bf16.gmra.mxu0 %v1164
      %v1204 = vpop.f32.mrf.mxu0
      %v1205 = vadd.f32 0.0, %v1204
      %v1206 = vpop.f32.mrf.mxu0
      %v1207 = vpop.f32.mrf.mxu0
      %v1208 = vpop.f32.mrf.mxu0
      %1209 = vdwg.mxu0
      %1210 = vst [vmem:[#allocation2] sm:$0xff] %v1205
      %1211 = vmatprep.subr.bf16.mxu0 0
      %1212 = vmatpush1.bf16.xpose.msra.mxu0 0
      %1213 = vmatprep.subr.bf16.mxu0 0
      %1214 = vmatpush1.bf16.xpose.msra.mxu0 0
      %1215 = vmatprep.subr.bf16.mxu0 0
      %1216 = vmatpush1.bf16.xpose.msra.mxu0 0
      %1217 = vmatprep.subr.bf16.mxu0 0
      %1218 = vmatpush1.bf16.xpose.msra.mxu0 0
      %1219 = vmatprep.subr.bf16.mxu0 0
      %1220 = vmatpush1.bf16.xpose.msra.mxu0 0
      %1221 = vmatprep.subr.bf16.mxu0 0
      %1222 = vmatpush1.bf16.xpose.msra.mxu0 0
      %1223 = vmatprep.subr.bf16.mxu0 0
      %1224 = vmatpush1.bf16.xpose.msra.mxu0 0
      %1225 = vmatprep.subr.bf16.mxu0 0
      %1226 = vmatpush1.bf16.xpose.msra.mxu0 %v1099
      %1227 = vmatprep.subr.bf16.mxu0 0
      %1228 = vmatpush2.bf16.xpose.msra.mxu0 0
      %1229 = vmatprep.subr.bf16.mxu0 0
      %1230 = vmatpush2.bf16.xpose.msra.mxu0 0
      %1231 = vmatprep.subr.bf16.mxu0 0
      %1232 = vmatpush2.bf16.xpose.msra.mxu0 0
      %1233 = vmatprep.subr.bf16.mxu0 0
      %1234 = vmatpush2.bf16.xpose.msra.mxu0 0
      %1235 = vmatprep.subr.bf16.mxu0 0
      %1236 = vmatpush2.bf16.xpose.msra.mxu0 0
      %1237 = vmatprep.subr.bf16.mxu0 0
      %1238 = vmatpush2.bf16.xpose.msra.mxu0 0
      %1239 = vmatprep.subr.bf16.mxu0 0
      %1240 = vmatpush2.bf16.xpose.msra.mxu0 0
      %1241 = vmatprep.subr.bf16.mxu0 0
      %1242 = vmatpush2.bf16.xpose.msra.mxu0 0
      %1243 = vmatprep.mubr.bf16.mxu0 0
      %1244 = vmatmul.mubr.bf16.gmra.mxu0 %v1097
      %v1245 = vpop.f32.mrf.mxu0
      %v1246 = vadd.f32 0.0, %v1245
      %v1247 = vpop.f32.mrf.mxu0
      %v1248 = vpop.f32.mrf.mxu0
      %v1249 = vpop.f32.mrf.mxu0
      %1250 = vdwg.mxu0
      %v1251 = vmul.f32 %v1246, 0.088388346
      %v1252 = vadd.f32 %v1251, %v1107
      %v1253 = vsel %vm1150, %v1252, -inf
      %1254 = vmax.xlane.f32.xlu0 %v1253
      %v1255 = vpop.xlane.xlu0 %1254
      %v1256 = vsub.f32 %v1252, %v1255
      %v1257 = vmul.f32 %v1256, 1.442695
      %v1258 = vpow.pop %v1257
      %v1259 = vsel %vm1150, %v1258, 0.0
      %1260 = vadd.xlane.f32.xlu0 %v1259
      %v1261 = vpop.xlane.xlu0 %1260
      %v1262 = vrcp.pop %v1261
      %v1263 = vmul.f32 %v1258, %v1262
      %v1264 = vpack.c.bf16 %v1263, %v1263
      %v1266 = vsel %vm1150, %v1264, 0
      %v1269 = vsel %vm1166, %v1101, 0
      %1271 = vmatprep.subr.bf16.mxu0 0
      %1272 = vmatpush1.bf16.msra.mxu0 0
      %1273 = vmatprep.subr.bf16.mxu0 0
      %1274 = vmatpush1.bf16.msra.mxu0 0
      %1275 = vmatprep.subr.bf16.mxu0 0
      %1276 = vmatpush1.bf16.msra.mxu0 0
      %1277 = vmatprep.subr.bf16.mxu0 0
      %1278 = vmatpush1.bf16.msra.mxu0 0
      %1279 = vmatprep.subr.bf16.mxu0 0
      %1280 = vmatpush1.bf16.msra.mxu0 0
      %1281 = vmatprep.subr.bf16.mxu0 0
      %1282 = vmatpush1.bf16.msra.mxu0 0
      %1283 = vmatprep.subr.bf16.mxu0 0
      %1284 = vmatpush1.bf16.msra.mxu0 0
      %1285 = vmatprep.subr.bf16.mxu0 0
      %1286 = vmatpush1.bf16.msra.mxu0 %v1269
      %1287 = vmatprep.subr.bf16.mxu0 0
      %1288 = vmatpush2.bf16.msra.mxu0 0
      %1289 = vmatprep.subr.bf16.mxu0 0
      %1290 = vmatpush2.bf16.msra.mxu0 0
      %1291 = vmatprep.subr.bf16.mxu0 0
      %1292 = vmatpush2.bf16.msra.mxu0 0
      %1293 = vmatprep.subr.bf16.mxu0 0
      %1294 = vmatpush2.bf16.msra.mxu0 0
      %1295 = vmatprep.subr.bf16.mxu0 0
      %1296 = vmatpush2.bf16.msra.mxu0 0
      %1297 = vmatprep.subr.bf16.mxu0 0
      %1298 = vmatpush2.bf16.msra.mxu0 0
      %1299 = vmatprep.subr.bf16.mxu0 0
      %1300 = vmatpush2.bf16.msra.mxu0 0
      %1301 = vmatprep.subr.bf16.mxu0 0
      %1302 = vmatpush2.bf16.msra.mxu0 0
      %1303 = vmatprep.mubr.bf16.mxu0 0
      %1304 = vmatmul.mubr.bf16.gmra.mxu0 %v1266
      %v1305 = vpop.f32.mrf.mxu0
      %v1306 = vadd.f32 0.0, %v1305
      %v1307 = vpop.f32.mrf.mxu0
      %v1308 = vpop.f32.mrf.mxu0
      %v1309 = vpop.f32.mrf.mxu0
      %1310 = vdwg.mxu0
      %1311 = vst [vmem:[#allocation2 + $0x8] sm:$0xff] %v1306
      %v1313 = vrot.slane %v1096, 4
      %v1316 = vrot.slane %v1098, 4
      %1318 = vmatprep.subr.bf16.mxu0 0
      %1319 = vmatpush1.bf16.xpose.msra.mxu0 0
      %1320 = vmatprep.subr.bf16.mxu0 0
      %1321 = vmatpush1.bf16.xpose.msra.mxu0 0
      %1322 = vmatprep.subr.bf16.mxu0 0
      %1323 = vmatpush1.bf16.xpose.msra.mxu0 0
      %1324 = vmatprep.subr.bf16.mxu0 0
      %1325 = vmatpush1.bf16.xpose.msra.mxu0 0
      %1326 = vmatprep.subr.bf16.mxu0 0
      %1327 = vmatpush1.bf16.xpose.msra.mxu0 0
      %1328 = vmatprep.subr.bf16.mxu0 0
      %1329 = vmatpush1.bf16.xpose.msra.mxu0 0
      %1330 = vmatprep.subr.bf16.mxu0 0
      %1331 = vmatpush1.bf16.xpose.msra.mxu0 0
      %1332 = vmatprep.subr.bf16.mxu0 0
      %1333 = vmatpush1.bf16.xpose.msra.mxu0 %v1316
      %1334 = vmatprep.subr.bf16.mxu0 0
      %1335 = vmatpush2.bf16.xpose.msra.mxu0 0
      %1336 = vmatprep.subr.bf16.mxu0 0
      %1337 = vmatpush2.bf16.xpose.msra.mxu0 0
      %1338 = vmatprep.subr.bf16.mxu0 0
      %1339 = vmatpush2.bf16.xpose.msra.mxu0 0
      %1340 = vmatprep.subr.bf16.mxu0 0
      %1341 = vmatpush2.bf16.xpose.msra.mxu0 0
      %1342 = vmatprep.subr.bf16.mxu0 0
      %1343 = vmatpush2.bf16.xpose.msra.mxu0 0
      %1344 = vmatprep.subr.bf16.mxu0 0
      %1345 = vmatpush2.bf16.xpose.msra.mxu0 0
      %1346 = vmatprep.subr.bf16.mxu0 0
      %1347 = vmatpush2.bf16.xpose.msra.mxu0 0
      %1348 = vmatprep.subr.bf16.mxu0 0
      %1349 = vmatpush2.bf16.xpose.msra.mxu0 0
      %1350 = vmatprep.mubr.bf16.mxu0 0
      %1351 = vmatmul.mubr.bf16.gmra.mxu0 %v1313
      %v1352 = vpop.f32.mrf.mxu0
      %v1353 = vadd.f32 0.0, %v1352
      %v1354 = vpop.f32.mrf.mxu0
      %v1355 = vpop.f32.mrf.mxu0
      %v1356 = vpop.f32.mrf.mxu0
      %1357 = vdwg.mxu0
      %v1358 = vmul.f32 %v1353, 0.088388346
      %v1359 = vadd.f32 %v1358, %v1107
      %v1360 = vsel %vm1150, %v1359, -inf
      %1361 = vmax.xlane.f32.xlu0 %v1360
      %v1362 = vpop.xlane.xlu0 %1361
      %v1363 = vsub.f32 %v1359, %v1362
      %v1364 = vmul.f32 %v1363, 1.442695
      %v1365 = vpow.pop %v1364
      %v1366 = vsel %vm1150, %v1365, 0.0
      %1367 = vadd.xlane.f32.xlu0 %v1366
      %v1368 = vpop.xlane.xlu0 %1367
      %v1369 = vrcp.pop %v1368
      %v1370 = vmul.f32 %v1365, %v1369
      %v1371 = vpack.c.bf16 %v1370, %v1370
      %v1373 = vrot.slane %v1100, 4
      %v1375 = vsel %vm1150, %v1371, 0
      %v1378 = vsel %vm1166, %v1373, 0
      %1380 = vmatprep.subr.bf16.mxu0 0
      %1381 = vmatpush1.bf16.msra.mxu0 0
      %1382 = vmatprep.subr.bf16.mxu0 0
      %1383 = vmatpush1.bf16.msra.mxu0 0
      %1384 = vmatprep.subr.bf16.mxu0 0
      %1385 = vmatpush1.bf16.msra.mxu0 0
      %1386 = vmatprep.subr.bf16.mxu0 0
      %1387 = vmatpush1.bf16.msra.mxu0 0
      %1388 = vmatprep.subr.bf16.mxu0 0
      %1389 = vmatpush1.bf16.msra.mxu0 0
      %1390 = vmatprep.subr.bf16.mxu0 0
      %1391 = vmatpush1.bf16.msra.mxu0 0
      %1392 = vmatprep.subr.bf16.mxu0 0
      %1393 = vmatpush1.bf16.msra.mxu0 0
      %1394 = vmatprep.subr.bf16.mxu0 0
      %1395 = vmatpush1.bf16.msra.mxu0 %v1378
      %1396 = vmatprep.subr.bf16.mxu0 0
      %1397 = vmatpush2.bf16.msra.mxu0 0
      %1398 = vmatprep.subr.bf16.mxu0 0
      %1399 = vmatpush2.bf16.msra.mxu0 0
      %1400 = vmatprep.subr.bf16.mxu0 0
      %1401 = vmatpush2.bf16.msra.mxu0 0
      %1402 = vmatprep.subr.bf16.mxu0 0
      %1403 = vmatpush2.bf16.msra.mxu0 0
      %1404 = vmatprep.subr.bf16.mxu0 0
      %1405 = vmatpush2.bf16.msra.mxu0 0
      %1406 = vmatprep.subr.bf16.mxu0 0
      %1407 = vmatpush2.bf16.msra.mxu0 0
      %1408 = vmatprep.subr.bf16.mxu0 0
      %1409 = vmatpush2.bf16.msra.mxu0 0
      %1410 = vmatprep.subr.bf16.mxu0 0
      %1411 = vmatpush2.bf16.msra.mxu0 0
      %1412 = vmatprep.mubr.bf16.mxu0 0
      %1413 = vmatmul.mubr.bf16.gmra.mxu0 %v1375
      %v1414 = vpop.f32.mrf.mxu0
      %v1415 = vadd.f32 0.0, %v1414
      %v1416 = vpop.f32.mrf.mxu0
      %v1417 = vpop.f32.mrf.mxu0
      %v1418 = vpop.f32.mrf.mxu0
      %1419 = vdwg.mxu0
      %1420 = vst [vmem:[#allocation2 + $0x10] sm:$0xff] %v1415
      %v1422 = vrot.slane %v1097, 4
      %v1425 = vrot.slane %v1099, 4
      %1427 = vmatprep.subr.bf16.mxu0 0
      %1428 = vmatpush1.bf16.xpose.msra.mxu0 0
      %1429 = vmatprep.subr.bf16.mxu0 0
      %1430 = vmatpush1.bf16.xpose.msra.mxu0 0
      %1431 = vmatprep.subr.bf16.mxu0 0
      %1432 = vmatpush1.bf16.xpose.msra.mxu0 0
      %1433 = vmatprep.subr.bf16.mxu0 0
      %1434 = vmatpush1.bf16.xpose.msra.mxu0 0
      %1435 = vmatprep.subr.bf16.mxu0 0
      %1436 = vmatpush1.bf16.xpose.msra.mxu0 0
      %1437 = vmatprep.subr.bf16.mxu0 0
      %1438 = vmatpush1.bf16.xpose.msra.mxu0 0
      %1439 = vmatprep.subr.bf16.mxu0 0
      %1440 = vmatpush1.bf16.xpose.msra.mxu0 0
      %1441 = vmatprep.subr.bf16.mxu0 0
      %1442 = vmatpush1.bf16.xpose.msra.mxu0 %v1425
      %1443 = vmatprep.subr.bf16.mxu0 0
      %1444 = vmatpush2.bf16.xpose.msra.mxu0 0
      %1445 = vmatprep.subr.bf16.mxu0 0
      %1446 = vmatpush2.bf16.xpose.msra.mxu0 0
      %1447 = vmatprep.subr.bf16.mxu0 0
      %1448 = vmatpush2.bf16.xpose.msra.mxu0 0
      %1449 = vmatprep.subr.bf16.mxu0 0
      %1450 = vmatpush2.bf16.xpose.msra.mxu0 0
      %1451 = vmatprep.subr.bf16.mxu0 0
      %1452 = vmatpush2.bf16.xpose.msra.mxu0 0
      %1453 = vmatprep.subr.bf16.mxu0 0
      %1454 = vmatpush2.bf16.xpose.msra.mxu0 0
      %1455 = vmatprep.subr.bf16.mxu0 0
      %1456 = vmatpush2.bf16.xpose.msra.mxu0 0
      %1457 = vmatprep.subr.bf16.mxu0 0
      %1458 = vmatpush2.bf16.xpose.msra.mxu0 0
      %1459 = vmatprep.mubr.bf16.mxu0 0
      %1460 = vmatmul.mubr.bf16.gmra.mxu0 %v1422
      %v1461 = vpop.f32.mrf.mxu0
      %v1462 = vadd.f32 0.0, %v1461
      %v1463 = vpop.f32.mrf.mxu0
      %v1464 = vpop.f32.mrf.mxu0
      %v1465 = vpop.f32.mrf.mxu0
      %1466 = vdwg.mxu0
      %v1467 = vmul.f32 %v1462, 0.088388346
      %v1468 = vadd.f32 %v1467, %v1107
      %v1469 = vsel %vm1150, %v1468, -inf
      %1470 = vmax.xlane.f32.xlu0 %v1469
      %v1471 = vpop.xlane.xlu0 %1470
      %v1472 = vsub.f32 %v1468, %v1471
      %v1473 = vmul.f32 %v1472, 1.442695
      %v1474 = vpow.pop %v1473
      %v1475 = vsel %vm1150, %v1474, 0.0
      %1476 = vadd.xlane.f32.xlu0 %v1475
      %v1477 = vpop.xlane.xlu0 %1476
      %v1478 = vrcp.pop %v1477
      %v1479 = vmul.f32 %v1474, %v1478
      %v1480 = vpack.c.bf16 %v1479, %v1479
      %v1482 = vrot.slane %v1101, 4
      %v1484 = vsel %vm1150, %v1480, 0
      %v1487 = vsel %vm1166, %v1482, 0
      %1489 = vmatprep.subr.bf16.mxu0 0
      %1490 = vmatpush1.bf16.msra.mxu0 0
      %1491 = vmatprep.subr.bf16.mxu0 0
      %1492 = vmatpush1.bf16.msra.mxu0 0
      %1493 = vmatprep.subr.bf16.mxu0 0
      %1494 = vmatpush1.bf16.msra.mxu0 0
      %1495 = vmatprep.subr.bf16.mxu0 0
      %1496 = vmatpush1.bf16.msra.mxu0 0
      %1497 = vmatprep.subr.bf16.mxu0 0
      %1498 = vmatpush1.bf16.msra.mxu0 0
      %1499 = vmatprep.subr.bf16.mxu0 0
      %1500 = vmatpush1.bf16.msra.mxu0 0
      %1501 = vmatprep.subr.bf16.mxu0 0
      %1502 = vmatpush1.bf16.msra.mxu0 0
      %1503 = vmatprep.subr.bf16.mxu0 0
      %1504 = vmatpush1.bf16.msra.mxu0 %v1487
      %1505 = vmatprep.subr.bf16.mxu0 0
      %1506 = vmatpush2.bf16.msra.mxu0 0
      %1507 = vmatprep.subr.bf16.mxu0 0
      %1508 = vmatpush2.bf16.msra.mxu0 0
      %1509 = vmatprep.subr.bf16.mxu0 0
      %1510 = vmatpush2.bf16.msra.mxu0 0
      %1511 = vmatprep.subr.bf16.mxu0 0
      %1512 = vmatpush2.bf16.msra.mxu0 0
      %1513 = vmatprep.subr.bf16.mxu0 0
      %1514 = vmatpush2.bf16.msra.mxu0 0
      %1515 = vmatprep.subr.bf16.mxu0 0
      %1516 = vmatpush2.bf16.msra.mxu0 0
      %1517 = vmatprep.subr.bf16.mxu0 0
      %1518 = vmatpush2.bf16.msra.mxu0 0
      %1519 = vmatprep.subr.bf16.mxu0 0
      %1520 = vmatpush2.bf16.msra.mxu0 0
      %1521 = vmatprep.mubr.bf16.mxu0 0
      %1522 = vmatmul.mubr.bf16.gmra.mxu0 %v1484
      %v1523 = vpop.f32.mrf.mxu0
      %v1524 = vadd.f32 0.0, %v1523
      %v1525 = vpop.f32.mrf.mxu0
      %v1526 = vpop.f32.mrf.mxu0
      %v1527 = vpop.f32.mrf.mxu0
      %1528 = vdwg.mxu0
      %1529 = vst [vmem:[#allocation2 + $0x18] sm:$0xff] %v1524
      %v1530 = vld [vmem:[#allocation2] sm:$0xff]
      %v1531 = vld [vmem:[#allocation2 + $0x8] sm:$0xff]
      %v1532 = vld [vmem:[#allocation2 + $0x10] sm:$0xff]
      %v1533 = vld [vmem:[#allocation2 + $0x18] sm:$0xff]
      %v1534 = vpack.c.bf16 %v1532, %v1530
      %v1535 = vpack.c.bf16 %v1533, %v1531
      %v1536 = vld [vmem:[%s5] sm:$0xff]
      %v1537 = vld [vmem:[%s5 + $0x8] sm:$0xff]
      %v1538 = vld [vmem:[%s5 + $0x10] sm:$0xff]
      %v1539 = vld [vmem:[%s5 + $0x18] sm:$0xff]
      %v1540 = vld [vmem:[%s5 + $0x20] sm:$0xff]
      %v1541 = vld [vmem:[%s5 + $0x28] sm:$0xff]
      %v1542 = vld [vmem:[%s5 + $0x30] sm:$0xff]
      %v1543 = vld [vmem:[%s5 + $0x38] sm:$0xff]
      %v1544 = vld [vmem:[%s5 + $0x40] sm:$0xff]
      %v1545 = vld [vmem:[%s5 + $0x48] sm:$0xff]
      %v1546 = vld [vmem:[%s5 + $0x50] sm:$0xff]
      %v1547 = vld [vmem:[%s5 + $0x58] sm:$0xff]
      %v1548 = vld [vmem:[%s5 + $0x60] sm:$0xff]
      %v1549 = vld [vmem:[%s5 + $0x68] sm:$0xff]
      %v1550 = vld [vmem:[%s5 + $0x70] sm:$0xff]
      %v1551 = vld [vmem:[%s5 + $0x78] sm:$0xff]
      %v1552 = vld [vmem:[%s5 + $0x80] sm:$0xff]
      %v1553 = vld [vmem:[%s5 + $0x88] sm:$0xff]
      %v1554 = vld [vmem:[%s5 + $0x90] sm:$0xff]
      %v1555 = vld [vmem:[%s5 + $0x98] sm:$0xff]
      %v1556 = vld [vmem:[%s5 + $0xa0] sm:$0xff]
      %v1557 = vld [vmem:[%s5 + $0xa8] sm:$0xff]
      %v1558 = vld [vmem:[%s5 + $0xb0] sm:$0xff]
      %v1559 = vld [vmem:[%s5 + $0xb8] sm:$0xff]
      %v1560 = vld [vmem:[%s5 + $0xc0] sm:$0xff]
      %v1561 = vld [vmem:[%s5 + $0xc8] sm:$0xff]
      %v1562 = vld [vmem:[%s5 + $0xd0] sm:$0xff]
      %v1563 = vld [vmem:[%s5 + $0xd8] sm:$0xff]
      %v1564 = vld [vmem:[%s5 + $0xe0] sm:$0xff]
      %v1565 = vld [vmem:[%s5 + $0xe8] sm:$0xff]
      %v1566 = vld [vmem:[%s5 + $0xf0] sm:$0xff]
      %v1567 = vld [vmem:[%s5 + $0xf8] sm:$0xff]
      %v1568 = vld [vmem:[%s6] sm:$0x3]
      %v1570 = vlaneseq
      %v1571 = vshrl.u32 %v1570, 7
      %v1572 = vsub.s32 0, %v1571
      %v1573 = vrot.slane %v1568, %v1572
      %v1574 = vlaneseq
      %v1575 = vshrl.u32 %v1574, 7
      %v1576 = vsub.s32 1, %v1575
      %v1577 = vrot.slane %v1568, %v1576
      %v1612 = vunpack.c.l.b16 %v1536
      %v1613 = vunpack.c.h.b16 %v1536
      %v1614 = vunpack.c.l.b16 %v1537
      %v1615 = vunpack.c.h.b16 %v1537
      %v1616 = vunpack.c.l.b16 %v1538
      %v1617 = vunpack.c.h.b16 %v1538
      %v1618 = vunpack.c.l.b16 %v1539
      %v1619 = vunpack.c.h.b16 %v1539
      %v1620 = vunpack.c.l.b16 %v1540
      %v1621 = vunpack.c.h.b16 %v1540
      %v1622 = vunpack.c.l.b16 %v1541
      %v1623 = vunpack.c.h.b16 %v1541
      %v1624 = vunpack.c.l.b16 %v1542
      %v1625 = vunpack.c.h.b16 %v1542
      %v1626 = vunpack.c.l.b16 %v1543
      %v1627 = vunpack.c.h.b16 %v1543
      %v1628 = vunpack.c.l.b16 %v1544
      %v1629 = vunpack.c.h.b16 %v1544
      %v1630 = vunpack.c.l.b16 %v1545
      %v1631 = vunpack.c.h.b16 %v1545
      %v1632 = vunpack.c.l.b16 %v1546
      %v1633 = vunpack.c.h.b16 %v1546
      %v1634 = vunpack.c.l.b16 %v1547
      %v1635 = vunpack.c.h.b16 %v1547
      %v1636 = vunpack.c.l.b16 %v1548
      %v1637 = vunpack.c.h.b16 %v1548
      %v1638 = vunpack.c.l.b16 %v1549
      %v1639 = vunpack.c.h.b16 %v1549
      %v1640 = vunpack.c.l.b16 %v1550
      %v1641 = vunpack.c.h.b16 %v1550
      %v1642 = vunpack.c.l.b16 %v1551
      %v1643 = vunpack.c.h.b16 %v1551
      %v1644 = vunpack.c.l.b16 %v1552
      %v1645 = vunpack.c.h.b16 %v1552
      %v1646 = vunpack.c.l.b16 %v1553
      %v1647 = vunpack.c.h.b16 %v1553
      %v1648 = vunpack.c.l.b16 %v1554
      %v1649 = vunpack.c.h.b16 %v1554
      %v1650 = vunpack.c.l.b16 %v1555
      %v1651 = vunpack.c.h.b16 %v1555
      %v1652 = vunpack.c.l.b16 %v1556
      %v1653 = vunpack.c.h.b16 %v1556
      %v1654 = vunpack.c.l.b16 %v1557
      %v1655 = vunpack.c.h.b16 %v1557
      %v1656 = vunpack.c.l.b16 %v1558
      %v1657 = vunpack.c.h.b16 %v1558
      %v1658 = vunpack.c.l.b16 %v1559
      %v1659 = vunpack.c.h.b16 %v1559
      %v1660 = vunpack.c.l.b16 %v1560
      %v1661 = vunpack.c.h.b16 %v1560
      %v1662 = vunpack.c.l.b16 %v1561
      %v1663 = vunpack.c.h.b16 %v1561
      %v1664 = vunpack.c.l.b16 %v1562
      %v1665 = vunpack.c.h.b16 %v1562
      %v1666 = vunpack.c.l.b16 %v1563
      %v1667 = vunpack.c.h.b16 %v1563
      %v1668 = vunpack.c.l.b16 %v1564
      %v1669 = vunpack.c.h.b16 %v1564
      %v1670 = vunpack.c.l.b16 %v1565
      %v1671 = vunpack.c.h.b16 %v1565
      %v1672 = vunpack.c.l.b16 %v1566
      %v1673 = vunpack.c.h.b16 %v1566
      %v1674 = vunpack.c.l.b16 %v1567
      %v1675 = vunpack.c.h.b16 %v1567
      %v1676 = vpack.c.b16 %v1614, %v1612
      %v1677 = vpack.c.b16 %v1615, %v1613
      %v1678 = vpack.c.b16 %v1618, %v1616
      %v1679 = vpack.c.b16 %v1619, %v1617
      %v1680 = vpack.c.b16 %v1622, %v1620
      %v1681 = vpack.c.b16 %v1623, %v1621
      %v1682 = vpack.c.b16 %v1626, %v1624
      %v1683 = vpack.c.b16 %v1627, %v1625
      %v1684 = vpack.c.b16 %v1630, %v1628
      %v1685 = vpack.c.b16 %v1631, %v1629
      %v1686 = vpack.c.b16 %v1634, %v1632
      %v1687 = vpack.c.b16 %v1635, %v1633
      %v1688 = vpack.c.b16 %v1638, %v1636
      %v1689 = vpack.c.b16 %v1639, %v1637
      %v1690 = vpack.c.b16 %v1642, %v1640
      %v1691 = vpack.c.b16 %v1643, %v1641
      %v1692 = vpack.c.b16 %v1646, %v1644
      %v1693 = vpack.c.b16 %v1647, %v1645
      %v1694 = vpack.c.b16 %v1650, %v1648
      %v1695 = vpack.c.b16 %v1651, %v1649
      %v1696 = vpack.c.b16 %v1654, %v1652
      %v1697 = vpack.c.b16 %v1655, %v1653
      %v1698 = vpack.c.b16 %v1658, %v1656
      %v1699 = vpack.c.b16 %v1659, %v1657
      %v1700 = vpack.c.b16 %v1662, %v1660
      %v1701 = vpack.c.b16 %v1663, %v1661
      %v1702 = vpack.c.b16 %v1666, %v1664
      %v1703 = vpack.c.b16 %v1667, %v1665
      %v1704 = vpack.c.b16 %v1670, %v1668
      %v1705 = vpack.c.b16 %v1671, %v1669
      %v1706 = vpack.c.b16 %v1674, %v1672
      %v1707 = vpack.c.b16 %v1675, %v1673
      %1740 = vmatprep.subr.bf16.mxu0 %v1691
      %1741 = vmatpush1.bf16.msra.mxu0 %v1690
      %1742 = vmatprep.subr.bf16.mxu0 %v1689
      %1743 = vmatpush1.bf16.msra.mxu0 %v1688
      %1744 = vmatprep.subr.bf16.mxu0 %v1687
      %1745 = vmatpush1.bf16.msra.mxu0 %v1686
      %1746 = vmatprep.subr.bf16.mxu0 %v1685
      %1747 = vmatpush1.bf16.msra.mxu0 %v1684
      %1748 = vmatprep.subr.bf16.mxu0 %v1683
      %1749 = vmatpush1.bf16.msra.mxu0 %v1682
      %1750 = vmatprep.subr.bf16.mxu0 %v1681
      %1751 = vmatpush1.bf16.msra.mxu0 %v1680
      %1752 = vmatprep.subr.bf16.mxu0 %v1679
      %1753 = vmatpush1.bf16.msra.mxu0 %v1678
      %1754 = vmatprep.subr.bf16.mxu0 %v1677
      %1755 = vmatpush1.bf16.msra.mxu0 %v1676
      %1756 = vmatprep.subr.bf16.mxu0 %v1707
      %1757 = vmatpush2.bf16.msra.mxu0 %v1706
      %1758 = vmatprep.subr.bf16.mxu0 %v1705
      %1759 = vmatpush2.bf16.msra.mxu0 %v1704
      %1760 = vmatprep.subr.bf16.mxu0 %v1703
      %1761 = vmatpush2.bf16.msra.mxu0 %v1702
      %1762 = vmatprep.subr.bf16.mxu0 %v1701
      %1763 = vmatpush2.bf16.msra.mxu0 %v1700
      %1764 = vmatprep.subr.bf16.mxu0 %v1699
      %1765 = vmatpush2.bf16.msra.mxu0 %v1698
      %1766 = vmatprep.subr.bf16.mxu0 %v1697
      %1767 = vmatpush2.bf16.msra.mxu0 %v1696
      %1768 = vmatprep.subr.bf16.mxu0 %v1695
      %1769 = vmatpush2.bf16.msra.mxu0 %v1694
      %1770 = vmatprep.subr.bf16.mxu0 %v1693
      %1771 = vmatpush2.bf16.msra.mxu0 %v1692
      %1772 = vmatprep.mubr.bf16.mxu0 %v1535
      %1773 = vmatmul.mubr.bf16.gmra.mxu0 %v1534
      %v1774 = vpop.f32.mrf.mxu0
      %v1775 = vadd.f32 %v1573, %v1774
      %v1776 = vpop.f32.mrf.mxu0
      %v1777 = vadd.f32 %v1577, %v1776
      %v1778 = vpop.f32.mrf.mxu0
      %v1779 = vadd.f32 %v1573, %v1778
      %v1780 = vpop.f32.mrf.mxu0
      %v1781 = vadd.f32 %v1577, %v1780
      %1782 = vdwg.mxu0
      %v1783 = vadd.f32 %v288, %v1775
      %v1784 = vadd.f32 %v289, %v1777
      %v1785 = vadd.f32 %v290, %v1779
      %v1786 = vadd.f32 %v291, %v1781
      %1787 = vst [vmem:[%s285] sm:$0xff] %v1783
      %1788 = vst [vmem:[%s285 + $0x8] sm:$0xff] %v1784
      %1789 = vst [vmem:[%s285 + $0x10] sm:$0xff] %v1785
      %1790 = vst [vmem:[%s285 + $0x18] sm:$0xff] %v1786
      %s1791 = smul.u32 2, %s18
      %p1792 = scmp.lt.s32.totalorder %s1791, 3
      %s1793 = scalar_select %p1792, %s1791, 3
      %s1794 = smul.addr %s1793, 2
      %s1795 = smul.addr %s1794, 8
      %s1796 = scalar_lea.vmem %s7, %s1795
      // Predicated region
      $region49: #{_lambda_.12} parent=47 // pred_check
        %p1797 = pneg %p188
      $region50: #{_lambda_.12} parent=47 // pred_check_branch
        %1799 = sbr.rel (%p1797) target = $region52
      $region51: #{_lambda_.12} parent=47 // pred_region
        %s1800 = smul.u32 2, %s18
      $region52: #{_lambda_.12} parent=47 // pred_fallthru
        _
    $region48: #{_lambda_.12} parent=5 // pred_fallthru
      _
    %p1801 = scmp.le.s32.totalorder 2, %s13
    // Predicated region
    $region53: #{_lambda_.12} parent=5 // pred_check
      %p1802 = pneg %p1801
    $region54: #{_lambda_.12} parent=5 // pred_check_branch
      %1804 = sbr.rel (%p1802) target = $region56
    $region55: #{_lambda_.12} parent=5 // pred_region
      %s1805 = ssub.s32 %s13, 2
      // Predicated region
      $region57: #{_lambda_.12} parent=55 // pred_check
        %p1806 = pneg %p194
      $region58: #{_lambda_.12} parent=55 // pred_check_branch
        %1808 = sbr.rel (%p1806) target = $region60
      $region59: #{_lambda_.12} parent=55 // pred_region
        %s1809 = smul.u32 2, %s19
        %p1810 = scmp.lt.s32.totalorder %s1809, 3
        %s1811 = scalar_select %p1810, %s1809, 3
        %s1812 = smul.addr %s1811, 2
        %s1813 = smul.addr %s1812, 8
        %s1814 = scalar_lea.vmem %s7, %s1813
      $region60: #{_lambda_.12} parent=55 // pred_fallthru
        _
    $region56: #{_lambda_.12} parent=5 // pred_fallthru
      _
  $region6: #{_lambda_.12} parent=0 // loop_footer
    %s17 = sadd.s32 1, %s13
  $region7: #{_lambda_.12} parent=0 // loop_footer_branch
    %12 = sbr.rel target = $region3
  $region8: #{_lambda_.12} parent=0 // loop_exit
    _

// kernel: _lambda_.15
$region0: #{_lambda_.15}
  #allocation0 [shape = 'u32[]', space=smem, size = 0x4, offset = 0x4, fixed_abs, tag = 'smem constant byte address 0x4 - core index']
  #allocation1 [shape = 'u32[144,128]{1,0:T(1,128)}', space=vmem, size = 0x12000, scoped, tag = 'internal scratch']
  %s0 = inlined_call_operand.vmem [shape: f32[32,256], index: 0, kind: input, shape index: {}]
  %s1 = inlined_call_operand.vmem [shape: bf16[128,256], index: 1, kind: input, shape index: {}]
  %s2 = inlined_call_operand.vmem [shape: f32[1,128], index: 2, kind: input, shape index: {}]
  %s3 = inlined_call_operand.vmem [shape: f32[32,128], index: 3, kind: output, shape index: {}]
  %s4 = sld [smem:[#allocation0]]
  $region45: #{_lambda_.15} parent=0
    _
  %s6 = ssub.s32 1, %s4
  %s7 = scalar_select 0, %s6, %s4
  loop: start=0, step=1, limit=4
  $region2: #{_lambda_.15} parent=0 // loop_pre_header
    _
  $region3: #{_lambda_.15} parent=0 // loop_header
    %s9 = sphi 0, %s13
    %p10 = scmp.ge.s32.totalorder %s9, 4
    %s16 = sphi 0, %s28
    %s17 = sphi 0, %s24
    %s18 = sphi 0, %s16
    %s19 = sphi 0, %s17
    %s20 = sphi 0, %s18
    %s21 = sphi 0, %s19
    %s31 = sphi 0, %s33
    %s34 = sphi 0, %s31
    %s35 = sphi 0, %s34
    %s51 = sphi 0, %s35
    %s57 = sphi 0, %s59
    %s60 = sphi 0, %s57
    %s61 = sphi 0, %s60
    %s77 = sphi 0, %s61
    %s83 = sphi 0, %s85
    %s86 = sphi 0, %s83
    %s87 = sphi 0, %s86
    %s103 = sphi 0, %s87
    %s111 = sphi 0, %s113
    %s114 = sphi 0, %s111
    %s115 = sphi 0, %s114
    %s131 = sphi 0, %s115
  $region4: #{_lambda_.15} parent=0 // loop_header_branch
    %12 = sbr.rel (%p10) target = $region8
  $region5: #{_lambda_.15} parent=0 // loop_body
    %s14 = ssub.s32 %s9, 1
    %s15 = ssub.s32 %s9, 2
    %s22 = sadd.s32 1, %s17
    %p23 = scmp.ge.s32.totalorder %s22, 1
    %s24 = scalar_select %p23, 0, %s22
    %s25 = sadd.s32 1, %s16
    %s26 = scalar_select %p23, %s25, %s16
    %p27 = scmp.ge.s32.totalorder %s26, 2
    %s28 = scalar_select %p27, 0, %s26
    %s29 = ssub.s32 %s16, %s28
    %p30 = scmp.eq.s32.totalorder %s29, 0
    %s32 = sadd.s32 %s31, 1
    %s33 = scalar_select %p30, %s31, %s32
    %p36 = pneg %p30
    %p37 = scmp.eq.s32.totalorder %s9, 1
    %p38 = por %p36, %p37
    %p39 = scmp.ne.s32.totalorder %s31, %s34
    %p40 = scmp.eq.s32.totalorder %s9, 0
    %p41 = por %p39, %p40
    %p42 = scmp.ne.s32.totalorder %s31, %s34
    %p43 = scmp.eq.s32.totalorder %s14, 1
    %p44 = por %p42, %p43
    %p45 = scmp.ne.s32.totalorder %s34, %s35
    %p46 = scmp.eq.s32.totalorder %s14, 0
    %p47 = por %p45, %p46
    %p48 = scmp.ne.s32.totalorder %s34, %s35
    %p49 = scmp.eq.s32.totalorder %s15, 1
    %p50 = por %p48, %p49
    %p52 = scmp.ne.s32.totalorder %s35, %s51
    %p53 = scmp.eq.s32.totalorder %s15, 0
    %p54 = por %p52, %p53
    %s55 = ssub.s32 %s17, %s24
    %p56 = scmp.eq.s32.totalorder %s55, 0
    %s58 = sadd.s32 %s57, 1
    %s59 = scalar_select %p56, %s57, %s58
    %p62 = pneg %p56
    %p63 = scmp.eq.s32.totalorder %s9, 1
    %p64 = por %p62, %p63
    %p65 = scmp.ne.s32.totalorder %s57, %s60
    %p66 = scmp.eq.s32.totalorder %s9, 0
    %p67 = por %p65, %p66
    %p68 = scmp.ne.s32.totalorder %s57, %s60
    %p69 = scmp.eq.s32.totalorder %s14, 1
    %p70 = por %p68, %p69
    %p71 = scmp.ne.s32.totalorder %s60, %s61
    %p72 = scmp.eq.s32.totalorder %s14, 0
    %p73 = por %p71, %p72
    %p74 = scmp.ne.s32.totalorder %s60, %s61
    %p75 = scmp.eq.s32.totalorder %s15, 1
    %p76 = por %p74, %p75
    %p78 = scmp.ne.s32.totalorder %s61, %s77
    %p79 = scmp.eq.s32.totalorder %s15, 0
    %p80 = por %p78, %p79
    %s81 = ssub.s32 %s17, %s24
    %p82 = scmp.eq.s32.totalorder %s81, 0
    %s84 = sadd.s32 %s83, 1
    %s85 = scalar_select %p82, %s83, %s84
    %p88 = pneg %p82
    %p89 = scmp.eq.s32.totalorder %s9, 1
    %p90 = por %p88, %p89
    %p91 = scmp.ne.s32.totalorder %s83, %s86
    %p92 = scmp.eq.s32.totalorder %s9, 0
    %p93 = por %p91, %p92
    %p94 = scmp.ne.s32.totalorder %s83, %s86
    %p95 = scmp.eq.s32.totalorder %s14, 1
    %p96 = por %p94, %p95
    %p97 = scmp.ne.s32.totalorder %s86, %s87
    %p98 = scmp.eq.s32.totalorder %s14, 0
    %p99 = por %p97, %p98
    %p100 = scmp.ne.s32.totalorder %s86, %s87
    %p101 = scmp.eq.s32.totalorder %s15, 1
    %p102 = por %p100, %p101
    %p104 = scmp.ne.s32.totalorder %s87, %s103
    %p105 = scmp.eq.s32.totalorder %s15, 0
    %p106 = por %p104, %p105
    %s107 = ssub.s32 %s16, %s28
    %s108 = ssub.s32 %s17, %s24
    %s109 = sor.u32 %s107, %s108
    %p110 = scmp.eq.s32.totalorder %s109, 0
    %s112 = sadd.s32 %s111, 1
    %s113 = scalar_select %p110, %s111, %s112
    %p116 = pneg %p110
    %p117 = scmp.eq.s32.totalorder %s9, 1
    %p118 = por %p116, %p117
    %p119 = scmp.ne.s32.totalorder %s111, %s114
    %p120 = scmp.eq.s32.totalorder %s9, 0
    %p121 = por %p119, %p120
    %p122 = scmp.ne.s32.totalorder %s111, %s114
    %p123 = scmp.eq.s32.totalorder %s14, 1
    %p124 = por %p122, %p123
    %p125 = scmp.ne.s32.totalorder %s114, %s115
    %p126 = scmp.eq.s32.totalorder %s14, 0
    %p127 = por %p125, %p126
    %p128 = scmp.ne.s32.totalorder %s114, %s115
    %p129 = scmp.eq.s32.totalorder %s15, 1
    %p130 = por %p128, %p129
    %p132 = scmp.ne.s32.totalorder %s115, %s131
    %p133 = scmp.eq.s32.totalorder %s15, 0
    %p134 = por %p132, %p133
    %p135 = scmp.le.s32.totalorder 1, %s9
    %p136 = scmp.lt.s32.totalorder %s9, 3
    %p137 = pnand %p135, %p136
    %p138 = pneg %p137
    // Predicated region
    $region9: #{_lambda_.15} parent=5 // pred_check
      _
    $region10: #{_lambda_.15} parent=5 // pred_check_branch
      %140 = sbr.rel (%p137) target = $region12
    $region11: #{_lambda_.15} parent=5 // pred_region
      %s141 = ssub.s32 %s9, 1
      // Predicated region
      $region13: #{_lambda_.15} parent=11 // pred_check
        %p142 = pneg %p73
      $region14: #{_lambda_.15} parent=11 // pred_check_branch
        %144 = sbr.rel (%p142) target = $region16
      $region15: #{_lambda_.15} parent=11 // pred_region
        %s145 = smul.u32 16, %s19
        %p146 = scmp.lt.s32.totalorder %s145, 15
        %s147 = scalar_select %p146, %s145, 15
        %s148 = smul.addr %s147, 2
        %s149 = smul.addr %s148, 4
        %s150 = scalar_lea.vmem %s1, %s149
        %s151 = smul.u32 16, %s19
      $region16: #{_lambda_.15} parent=11 // pred_fallthru
        _
      // Predicated region
      $region17: #{_lambda_.15} parent=11 // pred_check
        %p152 = pneg %p99
      $region18: #{_lambda_.15} parent=11 // pred_check_branch
        %154 = sbr.rel (%p152) target = $region20
      $region19: #{_lambda_.15} parent=11 // pred_region
        %p155 = scmp.lt.s32.totalorder %s19, 0
        %s156 = scalar_select %p155, %s19, 0
        %s157 = scalar_lea.vmem %s2, %s156
      $region20: #{_lambda_.15} parent=11 // pred_fallthru
        _
    $region12: #{_lambda_.15} parent=5 // pred_fallthru
      _
    %p158 = scmp.lt.s32.totalorder %s9, 2
    // Predicated region
    $region21: #{_lambda_.15} parent=5 // pred_check
      %p159 = pneg %p158
    $region22: #{_lambda_.15} parent=5 // pred_check_branch
      %161 = sbr.rel (%p159) target = $region24
    $region23: #{_lambda_.15} parent=5 // pred_region
      // Predicated region
      $region25: #{_lambda_.15} parent=23 // pred_check
        %p162 = pneg %p41
      $region26: #{_lambda_.15} parent=23 // pred_check_branch
        %164 = sbr.rel (%p162) target = $region28
      $region27: #{_lambda_.15} parent=23 // pred_region
        %s165 = smul.u32 2, %s16
        %p166 = scmp.lt.s32.totalorder %s165, 3
        %s167 = scalar_select %p166, %s165, 3
        %s168 = smul.addr %s167, 2
        %s169 = smul.addr %s168, 8
        %s170 = scalar_lea.vmem %s0, %s169
        %s171 = smul.u32 2, %s16
      $region28: #{_lambda_.15} parent=23 // pred_fallthru
        _
    $region24: #{_lambda_.15} parent=5 // pred_fallthru
      _
    %p172 = scmp.le.s32.totalorder 1, %s9
    %p173 = scmp.lt.s32.totalorder %s9, 3
    %p174 = pnand %p172, %p173
    %p175 = pneg %p174
    // Predicated region
    $region29: #{_lambda_.15} parent=5 // pred_check
      _
    $region30: #{_lambda_.15} parent=5 // pred_check_branch
      %177 = sbr.rel (%p174) target = $region32
    $region31: #{_lambda_.15} parent=5 // pred_region
      %s178 = ssub.s32 %s9, 1
      %s179 = smul.u32 2, %s18
      %p180 = scmp.lt.s32.totalorder %s179, 3
      %s181 = scalar_select %p180, %s179, 3
      %s182 = smul.addr %s181, 2
      %s183 = smul.addr %s182, 8
      %s184 = scalar_lea.vmem %s0, %s183
      %p185 = pneg %p47
      %p186 = pneg %p44
      %s187 = smul.u32 16, %s19
      %p188 = scmp.lt.s32.totalorder %s187, 15
      %s189 = scalar_select %p188, %s187, 15
      %s190 = smul.addr %s189, 2
      %s191 = smul.addr %s190, 4
      %s192 = scalar_lea.vmem %s1, %s191
      %p193 = pneg %p73
      %p194 = pneg %p70
      %p195 = scmp.lt.s32.totalorder %s19, 0
      %s196 = scalar_select %p195, %s19, 0
      %s197 = scalar_lea.vmem %s2, %s196
      %p198 = pneg %p99
      %p199 = pneg %p96
      %p200 = pneg %p127
      %p201 = pneg %p124
      %s202 = smul.u32 2, %s18
      %p203 = scmp.lt.s32.totalorder %s202, 3
      %s204 = scalar_select %p203, %s202, 3
      %p205 = scmp.lt.s32.totalorder %s19, 0
      %s206 = scalar_select %p205, %s19, 0
      %s207 = sadd.s32 %s206, %s204
      %s208 = smul.addr %s207, 8
      %s209 = scalar_lea.vmem %s3, %s208
      %s210 = smul.u32 2, %s18
      %p211 = scmp.lt.s32.totalorder %s210, 3
      %s212 = scalar_select %p211, %s210, 3
      %s213 = smul.addr %s212, 2
      %s214 = smul.addr %s213, 8
      %s215 = scalar_lea.vmem %s0, %s214
      %s216 = smul.u32 2, %s18
      %s217 = smul.u32 16, %s19
      %p218 = scmp.lt.s32.totalorder %s217, 15
      %s219 = scalar_select %p218, %s217, 15
      %s220 = smul.addr %s219, 2
      %s221 = smul.addr %s220, 4
      %s222 = scalar_lea.vmem %s1, %s221
      %s223 = smul.u32 16, %s19
      %p224 = scmp.lt.s32.totalorder %s19, 0
      %s225 = scalar_select %p224, %s19, 0
      %s226 = scalar_lea.vmem %s2, %s225
      %s227 = smul.u32 2, %s18
      %p228 = scmp.lt.s32.totalorder %s227, 3
      %s229 = scalar_select %p228, %s227, 3
      %p230 = scmp.lt.s32.totalorder %s19, 0
      %s231 = scalar_select %p230, %s19, 0
      %s232 = sadd.s32 %s231, %s229
      %s233 = smul.addr %s232, 8
      %s234 = scalar_lea.vmem %s3, %s233
      %s235 = smul.u32 2, %s18
      %v237 = vld [vmem:[%s215] sm:$0xff]
      %v238 = vld [vmem:[%s215 + $0x8] sm:$0xff]
      %v239 = vld [vmem:[%s215 + $0x10] sm:$0xff]
      %v240 = vld [vmem:[%s215 + $0x18] sm:$0xff]
      %v241 = vpack.c.bf16 %v239, %v237
      %v242 = vpack.c.bf16 %v240, %v238
      %v243 = vld [vmem:[%s222] sm:$0xff]
      %v244 = vld [vmem:[%s222 + $0x8] sm:$0xff]
      %v245 = vld [vmem:[%s222 + $0x10] sm:$0xff]
      %v246 = vld [vmem:[%s222 + $0x18] sm:$0xff]
      %v247 = vld [vmem:[%s222 + $0x20] sm:$0xff]
      %v248 = vld [vmem:[%s222 + $0x28] sm:$0xff]
      %v249 = vld [vmem:[%s222 + $0x30] sm:$0xff]
      %v250 = vld [vmem:[%s222 + $0x38] sm:$0xff]
      %v251 = vld [vmem:[%s222 + $0x40] sm:$0xff]
      %v252 = vld [vmem:[%s222 + $0x48] sm:$0xff]
      %v253 = vld [vmem:[%s222 + $0x50] sm:$0xff]
      %v254 = vld [vmem:[%s222 + $0x58] sm:$0xff]
      %v255 = vld [vmem:[%s222 + $0x60] sm:$0xff]
      %v256 = vld [vmem:[%s222 + $0x68] sm:$0xff]
      %v257 = vld [vmem:[%s222 + $0x70] sm:$0xff]
      %v258 = vld [vmem:[%s222 + $0x78] sm:$0xff]
      %v259 = vld [vmem:[%s226] sm:$0x1]
      %v261 = vlaneseq
      %v262 = vshrl.u32 %v261, 7
      %v263 = vsub.s32 0, %v262
      %v264 = vrot.slane %v259, %v263
      %v282 = vunpack.c.l.b16 %v243
      %v283 = vunpack.c.h.b16 %v243
      %v284 = vunpack.c.l.b16 %v244
      %v285 = vunpack.c.h.b16 %v244
      %v286 = vunpack.c.l.b16 %v245
      %v287 = vunpack.c.h.b16 %v245
      %v288 = vunpack.c.l.b16 %v246
      %v289 = vunpack.c.h.b16 %v246
      %v290 = vunpack.c.l.b16 %v247
      %v291 = vunpack.c.h.b16 %v247
      %v292 = vunpack.c.l.b16 %v248
      %v293 = vunpack.c.h.b16 %v248
      %v294 = vunpack.c.l.b16 %v249
      %v295 = vunpack.c.h.b16 %v249
      %v296 = vunpack.c.l.b16 %v250
      %v297 = vunpack.c.h.b16 %v250
      %v298 = vunpack.c.l.b16 %v251
      %v299 = vunpack.c.h.b16 %v251
      %v300 = vunpack.c.l.b16 %v252
      %v301 = vunpack.c.h.b16 %v252
      %v302 = vunpack.c.l.b16 %v253
      %v303 = vunpack.c.h.b16 %v253
      %v304 = vunpack.c.l.b16 %v254
      %v305 = vunpack.c.h.b16 %v254
      %v306 = vunpack.c.l.b16 %v255
      %v307 = vunpack.c.h.b16 %v255
      %v308 = vunpack.c.l.b16 %v256
      %v309 = vunpack.c.h.b16 %v256
      %v310 = vunpack.c.l.b16 %v257
      %v311 = vunpack.c.h.b16 %v257
      %v312 = vunpack.c.l.b16 %v258
      %v313 = vunpack.c.h.b16 %v258
      %v314 = vpack.c.b16 %v284, %v282
      %v315 = vpack.c.b16 %v285, %v283
      %v316 = vpack.c.b16 %v288, %v286
      %v317 = vpack.c.b16 %v289, %v287
      %v318 = vpack.c.b16 %v292, %v290
      %v319 = vpack.c.b16 %v293, %v291
      %v320 = vpack.c.b16 %v296, %v294
      %v321 = vpack.c.b16 %v297, %v295
      %v322 = vpack.c.b16 %v300, %v298
      %v323 = vpack.c.b16 %v301, %v299
      %v324 = vpack.c.b16 %v304, %v302
      %v325 = vpack.c.b16 %v305, %v303
      %v326 = vpack.c.b16 %v308, %v306
      %v327 = vpack.c.b16 %v309, %v307
      %v328 = vpack.c.b16 %v312, %v310
      %v329 = vpack.c.b16 %v313, %v311
      %346 = vmatprep.subr.bf16.mxu0 %v329
      %347 = vmatpush1.bf16.xpose.msra.mxu0 %v328
      %348 = vmatprep.subr.bf16.mxu0 %v327
      %349 = vmatpush1.bf16.xpose.msra.mxu0 %v326
      %350 = vmatprep.subr.bf16.mxu0 %v325
      %351 = vmatpush1.bf16.xpose.msra.mxu0 %v324
      %352 = vmatprep.subr.bf16.mxu0 %v323
      %353 = vmatpush1.bf16.xpose.msra.mxu0 %v322
      %354 = vmatprep.subr.bf16.mxu0 %v321
      %355 = vmatpush1.bf16.xpose.msra.mxu0 %v320
      %356 = vmatprep.subr.bf16.mxu0 %v319
      %357 = vmatpush1.bf16.xpose.msra.mxu0 %v318
      %358 = vmatprep.subr.bf16.mxu0 %v317
      %359 = vmatpush1.bf16.xpose.msra.mxu0 %v316
      %360 = vmatprep.subr.bf16.mxu0 %v315
      %361 = vmatpush1.bf16.xpose.msra.mxu0 %v314
      %362 = vmatprep.subr.bf16.mxu0 0
      %363 = vmatpush2.bf16.xpose.msra.mxu0 0
      %364 = vmatprep.subr.bf16.mxu0 0
      %365 = vmatpush2.bf16.xpose.msra.mxu0 0
      %366 = vmatprep.subr.bf16.mxu0 0
      %367 = vmatpush2.bf16.xpose.msra.mxu0 0
      %368 = vmatprep.subr.bf16.mxu0 0
      %369 = vmatpush2.bf16.xpose.msra.mxu0 0
      %370 = vmatprep.subr.bf16.mxu0 0
      %371 = vmatpush2.bf16.xpose.msra.mxu0 0
      %372 = vmatprep.subr.bf16.mxu0 0
      %373 = vmatpush2.bf16.xpose.msra.mxu0 0
      %374 = vmatprep.subr.bf16.mxu0 0
      %375 = vmatpush2.bf16.xpose.msra.mxu0 0
      %376 = vmatprep.subr.bf16.mxu0 0
      %377 = vmatpush2.bf16.xpose.msra.mxu0 0
      %378 = vmatprep.mubr.bf16.mxu0 %v242
      %379 = vmatmul.mubr.bf16.gmra.mxu0 %v241
      %v380 = vpop.f32.mrf.mxu0
      %v381 = vadd.f32 %v264, %v380
      %v382 = vpop.f32.mrf.mxu0
      %v383 = vpop.f32.mrf.mxu0
      %v384 = vadd.f32 %v264, %v383
      %v385 = vpop.f32.mrf.mxu0
      %386 = vdwg.mxu0
      %387 = vst [vmem:[%s234] sm:$0xff] %v381
      %388 = vst [vmem:[%s234 + $0x8] sm:$0xff] %v384
      %s389 = smul.u32 2, %s18
      %p390 = scmp.lt.s32.totalorder %s389, 3
      %s391 = scalar_select %p390, %s389, 3
      %p392 = scmp.lt.s32.totalorder %s19, 0
      %s393 = scalar_select %p392, %s19, 0
      %s394 = sadd.s32 %s393, %s391
      %s395 = smul.addr %s394, 8
      %s396 = scalar_lea.vmem %s3, %s395
      // Predicated region
      $region33: #{_lambda_.15} parent=31 // pred_check
        %p397 = pneg %p124
      $region34: #{_lambda_.15} parent=31 // pred_check_branch
        %399 = sbr.rel (%p397) target = $region36
      $region35: #{_lambda_.15} parent=31 // pred_region
        %s400 = smul.u32 2, %s18
      $region36: #{_lambda_.15} parent=31 // pred_fallthru
        _
    $region32: #{_lambda_.15} parent=5 // pred_fallthru
      _
    %p401 = scmp.le.s32.totalorder 2, %s9
    // Predicated region
    $region37: #{_lambda_.15} parent=5 // pred_check
      %p402 = pneg %p401
    $region38: #{_lambda_.15} parent=5 // pred_check_branch
      %404 = sbr.rel (%p402) target = $region40
    $region39: #{_lambda_.15} parent=5 // pred_region
      %s405 = ssub.s32 %s9, 2
      // Predicated region
      $region41: #{_lambda_.15} parent=39 // pred_check
        %p406 = pneg %p130
      $region42: #{_lambda_.15} parent=39 // pred_check_branch
        %408 = sbr.rel (%p406) target = $region44
      $region43: #{_lambda_.15} parent=39 // pred_region
        %s409 = smul.u32 2, %s20
        %p410 = scmp.lt.s32.totalorder %s409, 3
        %s411 = scalar_select %p410, %s409, 3
        %p412 = scmp.lt.s32.totalorder %s21, 0
        %s413 = scalar_select %p412, %s21, 0
        %s414 = sadd.s32 %s413, %s411
        %s415 = smul.addr %s414, 8
        %s416 = scalar_lea.vmem %s3, %s415
      $region44: #{_lambda_.15} parent=39 // pred_fallthru
        _
    $region40: #{_lambda_.15} parent=5 // pred_fallthru
      _
  $region6: #{_lambda_.15} parent=0 // loop_footer
    %s13 = sadd.s32 1, %s9
  $region7: #{_lambda_.15} parent=0 // loop_footer_branch
    %8 = sbr.rel target = $region3
  $region8: #{_lambda_.15} parent=0 // loop_exit
    _

</llo_original>
